<compile_context>
chip_gen: v7x
topology: tpu7x:2x2x1
jax: 0.10.0
libtpu: 0.0.40
codegen_flags: <defaults>
</compile_context>

<pallas_src>
import jax
import jax.numpy as jnp
from jax.experimental import pallas as pl
from jax.experimental.pallas import tpu as pltpu

C_IN = 1024
C_MID = 512
C_OUT = 1
NEG_SLOPE = 0.01  # nn.LeakyReLU() default


def _choose_tiling(L: int):
    """Return (TL, L_pad): lane-dense 128-multiple tile and padded length."""
    L_pad = ((L + 127) // 128) * 128
    for tl in (2048, 1024, 512, 256, 128):
        if L_pad % tl == 0:
            return tl, L_pad
    return 128, L_pad  # unreachable: L_pad is always a multiple of 128


def _filter_kernel(x_ref, w1_ref, b1_ref, w2_ref, b2_ref, o_ref):
    # x_ref:  (1, C_IN, TL)   f32    current (batch, length-tile) block
    # w1_ref: (C_MID, C_IN)   bf16   conv_1 weight (kernel dim squeezed)
    # b1_ref: (C_MID, 1)      f32
    # w2_ref: (C_OUT, C_MID)  bf16   conv_2 weight
    # b2_ref: (1, 1)          f32    SMEM scalar
    # o_ref:  (1, C_OUT, TL)  f32
    x = x_ref[0].astype(jnp.bfloat16)                                  # in-VMEM cast
    h = jnp.dot(w1_ref[...], x, preferred_element_type=jnp.float32)   # (C_MID, TL)
    h = h + b1_ref[...]
    h = jnp.maximum(h, NEG_SLOPE * h)                                  # LeakyReLU
    h = h.astype(jnp.bfloat16)                                         # bf16 second dot
    y = jnp.dot(w2_ref[...], h, preferred_element_type=jnp.float32)   # (C_OUT, TL)
    y = y + b2_ref[0, 0]
    o_ref[0] = jax.nn.sigmoid(y).astype(o_ref.dtype)                   # Sigmoid


def filter_module_forward(x_ncl, w1, b1, w2, b2):
    """x_ncl: (N, 1024, L) float32.  Returns (N, 1, L) float32.

    w1: (512, 1024)  conv_1.weight with the kernel dim squeezed
    b1: (512,)
    w2: (1, 512)     conv_2.weight with the kernel dim squeezed
    b2: (1,)
    """
    N, C, L = x_ncl.shape
    assert C == C_IN
    TL, L_pad = _choose_tiling(L)
    if L_pad != L:
        x_ncl = jnp.pad(x_ncl, ((0, 0), (0, 0), (0, L_pad - L)))
    grid = (N, L_pad // TL)

    x_f32 = x_ncl.astype(jnp.float32)                      # (N, C_IN, L_pad), no extra pass
    w1_bf16 = w1.astype(jnp.bfloat16)                      # (C_MID, C_IN) — tiny one-time cast
    b1_col = b1.reshape(C_MID, 1).astype(jnp.float32)      # (C_MID, 1)
    w2_bf16 = w2.reshape(C_OUT, C_MID).astype(jnp.bfloat16)
    b2_s = b2.reshape(1, 1).astype(jnp.float32)

    flops = 2 * N * L_pad * (C_IN * C_MID + C_MID * C_OUT)
    bytes_accessed = (
        x_f32.size * 4                      # f32 activation read (no wrapper cast pass)
        + w1_bf16.size * 2 + b1_col.size * 4
        + w2_bf16.size * 2 + b2_s.size * 4
        + N * C_OUT * L_pad * 4             # f32 output write
    )

    out = pl.pallas_call(
        _filter_kernel,
        out_shape=jax.ShapeDtypeStruct((N, C_OUT, L_pad), jnp.float32),
        grid_spec=pltpu.PrefetchScalarGridSpec(
            num_scalar_prefetch=0,
            grid=grid,
            in_specs=[
                pl.BlockSpec((1, C_IN, TL), lambda b, l: (b, 0, l)),
                pl.BlockSpec((C_MID, C_IN), lambda b, l: (0, 0)),
                pl.BlockSpec((C_MID, 1), lambda b, l: (0, 0)),
                pl.BlockSpec((C_OUT, C_MID), lambda b, l: (0, 0)),
                pl.BlockSpec(memory_space=pltpu.MemorySpace.SMEM),
            ],
            out_specs=pl.BlockSpec((1, C_OUT, TL), lambda b, l: (b, 0, l)),
        ),
        compiler_params=pltpu.CompilerParams(
            dimension_semantics=("parallel", "parallel"),
            vmem_limit_bytes=48 * 1024 * 1024,
        ),
        cost_estimate=pl.CostEstimate(
            flops=flops,
            transcendentals=N * L_pad,      # sigmoid per output element
            bytes_accessed=bytes_accessed,
        ),
    )(x_f32, w1_bf16, b1_col, w2_bf16, b2_s)

    if L_pad != L:
        out = out[:, :, :L]
    return out  # (N, 1, L), NCL layout preserved end-to-end


def _reference_forward(x_ncl, w1, b1, w2, b2):
    # Pure-JAX f32 reference (same math as the PyTorch module).
    x_nlc = jnp.transpose(x_ncl, (0, 2, 1))
    h = jnp.einsum("nlc,oc->nlo", x_nlc, w1) + b1
    h = jnp.where(h > 0, h, NEG_SLOPE * h)
    y = jnp.einsum("nlc,oc->nlo", h, w2) + b2
    y = jax.nn.sigmoid(y)
    return jnp.transpose(y, (0, 2, 1))


if __name__ == "__main__":
    key = jax.random.PRNGKey(0)
    k_x, k_w1, k_b1, k_w2, k_b2 = jax.random.split(key, 5)

    # L=500 deliberately not a multiple of 128 to exercise the pad+slice path.
    N, L = 2, 500
    x = jax.random.normal(k_x, (N, C_IN, L), dtype=jnp.float32)

    # Deterministic synthetic parameters (Conv1d k=1 weights, kernel dim squeezed).
    w1 = jax.random.normal(k_w1, (C_MID, C_IN), dtype=jnp.float32) * 0.02
    b1 = jax.random.normal(k_b1, (C_MID,), dtype=jnp.float32) * 0.02
    w2 = jax.random.normal(k_w2, (C_OUT, C_MID), dtype=jnp.float32) * 0.02
    b2 = jax.random.normal(k_b2, (C_OUT,), dtype=jnp.float32) * 0.02

    out = jax.block_until_ready(filter_module_forward(x, w1, b1, w2, b2))
    ref = jax.block_until_ready(_reference_forward(x, w1, b1, w2, b2))

    assert out.shape == (N, 1, L), out.shape
    # bf16 matmul operands (f32 accumulation) vs f32 reference -> loose tolerance.
    assert jnp.allclose(out, ref, atol=2e-2, rtol=2e-2), "mismatch vs reference"

    print("KERNEL_OK")
</pallas_src>

<mosaic_0001>
module attributes {stable_mosaic.version = 11 : i64} {
  func.func @_filter_kernel(%arg0: i32, %arg1: i32, %arg2: memref<1x1024x512xf32, #tpu.memory_space<vmem>>, %arg3: memref<512x1024xbf16, #tpu.memory_space<vmem>>, %arg4: memref<512x1xf32, #tpu.memory_space<vmem>>, %arg5: memref<1x512xbf16, #tpu.memory_space<vmem>>, %arg6: memref<1x1xf32, #tpu.memory_space<smem>>, %arg7: memref<1x1x512xf32, #tpu.memory_space<vmem>>) attributes {dimension_semantics = [#tpu.dimension_semantics<parallel>, #tpu.dimension_semantics<parallel>], iteration_bounds = array<i64: 2, 1>, scalar_prefetch = 0 : i64, scratch_operands = 0 : i64, tpu.core_type = #tpu.core_type<tc>, window_params = [{transform_indices = @transform_0, window_bounds = array<i64: 1, 1024, 512>}, {pipeline_mode = #tpu.pipeline_mode<synchronous>, transform_indices = @transform_1, window_bounds = array<i64: 512, 1024>}, {pipeline_mode = #tpu.pipeline_mode<synchronous>, transform_indices = @transform_2, window_bounds = array<i64: 512, 1>}, {pipeline_mode = #tpu.pipeline_mode<synchronous>, transform_indices = @transform_3, window_bounds = array<i64: 1, 512>}, {transform_indices = @transform_4, window_bounds = array<i64: 1, 1>}, {transform_indices = @transform_5, window_bounds = array<i64: 1, 1, 512>}]} {
    %c0 = arith.constant 0 : index
    %c0_0 = arith.constant 0 : index
    %c0_1 = arith.constant 0 : index
    %0 = vector.load %arg2[%c0, %c0_0, %c0_1] : memref<1x1024x512xf32, #tpu.memory_space<vmem>>, vector<1x1024x512xf32>
    %1 = vector.shape_cast %0 : vector<1x1024x512xf32> to vector<1024x512xf32>
    %2 = arith.truncf %1 : vector<1024x512xf32> to vector<1024x512xbf16>
    %c0_2 = arith.constant 0 : index
    %c0_3 = arith.constant 0 : index
    %3 = vector.load %arg3[%c0_2, %c0_3] : memref<512x1024xbf16, #tpu.memory_space<vmem>>, vector<512x1024xbf16>
    %cst = arith.constant dense<0.000000e+00> : vector<512x512xf32>
    %4 = tpu.matmul %3, %2, %cst {dimension_numbers = #tpu.dot_dimension_numbers<[1], [0], [0], [1], [0, 0, 1, 1], [], []>} : vector<512x1024xbf16>, vector<1024x512xbf16>, vector<512x512xf32> -> vector<512x512xf32>
    %c0_4 = arith.constant 0 : index
    %c0_5 = arith.constant 0 : index
    %5 = vector.load %arg4[%c0_4, %c0_5] : memref<512x1xf32, #tpu.memory_space<vmem>>, vector<512x1xf32>
    %6 = vector.broadcast %5 : vector<512x1xf32> to vector<512x512xf32>
    %7 = arith.addf %4, %6 : vector<512x512xf32>
    %cst_6 = arith.constant 0.00999999977 : f32
    %8 = vector.broadcast %cst_6 : f32 to vector<512x512xf32>
    %9 = arith.mulf %8, %7 : vector<512x512xf32>
    %10 = arith.maximumf %7, %9 : vector<512x512xf32>
    %11 = arith.truncf %10 : vector<512x512xf32> to vector<512x512xbf16>
    %c0_7 = arith.constant 0 : index
    %c0_8 = arith.constant 0 : index
    %12 = vector.load %arg5[%c0_7, %c0_8] : memref<1x512xbf16, #tpu.memory_space<vmem>>, vector<1x512xbf16>
    %cst_9 = arith.constant dense<0.000000e+00> : vector<1x512xf32>
    %13 = tpu.matmul %12, %11, %cst_9 {dimension_numbers = #tpu.dot_dimension_numbers<[1], [0], [0], [1], [0, 0, 1, 1], [], []>} : vector<1x512xbf16>, vector<512x512xbf16>, vector<1x512xf32> -> vector<1x512xf32>
    %c0_10 = arith.constant 0 : index
    %c0_11 = arith.constant 0 : index
    %14 = memref.load %arg6[%c0_10, %c0_11] : memref<1x1xf32, #tpu.memory_space<smem>>
    %15 = vector.broadcast %14 : f32 to vector<1x512xf32>
    %16 = arith.addf %13, %15 : vector<1x512xf32>
    %17 = arith.negf %16 : vector<1x512xf32>
    %18 = math.exp %17 : vector<1x512xf32>
    %cst_12 = arith.constant 1.000000e+00 : f32
    %19 = vector.broadcast %cst_12 : f32 to vector<1x512xf32>
    %20 = arith.addf %19, %18 : vector<1x512xf32>
    %21 = arith.divf %19, %20 : vector<1x512xf32>
    %c0_13 = arith.constant 0 : index
    %c0_14 = arith.constant 0 : index
    %c0_15 = arith.constant 0 : index
    %22 = vector.load %arg7[%c0_13, %c0_14, %c0_15] : memref<1x1x512xf32, #tpu.memory_space<vmem>>, vector<1x1x512xf32>
    %23 = vector.shape_cast %22 : vector<1x1x512xf32> to vector<1x512xf32>
    %24 = vector.shape_cast %21 : vector<1x512xf32> to vector<1x1x512xf32>
    tpu.vector_store %arg7[%c0_13, %c0_14, %c0_15], %24 {strides = array<i32>} : memref<1x1x512xf32, #tpu.memory_space<vmem>>, vector<1x1x512xf32>,
    return
  }
  func.func @transform_0(%arg0: i32, %arg1: i32) -> (i32, i32, i32) {
    %c0_i32 = arith.constant 0 : i32
    %c0_i32_0 = arith.constant 0 : i32
    return %arg0, %c0_i32, %arg1 : i32, i32, i32
  }
  func.func @transform_1(%arg0: i32, %arg1: i32) -> (i32, i32) {
    %c0_i32 = arith.constant 0 : i32
    %c0_i32_0 = arith.constant 0 : i32
    %c0_i32_1 = arith.constant 0 : i32
    return %c0_i32, %c0_i32_0 : i32, i32
  }
  func.func @transform_2(%arg0: i32, %arg1: i32) -> (i32, i32) {
    %c0_i32 = arith.constant 0 : i32
    %c0_i32_0 = arith.constant 0 : i32
    %c0_i32_1 = arith.constant 0 : i32
    return %c0_i32, %c0_i32_0 : i32, i32
  }
  func.func @transform_3(%arg0: i32, %arg1: i32) -> (i32, i32) {
    %c0_i32 = arith.constant 0 : i32
    %c0_i32_0 = arith.constant 0 : i32
    %c0_i32_1 = arith.constant 0 : i32
    return %c0_i32, %c0_i32_0 : i32, i32
  }
  func.func @transform_4(%arg0: i32, %arg1: i32) -> (i32, i32) {
    %c0_i32 = arith.constant 0 : i32
    %c0_i32_0 = arith.constant 0 : i32
    %c0_i32_1 = arith.constant 0 : i32
    return %c0_i32, %c0_i32_0 : i32, i32
  }
  func.func @transform_5(%arg0: i32, %arg1: i32) -> (i32, i32, i32) {
    %c0_i32 = arith.constant 0 : i32
    %c0_i32_0 = arith.constant 0 : i32
    return %arg0, %c0_i32, %arg1 : i32, i32, i32
  }
}

</mosaic_0001>

<llo_original>
// kernel: tpu_custom_call.1
$region0: #{tpu_custom_call.1}
  #allocation0 [shape = 'u32[]', space=smem, size = 0x4, offset = 0x4, fixed_abs, tag = 'smem constant byte address 0x4 - core index']
  #allocation1 [shape = 'u32[144,128]{1,0:T(1,128)}', space=vmem, size = 0x12000, scoped, tag = 'internal scratch']
  #allocation2 [shape = 'f32[1,1]{1,0:T(1,128)S(6)}', space=smem, size = 0x200, scoped, tag = 'scoped memory for tpu_custom_call.1']
  %s0 = inlined_call_operand.hbm [shape: f32[2,1024,512], index: 0, kind: input, shape index: {}]
  %s1 = inlined_call_operand.hbm [shape: bf16[512,1024], index: 1, kind: input, shape index: {}]
  %s2 = inlined_call_operand.vmem [shape: f32[512,1], index: 2, kind: input, shape index: {}]
  %s3 = inlined_call_operand.hbm [shape: bf16[1,512], index: 3, kind: input, shape index: {}]
  %s4 = inlined_call_operand.<no memory space> [shape: f32[1,1], index: 4, kind: input, shape index: {}]
  %s5 = inlined_call_operand.hbm [shape: f32[2,1,512], index: 5, kind: output, shape index: {}]
  %s6 = sld [smem:[#allocation0]]
  $region65: #{tpu_custom_call.1} parent=0
    _
  %s8 = ssub.s32 1, %s6
  %s9 = scalar_select 0, %s8, %s6
  %10 = sst [smem:[#allocation2]] %s4
  $region1: #{tpu_custom_call.1} parent=0
    #allocation3 [shape = 'u8[4194304]{0}', space=vmem, size = 0x400000, scoped, tag = 'input window, operand 0']
    #allocation4 [shape = 's32[2]{0}', space=sflag, size = 0x8, scoped, tag = 'scoped memory for tpu_custom_call.1']
    #allocation5 [shape = 's32[2]{0}', space=sflag, size = 0x8, scoped, tag = 'scoped memory for tpu_custom_call.1']
    #allocation6 [shape = 'u8[1048576]{0}', space=vmem, size = 0x100000, scoped, tag = 'input window, operand 1, single buffered']
    #allocation7 [shape = 's32[1]{0}', space=sflag, size = 0x4, scoped, tag = 'scoped memory for tpu_custom_call.1']
    #allocation8 [shape = 'u8[2048]{0}', space=vmem, size = 0x800, scoped, tag = 'input window, operand 3, single buffered']
    #allocation9 [shape = 'u8[4096]{0}', space=vmem, size = 0x1000, scoped, tag = 'output window, operand 0']
    %11 = vsyncpa [#allocation4], 0
    %s12 = scalar_lea.sflag [#allocation4], 1
    %13 = vsyncpa %s12, 0
    %14 = vsyncpa [#allocation7], 0
    %15 = vsyncpa [#allocation5], 0
    %s16 = scalar_lea.sflag [#allocation5], 1
    %17 = vsyncpa %s16, 0
    loop: start=0, step=1, limit=4
    $region2: #{tpu_custom_call.1} parent=1 // loop_pre_header
      _
    $region3: #{tpu_custom_call.1} parent=1 // loop_header
      %s19 = sphi 0, %s23
      %p20 = scmp.ge.s32.totalorder %s19, 4
      %s26 = sphi 0, %s38
      %s27 = sphi 0, %s34
      %s28 = sphi 0, %s26
      %s29 = sphi 0, %s27
      %s30 = sphi 0, %s28
      %s31 = sphi 0, %s29
      %s43 = sphi 0, %s45
      %s46 = sphi 0, %s43
      %s47 = sphi 0, %s46
      %s63 = sphi 0, %s47
      %s67 = sphi 0, %s67
      %s69 = sphi 0, %s67
      %s70 = sphi 0, %s69
      %s84 = sphi 0, %s70
      %s88 = sphi 0, %s88
      %s90 = sphi 0, %s88
      %s91 = sphi 0, %s90
      %s105 = sphi 0, %s91
      %s109 = sphi 0, %s109
      %s111 = sphi 0, %s109
      %s112 = sphi 0, %s111
      %s126 = sphi 0, %s112
      %s130 = sphi 0, %s130
      %s132 = sphi 0, %s130
      %s133 = sphi 0, %s132
      %s147 = sphi 0, %s133
      %s155 = sphi 0, %s157
      %s158 = sphi 0, %s155
      %s159 = sphi 0, %s158
      %s175 = sphi 0, %s159
    $region4: #{tpu_custom_call.1} parent=1 // loop_header_branch
      %22 = sbr.rel (%p20) target = $region8
    $region5: #{tpu_custom_call.1} parent=1 // loop_body
      %s24 = ssub.s32 %s19, 1
      %s25 = ssub.s32 %s19, 2
      %s32 = sadd.s32 1, %s27
      %p33 = scmp.ge.s32.totalorder %s32, 1
      %s34 = scalar_select %p33, 0, %s32
      %s35 = sadd.s32 1, %s26
      %s36 = scalar_select %p33, %s35, %s26
      %p37 = scmp.ge.s32.totalorder %s36, 2
      %s38 = scalar_select %p37, 0, %s36
      %s39 = ssub.s32 %s26, %s38
      %s40 = ssub.s32 %s27, %s34
      %s41 = sor.u32 %s39, %s40
      %p42 = scmp.eq.s32.totalorder %s41, 0
      %s44 = sadd.s32 %s43, 1
      %s45 = scalar_select %p42, %s43, %s44
      %p48 = pneg %p42
      %p49 = scmp.eq.s32.totalorder %s19, 1
      %p50 = por %p48, %p49
      %p51 = scmp.ne.s32.totalorder %s43, %s46
      %p52 = scmp.eq.s32.totalorder %s19, 0
      %p53 = por %p51, %p52
      %p54 = scmp.ne.s32.totalorder %s43, %s46
      %p55 = scmp.eq.s32.totalorder %s24, 1
      %p56 = por %p54, %p55
      %p57 = scmp.ne.s32.totalorder %s46, %s47
      %p58 = scmp.eq.s32.totalorder %s24, 0
      %p59 = por %p57, %p58
      %p60 = scmp.ne.s32.totalorder %s46, %s47
      %p61 = scmp.eq.s32.totalorder %s25, 1
      %p62 = por %p60, %p61
      %p64 = scmp.ne.s32.totalorder %s47, %s63
      %p65 = scmp.eq.s32.totalorder %s25, 0
      %p66 = por %p64, %p65
      %s68 = sadd.s32 %s67, 1
      %p71 = scmp.eq.s32.totalorder %s19, 1
      %p72 = scmp.ne.s32.totalorder %s67, %s69
      %p73 = scmp.eq.s32.totalorder %s19, 0
      %p74 = por %p72, %p73
      %p75 = scmp.ne.s32.totalorder %s67, %s69
      %p76 = scmp.eq.s32.totalorder %s24, 1
      %p77 = por %p75, %p76
      %p78 = scmp.ne.s32.totalorder %s69, %s70
      %p79 = scmp.eq.s32.totalorder %s24, 0
      %p80 = por %p78, %p79
      %p81 = scmp.ne.s32.totalorder %s69, %s70
      %p82 = scmp.eq.s32.totalorder %s25, 1
      %p83 = por %p81, %p82
      %p85 = scmp.ne.s32.totalorder %s70, %s84
      %p86 = scmp.eq.s32.totalorder %s25, 0
      %p87 = por %p85, %p86
      %s89 = sadd.s32 %s88, 1
      %p92 = scmp.eq.s32.totalorder %s19, 1
      %p93 = scmp.ne.s32.totalorder %s88, %s90
      %p94 = scmp.eq.s32.totalorder %s19, 0
      %p95 = por %p93, %p94
      %p96 = scmp.ne.s32.totalorder %s88, %s90
      %p97 = scmp.eq.s32.totalorder %s24, 1
      %p98 = por %p96, %p97
      %p99 = scmp.ne.s32.totalorder %s90, %s91
      %p100 = scmp.eq.s32.totalorder %s24, 0
      %p101 = por %p99, %p100
      %p102 = scmp.ne.s32.totalorder %s90, %s91
      %p103 = scmp.eq.s32.totalorder %s25, 1
      %p104 = por %p102, %p103
      %p106 = scmp.ne.s32.totalorder %s91, %s105
      %p107 = scmp.eq.s32.totalorder %s25, 0
      %p108 = por %p106, %p107
      %s110 = sadd.s32 %s109, 1
      %p113 = scmp.eq.s32.totalorder %s19, 1
      %p114 = scmp.ne.s32.totalorder %s109, %s111
      %p115 = scmp.eq.s32.totalorder %s19, 0
      %p116 = por %p114, %p115
      %p117 = scmp.ne.s32.totalorder %s109, %s111
      %p118 = scmp.eq.s32.totalorder %s24, 1
      %p119 = por %p117, %p118
      %p120 = scmp.ne.s32.totalorder %s111, %s112
      %p121 = scmp.eq.s32.totalorder %s24, 0
      %p122 = por %p120, %p121
      %p123 = scmp.ne.s32.totalorder %s111, %s112
      %p124 = scmp.eq.s32.totalorder %s25, 1
      %p125 = por %p123, %p124
      %p127 = scmp.ne.s32.totalorder %s112, %s126
      %p128 = scmp.eq.s32.totalorder %s25, 0
      %p129 = por %p127, %p128
      %s131 = sadd.s32 %s130, 1
      %p134 = scmp.eq.s32.totalorder %s19, 1
      %p135 = scmp.ne.s32.totalorder %s130, %s132
      %p136 = scmp.eq.s32.totalorder %s19, 0
      %p137 = por %p135, %p136
      %p138 = scmp.ne.s32.totalorder %s130, %s132
      %p139 = scmp.eq.s32.totalorder %s24, 1
      %p140 = por %p138, %p139
      %p141 = scmp.ne.s32.totalorder %s132, %s133
      %p142 = scmp.eq.s32.totalorder %s24, 0
      %p143 = por %p141, %p142
      %p144 = scmp.ne.s32.totalorder %s132, %s133
      %p145 = scmp.eq.s32.totalorder %s25, 1
      %p146 = por %p144, %p145
      %p148 = scmp.ne.s32.totalorder %s133, %s147
      %p149 = scmp.eq.s32.totalorder %s25, 0
      %p150 = por %p148, %p149
      %s151 = ssub.s32 %s26, %s38
      %s152 = ssub.s32 %s27, %s34
      %s153 = sor.u32 %s151, %s152
      %p154 = scmp.eq.s32.totalorder %s153, 0
      %s156 = sadd.s32 %s155, 1
      %s157 = scalar_select %p154, %s155, %s156
      %p160 = pneg %p154
      %p161 = scmp.eq.s32.totalorder %s19, 1
      %p162 = por %p160, %p161
      %p163 = scmp.ne.s32.totalorder %s155, %s158
      %p164 = scmp.eq.s32.totalorder %s19, 0
      %p165 = por %p163, %p164
      %p166 = scmp.ne.s32.totalorder %s155, %s158
      %p167 = scmp.eq.s32.totalorder %s24, 1
      %p168 = por %p166, %p167
      %p169 = scmp.ne.s32.totalorder %s158, %s159
      %p170 = scmp.eq.s32.totalorder %s24, 0
      %p171 = por %p169, %p170
      %p172 = scmp.ne.s32.totalorder %s158, %s159
      %p173 = scmp.eq.s32.totalorder %s25, 1
      %p174 = por %p172, %p173
      %p176 = scmp.ne.s32.totalorder %s159, %s175
      %p177 = scmp.eq.s32.totalorder %s25, 0
      %p178 = por %p176, %p177
      %p179 = scmp.le.s32.totalorder 1, %s19
      %p180 = scmp.lt.s32.totalorder %s19, 3
      %p181 = pnand %p179, %p180
      %p182 = pneg %p181
      // Predicated region
      $region9: #{tpu_custom_call.1} parent=5 // pred_check
        _
      $region10: #{tpu_custom_call.1} parent=5 // pred_check_branch
        %184 = sbr.rel (%p181) target = $region12
      $region11: #{tpu_custom_call.1} parent=5 // pred_region
        %s185 = ssub.s32 %s19, 1
        // Predicated region
        $region13: #{tpu_custom_call.1} parent=11 // pred_check
          %p186 = pneg %p80
        $region14: #{tpu_custom_call.1} parent=11 // pred_check_branch
          %188 = sbr.rel (%p186) target = $region16
        $region15: #{tpu_custom_call.1} parent=11 // pred_region
          %s190 = ssub.s32 32768, 32768
          %191 = vsyncadd [#allocation7], %s190
          %s192 = sshll.u32 [#allocation6], 4
          %s193 = int_to_ptr.vmem [resolvable:$true] %s192
          %198 = dma.hbm_to_vmem [thread:$0]  %s1, 32768, %s193, [#allocation7], 512, 512, 32
        $region16: #{tpu_custom_call.1} parent=11 // pred_fallthru
          _
        // Predicated region
        $region17: #{tpu_custom_call.1} parent=11 // pred_check
          %p199 = pneg %p101
        $region18: #{tpu_custom_call.1} parent=11 // pred_check_branch
          %201 = sbr.rel (%p199) target = $region20
        $region19: #{tpu_custom_call.1} parent=11 // pred_region
          _
        $region20: #{tpu_custom_call.1} parent=11 // pred_fallthru
          _
        // Predicated region
        $region21: #{tpu_custom_call.1} parent=11 // pred_check
          %p202 = pneg %p122
        $region22: #{tpu_custom_call.1} parent=11 // pred_check_branch
          %204 = sbr.rel (%p202) target = $region24
        $region23: #{tpu_custom_call.1} parent=11 // pred_region
          %s206 = ssub.s32 64, 64
          %207 = vsyncadd [#allocation7], %s206
          %s209 = sshll.u32 [#allocation8], 4
          %s210 = int_to_ptr.vmem [resolvable:$true] %s209
          %212 = dma.hbm_to_vmem [thread:$0]  %s3, 64, %s210, [#allocation7]
        $region24: #{tpu_custom_call.1} parent=11 // pred_fallthru
          _
        // Predicated region
        $region25: #{tpu_custom_call.1} parent=11 // pred_check
          %p213 = pneg %p143
        $region26: #{tpu_custom_call.1} parent=11 // pred_check_branch
          %215 = sbr.rel (%p213) target = $region28
        $region27: #{tpu_custom_call.1} parent=11 // pred_region
          _
        $region28: #{tpu_custom_call.1} parent=11 // pred_fallthru
          _
      $region12: #{tpu_custom_call.1} parent=5 // pred_fallthru
        _
      %p216 = scmp.lt.s32.totalorder %s19, 2
      // Predicated region
      $region29: #{tpu_custom_call.1} parent=5 // pred_check
        %p217 = pneg %p216
      $region30: #{tpu_custom_call.1} parent=5 // pred_check_branch
        %219 = sbr.rel (%p217) target = $region32
      $region31: #{tpu_custom_call.1} parent=5 // pred_region
        // Predicated region
        $region33: #{tpu_custom_call.1} parent=31 // pred_check
          %p220 = pneg %p53
        $region34: #{tpu_custom_call.1} parent=31 // pred_check_branch
          %222 = sbr.rel (%p220) target = $region36
        $region35: #{tpu_custom_call.1} parent=31 // pred_region
          %s223 = sand.u32 %s43, 1
          %s224 = scalar_lea.sflag [#allocation4], %s223
          %s225 = sand.u32 %s43, 1
          %s226 = smul.addr %s225, 4096
          %s227 = scalar_lea.vmem [#allocation3], %s226
          %s228 = smul.u32 4, %s27
          %s230 = ssub.s32 65536, 65536
          %231 = vsyncadd %s224, %s230
          %s232 = smul.addr %s26, 512
          %s233 = sadd.s32 %s228, %s232
          %s234 = smul.addr %s233, 128
          %s235 = scalar_lea.hbm %s0, %s234
          %s236 = sshll.u32 %s227, 4
          %s237 = int_to_ptr.vmem [resolvable:$true] %s236
          %242 = dma.hbm_to_vmem [thread:$0]  %s235, 65536, %s237, %s224, 512, 512, 32
        $region36: #{tpu_custom_call.1} parent=31 // pred_fallthru
          _
      $region32: #{tpu_custom_call.1} parent=5 // pred_fallthru
        _
      %p243 = scmp.le.s32.totalorder 1, %s19
      %p244 = scmp.lt.s32.totalorder %s19, 3
      %p245 = pnand %p243, %p244
      %p246 = pneg %p245
      // Predicated region
      $region37: #{tpu_custom_call.1} parent=5 // pred_check
        _
      $region38: #{tpu_custom_call.1} parent=5 // pred_check_branch
        %248 = sbr.rel (%p245) target = $region40
      $region39: #{tpu_custom_call.1} parent=5 // pred_region
        %s249 = ssub.s32 %s19, 1
        %s250 = sand.u32 %s46, 1
        %s251 = scalar_lea.sflag [#allocation4], %s250
        %s252 = sand.u32 %s46, 1
        %s253 = smul.addr %s252, 4096
        %s254 = scalar_lea.vmem [#allocation3], %s253
        // Predicated region
        $region41: #{tpu_custom_call.1} parent=39 // pred_check
          %p255 = pneg %p59
        $region42: #{tpu_custom_call.1} parent=39 // pred_check_branch
          %257 = sbr.rel (%p255) target = $region44
        $region43: #{tpu_custom_call.1} parent=39 // pred_region
          %258 = dma.done %s251, 65536
        $region44: #{tpu_custom_call.1} parent=39 // pred_fallthru
          _
        // Predicated region
        $region45: #{tpu_custom_call.1} parent=39 // pred_check
          %p259 = pneg %p80
        $region46: #{tpu_custom_call.1} parent=39 // pred_check_branch
          %261 = sbr.rel (%p259) target = $region48
        $region47: #{tpu_custom_call.1} parent=39 // pred_region
          %262 = dma.done [#allocation7], 32768
        $region48: #{tpu_custom_call.1} parent=39 // pred_fallthru
          _
        // Predicated region
        $region49: #{tpu_custom_call.1} parent=39 // pred_check
          %p263 = pneg %p122
        $region50: #{tpu_custom_call.1} parent=39 // pred_check_branch
          %265 = sbr.rel (%p263) target = $region52
        $region51: #{tpu_custom_call.1} parent=39 // pred_region
          %266 = dma.done [#allocation7], 64
        $region52: #{tpu_custom_call.1} parent=39 // pred_fallthru
          _
        %s267 = sand.u32 %s46, 1
        %s268 = scalar_lea.sflag [#allocation4], %s267
        %s269 = sand.u32 %s46, 1
        %s270 = smul.addr %s269, 4096
        %s271 = scalar_lea.vmem [#allocation3], %s270
        %p272 = pneg %p59
        %p273 = pneg %p56
        %p274 = pneg %p80
        %p275 = pneg %p77
        %p276 = pneg %p101
        %p277 = pneg %p98
        %p278 = pneg %p122
        %p279 = pneg %p119
        %p280 = pneg %p143
        %p281 = pneg %p140
        %p282 = pneg %p171
        %p283 = pneg %p168
        %s284 = sand.u32 %s158, 1
        %s285 = scalar_lea.sflag [#allocation5], %s284
        %s286 = sand.u32 %s158, 1
        %s287 = smul.addr %s286, 4
        %s288 = scalar_lea.vmem [#allocation9], %s287
        %s289 = smul.u32 4, %s29
        %s290 = smul.u32 4, %s29
        %v291 = vld [vmem:[%s254] sm:$0xff]
        %v292 = vld [vmem:[%s254 + $0x8] sm:$0xff]
        %v293 = vld [vmem:[%s254 + $0x10] sm:$0xff]
        %v294 = vld [vmem:[%s254 + $0x18] sm:$0xff]
        %v295 = vld [vmem:[%s254 + $0x20] sm:$0xff]
        %v296 = vld [vmem:[%s254 + $0x28] sm:$0xff]
        %v297 = vld [vmem:[%s254 + $0x30] sm:$0xff]
        %v298 = vld [vmem:[%s254 + $0x38] sm:$0xff]
        %v299 = vld [vmem:[%s254 + $0x40] sm:$0xff]
        %v300 = vld [vmem:[%s254 + $0x48] sm:$0xff]
        %v301 = vld [vmem:[%s254 + $0x50] sm:$0xff]
        %v302 = vld [vmem:[%s254 + $0x58] sm:$0xff]
        %v303 = vld [vmem:[%s254 + $0x60] sm:$0xff]
        %v304 = vld [vmem:[%s254 + $0x68] sm:$0xff]
        %v305 = vld [vmem:[%s254 + $0x70] sm:$0xff]
        %v306 = vld [vmem:[%s254 + $0x78] sm:$0xff]
        %v307 = vld [vmem:[%s254 + $0x80] sm:$0xff]
        %v308 = vld [vmem:[%s254 + $0x88] sm:$0xff]
        %v309 = vld [vmem:[%s254 + $0x90] sm:$0xff]
        %v310 = vld [vmem:[%s254 + $0x98] sm:$0xff]
        %v311 = vld [vmem:[%s254 + $0xa0] sm:$0xff]
        %v312 = vld [vmem:[%s254 + $0xa8] sm:$0xff]
        %v313 = vld [vmem:[%s254 + $0xb0] sm:$0xff]
        %v314 = vld [vmem:[%s254 + $0xb8] sm:$0xff]
        %v315 = vld [vmem:[%s254 + $0xc0] sm:$0xff]
        %v316 = vld [vmem:[%s254 + $0xc8] sm:$0xff]
        %v317 = vld [vmem:[%s254 + $0xd0] sm:$0xff]
        %v318 = vld [vmem:[%s254 + $0xd8] sm:$0xff]
        %v319 = vld [vmem:[%s254 + $0xe0] sm:$0xff]
        %v320 = vld [vmem:[%s254 + $0xe8] sm:$0xff]
        %v321 = vld [vmem:[%s254 + $0xf0] sm:$0xff]
        %v322 = vld [vmem:[%s254 + $0xf8] sm:$0xff]
        %v323 = vld [vmem:[%s254 + $0x100] sm:$0xff]
        %v324 = vld [vmem:[%s254 + $0x108] sm:$0xff]
        %v325 = vld [vmem:[%s254 + $0x110] sm:$0xff]
        %v326 = vld [vmem:[%s254 + $0x118] sm:$0xff]
        %v327 = vld [vmem:[%s254 + $0x120] sm:$0xff]
        %v328 = vld [vmem:[%s254 + $0x128] sm:$0xff]
        %v329 = vld [vmem:[%s254 + $0x130] sm:$0xff]
        %v330 = vld [vmem:[%s254 + $0x138] sm:$0xff]
        %v331 = vld [vmem:[%s254 + $0x140] sm:$0xff]
        %v332 = vld [vmem:[%s254 + $0x148] sm:$0xff]
        %v333 = vld [vmem:[%s254 + $0x150] sm:$0xff]
        %v334 = vld [vmem:[%s254 + $0x158] sm:$0xff]
        %v335 = vld [vmem:[%s254 + $0x160] sm:$0xff]
        %v336 = vld [vmem:[%s254 + $0x168] sm:$0xff]
        %v337 = vld [vmem:[%s254 + $0x170] sm:$0xff]
        %v338 = vld [vmem:[%s254 + $0x178] sm:$0xff]
        %v339 = vld [vmem:[%s254 + $0x180] sm:$0xff]
        %v340 = vld [vmem:[%s254 + $0x188] sm:$0xff]
        %v341 = vld [vmem:[%s254 + $0x190] sm:$0xff]
        %v342 = vld [vmem:[%s254 + $0x198] sm:$0xff]
        %v343 = vld [vmem:[%s254 + $0x1a0] sm:$0xff]
        %v344 = vld [vmem:[%s254 + $0x1a8] sm:$0xff]
        %v345 = vld [vmem:[%s254 + $0x1b0] sm:$0xff]
        %v346 = vld [vmem:[%s254 + $0x1b8] sm:$0xff]
        %v347 = vld [vmem:[%s254 + $0x1c0] sm:$0xff]
        %v348 = vld [vmem:[%s254 + $0x1c8] sm:$0xff]
        %v349 = vld [vmem:[%s254 + $0x1d0] sm:$0xff]
        %v350 = vld [vmem:[%s254 + $0x1d8] sm:$0xff]
        %v351 = vld [vmem:[%s254 + $0x1e0] sm:$0xff]
        %v352 = vld [vmem:[%s254 + $0x1e8] sm:$0xff]
        %v353 = vld [vmem:[%s254 + $0x1f0] sm:$0xff]
        %v354 = vld [vmem:[%s254 + $0x1f8] sm:$0xff]
        %v355 = vld [vmem:[%s254 + $0x200] sm:$0xff]
        %v356 = vld [vmem:[%s254 + $0x208] sm:$0xff]
        %v357 = vld [vmem:[%s254 + $0x210] sm:$0xff]
        %v358 = vld [vmem:[%s254 + $0x218] sm:$0xff]
        %v359 = vld [vmem:[%s254 + $0x220] sm:$0xff]
        %v360 = vld [vmem:[%s254 + $0x228] sm:$0xff]
        %v361 = vld [vmem:[%s254 + $0x230] sm:$0xff]
        %v362 = vld [vmem:[%s254 + $0x238] sm:$0xff]
        %v363 = vld [vmem:[%s254 + $0x240] sm:$0xff]
        %v364 = vld [vmem:[%s254 + $0x248] sm:$0xff]
        %v365 = vld [vmem:[%s254 + $0x250] sm:$0xff]
        %v366 = vld [vmem:[%s254 + $0x258] sm:$0xff]
        %v367 = vld [vmem:[%s254 + $0x260] sm:$0xff]
        %v368 = vld [vmem:[%s254 + $0x268] sm:$0xff]
        %v369 = vld [vmem:[%s254 + $0x270] sm:$0xff]
        %v370 = vld [vmem:[%s254 + $0x278] sm:$0xff]
        %v371 = vld [vmem:[%s254 + $0x280] sm:$0xff]
        %v372 = vld [vmem:[%s254 + $0x288] sm:$0xff]
        %v373 = vld [vmem:[%s254 + $0x290] sm:$0xff]
        %v374 = vld [vmem:[%s254 + $0x298] sm:$0xff]
        %v375 = vld [vmem:[%s254 + $0x2a0] sm:$0xff]
        %v376 = vld [vmem:[%s254 + $0x2a8] sm:$0xff]
        %v377 = vld [vmem:[%s254 + $0x2b0] sm:$0xff]
        %v378 = vld [vmem:[%s254 + $0x2b8] sm:$0xff]
        %v379 = vld [vmem:[%s254 + $0x2c0] sm:$0xff]
        %v380 = vld [vmem:[%s254 + $0x2c8] sm:$0xff]
        %v381 = vld [vmem:[%s254 + $0x2d0] sm:$0xff]
        %v382 = vld [vmem:[%s254 + $0x2d8] sm:$0xff]
        %v383 = vld [vmem:[%s254 + $0x2e0] sm:$0xff]
        %v384 = vld [vmem:[%s254 + $0x2e8] sm:$0xff]
        %v385 = vld [vmem:[%s254 + $0x2f0] sm:$0xff]
        %v386 = vld [vmem:[%s254 + $0x2f8] sm:$0xff]
        %v387 = vld [vmem:[%s254 + $0x300] sm:$0xff]
        %v388 = vld [vmem:[%s254 + $0x308] sm:$0xff]
        %v389 = vld [vmem:[%s254 + $0x310] sm:$0xff]
        %v390 = vld [vmem:[%s254 + $0x318] sm:$0xff]
        %v391 = vld [vmem:[%s254 + $0x320] sm:$0xff]
        %v392 = vld [vmem:[%s254 + $0x328] sm:$0xff]
        %v393 = vld [vmem:[%s254 + $0x330] sm:$0xff]
        %v394 = vld [vmem:[%s254 + $0x338] sm:$0xff]
        %v395 = vld [vmem:[%s254 + $0x340] sm:$0xff]
        %v396 = vld [vmem:[%s254 + $0x348] sm:$0xff]
        %v397 = vld [vmem:[%s254 + $0x350] sm:$0xff]
        %v398 = vld [vmem:[%s254 + $0x358] sm:$0xff]
        %v399 = vld [vmem:[%s254 + $0x360] sm:$0xff]
        %v400 = vld [vmem:[%s254 + $0x368] sm:$0xff]
        %v401 = vld [vmem:[%s254 + $0x370] sm:$0xff]
        %v402 = vld [vmem:[%s254 + $0x378] sm:$0xff]
        %v403 = vld [vmem:[%s254 + $0x380] sm:$0xff]
        %v404 = vld [vmem:[%s254 + $0x388] sm:$0xff]
        %v405 = vld [vmem:[%s254 + $0x390] sm:$0xff]
        %v406 = vld [vmem:[%s254 + $0x398] sm:$0xff]
        %v407 = vld [vmem:[%s254 + $0x3a0] sm:$0xff]
        %v408 = vld [vmem:[%s254 + $0x3a8] sm:$0xff]
        %v409 = vld [vmem:[%s254 + $0x3b0] sm:$0xff]
        %v410 = vld [vmem:[%s254 + $0x3b8] sm:$0xff]
        %v411 = vld [vmem:[%s254 + $0x3c0] sm:$0xff]
        %v412 = vld [vmem:[%s254 + $0x3c8] sm:$0xff]
        %v413 = vld [vmem:[%s254 + $0x3d0] sm:$0xff]
        %v414 = vld [vmem:[%s254 + $0x3d8] sm:$0xff]
        %v415 = vld [vmem:[%s254 + $0x3e0] sm:$0xff]
        %v416 = vld [vmem:[%s254 + $0x3e8] sm:$0xff]
        %v417 = vld [vmem:[%s254 + $0x3f0] sm:$0xff]
        %v418 = vld [vmem:[%s254 + $0x3f8] sm:$0xff]
        %v419 = vld [vmem:[%s254 + $0x400] sm:$0xff]
        %v420 = vld [vmem:[%s254 + $0x408] sm:$0xff]
        %v421 = vld [vmem:[%s254 + $0x410] sm:$0xff]
        %v422 = vld [vmem:[%s254 + $0x418] sm:$0xff]
        %v423 = vld [vmem:[%s254 + $0x420] sm:$0xff]
        %v424 = vld [vmem:[%s254 + $0x428] sm:$0xff]
        %v425 = vld [vmem:[%s254 + $0x430] sm:$0xff]
        %v426 = vld [vmem:[%s254 + $0x438] sm:$0xff]
        %v427 = vld [vmem:[%s254 + $0x440] sm:$0xff]
        %v428 = vld [vmem:[%s254 + $0x448] sm:$0xff]
        %v429 = vld [vmem:[%s254 + $0x450] sm:$0xff]
        %v430 = vld [vmem:[%s254 + $0x458] sm:$0xff]
        %v431 = vld [vmem:[%s254 + $0x460] sm:$0xff]
        %v432 = vld [vmem:[%s254 + $0x468] sm:$0xff]
        %v433 = vld [vmem:[%s254 + $0x470] sm:$0xff]
        %v434 = vld [vmem:[%s254 + $0x478] sm:$0xff]
        %v435 = vld [vmem:[%s254 + $0x480] sm:$0xff]
        %v436 = vld [vmem:[%s254 + $0x488] sm:$0xff]
        %v437 = vld [vmem:[%s254 + $0x490] sm:$0xff]
        %v438 = vld [vmem:[%s254 + $0x498] sm:$0xff]
        %v439 = vld [vmem:[%s254 + $0x4a0] sm:$0xff]
        %v440 = vld [vmem:[%s254 + $0x4a8] sm:$0xff]
        %v441 = vld [vmem:[%s254 + $0x4b0] sm:$0xff]
        %v442 = vld [vmem:[%s254 + $0x4b8] sm:$0xff]
        %v443 = vld [vmem:[%s254 + $0x4c0] sm:$0xff]
        %v444 = vld [vmem:[%s254 + $0x4c8] sm:$0xff]
        %v445 = vld [vmem:[%s254 + $0x4d0] sm:$0xff]
        %v446 = vld [vmem:[%s254 + $0x4d8] sm:$0xff]
        %v447 = vld [vmem:[%s254 + $0x4e0] sm:$0xff]
        %v448 = vld [vmem:[%s254 + $0x4e8] sm:$0xff]
        %v449 = vld [vmem:[%s254 + $0x4f0] sm:$0xff]
        %v450 = vld [vmem:[%s254 + $0x4f8] sm:$0xff]
        %v451 = vld [vmem:[%s254 + $0x500] sm:$0xff]
        %v452 = vld [vmem:[%s254 + $0x508] sm:$0xff]
        %v453 = vld [vmem:[%s254 + $0x510] sm:$0xff]
        %v454 = vld [vmem:[%s254 + $0x518] sm:$0xff]
        %v455 = vld [vmem:[%s254 + $0x520] sm:$0xff]
        %v456 = vld [vmem:[%s254 + $0x528] sm:$0xff]
        %v457 = vld [vmem:[%s254 + $0x530] sm:$0xff]
        %v458 = vld [vmem:[%s254 + $0x538] sm:$0xff]
        %v459 = vld [vmem:[%s254 + $0x540] sm:$0xff]
        %v460 = vld [vmem:[%s254 + $0x548] sm:$0xff]
        %v461 = vld [vmem:[%s254 + $0x550] sm:$0xff]
        %v462 = vld [vmem:[%s254 + $0x558] sm:$0xff]
        %v463 = vld [vmem:[%s254 + $0x560] sm:$0xff]
        %v464 = vld [vmem:[%s254 + $0x568] sm:$0xff]
        %v465 = vld [vmem:[%s254 + $0x570] sm:$0xff]
        %v466 = vld [vmem:[%s254 + $0x578] sm:$0xff]
        %v467 = vld [vmem:[%s254 + $0x580] sm:$0xff]
        %v468 = vld [vmem:[%s254 + $0x588] sm:$0xff]
        %v469 = vld [vmem:[%s254 + $0x590] sm:$0xff]
        %v470 = vld [vmem:[%s254 + $0x598] sm:$0xff]
        %v471 = vld [vmem:[%s254 + $0x5a0] sm:$0xff]
        %v472 = vld [vmem:[%s254 + $0x5a8] sm:$0xff]
        %v473 = vld [vmem:[%s254 + $0x5b0] sm:$0xff]
        %v474 = vld [vmem:[%s254 + $0x5b8] sm:$0xff]
        %v475 = vld [vmem:[%s254 + $0x5c0] sm:$0xff]
        %v476 = vld [vmem:[%s254 + $0x5c8] sm:$0xff]
        %v477 = vld [vmem:[%s254 + $0x5d0] sm:$0xff]
        %v478 = vld [vmem:[%s254 + $0x5d8] sm:$0xff]
        %v479 = vld [vmem:[%s254 + $0x5e0] sm:$0xff]
        %v480 = vld [vmem:[%s254 + $0x5e8] sm:$0xff]
        %v481 = vld [vmem:[%s254 + $0x5f0] sm:$0xff]
        %v482 = vld [vmem:[%s254 + $0x5f8] sm:$0xff]
        %v483 = vld [vmem:[%s254 + $0x600] sm:$0xff]
        %v484 = vld [vmem:[%s254 + $0x608] sm:$0xff]
        %v485 = vld [vmem:[%s254 + $0x610] sm:$0xff]
        %v486 = vld [vmem:[%s254 + $0x618] sm:$0xff]
        %v487 = vld [vmem:[%s254 + $0x620] sm:$0xff]
        %v488 = vld [vmem:[%s254 + $0x628] sm:$0xff]
        %v489 = vld [vmem:[%s254 + $0x630] sm:$0xff]
        %v490 = vld [vmem:[%s254 + $0x638] sm:$0xff]
        %v491 = vld [vmem:[%s254 + $0x640] sm:$0xff]
        %v492 = vld [vmem:[%s254 + $0x648] sm:$0xff]
        %v493 = vld [vmem:[%s254 + $0x650] sm:$0xff]
        %v494 = vld [vmem:[%s254 + $0x658] sm:$0xff]
        %v495 = vld [vmem:[%s254 + $0x660] sm:$0xff]
        %v496 = vld [vmem:[%s254 + $0x668] sm:$0xff]
        %v497 = vld [vmem:[%s254 + $0x670] sm:$0xff]
        %v498 = vld [vmem:[%s254 + $0x678] sm:$0xff]
        %v499 = vld [vmem:[%s254 + $0x680] sm:$0xff]
        %v500 = vld [vmem:[%s254 + $0x688] sm:$0xff]
        %v501 = vld [vmem:[%s254 + $0x690] sm:$0xff]
        %v502 = vld [vmem:[%s254 + $0x698] sm:$0xff]
        %v503 = vld [vmem:[%s254 + $0x6a0] sm:$0xff]
        %v504 = vld [vmem:[%s254 + $0x6a8] sm:$0xff]
        %v505 = vld [vmem:[%s254 + $0x6b0] sm:$0xff]
        %v506 = vld [vmem:[%s254 + $0x6b8] sm:$0xff]
        %v507 = vld [vmem:[%s254 + $0x6c0] sm:$0xff]
        %v508 = vld [vmem:[%s254 + $0x6c8] sm:$0xff]
        %v509 = vld [vmem:[%s254 + $0x6d0] sm:$0xff]
        %v510 = vld [vmem:[%s254 + $0x6d8] sm:$0xff]
        %v511 = vld [vmem:[%s254 + $0x6e0] sm:$0xff]
        %v512 = vld [vmem:[%s254 + $0x6e8] sm:$0xff]
        %v513 = vld [vmem:[%s254 + $0x6f0] sm:$0xff]
        %v514 = vld [vmem:[%s254 + $0x6f8] sm:$0xff]
        %v515 = vld [vmem:[%s254 + $0x700] sm:$0xff]
        %v516 = vld [vmem:[%s254 + $0x708] sm:$0xff]
        %v517 = vld [vmem:[%s254 + $0x710] sm:$0xff]
        %v518 = vld [vmem:[%s254 + $0x718] sm:$0xff]
        %v519 = vld [vmem:[%s254 + $0x720] sm:$0xff]
        %v520 = vld [vmem:[%s254 + $0x728] sm:$0xff]
        %v521 = vld [vmem:[%s254 + $0x730] sm:$0xff]
        %v522 = vld [vmem:[%s254 + $0x738] sm:$0xff]
        %v523 = vld [vmem:[%s254 + $0x740] sm:$0xff]
        %v524 = vld [vmem:[%s254 + $0x748] sm:$0xff]
        %v525 = vld [vmem:[%s254 + $0x750] sm:$0xff]
        %v526 = vld [vmem:[%s254 + $0x758] sm:$0xff]
        %v527 = vld [vmem:[%s254 + $0x760] sm:$0xff]
        %v528 = vld [vmem:[%s254 + $0x768] sm:$0xff]
        %v529 = vld [vmem:[%s254 + $0x770] sm:$0xff]
        %v530 = vld [vmem:[%s254 + $0x778] sm:$0xff]
        %v531 = vld [vmem:[%s254 + $0x780] sm:$0xff]
        %v532 = vld [vmem:[%s254 + $0x788] sm:$0xff]
        %v533 = vld [vmem:[%s254 + $0x790] sm:$0xff]
        %v534 = vld [vmem:[%s254 + $0x798] sm:$0xff]
        %v535 = vld [vmem:[%s254 + $0x7a0] sm:$0xff]
        %v536 = vld [vmem:[%s254 + $0x7a8] sm:$0xff]
        %v537 = vld [vmem:[%s254 + $0x7b0] sm:$0xff]
        %v538 = vld [vmem:[%s254 + $0x7b8] sm:$0xff]
        %v539 = vld [vmem:[%s254 + $0x7c0] sm:$0xff]
        %v540 = vld [vmem:[%s254 + $0x7c8] sm:$0xff]
        %v541 = vld [vmem:[%s254 + $0x7d0] sm:$0xff]
        %v542 = vld [vmem:[%s254 + $0x7d8] sm:$0xff]
        %v543 = vld [vmem:[%s254 + $0x7e0] sm:$0xff]
        %v544 = vld [vmem:[%s254 + $0x7e8] sm:$0xff]
        %v545 = vld [vmem:[%s254 + $0x7f0] sm:$0xff]
        %v546 = vld [vmem:[%s254 + $0x7f8] sm:$0xff]
        %v547 = vld [vmem:[%s254 + $0x800] sm:$0xff]
        %v548 = vld [vmem:[%s254 + $0x808] sm:$0xff]
        %v549 = vld [vmem:[%s254 + $0x810] sm:$0xff]
        %v550 = vld [vmem:[%s254 + $0x818] sm:$0xff]
        %v551 = vld [vmem:[%s254 + $0x820] sm:$0xff]
        %v552 = vld [vmem:[%s254 + $0x828] sm:$0xff]
        %v553 = vld [vmem:[%s254 + $0x830] sm:$0xff]
        %v554 = vld [vmem:[%s254 + $0x838] sm:$0xff]
        %v555 = vld [vmem:[%s254 + $0x840] sm:$0xff]
        %v556 = vld [vmem:[%s254 + $0x848] sm:$0xff]
        %v557 = vld [vmem:[%s254 + $0x850] sm:$0xff]
        %v558 = vld [vmem:[%s254 + $0x858] sm:$0xff]
        %v559 = vld [vmem:[%s254 + $0x860] sm:$0xff]
        %v560 = vld [vmem:[%s254 + $0x868] sm:$0xff]
        %v561 = vld [vmem:[%s254 + $0x870] sm:$0xff]
        %v562 = vld [vmem:[%s254 + $0x878] sm:$0xff]
        %v563 = vld [vmem:[%s254 + $0x880] sm:$0xff]
        %v564 = vld [vmem:[%s254 + $0x888] sm:$0xff]
        %v565 = vld [vmem:[%s254 + $0x890] sm:$0xff]
        %v566 = vld [vmem:[%s254 + $0x898] sm:$0xff]
        %v567 = vld [vmem:[%s254 + $0x8a0] sm:$0xff]
        %v568 = vld [vmem:[%s254 + $0x8a8] sm:$0xff]
        %v569 = vld [vmem:[%s254 + $0x8b0] sm:$0xff]
        %v570 = vld [vmem:[%s254 + $0x8b8] sm:$0xff]
        %v571 = vld [vmem:[%s254 + $0x8c0] sm:$0xff]
        %v572 = vld [vmem:[%s254 + $0x8c8] sm:$0xff]
        %v573 = vld [vmem:[%s254 + $0x8d0] sm:$0xff]
        %v574 = vld [vmem:[%s254 + $0x8d8] sm:$0xff]
        %v575 = vld [vmem:[%s254 + $0x8e0] sm:$0xff]
        %v576 = vld [vmem:[%s254 + $0x8e8] sm:$0xff]
        %v577 = vld [vmem:[%s254 + $0x8f0] sm:$0xff]
        %v578 = vld [vmem:[%s254 + $0x8f8] sm:$0xff]
        %v579 = vld [vmem:[%s254 + $0x900] sm:$0xff]
        %v580 = vld [vmem:[%s254 + $0x908] sm:$0xff]
        %v581 = vld [vmem:[%s254 + $0x910] sm:$0xff]
        %v582 = vld [vmem:[%s254 + $0x918] sm:$0xff]
        %v583 = vld [vmem:[%s254 + $0x920] sm:$0xff]
        %v584 = vld [vmem:[%s254 + $0x928] sm:$0xff]
        %v585 = vld [vmem:[%s254 + $0x930] sm:$0xff]
        %v586 = vld [vmem:[%s254 + $0x938] sm:$0xff]
        %v587 = vld [vmem:[%s254 + $0x940] sm:$0xff]
        %v588 = vld [vmem:[%s254 + $0x948] sm:$0xff]
        %v589 = vld [vmem:[%s254 + $0x950] sm:$0xff]
        %v590 = vld [vmem:[%s254 + $0x958] sm:$0xff]
        %v591 = vld [vmem:[%s254 + $0x960] sm:$0xff]
        %v592 = vld [vmem:[%s254 + $0x968] sm:$0xff]
        %v593 = vld [vmem:[%s254 + $0x970] sm:$0xff]
        %v594 = vld [vmem:[%s254 + $0x978] sm:$0xff]
        %v595 = vld [vmem:[%s254 + $0x980] sm:$0xff]
        %v596 = vld [vmem:[%s254 + $0x988] sm:$0xff]
        %v597 = vld [vmem:[%s254 + $0x990] sm:$0xff]
        %v598 = vld [vmem:[%s254 + $0x998] sm:$0xff]
        %v599 = vld [vmem:[%s254 + $0x9a0] sm:$0xff]
        %v600 = vld [vmem:[%s254 + $0x9a8] sm:$0xff]
        %v601 = vld [vmem:[%s254 + $0x9b0] sm:$0xff]
        %v602 = vld [vmem:[%s254 + $0x9b8] sm:$0xff]
        %v603 = vld [vmem:[%s254 + $0x9c0] sm:$0xff]
        %v604 = vld [vmem:[%s254 + $0x9c8] sm:$0xff]
        %v605 = vld [vmem:[%s254 + $0x9d0] sm:$0xff]
        %v606 = vld [vmem:[%s254 + $0x9d8] sm:$0xff]
        %v607 = vld [vmem:[%s254 + $0x9e0] sm:$0xff]
        %v608 = vld [vmem:[%s254 + $0x9e8] sm:$0xff]
        %v609 = vld [vmem:[%s254 + $0x9f0] sm:$0xff]
        %v610 = vld [vmem:[%s254 + $0x9f8] sm:$0xff]
        %v611 = vld [vmem:[%s254 + $0xa00] sm:$0xff]
        %v612 = vld [vmem:[%s254 + $0xa08] sm:$0xff]
        %v613 = vld [vmem:[%s254 + $0xa10] sm:$0xff]
        %v614 = vld [vmem:[%s254 + $0xa18] sm:$0xff]
        %v615 = vld [vmem:[%s254 + $0xa20] sm:$0xff]
        %v616 = vld [vmem:[%s254 + $0xa28] sm:$0xff]
        %v617 = vld [vmem:[%s254 + $0xa30] sm:$0xff]
        %v618 = vld [vmem:[%s254 + $0xa38] sm:$0xff]
        %v619 = vld [vmem:[%s254 + $0xa40] sm:$0xff]
        %v620 = vld [vmem:[%s254 + $0xa48] sm:$0xff]
        %v621 = vld [vmem:[%s254 + $0xa50] sm:$0xff]
        %v622 = vld [vmem:[%s254 + $0xa58] sm:$0xff]
        %v623 = vld [vmem:[%s254 + $0xa60] sm:$0xff]
        %v624 = vld [vmem:[%s254 + $0xa68] sm:$0xff]
        %v625 = vld [vmem:[%s254 + $0xa70] sm:$0xff]
        %v626 = vld [vmem:[%s254 + $0xa78] sm:$0xff]
        %v627 = vld [vmem:[%s254 + $0xa80] sm:$0xff]
        %v628 = vld [vmem:[%s254 + $0xa88] sm:$0xff]
        %v629 = vld [vmem:[%s254 + $0xa90] sm:$0xff]
        %v630 = vld [vmem:[%s254 + $0xa98] sm:$0xff]
        %v631 = vld [vmem:[%s254 + $0xaa0] sm:$0xff]
        %v632 = vld [vmem:[%s254 + $0xaa8] sm:$0xff]
        %v633 = vld [vmem:[%s254 + $0xab0] sm:$0xff]
        %v634 = vld [vmem:[%s254 + $0xab8] sm:$0xff]
        %v635 = vld [vmem:[%s254 + $0xac0] sm:$0xff]
        %v636 = vld [vmem:[%s254 + $0xac8] sm:$0xff]
        %v637 = vld [vmem:[%s254 + $0xad0] sm:$0xff]
        %v638 = vld [vmem:[%s254 + $0xad8] sm:$0xff]
        %v639 = vld [vmem:[%s254 + $0xae0] sm:$0xff]
        %v640 = vld [vmem:[%s254 + $0xae8] sm:$0xff]
        %v641 = vld [vmem:[%s254 + $0xaf0] sm:$0xff]
        %v642 = vld [vmem:[%s254 + $0xaf8] sm:$0xff]
        %v643 = vld [vmem:[%s254 + $0xb00] sm:$0xff]
        %v644 = vld [vmem:[%s254 + $0xb08] sm:$0xff]
        %v645 = vld [vmem:[%s254 + $0xb10] sm:$0xff]
        %v646 = vld [vmem:[%s254 + $0xb18] sm:$0xff]
        %v647 = vld [vmem:[%s254 + $0xb20] sm:$0xff]
        %v648 = vld [vmem:[%s254 + $0xb28] sm:$0xff]
        %v649 = vld [vmem:[%s254 + $0xb30] sm:$0xff]
        %v650 = vld [vmem:[%s254 + $0xb38] sm:$0xff]
        %v651 = vld [vmem:[%s254 + $0xb40] sm:$0xff]
        %v652 = vld [vmem:[%s254 + $0xb48] sm:$0xff]
        %v653 = vld [vmem:[%s254 + $0xb50] sm:$0xff]
        %v654 = vld [vmem:[%s254 + $0xb58] sm:$0xff]
        %v655 = vld [vmem:[%s254 + $0xb60] sm:$0xff]
        %v656 = vld [vmem:[%s254 + $0xb68] sm:$0xff]
        %v657 = vld [vmem:[%s254 + $0xb70] sm:$0xff]
        %v658 = vld [vmem:[%s254 + $0xb78] sm:$0xff]
        %v659 = vld [vmem:[%s254 + $0xb80] sm:$0xff]
        %v660 = vld [vmem:[%s254 + $0xb88] sm:$0xff]
        %v661 = vld [vmem:[%s254 + $0xb90] sm:$0xff]
        %v662 = vld [vmem:[%s254 + $0xb98] sm:$0xff]
        %v663 = vld [vmem:[%s254 + $0xba0] sm:$0xff]
        %v664 = vld [vmem:[%s254 + $0xba8] sm:$0xff]
        %v665 = vld [vmem:[%s254 + $0xbb0] sm:$0xff]
        %v666 = vld [vmem:[%s254 + $0xbb8] sm:$0xff]
        %v667 = vld [vmem:[%s254 + $0xbc0] sm:$0xff]
        %v668 = vld [vmem:[%s254 + $0xbc8] sm:$0xff]
        %v669 = vld [vmem:[%s254 + $0xbd0] sm:$0xff]
        %v670 = vld [vmem:[%s254 + $0xbd8] sm:$0xff]
        %v671 = vld [vmem:[%s254 + $0xbe0] sm:$0xff]
        %v672 = vld [vmem:[%s254 + $0xbe8] sm:$0xff]
        %v673 = vld [vmem:[%s254 + $0xbf0] sm:$0xff]
        %v674 = vld [vmem:[%s254 + $0xbf8] sm:$0xff]
        %v675 = vld [vmem:[%s254 + $0xc00] sm:$0xff]
        %v676 = vld [vmem:[%s254 + $0xc08] sm:$0xff]
        %v677 = vld [vmem:[%s254 + $0xc10] sm:$0xff]
        %v678 = vld [vmem:[%s254 + $0xc18] sm:$0xff]
        %v679 = vld [vmem:[%s254 + $0xc20] sm:$0xff]
        %v680 = vld [vmem:[%s254 + $0xc28] sm:$0xff]
        %v681 = vld [vmem:[%s254 + $0xc30] sm:$0xff]
        %v682 = vld [vmem:[%s254 + $0xc38] sm:$0xff]
        %v683 = vld [vmem:[%s254 + $0xc40] sm:$0xff]
        %v684 = vld [vmem:[%s254 + $0xc48] sm:$0xff]
        %v685 = vld [vmem:[%s254 + $0xc50] sm:$0xff]
        %v686 = vld [vmem:[%s254 + $0xc58] sm:$0xff]
        %v687 = vld [vmem:[%s254 + $0xc60] sm:$0xff]
        %v688 = vld [vmem:[%s254 + $0xc68] sm:$0xff]
        %v689 = vld [vmem:[%s254 + $0xc70] sm:$0xff]
        %v690 = vld [vmem:[%s254 + $0xc78] sm:$0xff]
        %v691 = vld [vmem:[%s254 + $0xc80] sm:$0xff]
        %v692 = vld [vmem:[%s254 + $0xc88] sm:$0xff]
        %v693 = vld [vmem:[%s254 + $0xc90] sm:$0xff]
        %v694 = vld [vmem:[%s254 + $0xc98] sm:$0xff]
        %v695 = vld [vmem:[%s254 + $0xca0] sm:$0xff]
        %v696 = vld [vmem:[%s254 + $0xca8] sm:$0xff]
        %v697 = vld [vmem:[%s254 + $0xcb0] sm:$0xff]
        %v698 = vld [vmem:[%s254 + $0xcb8] sm:$0xff]
        %v699 = vld [vmem:[%s254 + $0xcc0] sm:$0xff]
        %v700 = vld [vmem:[%s254 + $0xcc8] sm:$0xff]
        %v701 = vld [vmem:[%s254 + $0xcd0] sm:$0xff]
        %v702 = vld [vmem:[%s254 + $0xcd8] sm:$0xff]
        %v703 = vld [vmem:[%s254 + $0xce0] sm:$0xff]
        %v704 = vld [vmem:[%s254 + $0xce8] sm:$0xff]
        %v705 = vld [vmem:[%s254 + $0xcf0] sm:$0xff]
        %v706 = vld [vmem:[%s254 + $0xcf8] sm:$0xff]
        %v707 = vld [vmem:[%s254 + $0xd00] sm:$0xff]
        %v708 = vld [vmem:[%s254 + $0xd08] sm:$0xff]
        %v709 = vld [vmem:[%s254 + $0xd10] sm:$0xff]
        %v710 = vld [vmem:[%s254 + $0xd18] sm:$0xff]
        %v711 = vld [vmem:[%s254 + $0xd20] sm:$0xff]
        %v712 = vld [vmem:[%s254 + $0xd28] sm:$0xff]
        %v713 = vld [vmem:[%s254 + $0xd30] sm:$0xff]
        %v714 = vld [vmem:[%s254 + $0xd38] sm:$0xff]
        %v715 = vld [vmem:[%s254 + $0xd40] sm:$0xff]
        %v716 = vld [vmem:[%s254 + $0xd48] sm:$0xff]
        %v717 = vld [vmem:[%s254 + $0xd50] sm:$0xff]
        %v718 = vld [vmem:[%s254 + $0xd58] sm:$0xff]
        %v719 = vld [vmem:[%s254 + $0xd60] sm:$0xff]
        %v720 = vld [vmem:[%s254 + $0xd68] sm:$0xff]
        %v721 = vld [vmem:[%s254 + $0xd70] sm:$0xff]
        %v722 = vld [vmem:[%s254 + $0xd78] sm:$0xff]
        %v723 = vld [vmem:[%s254 + $0xd80] sm:$0xff]
        %v724 = vld [vmem:[%s254 + $0xd88] sm:$0xff]
        %v725 = vld [vmem:[%s254 + $0xd90] sm:$0xff]
        %v726 = vld [vmem:[%s254 + $0xd98] sm:$0xff]
        %v727 = vld [vmem:[%s254 + $0xda0] sm:$0xff]
        %v728 = vld [vmem:[%s254 + $0xda8] sm:$0xff]
        %v729 = vld [vmem:[%s254 + $0xdb0] sm:$0xff]
        %v730 = vld [vmem:[%s254 + $0xdb8] sm:$0xff]
        %v731 = vld [vmem:[%s254 + $0xdc0] sm:$0xff]
        %v732 = vld [vmem:[%s254 + $0xdc8] sm:$0xff]
        %v733 = vld [vmem:[%s254 + $0xdd0] sm:$0xff]
        %v734 = vld [vmem:[%s254 + $0xdd8] sm:$0xff]
        %v735 = vld [vmem:[%s254 + $0xde0] sm:$0xff]
        %v736 = vld [vmem:[%s254 + $0xde8] sm:$0xff]
        %v737 = vld [vmem:[%s254 + $0xdf0] sm:$0xff]
        %v738 = vld [vmem:[%s254 + $0xdf8] sm:$0xff]
        %v739 = vld [vmem:[%s254 + $0xe00] sm:$0xff]
        %v740 = vld [vmem:[%s254 + $0xe08] sm:$0xff]
        %v741 = vld [vmem:[%s254 + $0xe10] sm:$0xff]
        %v742 = vld [vmem:[%s254 + $0xe18] sm:$0xff]
        %v743 = vld [vmem:[%s254 + $0xe20] sm:$0xff]
        %v744 = vld [vmem:[%s254 + $0xe28] sm:$0xff]
        %v745 = vld [vmem:[%s254 + $0xe30] sm:$0xff]
        %v746 = vld [vmem:[%s254 + $0xe38] sm:$0xff]
        %v747 = vld [vmem:[%s254 + $0xe40] sm:$0xff]
        %v748 = vld [vmem:[%s254 + $0xe48] sm:$0xff]
        %v749 = vld [vmem:[%s254 + $0xe50] sm:$0xff]
        %v750 = vld [vmem:[%s254 + $0xe58] sm:$0xff]
        %v751 = vld [vmem:[%s254 + $0xe60] sm:$0xff]
        %v752 = vld [vmem:[%s254 + $0xe68] sm:$0xff]
        %v753 = vld [vmem:[%s254 + $0xe70] sm:$0xff]
        %v754 = vld [vmem:[%s254 + $0xe78] sm:$0xff]
        %v755 = vld [vmem:[%s254 + $0xe80] sm:$0xff]
        %v756 = vld [vmem:[%s254 + $0xe88] sm:$0xff]
        %v757 = vld [vmem:[%s254 + $0xe90] sm:$0xff]
        %v758 = vld [vmem:[%s254 + $0xe98] sm:$0xff]
        %v759 = vld [vmem:[%s254 + $0xea0] sm:$0xff]
        %v760 = vld [vmem:[%s254 + $0xea8] sm:$0xff]
        %v761 = vld [vmem:[%s254 + $0xeb0] sm:$0xff]
        %v762 = vld [vmem:[%s254 + $0xeb8] sm:$0xff]
        %v763 = vld [vmem:[%s254 + $0xec0] sm:$0xff]
        %v764 = vld [vmem:[%s254 + $0xec8] sm:$0xff]
        %v765 = vld [vmem:[%s254 + $0xed0] sm:$0xff]
        %v766 = vld [vmem:[%s254 + $0xed8] sm:$0xff]
        %v767 = vld [vmem:[%s254 + $0xee0] sm:$0xff]
        %v768 = vld [vmem:[%s254 + $0xee8] sm:$0xff]
        %v769 = vld [vmem:[%s254 + $0xef0] sm:$0xff]
        %v770 = vld [vmem:[%s254 + $0xef8] sm:$0xff]
        %v771 = vld [vmem:[%s254 + $0xf00] sm:$0xff]
        %v772 = vld [vmem:[%s254 + $0xf08] sm:$0xff]
        %v773 = vld [vmem:[%s254 + $0xf10] sm:$0xff]
        %v774 = vld [vmem:[%s254 + $0xf18] sm:$0xff]
        %v775 = vld [vmem:[%s254 + $0xf20] sm:$0xff]
        %v776 = vld [vmem:[%s254 + $0xf28] sm:$0xff]
        %v777 = vld [vmem:[%s254 + $0xf30] sm:$0xff]
        %v778 = vld [vmem:[%s254 + $0xf38] sm:$0xff]
        %v779 = vld [vmem:[%s254 + $0xf40] sm:$0xff]
        %v780 = vld [vmem:[%s254 + $0xf48] sm:$0xff]
        %v781 = vld [vmem:[%s254 + $0xf50] sm:$0xff]
        %v782 = vld [vmem:[%s254 + $0xf58] sm:$0xff]
        %v783 = vld [vmem:[%s254 + $0xf60] sm:$0xff]
        %v784 = vld [vmem:[%s254 + $0xf68] sm:$0xff]
        %v785 = vld [vmem:[%s254 + $0xf70] sm:$0xff]
        %v786 = vld [vmem:[%s254 + $0xf78] sm:$0xff]
        %v787 = vld [vmem:[%s254 + $0xf80] sm:$0xff]
        %v788 = vld [vmem:[%s254 + $0xf88] sm:$0xff]
        %v789 = vld [vmem:[%s254 + $0xf90] sm:$0xff]
        %v790 = vld [vmem:[%s254 + $0xf98] sm:$0xff]
        %v791 = vld [vmem:[%s254 + $0xfa0] sm:$0xff]
        %v792 = vld [vmem:[%s254 + $0xfa8] sm:$0xff]
        %v793 = vld [vmem:[%s254 + $0xfb0] sm:$0xff]
        %v794 = vld [vmem:[%s254 + $0xfb8] sm:$0xff]
        %v795 = vld [vmem:[%s254 + $0xfc0] sm:$0xff]
        %v796 = vld [vmem:[%s254 + $0xfc8] sm:$0xff]
        %v797 = vld [vmem:[%s254 + $0xfd0] sm:$0xff]
        %v798 = vld [vmem:[%s254 + $0xfd8] sm:$0xff]
        %v799 = vld [vmem:[%s254 + $0xfe0] sm:$0xff]
        %v800 = vld [vmem:[%s254 + $0xfe8] sm:$0xff]
        %v801 = vld [vmem:[%s254 + $0xff0] sm:$0xff]
        %v802 = vld [vmem:[%s254 + $0xff8] sm:$0xff]
        %v803 = vpack.c.bf16 %v295, %v291
        %v804 = vpack.c.bf16 %v296, %v292
        %v805 = vpack.c.bf16 %v297, %v293
        %v806 = vpack.c.bf16 %v298, %v294
        %v807 = vpack.c.bf16 %v303, %v299
        %v808 = vpack.c.bf16 %v304, %v300
        %v809 = vpack.c.bf16 %v305, %v301
        %v810 = vpack.c.bf16 %v306, %v302
        %v811 = vpack.c.bf16 %v311, %v307
        %v812 = vpack.c.bf16 %v312, %v308
        %v813 = vpack.c.bf16 %v313, %v309
        %v814 = vpack.c.bf16 %v314, %v310
        %v815 = vpack.c.bf16 %v319, %v315
        %v816 = vpack.c.bf16 %v320, %v316
        %v817 = vpack.c.bf16 %v321, %v317
        %v818 = vpack.c.bf16 %v322, %v318
        %v819 = vpack.c.bf16 %v327, %v323
        %v820 = vpack.c.bf16 %v328, %v324
        %v821 = vpack.c.bf16 %v329, %v325
        %v822 = vpack.c.bf16 %v330, %v326
        %v823 = vpack.c.bf16 %v335, %v331
        %v824 = vpack.c.bf16 %v336, %v332
        %v825 = vpack.c.bf16 %v337, %v333
        %v826 = vpack.c.bf16 %v338, %v334
        %v827 = vpack.c.bf16 %v343, %v339
        %v828 = vpack.c.bf16 %v344, %v340
        %v829 = vpack.c.bf16 %v345, %v341
        %v830 = vpack.c.bf16 %v346, %v342
        %v831 = vpack.c.bf16 %v351, %v347
        %v832 = vpack.c.bf16 %v352, %v348
        %v833 = vpack.c.bf16 %v353, %v349
        %v834 = vpack.c.bf16 %v354, %v350
        %v835 = vpack.c.bf16 %v359, %v355
        %v836 = vpack.c.bf16 %v360, %v356
        %v837 = vpack.c.bf16 %v361, %v357
        %v838 = vpack.c.bf16 %v362, %v358
        %v839 = vpack.c.bf16 %v367, %v363
        %v840 = vpack.c.bf16 %v368, %v364
        %v841 = vpack.c.bf16 %v369, %v365
        %v842 = vpack.c.bf16 %v370, %v366
        %v843 = vpack.c.bf16 %v375, %v371
        %v844 = vpack.c.bf16 %v376, %v372
        %v845 = vpack.c.bf16 %v377, %v373
        %v846 = vpack.c.bf16 %v378, %v374
        %v847 = vpack.c.bf16 %v383, %v379
        %v848 = vpack.c.bf16 %v384, %v380
        %v849 = vpack.c.bf16 %v385, %v381
        %v850 = vpack.c.bf16 %v386, %v382
        %v851 = vpack.c.bf16 %v391, %v387
        %v852 = vpack.c.bf16 %v392, %v388
        %v853 = vpack.c.bf16 %v393, %v389
        %v854 = vpack.c.bf16 %v394, %v390
        %v855 = vpack.c.bf16 %v399, %v395
        %v856 = vpack.c.bf16 %v400, %v396
        %v857 = vpack.c.bf16 %v401, %v397
        %v858 = vpack.c.bf16 %v402, %v398
        %v859 = vpack.c.bf16 %v407, %v403
        %v860 = vpack.c.bf16 %v408, %v404
        %v861 = vpack.c.bf16 %v409, %v405
        %v862 = vpack.c.bf16 %v410, %v406
        %v863 = vpack.c.bf16 %v415, %v411
        %v864 = vpack.c.bf16 %v416, %v412
        %v865 = vpack.c.bf16 %v417, %v413
        %v866 = vpack.c.bf16 %v418, %v414
        %v867 = vpack.c.bf16 %v423, %v419
        %v868 = vpack.c.bf16 %v424, %v420
        %v869 = vpack.c.bf16 %v425, %v421
        %v870 = vpack.c.bf16 %v426, %v422
        %v871 = vpack.c.bf16 %v431, %v427
        %v872 = vpack.c.bf16 %v432, %v428
        %v873 = vpack.c.bf16 %v433, %v429
        %v874 = vpack.c.bf16 %v434, %v430
        %v875 = vpack.c.bf16 %v439, %v435
        %v876 = vpack.c.bf16 %v440, %v436
        %v877 = vpack.c.bf16 %v441, %v437
        %v878 = vpack.c.bf16 %v442, %v438
        %v879 = vpack.c.bf16 %v447, %v443
        %v880 = vpack.c.bf16 %v448, %v444
        %v881 = vpack.c.bf16 %v449, %v445
        %v882 = vpack.c.bf16 %v450, %v446
        %v883 = vpack.c.bf16 %v455, %v451
        %v884 = vpack.c.bf16 %v456, %v452
        %v885 = vpack.c.bf16 %v457, %v453
        %v886 = vpack.c.bf16 %v458, %v454
        %v887 = vpack.c.bf16 %v463, %v459
        %v888 = vpack.c.bf16 %v464, %v460
        %v889 = vpack.c.bf16 %v465, %v461
        %v890 = vpack.c.bf16 %v466, %v462
        %v891 = vpack.c.bf16 %v471, %v467
        %v892 = vpack.c.bf16 %v472, %v468
        %v893 = vpack.c.bf16 %v473, %v469
        %v894 = vpack.c.bf16 %v474, %v470
        %v895 = vpack.c.bf16 %v479, %v475
        %v896 = vpack.c.bf16 %v480, %v476
        %v897 = vpack.c.bf16 %v481, %v477
        %v898 = vpack.c.bf16 %v482, %v478
        %v899 = vpack.c.bf16 %v487, %v483
        %v900 = vpack.c.bf16 %v488, %v484
        %v901 = vpack.c.bf16 %v489, %v485
        %v902 = vpack.c.bf16 %v490, %v486
        %v903 = vpack.c.bf16 %v495, %v491
        %v904 = vpack.c.bf16 %v496, %v492
        %v905 = vpack.c.bf16 %v497, %v493
        %v906 = vpack.c.bf16 %v498, %v494
        %v907 = vpack.c.bf16 %v503, %v499
        %v908 = vpack.c.bf16 %v504, %v500
        %v909 = vpack.c.bf16 %v505, %v501
        %v910 = vpack.c.bf16 %v506, %v502
        %v911 = vpack.c.bf16 %v511, %v507
        %v912 = vpack.c.bf16 %v512, %v508
        %v913 = vpack.c.bf16 %v513, %v509
        %v914 = vpack.c.bf16 %v514, %v510
        %v915 = vpack.c.bf16 %v519, %v515
        %v916 = vpack.c.bf16 %v520, %v516
        %v917 = vpack.c.bf16 %v521, %v517
        %v918 = vpack.c.bf16 %v522, %v518
        %v919 = vpack.c.bf16 %v527, %v523
        %v920 = vpack.c.bf16 %v528, %v524
        %v921 = vpack.c.bf16 %v529, %v525
        %v922 = vpack.c.bf16 %v530, %v526
        %v923 = vpack.c.bf16 %v535, %v531
        %v924 = vpack.c.bf16 %v536, %v532
        %v925 = vpack.c.bf16 %v537, %v533
        %v926 = vpack.c.bf16 %v538, %v534
        %v927 = vpack.c.bf16 %v543, %v539
        %v928 = vpack.c.bf16 %v544, %v540
        %v929 = vpack.c.bf16 %v545, %v541
        %v930 = vpack.c.bf16 %v546, %v542
        %v931 = vpack.c.bf16 %v551, %v547
        %v932 = vpack.c.bf16 %v552, %v548
        %v933 = vpack.c.bf16 %v553, %v549
        %v934 = vpack.c.bf16 %v554, %v550
        %v935 = vpack.c.bf16 %v559, %v555
        %v936 = vpack.c.bf16 %v560, %v556
        %v937 = vpack.c.bf16 %v561, %v557
        %v938 = vpack.c.bf16 %v562, %v558
        %v939 = vpack.c.bf16 %v567, %v563
        %v940 = vpack.c.bf16 %v568, %v564
        %v941 = vpack.c.bf16 %v569, %v565
        %v942 = vpack.c.bf16 %v570, %v566
        %v943 = vpack.c.bf16 %v575, %v571
        %v944 = vpack.c.bf16 %v576, %v572
        %v945 = vpack.c.bf16 %v577, %v573
        %v946 = vpack.c.bf16 %v578, %v574
        %v947 = vpack.c.bf16 %v583, %v579
        %v948 = vpack.c.bf16 %v584, %v580
        %v949 = vpack.c.bf16 %v585, %v581
        %v950 = vpack.c.bf16 %v586, %v582
        %v951 = vpack.c.bf16 %v591, %v587
        %v952 = vpack.c.bf16 %v592, %v588
        %v953 = vpack.c.bf16 %v593, %v589
        %v954 = vpack.c.bf16 %v594, %v590
        %v955 = vpack.c.bf16 %v599, %v595
        %v956 = vpack.c.bf16 %v600, %v596
        %v957 = vpack.c.bf16 %v601, %v597
        %v958 = vpack.c.bf16 %v602, %v598
        %v959 = vpack.c.bf16 %v607, %v603
        %v960 = vpack.c.bf16 %v608, %v604
        %v961 = vpack.c.bf16 %v609, %v605
        %v962 = vpack.c.bf16 %v610, %v606
        %v963 = vpack.c.bf16 %v615, %v611
        %v964 = vpack.c.bf16 %v616, %v612
        %v965 = vpack.c.bf16 %v617, %v613
        %v966 = vpack.c.bf16 %v618, %v614
        %v967 = vpack.c.bf16 %v623, %v619
        %v968 = vpack.c.bf16 %v624, %v620
        %v969 = vpack.c.bf16 %v625, %v621
        %v970 = vpack.c.bf16 %v626, %v622
        %v971 = vpack.c.bf16 %v631, %v627
        %v972 = vpack.c.bf16 %v632, %v628
        %v973 = vpack.c.bf16 %v633, %v629
        %v974 = vpack.c.bf16 %v634, %v630
        %v975 = vpack.c.bf16 %v639, %v635
        %v976 = vpack.c.bf16 %v640, %v636
        %v977 = vpack.c.bf16 %v641, %v637
        %v978 = vpack.c.bf16 %v642, %v638
        %v979 = vpack.c.bf16 %v647, %v643
        %v980 = vpack.c.bf16 %v648, %v644
        %v981 = vpack.c.bf16 %v649, %v645
        %v982 = vpack.c.bf16 %v650, %v646
        %v983 = vpack.c.bf16 %v655, %v651
        %v984 = vpack.c.bf16 %v656, %v652
        %v985 = vpack.c.bf16 %v657, %v653
        %v986 = vpack.c.bf16 %v658, %v654
        %v987 = vpack.c.bf16 %v663, %v659
        %v988 = vpack.c.bf16 %v664, %v660
        %v989 = vpack.c.bf16 %v665, %v661
        %v990 = vpack.c.bf16 %v666, %v662
        %v991 = vpack.c.bf16 %v671, %v667
        %v992 = vpack.c.bf16 %v672, %v668
        %v993 = vpack.c.bf16 %v673, %v669
        %v994 = vpack.c.bf16 %v674, %v670
        %v995 = vpack.c.bf16 %v679, %v675
        %v996 = vpack.c.bf16 %v680, %v676
        %v997 = vpack.c.bf16 %v681, %v677
        %v998 = vpack.c.bf16 %v682, %v678
        %v999 = vpack.c.bf16 %v687, %v683
        %v1000 = vpack.c.bf16 %v688, %v684
        %v1001 = vpack.c.bf16 %v689, %v685
        %v1002 = vpack.c.bf16 %v690, %v686
        %v1003 = vpack.c.bf16 %v695, %v691
        %v1004 = vpack.c.bf16 %v696, %v692
        %v1005 = vpack.c.bf16 %v697, %v693
        %v1006 = vpack.c.bf16 %v698, %v694
        %v1007 = vpack.c.bf16 %v703, %v699
        %v1008 = vpack.c.bf16 %v704, %v700
        %v1009 = vpack.c.bf16 %v705, %v701
        %v1010 = vpack.c.bf16 %v706, %v702
        %v1011 = vpack.c.bf16 %v711, %v707
        %v1012 = vpack.c.bf16 %v712, %v708
        %v1013 = vpack.c.bf16 %v713, %v709
        %v1014 = vpack.c.bf16 %v714, %v710
        %v1015 = vpack.c.bf16 %v719, %v715
        %v1016 = vpack.c.bf16 %v720, %v716
        %v1017 = vpack.c.bf16 %v721, %v717
        %v1018 = vpack.c.bf16 %v722, %v718
        %v1019 = vpack.c.bf16 %v727, %v723
        %v1020 = vpack.c.bf16 %v728, %v724
        %v1021 = vpack.c.bf16 %v729, %v725
        %v1022 = vpack.c.bf16 %v730, %v726
        %v1023 = vpack.c.bf16 %v735, %v731
        %v1024 = vpack.c.bf16 %v736, %v732
        %v1025 = vpack.c.bf16 %v737, %v733
        %v1026 = vpack.c.bf16 %v738, %v734
        %v1027 = vpack.c.bf16 %v743, %v739
        %v1028 = vpack.c.bf16 %v744, %v740
        %v1029 = vpack.c.bf16 %v745, %v741
        %v1030 = vpack.c.bf16 %v746, %v742
        %v1031 = vpack.c.bf16 %v751, %v747
        %v1032 = vpack.c.bf16 %v752, %v748
        %v1033 = vpack.c.bf16 %v753, %v749
        %v1034 = vpack.c.bf16 %v754, %v750
        %v1035 = vpack.c.bf16 %v759, %v755
        %v1036 = vpack.c.bf16 %v760, %v756
        %v1037 = vpack.c.bf16 %v761, %v757
        %v1038 = vpack.c.bf16 %v762, %v758
        %v1039 = vpack.c.bf16 %v767, %v763
        %v1040 = vpack.c.bf16 %v768, %v764
        %v1041 = vpack.c.bf16 %v769, %v765
        %v1042 = vpack.c.bf16 %v770, %v766
        %v1043 = vpack.c.bf16 %v775, %v771
        %v1044 = vpack.c.bf16 %v776, %v772
        %v1045 = vpack.c.bf16 %v777, %v773
        %v1046 = vpack.c.bf16 %v778, %v774
        %v1047 = vpack.c.bf16 %v783, %v779
        %v1048 = vpack.c.bf16 %v784, %v780
        %v1049 = vpack.c.bf16 %v785, %v781
        %v1050 = vpack.c.bf16 %v786, %v782
        %v1051 = vpack.c.bf16 %v791, %v787
        %v1052 = vpack.c.bf16 %v792, %v788
        %v1053 = vpack.c.bf16 %v793, %v789
        %v1054 = vpack.c.bf16 %v794, %v790
        %v1055 = vpack.c.bf16 %v799, %v795
        %v1056 = vpack.c.bf16 %v800, %v796
        %v1057 = vpack.c.bf16 %v801, %v797
        %v1058 = vpack.c.bf16 %v802, %v798
        %v1059 = vld [vmem:[#allocation6] sm:$0xff]
        %v1060 = vld [vmem:[#allocation6 + $0x8] sm:$0xff]
        %v1061 = vld [vmem:[#allocation6 + $0x10] sm:$0xff]
        %v1062 = vld [vmem:[#allocation6 + $0x18] sm:$0xff]
        %v1063 = vld [vmem:[#allocation6 + $0x20] sm:$0xff]
        %v1064 = vld [vmem:[#allocation6 + $0x28] sm:$0xff]
        %v1065 = vld [vmem:[#allocation6 + $0x30] sm:$0xff]
        %v1066 = vld [vmem:[#allocation6 + $0x38] sm:$0xff]
        %v1067 = vld [vmem:[#allocation6 + $0x40] sm:$0xff]
        %v1068 = vld [vmem:[#allocation6 + $0x48] sm:$0xff]
        %v1069 = vld [vmem:[#allocation6 + $0x50] sm:$0xff]
        %v1070 = vld [vmem:[#allocation6 + $0x58] sm:$0xff]
        %v1071 = vld [vmem:[#allocation6 + $0x60] sm:$0xff]
        %v1072 = vld [vmem:[#allocation6 + $0x68] sm:$0xff]
        %v1073 = vld [vmem:[#allocation6 + $0x70] sm:$0xff]
        %v1074 = vld [vmem:[#allocation6 + $0x78] sm:$0xff]
        %v1075 = vld [vmem:[#allocation6 + $0x80] sm:$0xff]
        %v1076 = vld [vmem:[#allocation6 + $0x88] sm:$0xff]
        %v1077 = vld [vmem:[#allocation6 + $0x90] sm:$0xff]
        %v1078 = vld [vmem:[#allocation6 + $0x98] sm:$0xff]
        %v1079 = vld [vmem:[#allocation6 + $0xa0] sm:$0xff]
        %v1080 = vld [vmem:[#allocation6 + $0xa8] sm:$0xff]
        %v1081 = vld [vmem:[#allocation6 + $0xb0] sm:$0xff]
        %v1082 = vld [vmem:[#allocation6 + $0xb8] sm:$0xff]
        %v1083 = vld [vmem:[#allocation6 + $0xc0] sm:$0xff]
        %v1084 = vld [vmem:[#allocation6 + $0xc8] sm:$0xff]
        %v1085 = vld [vmem:[#allocation6 + $0xd0] sm:$0xff]
        %v1086 = vld [vmem:[#allocation6 + $0xd8] sm:$0xff]
        %v1087 = vld [vmem:[#allocation6 + $0xe0] sm:$0xff]
        %v1088 = vld [vmem:[#allocation6 + $0xe8] sm:$0xff]
        %v1089 = vld [vmem:[#allocation6 + $0xf0] sm:$0xff]
        %v1090 = vld [vmem:[#allocation6 + $0xf8] sm:$0xff]
        %v1091 = vld [vmem:[#allocation6 + $0x100] sm:$0xff]
        %v1092 = vld [vmem:[#allocation6 + $0x108] sm:$0xff]
        %v1093 = vld [vmem:[#allocation6 + $0x110] sm:$0xff]
        %v1094 = vld [vmem:[#allocation6 + $0x118] sm:$0xff]
        %v1095 = vld [vmem:[#allocation6 + $0x120] sm:$0xff]
        %v1096 = vld [vmem:[#allocation6 + $0x128] sm:$0xff]
        %v1097 = vld [vmem:[#allocation6 + $0x130] sm:$0xff]
        %v1098 = vld [vmem:[#allocation6 + $0x138] sm:$0xff]
        %v1099 = vld [vmem:[#allocation6 + $0x140] sm:$0xff]
        %v1100 = vld [vmem:[#allocation6 + $0x148] sm:$0xff]
        %v1101 = vld [vmem:[#allocation6 + $0x150] sm:$0xff]
        %v1102 = vld [vmem:[#allocation6 + $0x158] sm:$0xff]
        %v1103 = vld [vmem:[#allocation6 + $0x160] sm:$0xff]
        %v1104 = vld [vmem:[#allocation6 + $0x168] sm:$0xff]
        %v1105 = vld [vmem:[#allocation6 + $0x170] sm:$0xff]
        %v1106 = vld [vmem:[#allocation6 + $0x178] sm:$0xff]
        %v1107 = vld [vmem:[#allocation6 + $0x180] sm:$0xff]
        %v1108 = vld [vmem:[#allocation6 + $0x188] sm:$0xff]
        %v1109 = vld [vmem:[#allocation6 + $0x190] sm:$0xff]
        %v1110 = vld [vmem:[#allocation6 + $0x198] sm:$0xff]
        %v1111 = vld [vmem:[#allocation6 + $0x1a0] sm:$0xff]
        %v1112 = vld [vmem:[#allocation6 + $0x1a8] sm:$0xff]
        %v1113 = vld [vmem:[#allocation6 + $0x1b0] sm:$0xff]
        %v1114 = vld [vmem:[#allocation6 + $0x1b8] sm:$0xff]
        %v1115 = vld [vmem:[#allocation6 + $0x1c0] sm:$0xff]
        %v1116 = vld [vmem:[#allocation6 + $0x1c8] sm:$0xff]
        %v1117 = vld [vmem:[#allocation6 + $0x1d0] sm:$0xff]
        %v1118 = vld [vmem:[#allocation6 + $0x1d8] sm:$0xff]
        %v1119 = vld [vmem:[#allocation6 + $0x1e0] sm:$0xff]
        %v1120 = vld [vmem:[#allocation6 + $0x1e8] sm:$0xff]
        %v1121 = vld [vmem:[#allocation6 + $0x1f0] sm:$0xff]
        %v1122 = vld [vmem:[#allocation6 + $0x1f8] sm:$0xff]
        %v1123 = vld [vmem:[#allocation6 + $0x200] sm:$0xff]
        %v1124 = vld [vmem:[#allocation6 + $0x208] sm:$0xff]
        %v1125 = vld [vmem:[#allocation6 + $0x210] sm:$0xff]
        %v1126 = vld [vmem:[#allocation6 + $0x218] sm:$0xff]
        %v1127 = vld [vmem:[#allocation6 + $0x220] sm:$0xff]
        %v1128 = vld [vmem:[#allocation6 + $0x228] sm:$0xff]
        %v1129 = vld [vmem:[#allocation6 + $0x230] sm:$0xff]
        %v1130 = vld [vmem:[#allocation6 + $0x238] sm:$0xff]
        %v1131 = vld [vmem:[#allocation6 + $0x240] sm:$0xff]
        %v1132 = vld [vmem:[#allocation6 + $0x248] sm:$0xff]
        %v1133 = vld [vmem:[#allocation6 + $0x250] sm:$0xff]
        %v1134 = vld [vmem:[#allocation6 + $0x258] sm:$0xff]
        %v1135 = vld [vmem:[#allocation6 + $0x260] sm:$0xff]
        %v1136 = vld [vmem:[#allocation6 + $0x268] sm:$0xff]
        %v1137 = vld [vmem:[#allocation6 + $0x270] sm:$0xff]
        %v1138 = vld [vmem:[#allocation6 + $0x278] sm:$0xff]
        %v1139 = vld [vmem:[#allocation6 + $0x280] sm:$0xff]
        %v1140 = vld [vmem:[#allocation6 + $0x288] sm:$0xff]
        %v1141 = vld [vmem:[#allocation6 + $0x290] sm:$0xff]
        %v1142 = vld [vmem:[#allocation6 + $0x298] sm:$0xff]
        %v1143 = vld [vmem:[#allocation6 + $0x2a0] sm:$0xff]
        %v1144 = vld [vmem:[#allocation6 + $0x2a8] sm:$0xff]
        %v1145 = vld [vmem:[#allocation6 + $0x2b0] sm:$0xff]
        %v1146 = vld [vmem:[#allocation6 + $0x2b8] sm:$0xff]
        %v1147 = vld [vmem:[#allocation6 + $0x2c0] sm:$0xff]
        %v1148 = vld [vmem:[#allocation6 + $0x2c8] sm:$0xff]
        %v1149 = vld [vmem:[#allocation6 + $0x2d0] sm:$0xff]
        %v1150 = vld [vmem:[#allocation6 + $0x2d8] sm:$0xff]
        %v1151 = vld [vmem:[#allocation6 + $0x2e0] sm:$0xff]
        %v1152 = vld [vmem:[#allocation6 + $0x2e8] sm:$0xff]
        %v1153 = vld [vmem:[#allocation6 + $0x2f0] sm:$0xff]
        %v1154 = vld [vmem:[#allocation6 + $0x2f8] sm:$0xff]
        %v1155 = vld [vmem:[#allocation6 + $0x300] sm:$0xff]
        %v1156 = vld [vmem:[#allocation6 + $0x308] sm:$0xff]
        %v1157 = vld [vmem:[#allocation6 + $0x310] sm:$0xff]
        %v1158 = vld [vmem:[#allocation6 + $0x318] sm:$0xff]
        %v1159 = vld [vmem:[#allocation6 + $0x320] sm:$0xff]
        %v1160 = vld [vmem:[#allocation6 + $0x328] sm:$0xff]
        %v1161 = vld [vmem:[#allocation6 + $0x330] sm:$0xff]
        %v1162 = vld [vmem:[#allocation6 + $0x338] sm:$0xff]
        %v1163 = vld [vmem:[#allocation6 + $0x340] sm:$0xff]
        %v1164 = vld [vmem:[#allocation6 + $0x348] sm:$0xff]
        %v1165 = vld [vmem:[#allocation6 + $0x350] sm:$0xff]
        %v1166 = vld [vmem:[#allocation6 + $0x358] sm:$0xff]
        %v1167 = vld [vmem:[#allocation6 + $0x360] sm:$0xff]
        %v1168 = vld [vmem:[#allocation6 + $0x368] sm:$0xff]
        %v1169 = vld [vmem:[#allocation6 + $0x370] sm:$0xff]
        %v1170 = vld [vmem:[#allocation6 + $0x378] sm:$0xff]
        %v1171 = vld [vmem:[#allocation6 + $0x380] sm:$0xff]
        %v1172 = vld [vmem:[#allocation6 + $0x388] sm:$0xff]
        %v1173 = vld [vmem:[#allocation6 + $0x390] sm:$0xff]
        %v1174 = vld [vmem:[#allocation6 + $0x398] sm:$0xff]
        %v1175 = vld [vmem:[#allocation6 + $0x3a0] sm:$0xff]
        %v1176 = vld [vmem:[#allocation6 + $0x3a8] sm:$0xff]
        %v1177 = vld [vmem:[#allocation6 + $0x3b0] sm:$0xff]
        %v1178 = vld [vmem:[#allocation6 + $0x3b8] sm:$0xff]
        %v1179 = vld [vmem:[#allocation6 + $0x3c0] sm:$0xff]
        %v1180 = vld [vmem:[#allocation6 + $0x3c8] sm:$0xff]
        %v1181 = vld [vmem:[#allocation6 + $0x3d0] sm:$0xff]
        %v1182 = vld [vmem:[#allocation6 + $0x3d8] sm:$0xff]
        %v1183 = vld [vmem:[#allocation6 + $0x3e0] sm:$0xff]
        %v1184 = vld [vmem:[#allocation6 + $0x3e8] sm:$0xff]
        %v1185 = vld [vmem:[#allocation6 + $0x3f0] sm:$0xff]
        %v1186 = vld [vmem:[#allocation6 + $0x3f8] sm:$0xff]
        %v1187 = vld [vmem:[#allocation6 + $0x400] sm:$0xff]
        %v1188 = vld [vmem:[#allocation6 + $0x408] sm:$0xff]
        %v1189 = vld [vmem:[#allocation6 + $0x410] sm:$0xff]
        %v1190 = vld [vmem:[#allocation6 + $0x418] sm:$0xff]
        %v1191 = vld [vmem:[#allocation6 + $0x420] sm:$0xff]
        %v1192 = vld [vmem:[#allocation6 + $0x428] sm:$0xff]
        %v1193 = vld [vmem:[#allocation6 + $0x430] sm:$0xff]
        %v1194 = vld [vmem:[#allocation6 + $0x438] sm:$0xff]
        %v1195 = vld [vmem:[#allocation6 + $0x440] sm:$0xff]
        %v1196 = vld [vmem:[#allocation6 + $0x448] sm:$0xff]
        %v1197 = vld [vmem:[#allocation6 + $0x450] sm:$0xff]
        %v1198 = vld [vmem:[#allocation6 + $0x458] sm:$0xff]
        %v1199 = vld [vmem:[#allocation6 + $0x460] sm:$0xff]
        %v1200 = vld [vmem:[#allocation6 + $0x468] sm:$0xff]
        %v1201 = vld [vmem:[#allocation6 + $0x470] sm:$0xff]
        %v1202 = vld [vmem:[#allocation6 + $0x478] sm:$0xff]
        %v1203 = vld [vmem:[#allocation6 + $0x480] sm:$0xff]
        %v1204 = vld [vmem:[#allocation6 + $0x488] sm:$0xff]
        %v1205 = vld [vmem:[#allocation6 + $0x490] sm:$0xff]
        %v1206 = vld [vmem:[#allocation6 + $0x498] sm:$0xff]
        %v1207 = vld [vmem:[#allocation6 + $0x4a0] sm:$0xff]
        %v1208 = vld [vmem:[#allocation6 + $0x4a8] sm:$0xff]
        %v1209 = vld [vmem:[#allocation6 + $0x4b0] sm:$0xff]
        %v1210 = vld [vmem:[#allocation6 + $0x4b8] sm:$0xff]
        %v1211 = vld [vmem:[#allocation6 + $0x4c0] sm:$0xff]
        %v1212 = vld [vmem:[#allocation6 + $0x4c8] sm:$0xff]
        %v1213 = vld [vmem:[#allocation6 + $0x4d0] sm:$0xff]
        %v1214 = vld [vmem:[#allocation6 + $0x4d8] sm:$0xff]
        %v1215 = vld [vmem:[#allocation6 + $0x4e0] sm:$0xff]
        %v1216 = vld [vmem:[#allocation6 + $0x4e8] sm:$0xff]
        %v1217 = vld [vmem:[#allocation6 + $0x4f0] sm:$0xff]
        %v1218 = vld [vmem:[#allocation6 + $0x4f8] sm:$0xff]
        %v1219 = vld [vmem:[#allocation6 + $0x500] sm:$0xff]
        %v1220 = vld [vmem:[#allocation6 + $0x508] sm:$0xff]
        %v1221 = vld [vmem:[#allocation6 + $0x510] sm:$0xff]
        %v1222 = vld [vmem:[#allocation6 + $0x518] sm:$0xff]
        %v1223 = vld [vmem:[#allocation6 + $0x520] sm:$0xff]
        %v1224 = vld [vmem:[#allocation6 + $0x528] sm:$0xff]
        %v1225 = vld [vmem:[#allocation6 + $0x530] sm:$0xff]
        %v1226 = vld [vmem:[#allocation6 + $0x538] sm:$0xff]
        %v1227 = vld [vmem:[#allocation6 + $0x540] sm:$0xff]
        %v1228 = vld [vmem:[#allocation6 + $0x548] sm:$0xff]
        %v1229 = vld [vmem:[#allocation6 + $0x550] sm:$0xff]
        %v1230 = vld [vmem:[#allocation6 + $0x558] sm:$0xff]
        %v1231 = vld [vmem:[#allocation6 + $0x560] sm:$0xff]
        %v1232 = vld [vmem:[#allocation6 + $0x568] sm:$0xff]
        %v1233 = vld [vmem:[#allocation6 + $0x570] sm:$0xff]
        %v1234 = vld [vmem:[#allocation6 + $0x578] sm:$0xff]
        %v1235 = vld [vmem:[#allocation6 + $0x580] sm:$0xff]
        %v1236 = vld [vmem:[#allocation6 + $0x588] sm:$0xff]
        %v1237 = vld [vmem:[#allocation6 + $0x590] sm:$0xff]
        %v1238 = vld [vmem:[#allocation6 + $0x598] sm:$0xff]
        %v1239 = vld [vmem:[#allocation6 + $0x5a0] sm:$0xff]
        %v1240 = vld [vmem:[#allocation6 + $0x5a8] sm:$0xff]
        %v1241 = vld [vmem:[#allocation6 + $0x5b0] sm:$0xff]
        %v1242 = vld [vmem:[#allocation6 + $0x5b8] sm:$0xff]
        %v1243 = vld [vmem:[#allocation6 + $0x5c0] sm:$0xff]
        %v1244 = vld [vmem:[#allocation6 + $0x5c8] sm:$0xff]
        %v1245 = vld [vmem:[#allocation6 + $0x5d0] sm:$0xff]
        %v1246 = vld [vmem:[#allocation6 + $0x5d8] sm:$0xff]
        %v1247 = vld [vmem:[#allocation6 + $0x5e0] sm:$0xff]
        %v1248 = vld [vmem:[#allocation6 + $0x5e8] sm:$0xff]
        %v1249 = vld [vmem:[#allocation6 + $0x5f0] sm:$0xff]
        %v1250 = vld [vmem:[#allocation6 + $0x5f8] sm:$0xff]
        %v1251 = vld [vmem:[#allocation6 + $0x600] sm:$0xff]
        %v1252 = vld [vmem:[#allocation6 + $0x608] sm:$0xff]
        %v1253 = vld [vmem:[#allocation6 + $0x610] sm:$0xff]
        %v1254 = vld [vmem:[#allocation6 + $0x618] sm:$0xff]
        %v1255 = vld [vmem:[#allocation6 + $0x620] sm:$0xff]
        %v1256 = vld [vmem:[#allocation6 + $0x628] sm:$0xff]
        %v1257 = vld [vmem:[#allocation6 + $0x630] sm:$0xff]
        %v1258 = vld [vmem:[#allocation6 + $0x638] sm:$0xff]
        %v1259 = vld [vmem:[#allocation6 + $0x640] sm:$0xff]
        %v1260 = vld [vmem:[#allocation6 + $0x648] sm:$0xff]
        %v1261 = vld [vmem:[#allocation6 + $0x650] sm:$0xff]
        %v1262 = vld [vmem:[#allocation6 + $0x658] sm:$0xff]
        %v1263 = vld [vmem:[#allocation6 + $0x660] sm:$0xff]
        %v1264 = vld [vmem:[#allocation6 + $0x668] sm:$0xff]
        %v1265 = vld [vmem:[#allocation6 + $0x670] sm:$0xff]
        %v1266 = vld [vmem:[#allocation6 + $0x678] sm:$0xff]
        %v1267 = vld [vmem:[#allocation6 + $0x680] sm:$0xff]
        %v1268 = vld [vmem:[#allocation6 + $0x688] sm:$0xff]
        %v1269 = vld [vmem:[#allocation6 + $0x690] sm:$0xff]
        %v1270 = vld [vmem:[#allocation6 + $0x698] sm:$0xff]
        %v1271 = vld [vmem:[#allocation6 + $0x6a0] sm:$0xff]
        %v1272 = vld [vmem:[#allocation6 + $0x6a8] sm:$0xff]
        %v1273 = vld [vmem:[#allocation6 + $0x6b0] sm:$0xff]
        %v1274 = vld [vmem:[#allocation6 + $0x6b8] sm:$0xff]
        %v1275 = vld [vmem:[#allocation6 + $0x6c0] sm:$0xff]
        %v1276 = vld [vmem:[#allocation6 + $0x6c8] sm:$0xff]
        %v1277 = vld [vmem:[#allocation6 + $0x6d0] sm:$0xff]
        %v1278 = vld [vmem:[#allocation6 + $0x6d8] sm:$0xff]
        %v1279 = vld [vmem:[#allocation6 + $0x6e0] sm:$0xff]
        %v1280 = vld [vmem:[#allocation6 + $0x6e8] sm:$0xff]
        %v1281 = vld [vmem:[#allocation6 + $0x6f0] sm:$0xff]
        %v1282 = vld [vmem:[#allocation6 + $0x6f8] sm:$0xff]
        %v1283 = vld [vmem:[#allocation6 + $0x700] sm:$0xff]
        %v1284 = vld [vmem:[#allocation6 + $0x708] sm:$0xff]
        %v1285 = vld [vmem:[#allocation6 + $0x710] sm:$0xff]
        %v1286 = vld [vmem:[#allocation6 + $0x718] sm:$0xff]
        %v1287 = vld [vmem:[#allocation6 + $0x720] sm:$0xff]
        %v1288 = vld [vmem:[#allocation6 + $0x728] sm:$0xff]
        %v1289 = vld [vmem:[#allocation6 + $0x730] sm:$0xff]
        %v1290 = vld [vmem:[#allocation6 + $0x738] sm:$0xff]
        %v1291 = vld [vmem:[#allocation6 + $0x740] sm:$0xff]
        %v1292 = vld [vmem:[#allocation6 + $0x748] sm:$0xff]
        %v1293 = vld [vmem:[#allocation6 + $0x750] sm:$0xff]
        %v1294 = vld [vmem:[#allocation6 + $0x758] sm:$0xff]
        %v1295 = vld [vmem:[#allocation6 + $0x760] sm:$0xff]
        %v1296 = vld [vmem:[#allocation6 + $0x768] sm:$0xff]
        %v1297 = vld [vmem:[#allocation6 + $0x770] sm:$0xff]
        %v1298 = vld [vmem:[#allocation6 + $0x778] sm:$0xff]
        %v1299 = vld [vmem:[#allocation6 + $0x780] sm:$0xff]
        %v1300 = vld [vmem:[#allocation6 + $0x788] sm:$0xff]
        %v1301 = vld [vmem:[#allocation6 + $0x790] sm:$0xff]
        %v1302 = vld [vmem:[#allocation6 + $0x798] sm:$0xff]
        %v1303 = vld [vmem:[#allocation6 + $0x7a0] sm:$0xff]
        %v1304 = vld [vmem:[#allocation6 + $0x7a8] sm:$0xff]
        %v1305 = vld [vmem:[#allocation6 + $0x7b0] sm:$0xff]
        %v1306 = vld [vmem:[#allocation6 + $0x7b8] sm:$0xff]
        %v1307 = vld [vmem:[#allocation6 + $0x7c0] sm:$0xff]
        %v1308 = vld [vmem:[#allocation6 + $0x7c8] sm:$0xff]
        %v1309 = vld [vmem:[#allocation6 + $0x7d0] sm:$0xff]
        %v1310 = vld [vmem:[#allocation6 + $0x7d8] sm:$0xff]
        %v1311 = vld [vmem:[#allocation6 + $0x7e0] sm:$0xff]
        %v1312 = vld [vmem:[#allocation6 + $0x7e8] sm:$0xff]
        %v1313 = vld [vmem:[#allocation6 + $0x7f0] sm:$0xff]
        %v1314 = vld [vmem:[#allocation6 + $0x7f8] sm:$0xff]
        %v1315 = vld [vmem:[%s2] sm:$0xff]
        %v1316 = vld [vmem:[%s2 + $0x8] sm:$0xff]
        %v1317 = vld [vmem:[%s2 + $0x10] sm:$0xff]
        %v1318 = vld [vmem:[%s2 + $0x18] sm:$0xff]
        %v1319 = vld [vmem:[%s2 + $0x20] sm:$0xff]
        %v1320 = vld [vmem:[%s2 + $0x28] sm:$0xff]
        %v1321 = vld [vmem:[%s2 + $0x30] sm:$0xff]
        %v1322 = vld [vmem:[%s2 + $0x38] sm:$0xff]
        %v1323 = vld [vmem:[%s2 + $0x40] sm:$0xff]
        %v1324 = vld [vmem:[%s2 + $0x48] sm:$0xff]
        %v1325 = vld [vmem:[%s2 + $0x50] sm:$0xff]
        %v1326 = vld [vmem:[%s2 + $0x58] sm:$0xff]
        %v1327 = vld [vmem:[%s2 + $0x60] sm:$0xff]
        %v1328 = vld [vmem:[%s2 + $0x68] sm:$0xff]
        %v1329 = vld [vmem:[%s2 + $0x70] sm:$0xff]
        %v1330 = vld [vmem:[%s2 + $0x78] sm:$0xff]
        %v1331 = vld [vmem:[%s2 + $0x80] sm:$0xff]
        %v1332 = vld [vmem:[%s2 + $0x88] sm:$0xff]
        %v1333 = vld [vmem:[%s2 + $0x90] sm:$0xff]
        %v1334 = vld [vmem:[%s2 + $0x98] sm:$0xff]
        %v1335 = vld [vmem:[%s2 + $0xa0] sm:$0xff]
        %v1336 = vld [vmem:[%s2 + $0xa8] sm:$0xff]
        %v1337 = vld [vmem:[%s2 + $0xb0] sm:$0xff]
        %v1338 = vld [vmem:[%s2 + $0xb8] sm:$0xff]
        %v1339 = vld [vmem:[%s2 + $0xc0] sm:$0xff]
        %v1340 = vld [vmem:[%s2 + $0xc8] sm:$0xff]
        %v1341 = vld [vmem:[%s2 + $0xd0] sm:$0xff]
        %v1342 = vld [vmem:[%s2 + $0xd8] sm:$0xff]
        %v1343 = vld [vmem:[%s2 + $0xe0] sm:$0xff]
        %v1344 = vld [vmem:[%s2 + $0xe8] sm:$0xff]
        %v1345 = vld [vmem:[%s2 + $0xf0] sm:$0xff]
        %v1346 = vld [vmem:[%s2 + $0xf8] sm:$0xff]
        %v1347 = vld [vmem:[%s2 + $0x100] sm:$0xff]
        %v1348 = vld [vmem:[%s2 + $0x108] sm:$0xff]
        %v1349 = vld [vmem:[%s2 + $0x110] sm:$0xff]
        %v1350 = vld [vmem:[%s2 + $0x118] sm:$0xff]
        %v1351 = vld [vmem:[%s2 + $0x120] sm:$0xff]
        %v1352 = vld [vmem:[%s2 + $0x128] sm:$0xff]
        %v1353 = vld [vmem:[%s2 + $0x130] sm:$0xff]
        %v1354 = vld [vmem:[%s2 + $0x138] sm:$0xff]
        %v1355 = vld [vmem:[%s2 + $0x140] sm:$0xff]
        %v1356 = vld [vmem:[%s2 + $0x148] sm:$0xff]
        %v1357 = vld [vmem:[%s2 + $0x150] sm:$0xff]
        %v1358 = vld [vmem:[%s2 + $0x158] sm:$0xff]
        %v1359 = vld [vmem:[%s2 + $0x160] sm:$0xff]
        %v1360 = vld [vmem:[%s2 + $0x168] sm:$0xff]
        %v1361 = vld [vmem:[%s2 + $0x170] sm:$0xff]
        %v1362 = vld [vmem:[%s2 + $0x178] sm:$0xff]
        %v1363 = vld [vmem:[%s2 + $0x180] sm:$0xff]
        %v1364 = vld [vmem:[%s2 + $0x188] sm:$0xff]
        %v1365 = vld [vmem:[%s2 + $0x190] sm:$0xff]
        %v1366 = vld [vmem:[%s2 + $0x198] sm:$0xff]
        %v1367 = vld [vmem:[%s2 + $0x1a0] sm:$0xff]
        %v1368 = vld [vmem:[%s2 + $0x1a8] sm:$0xff]
        %v1369 = vld [vmem:[%s2 + $0x1b0] sm:$0xff]
        %v1370 = vld [vmem:[%s2 + $0x1b8] sm:$0xff]
        %v1371 = vld [vmem:[%s2 + $0x1c0] sm:$0xff]
        %v1372 = vld [vmem:[%s2 + $0x1c8] sm:$0xff]
        %v1373 = vld [vmem:[%s2 + $0x1d0] sm:$0xff]
        %v1374 = vld [vmem:[%s2 + $0x1d8] sm:$0xff]
        %v1375 = vld [vmem:[%s2 + $0x1e0] sm:$0xff]
        %v1376 = vld [vmem:[%s2 + $0x1e8] sm:$0xff]
        %v1377 = vld [vmem:[%s2 + $0x1f0] sm:$0xff]
        %v1378 = vld [vmem:[%s2 + $0x1f8] sm:$0xff]
        %1380 = vset.pattern.permute.xlu0 0
        %1381 = vperm.xlu0 %1380, %v1315
        %v1382 = vpop.permute.xlu0 %1381
        %1385 = vset.pattern.permute.xlu0 0
        %1386 = vperm.xlu0 %1385, %v1316
        %v1387 = vpop.permute.xlu0 %1386
        %1390 = vset.pattern.permute.xlu0 0
        %1391 = vperm.xlu0 %1390, %v1317
        %v1392 = vpop.permute.xlu0 %1391
        %1395 = vset.pattern.permute.xlu0 0
        %1396 = vperm.xlu0 %1395, %v1318
        %v1397 = vpop.permute.xlu0 %1396
        %1400 = vset.pattern.permute.xlu0 0
        %1401 = vperm.xlu0 %1400, %v1319
        %v1402 = vpop.permute.xlu0 %1401
        %1405 = vset.pattern.permute.xlu0 0
        %1406 = vperm.xlu0 %1405, %v1320
        %v1407 = vpop.permute.xlu0 %1406
        %1410 = vset.pattern.permute.xlu0 0
        %1411 = vperm.xlu0 %1410, %v1321
        %v1412 = vpop.permute.xlu0 %1411
        %1415 = vset.pattern.permute.xlu0 0
        %1416 = vperm.xlu0 %1415, %v1322
        %v1417 = vpop.permute.xlu0 %1416
        %1420 = vset.pattern.permute.xlu0 0
        %1421 = vperm.xlu0 %1420, %v1323
        %v1422 = vpop.permute.xlu0 %1421
        %1425 = vset.pattern.permute.xlu0 0
        %1426 = vperm.xlu0 %1425, %v1324
        %v1427 = vpop.permute.xlu0 %1426
        %1430 = vset.pattern.permute.xlu0 0
        %1431 = vperm.xlu0 %1430, %v1325
        %v1432 = vpop.permute.xlu0 %1431
        %1435 = vset.pattern.permute.xlu0 0
        %1436 = vperm.xlu0 %1435, %v1326
        %v1437 = vpop.permute.xlu0 %1436
        %1440 = vset.pattern.permute.xlu0 0
        %1441 = vperm.xlu0 %1440, %v1327
        %v1442 = vpop.permute.xlu0 %1441
        %1445 = vset.pattern.permute.xlu0 0
        %1446 = vperm.xlu0 %1445, %v1328
        %v1447 = vpop.permute.xlu0 %1446
        %1450 = vset.pattern.permute.xlu0 0
        %1451 = vperm.xlu0 %1450, %v1329
        %v1452 = vpop.permute.xlu0 %1451
        %1455 = vset.pattern.permute.xlu0 0
        %1456 = vperm.xlu0 %1455, %v1330
        %v1457 = vpop.permute.xlu0 %1456
        %1460 = vset.pattern.permute.xlu0 0
        %1461 = vperm.xlu0 %1460, %v1331
        %v1462 = vpop.permute.xlu0 %1461
        %1465 = vset.pattern.permute.xlu0 0
        %1466 = vperm.xlu0 %1465, %v1332
        %v1467 = vpop.permute.xlu0 %1466
        %1470 = vset.pattern.permute.xlu0 0
        %1471 = vperm.xlu0 %1470, %v1333
        %v1472 = vpop.permute.xlu0 %1471
        %1475 = vset.pattern.permute.xlu0 0
        %1476 = vperm.xlu0 %1475, %v1334
        %v1477 = vpop.permute.xlu0 %1476
        %1480 = vset.pattern.permute.xlu0 0
        %1481 = vperm.xlu0 %1480, %v1335
        %v1482 = vpop.permute.xlu0 %1481
        %1485 = vset.pattern.permute.xlu0 0
        %1486 = vperm.xlu0 %1485, %v1336
        %v1487 = vpop.permute.xlu0 %1486
        %1490 = vset.pattern.permute.xlu0 0
        %1491 = vperm.xlu0 %1490, %v1337
        %v1492 = vpop.permute.xlu0 %1491
        %1495 = vset.pattern.permute.xlu0 0
        %1496 = vperm.xlu0 %1495, %v1338
        %v1497 = vpop.permute.xlu0 %1496
        %1500 = vset.pattern.permute.xlu0 0
        %1501 = vperm.xlu0 %1500, %v1339
        %v1502 = vpop.permute.xlu0 %1501
        %1505 = vset.pattern.permute.xlu0 0
        %1506 = vperm.xlu0 %1505, %v1340
        %v1507 = vpop.permute.xlu0 %1506
        %1510 = vset.pattern.permute.xlu0 0
        %1511 = vperm.xlu0 %1510, %v1341
        %v1512 = vpop.permute.xlu0 %1511
        %1515 = vset.pattern.permute.xlu0 0
        %1516 = vperm.xlu0 %1515, %v1342
        %v1517 = vpop.permute.xlu0 %1516
        %1520 = vset.pattern.permute.xlu0 0
        %1521 = vperm.xlu0 %1520, %v1343
        %v1522 = vpop.permute.xlu0 %1521
        %1525 = vset.pattern.permute.xlu0 0
        %1526 = vperm.xlu0 %1525, %v1344
        %v1527 = vpop.permute.xlu0 %1526
        %1530 = vset.pattern.permute.xlu0 0
        %1531 = vperm.xlu0 %1530, %v1345
        %v1532 = vpop.permute.xlu0 %1531
        %1535 = vset.pattern.permute.xlu0 0
        %1536 = vperm.xlu0 %1535, %v1346
        %v1537 = vpop.permute.xlu0 %1536
        %1540 = vset.pattern.permute.xlu0 0
        %1541 = vperm.xlu0 %1540, %v1347
        %v1542 = vpop.permute.xlu0 %1541
        %1545 = vset.pattern.permute.xlu0 0
        %1546 = vperm.xlu0 %1545, %v1348
        %v1547 = vpop.permute.xlu0 %1546
        %1550 = vset.pattern.permute.xlu0 0
        %1551 = vperm.xlu0 %1550, %v1349
        %v1552 = vpop.permute.xlu0 %1551
        %1555 = vset.pattern.permute.xlu0 0
        %1556 = vperm.xlu0 %1555, %v1350
        %v1557 = vpop.permute.xlu0 %1556
        %1560 = vset.pattern.permute.xlu0 0
        %1561 = vperm.xlu0 %1560, %v1351
        %v1562 = vpop.permute.xlu0 %1561
        %1565 = vset.pattern.permute.xlu0 0
        %1566 = vperm.xlu0 %1565, %v1352
        %v1567 = vpop.permute.xlu0 %1566
        %1570 = vset.pattern.permute.xlu0 0
        %1571 = vperm.xlu0 %1570, %v1353
        %v1572 = vpop.permute.xlu0 %1571
        %1575 = vset.pattern.permute.xlu0 0
        %1576 = vperm.xlu0 %1575, %v1354
        %v1577 = vpop.permute.xlu0 %1576
        %1580 = vset.pattern.permute.xlu0 0
        %1581 = vperm.xlu0 %1580, %v1355
        %v1582 = vpop.permute.xlu0 %1581
        %1585 = vset.pattern.permute.xlu0 0
        %1586 = vperm.xlu0 %1585, %v1356
        %v1587 = vpop.permute.xlu0 %1586
        %1590 = vset.pattern.permute.xlu0 0
        %1591 = vperm.xlu0 %1590, %v1357
        %v1592 = vpop.permute.xlu0 %1591
        %1595 = vset.pattern.permute.xlu0 0
        %1596 = vperm.xlu0 %1595, %v1358
        %v1597 = vpop.permute.xlu0 %1596
        %1600 = vset.pattern.permute.xlu0 0
        %1601 = vperm.xlu0 %1600, %v1359
        %v1602 = vpop.permute.xlu0 %1601
        %1605 = vset.pattern.permute.xlu0 0
        %1606 = vperm.xlu0 %1605, %v1360
        %v1607 = vpop.permute.xlu0 %1606
        %1610 = vset.pattern.permute.xlu0 0
        %1611 = vperm.xlu0 %1610, %v1361
        %v1612 = vpop.permute.xlu0 %1611
        %1615 = vset.pattern.permute.xlu0 0
        %1616 = vperm.xlu0 %1615, %v1362
        %v1617 = vpop.permute.xlu0 %1616
        %1620 = vset.pattern.permute.xlu0 0
        %1621 = vperm.xlu0 %1620, %v1363
        %v1622 = vpop.permute.xlu0 %1621
        %1625 = vset.pattern.permute.xlu0 0
        %1626 = vperm.xlu0 %1625, %v1364
        %v1627 = vpop.permute.xlu0 %1626
        %1630 = vset.pattern.permute.xlu0 0
        %1631 = vperm.xlu0 %1630, %v1365
        %v1632 = vpop.permute.xlu0 %1631
        %1635 = vset.pattern.permute.xlu0 0
        %1636 = vperm.xlu0 %1635, %v1366
        %v1637 = vpop.permute.xlu0 %1636
        %1640 = vset.pattern.permute.xlu0 0
        %1641 = vperm.xlu0 %1640, %v1367
        %v1642 = vpop.permute.xlu0 %1641
        %1645 = vset.pattern.permute.xlu0 0
        %1646 = vperm.xlu0 %1645, %v1368
        %v1647 = vpop.permute.xlu0 %1646
        %1650 = vset.pattern.permute.xlu0 0
        %1651 = vperm.xlu0 %1650, %v1369
        %v1652 = vpop.permute.xlu0 %1651
        %1655 = vset.pattern.permute.xlu0 0
        %1656 = vperm.xlu0 %1655, %v1370
        %v1657 = vpop.permute.xlu0 %1656
        %1660 = vset.pattern.permute.xlu0 0
        %1661 = vperm.xlu0 %1660, %v1371
        %v1662 = vpop.permute.xlu0 %1661
        %1665 = vset.pattern.permute.xlu0 0
        %1666 = vperm.xlu0 %1665, %v1372
        %v1667 = vpop.permute.xlu0 %1666
        %1670 = vset.pattern.permute.xlu0 0
        %1671 = vperm.xlu0 %1670, %v1373
        %v1672 = vpop.permute.xlu0 %1671
        %1675 = vset.pattern.permute.xlu0 0
        %1676 = vperm.xlu0 %1675, %v1374
        %v1677 = vpop.permute.xlu0 %1676
        %1680 = vset.pattern.permute.xlu0 0
        %1681 = vperm.xlu0 %1680, %v1375
        %v1682 = vpop.permute.xlu0 %1681
        %1685 = vset.pattern.permute.xlu0 0
        %1686 = vperm.xlu0 %1685, %v1376
        %v1687 = vpop.permute.xlu0 %1686
        %1690 = vset.pattern.permute.xlu0 0
        %1691 = vperm.xlu0 %1690, %v1377
        %v1692 = vpop.permute.xlu0 %1691
        %1695 = vset.pattern.permute.xlu0 0
        %1696 = vperm.xlu0 %1695, %v1378
        %v1697 = vpop.permute.xlu0 %1696
        %v1955 = vunpack.c.l.b16 %v1059
        %v1956 = vunpack.c.h.b16 %v1059
        %v1957 = vunpack.c.l.b16 %v1060
        %v1958 = vunpack.c.h.b16 %v1060
        %v1959 = vunpack.c.l.b16 %v1061
        %v1960 = vunpack.c.h.b16 %v1061
        %v1961 = vunpack.c.l.b16 %v1062
        %v1962 = vunpack.c.h.b16 %v1062
        %v1963 = vunpack.c.l.b16 %v1063
        %v1964 = vunpack.c.h.b16 %v1063
        %v1965 = vunpack.c.l.b16 %v1064
        %v1966 = vunpack.c.h.b16 %v1064
        %v1967 = vunpack.c.l.b16 %v1065
        %v1968 = vunpack.c.h.b16 %v1065
        %v1969 = vunpack.c.l.b16 %v1066
        %v1970 = vunpack.c.h.b16 %v1066
        %v1971 = vunpack.c.l.b16 %v1067
        %v1972 = vunpack.c.h.b16 %v1067
        %v1973 = vunpack.c.l.b16 %v1068
        %v1974 = vunpack.c.h.b16 %v1068
        %v1975 = vunpack.c.l.b16 %v1069
        %v1976 = vunpack.c.h.b16 %v1069
        %v1977 = vunpack.c.l.b16 %v1070
        %v1978 = vunpack.c.h.b16 %v1070
        %v1979 = vunpack.c.l.b16 %v1071
        %v1980 = vunpack.c.h.b16 %v1071
        %v1981 = vunpack.c.l.b16 %v1072
        %v1982 = vunpack.c.h.b16 %v1072
        %v1983 = vunpack.c.l.b16 %v1073
        %v1984 = vunpack.c.h.b16 %v1073
        %v1985 = vunpack.c.l.b16 %v1074
        %v1986 = vunpack.c.h.b16 %v1074
        %v1987 = vunpack.c.l.b16 %v1075
        %v1988 = vunpack.c.h.b16 %v1075
        %v1989 = vunpack.c.l.b16 %v1076
        %v1990 = vunpack.c.h.b16 %v1076
        %v1991 = vunpack.c.l.b16 %v1077
        %v1992 = vunpack.c.h.b16 %v1077
        %v1993 = vunpack.c.l.b16 %v1078
        %v1994 = vunpack.c.h.b16 %v1078
        %v1995 = vunpack.c.l.b16 %v1079
        %v1996 = vunpack.c.h.b16 %v1079
        %v1997 = vunpack.c.l.b16 %v1080
        %v1998 = vunpack.c.h.b16 %v1080
        %v1999 = vunpack.c.l.b16 %v1081
        %v2000 = vunpack.c.h.b16 %v1081
        %v2001 = vunpack.c.l.b16 %v1082
        %v2002 = vunpack.c.h.b16 %v1082
        %v2003 = vunpack.c.l.b16 %v1083
        %v2004 = vunpack.c.h.b16 %v1083
        %v2005 = vunpack.c.l.b16 %v1084
        %v2006 = vunpack.c.h.b16 %v1084
        %v2007 = vunpack.c.l.b16 %v1085
        %v2008 = vunpack.c.h.b16 %v1085
        %v2009 = vunpack.c.l.b16 %v1086
        %v2010 = vunpack.c.h.b16 %v1086
        %v2011 = vunpack.c.l.b16 %v1087
        %v2012 = vunpack.c.h.b16 %v1087
        %v2013 = vunpack.c.l.b16 %v1088
        %v2014 = vunpack.c.h.b16 %v1088
        %v2015 = vunpack.c.l.b16 %v1089
        %v2016 = vunpack.c.h.b16 %v1089
        %v2017 = vunpack.c.l.b16 %v1090
        %v2018 = vunpack.c.h.b16 %v1090
        %v2019 = vunpack.c.l.b16 %v1091
        %v2020 = vunpack.c.h.b16 %v1091
        %v2021 = vunpack.c.l.b16 %v1092
        %v2022 = vunpack.c.h.b16 %v1092
        %v2023 = vunpack.c.l.b16 %v1093
        %v2024 = vunpack.c.h.b16 %v1093
        %v2025 = vunpack.c.l.b16 %v1094
        %v2026 = vunpack.c.h.b16 %v1094
        %v2027 = vunpack.c.l.b16 %v1095
        %v2028 = vunpack.c.h.b16 %v1095
        %v2029 = vunpack.c.l.b16 %v1096
        %v2030 = vunpack.c.h.b16 %v1096
        %v2031 = vunpack.c.l.b16 %v1097
        %v2032 = vunpack.c.h.b16 %v1097
        %v2033 = vunpack.c.l.b16 %v1098
        %v2034 = vunpack.c.h.b16 %v1098
        %v2035 = vunpack.c.l.b16 %v1099
        %v2036 = vunpack.c.h.b16 %v1099
        %v2037 = vunpack.c.l.b16 %v1100
        %v2038 = vunpack.c.h.b16 %v1100
        %v2039 = vunpack.c.l.b16 %v1101
        %v2040 = vunpack.c.h.b16 %v1101
        %v2041 = vunpack.c.l.b16 %v1102
        %v2042 = vunpack.c.h.b16 %v1102
        %v2043 = vunpack.c.l.b16 %v1103
        %v2044 = vunpack.c.h.b16 %v1103
        %v2045 = vunpack.c.l.b16 %v1104
        %v2046 = vunpack.c.h.b16 %v1104
        %v2047 = vunpack.c.l.b16 %v1105
        %v2048 = vunpack.c.h.b16 %v1105
        %v2049 = vunpack.c.l.b16 %v1106
        %v2050 = vunpack.c.h.b16 %v1106
        %v2051 = vunpack.c.l.b16 %v1107
        %v2052 = vunpack.c.h.b16 %v1107
        %v2053 = vunpack.c.l.b16 %v1108
        %v2054 = vunpack.c.h.b16 %v1108
        %v2055 = vunpack.c.l.b16 %v1109
        %v2056 = vunpack.c.h.b16 %v1109
        %v2057 = vunpack.c.l.b16 %v1110
        %v2058 = vunpack.c.h.b16 %v1110
        %v2059 = vunpack.c.l.b16 %v1111
        %v2060 = vunpack.c.h.b16 %v1111
        %v2061 = vunpack.c.l.b16 %v1112
        %v2062 = vunpack.c.h.b16 %v1112
        %v2063 = vunpack.c.l.b16 %v1113
        %v2064 = vunpack.c.h.b16 %v1113
        %v2065 = vunpack.c.l.b16 %v1114
        %v2066 = vunpack.c.h.b16 %v1114
        %v2067 = vunpack.c.l.b16 %v1115
        %v2068 = vunpack.c.h.b16 %v1115
        %v2069 = vunpack.c.l.b16 %v1116
        %v2070 = vunpack.c.h.b16 %v1116
        %v2071 = vunpack.c.l.b16 %v1117
        %v2072 = vunpack.c.h.b16 %v1117
        %v2073 = vunpack.c.l.b16 %v1118
        %v2074 = vunpack.c.h.b16 %v1118
        %v2075 = vunpack.c.l.b16 %v1119
        %v2076 = vunpack.c.h.b16 %v1119
        %v2077 = vunpack.c.l.b16 %v1120
        %v2078 = vunpack.c.h.b16 %v1120
        %v2079 = vunpack.c.l.b16 %v1121
        %v2080 = vunpack.c.h.b16 %v1121
        %v2081 = vunpack.c.l.b16 %v1122
        %v2082 = vunpack.c.h.b16 %v1122
        %v2083 = vunpack.c.l.b16 %v1123
        %v2084 = vunpack.c.h.b16 %v1123
        %v2085 = vunpack.c.l.b16 %v1124
        %v2086 = vunpack.c.h.b16 %v1124
        %v2087 = vunpack.c.l.b16 %v1125
        %v2088 = vunpack.c.h.b16 %v1125
        %v2089 = vunpack.c.l.b16 %v1126
        %v2090 = vunpack.c.h.b16 %v1126
        %v2091 = vunpack.c.l.b16 %v1127
        %v2092 = vunpack.c.h.b16 %v1127
        %v2093 = vunpack.c.l.b16 %v1128
        %v2094 = vunpack.c.h.b16 %v1128
        %v2095 = vunpack.c.l.b16 %v1129
        %v2096 = vunpack.c.h.b16 %v1129
        %v2097 = vunpack.c.l.b16 %v1130
        %v2098 = vunpack.c.h.b16 %v1130
        %v2099 = vunpack.c.l.b16 %v1131
        %v2100 = vunpack.c.h.b16 %v1131
        %v2101 = vunpack.c.l.b16 %v1132
        %v2102 = vunpack.c.h.b16 %v1132
        %v2103 = vunpack.c.l.b16 %v1133
        %v2104 = vunpack.c.h.b16 %v1133
        %v2105 = vunpack.c.l.b16 %v1134
        %v2106 = vunpack.c.h.b16 %v1134
        %v2107 = vunpack.c.l.b16 %v1135
        %v2108 = vunpack.c.h.b16 %v1135
        %v2109 = vunpack.c.l.b16 %v1136
        %v2110 = vunpack.c.h.b16 %v1136
        %v2111 = vunpack.c.l.b16 %v1137
        %v2112 = vunpack.c.h.b16 %v1137
        %v2113 = vunpack.c.l.b16 %v1138
        %v2114 = vunpack.c.h.b16 %v1138
        %v2115 = vunpack.c.l.b16 %v1139
        %v2116 = vunpack.c.h.b16 %v1139
        %v2117 = vunpack.c.l.b16 %v1140
        %v2118 = vunpack.c.h.b16 %v1140
        %v2119 = vunpack.c.l.b16 %v1141
        %v2120 = vunpack.c.h.b16 %v1141
        %v2121 = vunpack.c.l.b16 %v1142
        %v2122 = vunpack.c.h.b16 %v1142
        %v2123 = vunpack.c.l.b16 %v1143
        %v2124 = vunpack.c.h.b16 %v1143
        %v2125 = vunpack.c.l.b16 %v1144
        %v2126 = vunpack.c.h.b16 %v1144
        %v2127 = vunpack.c.l.b16 %v1145
        %v2128 = vunpack.c.h.b16 %v1145
        %v2129 = vunpack.c.l.b16 %v1146
        %v2130 = vunpack.c.h.b16 %v1146
        %v2131 = vunpack.c.l.b16 %v1147
        %v2132 = vunpack.c.h.b16 %v1147
        %v2133 = vunpack.c.l.b16 %v1148
        %v2134 = vunpack.c.h.b16 %v1148
        %v2135 = vunpack.c.l.b16 %v1149
        %v2136 = vunpack.c.h.b16 %v1149
        %v2137 = vunpack.c.l.b16 %v1150
        %v2138 = vunpack.c.h.b16 %v1150
        %v2139 = vunpack.c.l.b16 %v1151
        %v2140 = vunpack.c.h.b16 %v1151
        %v2141 = vunpack.c.l.b16 %v1152
        %v2142 = vunpack.c.h.b16 %v1152
        %v2143 = vunpack.c.l.b16 %v1153
        %v2144 = vunpack.c.h.b16 %v1153
        %v2145 = vunpack.c.l.b16 %v1154
        %v2146 = vunpack.c.h.b16 %v1154
        %v2147 = vunpack.c.l.b16 %v1155
        %v2148 = vunpack.c.h.b16 %v1155
        %v2149 = vunpack.c.l.b16 %v1156
        %v2150 = vunpack.c.h.b16 %v1156
        %v2151 = vunpack.c.l.b16 %v1157
        %v2152 = vunpack.c.h.b16 %v1157
        %v2153 = vunpack.c.l.b16 %v1158
        %v2154 = vunpack.c.h.b16 %v1158
        %v2155 = vunpack.c.l.b16 %v1159
        %v2156 = vunpack.c.h.b16 %v1159
        %v2157 = vunpack.c.l.b16 %v1160
        %v2158 = vunpack.c.h.b16 %v1160
        %v2159 = vunpack.c.l.b16 %v1161
        %v2160 = vunpack.c.h.b16 %v1161
        %v2161 = vunpack.c.l.b16 %v1162
        %v2162 = vunpack.c.h.b16 %v1162
        %v2163 = vunpack.c.l.b16 %v1163
        %v2164 = vunpack.c.h.b16 %v1163
        %v2165 = vunpack.c.l.b16 %v1164
        %v2166 = vunpack.c.h.b16 %v1164
        %v2167 = vunpack.c.l.b16 %v1165
        %v2168 = vunpack.c.h.b16 %v1165
        %v2169 = vunpack.c.l.b16 %v1166
        %v2170 = vunpack.c.h.b16 %v1166
        %v2171 = vunpack.c.l.b16 %v1167
        %v2172 = vunpack.c.h.b16 %v1167
        %v2173 = vunpack.c.l.b16 %v1168
        %v2174 = vunpack.c.h.b16 %v1168
        %v2175 = vunpack.c.l.b16 %v1169
        %v2176 = vunpack.c.h.b16 %v1169
        %v2177 = vunpack.c.l.b16 %v1170
        %v2178 = vunpack.c.h.b16 %v1170
        %v2179 = vunpack.c.l.b16 %v1171
        %v2180 = vunpack.c.h.b16 %v1171
        %v2181 = vunpack.c.l.b16 %v1172
        %v2182 = vunpack.c.h.b16 %v1172
        %v2183 = vunpack.c.l.b16 %v1173
        %v2184 = vunpack.c.h.b16 %v1173
        %v2185 = vunpack.c.l.b16 %v1174
        %v2186 = vunpack.c.h.b16 %v1174
        %v2187 = vunpack.c.l.b16 %v1175
        %v2188 = vunpack.c.h.b16 %v1175
        %v2189 = vunpack.c.l.b16 %v1176
        %v2190 = vunpack.c.h.b16 %v1176
        %v2191 = vunpack.c.l.b16 %v1177
        %v2192 = vunpack.c.h.b16 %v1177
        %v2193 = vunpack.c.l.b16 %v1178
        %v2194 = vunpack.c.h.b16 %v1178
        %v2195 = vunpack.c.l.b16 %v1179
        %v2196 = vunpack.c.h.b16 %v1179
        %v2197 = vunpack.c.l.b16 %v1180
        %v2198 = vunpack.c.h.b16 %v1180
        %v2199 = vunpack.c.l.b16 %v1181
        %v2200 = vunpack.c.h.b16 %v1181
        %v2201 = vunpack.c.l.b16 %v1182
        %v2202 = vunpack.c.h.b16 %v1182
        %v2203 = vunpack.c.l.b16 %v1183
        %v2204 = vunpack.c.h.b16 %v1183
        %v2205 = vunpack.c.l.b16 %v1184
        %v2206 = vunpack.c.h.b16 %v1184
        %v2207 = vunpack.c.l.b16 %v1185
        %v2208 = vunpack.c.h.b16 %v1185
        %v2209 = vunpack.c.l.b16 %v1186
        %v2210 = vunpack.c.h.b16 %v1186
        %v2211 = vunpack.c.l.b16 %v1187
        %v2212 = vunpack.c.h.b16 %v1187
        %v2213 = vunpack.c.l.b16 %v1188
        %v2214 = vunpack.c.h.b16 %v1188
        %v2215 = vunpack.c.l.b16 %v1189
        %v2216 = vunpack.c.h.b16 %v1189
        %v2217 = vunpack.c.l.b16 %v1190
        %v2218 = vunpack.c.h.b16 %v1190
        %v2219 = vunpack.c.l.b16 %v1191
        %v2220 = vunpack.c.h.b16 %v1191
        %v2221 = vunpack.c.l.b16 %v1192
        %v2222 = vunpack.c.h.b16 %v1192
        %v2223 = vunpack.c.l.b16 %v1193
        %v2224 = vunpack.c.h.b16 %v1193
        %v2225 = vunpack.c.l.b16 %v1194
        %v2226 = vunpack.c.h.b16 %v1194
        %v2227 = vunpack.c.l.b16 %v1195
        %v2228 = vunpack.c.h.b16 %v1195
        %v2229 = vunpack.c.l.b16 %v1196
        %v2230 = vunpack.c.h.b16 %v1196
        %v2231 = vunpack.c.l.b16 %v1197
        %v2232 = vunpack.c.h.b16 %v1197
        %v2233 = vunpack.c.l.b16 %v1198
        %v2234 = vunpack.c.h.b16 %v1198
        %v2235 = vunpack.c.l.b16 %v1199
        %v2236 = vunpack.c.h.b16 %v1199
        %v2237 = vunpack.c.l.b16 %v1200
        %v2238 = vunpack.c.h.b16 %v1200
        %v2239 = vunpack.c.l.b16 %v1201
        %v2240 = vunpack.c.h.b16 %v1201
        %v2241 = vunpack.c.l.b16 %v1202
        %v2242 = vunpack.c.h.b16 %v1202
        %v2243 = vunpack.c.l.b16 %v1203
        %v2244 = vunpack.c.h.b16 %v1203
        %v2245 = vunpack.c.l.b16 %v1204
        %v2246 = vunpack.c.h.b16 %v1204
        %v2247 = vunpack.c.l.b16 %v1205
        %v2248 = vunpack.c.h.b16 %v1205
        %v2249 = vunpack.c.l.b16 %v1206
        %v2250 = vunpack.c.h.b16 %v1206
        %v2251 = vunpack.c.l.b16 %v1207
        %v2252 = vunpack.c.h.b16 %v1207
        %v2253 = vunpack.c.l.b16 %v1208
        %v2254 = vunpack.c.h.b16 %v1208
        %v2255 = vunpack.c.l.b16 %v1209
        %v2256 = vunpack.c.h.b16 %v1209
        %v2257 = vunpack.c.l.b16 %v1210
        %v2258 = vunpack.c.h.b16 %v1210
        %v2259 = vunpack.c.l.b16 %v1211
        %v2260 = vunpack.c.h.b16 %v1211
        %v2261 = vunpack.c.l.b16 %v1212
        %v2262 = vunpack.c.h.b16 %v1212
        %v2263 = vunpack.c.l.b16 %v1213
        %v2264 = vunpack.c.h.b16 %v1213
        %v2265 = vunpack.c.l.b16 %v1214
        %v2266 = vunpack.c.h.b16 %v1214
        %v2267 = vunpack.c.l.b16 %v1215
        %v2268 = vunpack.c.h.b16 %v1215
        %v2269 = vunpack.c.l.b16 %v1216
        %v2270 = vunpack.c.h.b16 %v1216
        %v2271 = vunpack.c.l.b16 %v1217
        %v2272 = vunpack.c.h.b16 %v1217
        %v2273 = vunpack.c.l.b16 %v1218
        %v2274 = vunpack.c.h.b16 %v1218
        %v2275 = vunpack.c.l.b16 %v1219
        %v2276 = vunpack.c.h.b16 %v1219
        %v2277 = vunpack.c.l.b16 %v1220
        %v2278 = vunpack.c.h.b16 %v1220
        %v2279 = vunpack.c.l.b16 %v1221
        %v2280 = vunpack.c.h.b16 %v1221
        %v2281 = vunpack.c.l.b16 %v1222
        %v2282 = vunpack.c.h.b16 %v1222
        %v2283 = vunpack.c.l.b16 %v1223
        %v2284 = vunpack.c.h.b16 %v1223
        %v2285 = vunpack.c.l.b16 %v1224
        %v2286 = vunpack.c.h.b16 %v1224
        %v2287 = vunpack.c.l.b16 %v1225
        %v2288 = vunpack.c.h.b16 %v1225
        %v2289 = vunpack.c.l.b16 %v1226
        %v2290 = vunpack.c.h.b16 %v1226
        %v2291 = vunpack.c.l.b16 %v1227
        %v2292 = vunpack.c.h.b16 %v1227
        %v2293 = vunpack.c.l.b16 %v1228
        %v2294 = vunpack.c.h.b16 %v1228
        %v2295 = vunpack.c.l.b16 %v1229
        %v2296 = vunpack.c.h.b16 %v1229
        %v2297 = vunpack.c.l.b16 %v1230
        %v2298 = vunpack.c.h.b16 %v1230
        %v2299 = vunpack.c.l.b16 %v1231
        %v2300 = vunpack.c.h.b16 %v1231
        %v2301 = vunpack.c.l.b16 %v1232
        %v2302 = vunpack.c.h.b16 %v1232
        %v2303 = vunpack.c.l.b16 %v1233
        %v2304 = vunpack.c.h.b16 %v1233
        %v2305 = vunpack.c.l.b16 %v1234
        %v2306 = vunpack.c.h.b16 %v1234
        %v2307 = vunpack.c.l.b16 %v1235
        %v2308 = vunpack.c.h.b16 %v1235
        %v2309 = vunpack.c.l.b16 %v1236
        %v2310 = vunpack.c.h.b16 %v1236
        %v2311 = vunpack.c.l.b16 %v1237
        %v2312 = vunpack.c.h.b16 %v1237
        %v2313 = vunpack.c.l.b16 %v1238
        %v2314 = vunpack.c.h.b16 %v1238
        %v2315 = vunpack.c.l.b16 %v1239
        %v2316 = vunpack.c.h.b16 %v1239
        %v2317 = vunpack.c.l.b16 %v1240
        %v2318 = vunpack.c.h.b16 %v1240
        %v2319 = vunpack.c.l.b16 %v1241
        %v2320 = vunpack.c.h.b16 %v1241
        %v2321 = vunpack.c.l.b16 %v1242
        %v2322 = vunpack.c.h.b16 %v1242
        %v2323 = vunpack.c.l.b16 %v1243
        %v2324 = vunpack.c.h.b16 %v1243
        %v2325 = vunpack.c.l.b16 %v1244
        %v2326 = vunpack.c.h.b16 %v1244
        %v2327 = vunpack.c.l.b16 %v1245
        %v2328 = vunpack.c.h.b16 %v1245
        %v2329 = vunpack.c.l.b16 %v1246
        %v2330 = vunpack.c.h.b16 %v1246
        %v2331 = vunpack.c.l.b16 %v1247
        %v2332 = vunpack.c.h.b16 %v1247
        %v2333 = vunpack.c.l.b16 %v1248
        %v2334 = vunpack.c.h.b16 %v1248
        %v2335 = vunpack.c.l.b16 %v1249
        %v2336 = vunpack.c.h.b16 %v1249
        %v2337 = vunpack.c.l.b16 %v1250
        %v2338 = vunpack.c.h.b16 %v1250
        %v2339 = vunpack.c.l.b16 %v1251
        %v2340 = vunpack.c.h.b16 %v1251
        %v2341 = vunpack.c.l.b16 %v1252
        %v2342 = vunpack.c.h.b16 %v1252
        %v2343 = vunpack.c.l.b16 %v1253
        %v2344 = vunpack.c.h.b16 %v1253
        %v2345 = vunpack.c.l.b16 %v1254
        %v2346 = vunpack.c.h.b16 %v1254
        %v2347 = vunpack.c.l.b16 %v1255
        %v2348 = vunpack.c.h.b16 %v1255
        %v2349 = vunpack.c.l.b16 %v1256
        %v2350 = vunpack.c.h.b16 %v1256
        %v2351 = vunpack.c.l.b16 %v1257
        %v2352 = vunpack.c.h.b16 %v1257
        %v2353 = vunpack.c.l.b16 %v1258
        %v2354 = vunpack.c.h.b16 %v1258
        %v2355 = vunpack.c.l.b16 %v1259
        %v2356 = vunpack.c.h.b16 %v1259
        %v2357 = vunpack.c.l.b16 %v1260
        %v2358 = vunpack.c.h.b16 %v1260
        %v2359 = vunpack.c.l.b16 %v1261
        %v2360 = vunpack.c.h.b16 %v1261
        %v2361 = vunpack.c.l.b16 %v1262
        %v2362 = vunpack.c.h.b16 %v1262
        %v2363 = vunpack.c.l.b16 %v1263
        %v2364 = vunpack.c.h.b16 %v1263
        %v2365 = vunpack.c.l.b16 %v1264
        %v2366 = vunpack.c.h.b16 %v1264
        %v2367 = vunpack.c.l.b16 %v1265
        %v2368 = vunpack.c.h.b16 %v1265
        %v2369 = vunpack.c.l.b16 %v1266
        %v2370 = vunpack.c.h.b16 %v1266
        %v2371 = vunpack.c.l.b16 %v1267
        %v2372 = vunpack.c.h.b16 %v1267
        %v2373 = vunpack.c.l.b16 %v1268
        %v2374 = vunpack.c.h.b16 %v1268
        %v2375 = vunpack.c.l.b16 %v1269
        %v2376 = vunpack.c.h.b16 %v1269
        %v2377 = vunpack.c.l.b16 %v1270
        %v2378 = vunpack.c.h.b16 %v1270
        %v2379 = vunpack.c.l.b16 %v1271
        %v2380 = vunpack.c.h.b16 %v1271
        %v2381 = vunpack.c.l.b16 %v1272
        %v2382 = vunpack.c.h.b16 %v1272
        %v2383 = vunpack.c.l.b16 %v1273
        %v2384 = vunpack.c.h.b16 %v1273
        %v2385 = vunpack.c.l.b16 %v1274
        %v2386 = vunpack.c.h.b16 %v1274
        %v2387 = vunpack.c.l.b16 %v1275
        %v2388 = vunpack.c.h.b16 %v1275
        %v2389 = vunpack.c.l.b16 %v1276
        %v2390 = vunpack.c.h.b16 %v1276
        %v2391 = vunpack.c.l.b16 %v1277
        %v2392 = vunpack.c.h.b16 %v1277
        %v2393 = vunpack.c.l.b16 %v1278
        %v2394 = vunpack.c.h.b16 %v1278
        %v2395 = vunpack.c.l.b16 %v1279
        %v2396 = vunpack.c.h.b16 %v1279
        %v2397 = vunpack.c.l.b16 %v1280
        %v2398 = vunpack.c.h.b16 %v1280
        %v2399 = vunpack.c.l.b16 %v1281
        %v2400 = vunpack.c.h.b16 %v1281
        %v2401 = vunpack.c.l.b16 %v1282
        %v2402 = vunpack.c.h.b16 %v1282
        %v2403 = vunpack.c.l.b16 %v1283
        %v2404 = vunpack.c.h.b16 %v1283
        %v2405 = vunpack.c.l.b16 %v1284
        %v2406 = vunpack.c.h.b16 %v1284
        %v2407 = vunpack.c.l.b16 %v1285
        %v2408 = vunpack.c.h.b16 %v1285
        %v2409 = vunpack.c.l.b16 %v1286
        %v2410 = vunpack.c.h.b16 %v1286
        %v2411 = vunpack.c.l.b16 %v1287
        %v2412 = vunpack.c.h.b16 %v1287
        %v2413 = vunpack.c.l.b16 %v1288
        %v2414 = vunpack.c.h.b16 %v1288
        %v2415 = vunpack.c.l.b16 %v1289
        %v2416 = vunpack.c.h.b16 %v1289
        %v2417 = vunpack.c.l.b16 %v1290
        %v2418 = vunpack.c.h.b16 %v1290
        %v2419 = vunpack.c.l.b16 %v1291
        %v2420 = vunpack.c.h.b16 %v1291
        %v2421 = vunpack.c.l.b16 %v1292
        %v2422 = vunpack.c.h.b16 %v1292
        %v2423 = vunpack.c.l.b16 %v1293
        %v2424 = vunpack.c.h.b16 %v1293
        %v2425 = vunpack.c.l.b16 %v1294
        %v2426 = vunpack.c.h.b16 %v1294
        %v2427 = vunpack.c.l.b16 %v1295
        %v2428 = vunpack.c.h.b16 %v1295
        %v2429 = vunpack.c.l.b16 %v1296
        %v2430 = vunpack.c.h.b16 %v1296
        %v2431 = vunpack.c.l.b16 %v1297
        %v2432 = vunpack.c.h.b16 %v1297
        %v2433 = vunpack.c.l.b16 %v1298
        %v2434 = vunpack.c.h.b16 %v1298
        %v2435 = vunpack.c.l.b16 %v1299
        %v2436 = vunpack.c.h.b16 %v1299
        %v2437 = vunpack.c.l.b16 %v1300
        %v2438 = vunpack.c.h.b16 %v1300
        %v2439 = vunpack.c.l.b16 %v1301
        %v2440 = vunpack.c.h.b16 %v1301
        %v2441 = vunpack.c.l.b16 %v1302
        %v2442 = vunpack.c.h.b16 %v1302
        %v2443 = vunpack.c.l.b16 %v1303
        %v2444 = vunpack.c.h.b16 %v1303
        %v2445 = vunpack.c.l.b16 %v1304
        %v2446 = vunpack.c.h.b16 %v1304
        %v2447 = vunpack.c.l.b16 %v1305
        %v2448 = vunpack.c.h.b16 %v1305
        %v2449 = vunpack.c.l.b16 %v1306
        %v2450 = vunpack.c.h.b16 %v1306
        %v2451 = vunpack.c.l.b16 %v1307
        %v2452 = vunpack.c.h.b16 %v1307
        %v2453 = vunpack.c.l.b16 %v1308
        %v2454 = vunpack.c.h.b16 %v1308
        %v2455 = vunpack.c.l.b16 %v1309
        %v2456 = vunpack.c.h.b16 %v1309
        %v2457 = vunpack.c.l.b16 %v1310
        %v2458 = vunpack.c.h.b16 %v1310
        %v2459 = vunpack.c.l.b16 %v1311
        %v2460 = vunpack.c.h.b16 %v1311
        %v2461 = vunpack.c.l.b16 %v1312
        %v2462 = vunpack.c.h.b16 %v1312
        %v2463 = vunpack.c.l.b16 %v1313
        %v2464 = vunpack.c.h.b16 %v1313
        %v2465 = vunpack.c.l.b16 %v1314
        %v2466 = vunpack.c.h.b16 %v1314
        %v2467 = vpack.c.b16 %v1963, %v1955
        %v2468 = vpack.c.b16 %v1964, %v1956
        %v2469 = vpack.c.b16 %v1965, %v1957
        %v2470 = vpack.c.b16 %v1966, %v1958
        %v2471 = vpack.c.b16 %v1967, %v1959
        %v2472 = vpack.c.b16 %v1968, %v1960
        %v2473 = vpack.c.b16 %v1969, %v1961
        %v2474 = vpack.c.b16 %v1970, %v1962
        %v2475 = vpack.c.b16 %v1979, %v1971
        %v2476 = vpack.c.b16 %v1980, %v1972
        %v2477 = vpack.c.b16 %v1981, %v1973
        %v2478 = vpack.c.b16 %v1982, %v1974
        %v2479 = vpack.c.b16 %v1983, %v1975
        %v2480 = vpack.c.b16 %v1984, %v1976
        %v2481 = vpack.c.b16 %v1985, %v1977
        %v2482 = vpack.c.b16 %v1986, %v1978
        %v2483 = vpack.c.b16 %v1995, %v1987
        %v2484 = vpack.c.b16 %v1996, %v1988
        %v2485 = vpack.c.b16 %v1997, %v1989
        %v2486 = vpack.c.b16 %v1998, %v1990
        %v2487 = vpack.c.b16 %v1999, %v1991
        %v2488 = vpack.c.b16 %v2000, %v1992
        %v2489 = vpack.c.b16 %v2001, %v1993
        %v2490 = vpack.c.b16 %v2002, %v1994
        %v2491 = vpack.c.b16 %v2011, %v2003
        %v2492 = vpack.c.b16 %v2012, %v2004
        %v2493 = vpack.c.b16 %v2013, %v2005
        %v2494 = vpack.c.b16 %v2014, %v2006
        %v2495 = vpack.c.b16 %v2015, %v2007
        %v2496 = vpack.c.b16 %v2016, %v2008
        %v2497 = vpack.c.b16 %v2017, %v2009
        %v2498 = vpack.c.b16 %v2018, %v2010
        %v2499 = vpack.c.b16 %v2027, %v2019
        %v2500 = vpack.c.b16 %v2028, %v2020
        %v2501 = vpack.c.b16 %v2029, %v2021
        %v2502 = vpack.c.b16 %v2030, %v2022
        %v2503 = vpack.c.b16 %v2031, %v2023
        %v2504 = vpack.c.b16 %v2032, %v2024
        %v2505 = vpack.c.b16 %v2033, %v2025
        %v2506 = vpack.c.b16 %v2034, %v2026
        %v2507 = vpack.c.b16 %v2043, %v2035
        %v2508 = vpack.c.b16 %v2044, %v2036
        %v2509 = vpack.c.b16 %v2045, %v2037
        %v2510 = vpack.c.b16 %v2046, %v2038
        %v2511 = vpack.c.b16 %v2047, %v2039
        %v2512 = vpack.c.b16 %v2048, %v2040
        %v2513 = vpack.c.b16 %v2049, %v2041
        %v2514 = vpack.c.b16 %v2050, %v2042
        %v2515 = vpack.c.b16 %v2059, %v2051
        %v2516 = vpack.c.b16 %v2060, %v2052
        %v2517 = vpack.c.b16 %v2061, %v2053
        %v2518 = vpack.c.b16 %v2062, %v2054
        %v2519 = vpack.c.b16 %v2063, %v2055
        %v2520 = vpack.c.b16 %v2064, %v2056
        %v2521 = vpack.c.b16 %v2065, %v2057
        %v2522 = vpack.c.b16 %v2066, %v2058
        %v2523 = vpack.c.b16 %v2075, %v2067
        %v2524 = vpack.c.b16 %v2076, %v2068
        %v2525 = vpack.c.b16 %v2077, %v2069
        %v2526 = vpack.c.b16 %v2078, %v2070
        %v2527 = vpack.c.b16 %v2079, %v2071
        %v2528 = vpack.c.b16 %v2080, %v2072
        %v2529 = vpack.c.b16 %v2081, %v2073
        %v2530 = vpack.c.b16 %v2082, %v2074
        %v2531 = vpack.c.b16 %v2091, %v2083
        %v2532 = vpack.c.b16 %v2092, %v2084
        %v2533 = vpack.c.b16 %v2093, %v2085
        %v2534 = vpack.c.b16 %v2094, %v2086
        %v2535 = vpack.c.b16 %v2095, %v2087
        %v2536 = vpack.c.b16 %v2096, %v2088
        %v2537 = vpack.c.b16 %v2097, %v2089
        %v2538 = vpack.c.b16 %v2098, %v2090
        %v2539 = vpack.c.b16 %v2107, %v2099
        %v2540 = vpack.c.b16 %v2108, %v2100
        %v2541 = vpack.c.b16 %v2109, %v2101
        %v2542 = vpack.c.b16 %v2110, %v2102
        %v2543 = vpack.c.b16 %v2111, %v2103
        %v2544 = vpack.c.b16 %v2112, %v2104
        %v2545 = vpack.c.b16 %v2113, %v2105
        %v2546 = vpack.c.b16 %v2114, %v2106
        %v2547 = vpack.c.b16 %v2123, %v2115
        %v2548 = vpack.c.b16 %v2124, %v2116
        %v2549 = vpack.c.b16 %v2125, %v2117
        %v2550 = vpack.c.b16 %v2126, %v2118
        %v2551 = vpack.c.b16 %v2127, %v2119
        %v2552 = vpack.c.b16 %v2128, %v2120
        %v2553 = vpack.c.b16 %v2129, %v2121
        %v2554 = vpack.c.b16 %v2130, %v2122
        %v2555 = vpack.c.b16 %v2139, %v2131
        %v2556 = vpack.c.b16 %v2140, %v2132
        %v2557 = vpack.c.b16 %v2141, %v2133
        %v2558 = vpack.c.b16 %v2142, %v2134
        %v2559 = vpack.c.b16 %v2143, %v2135
        %v2560 = vpack.c.b16 %v2144, %v2136
        %v2561 = vpack.c.b16 %v2145, %v2137
        %v2562 = vpack.c.b16 %v2146, %v2138
        %v2563 = vpack.c.b16 %v2155, %v2147
        %v2564 = vpack.c.b16 %v2156, %v2148
        %v2565 = vpack.c.b16 %v2157, %v2149
        %v2566 = vpack.c.b16 %v2158, %v2150
        %v2567 = vpack.c.b16 %v2159, %v2151
        %v2568 = vpack.c.b16 %v2160, %v2152
        %v2569 = vpack.c.b16 %v2161, %v2153
        %v2570 = vpack.c.b16 %v2162, %v2154
        %v2571 = vpack.c.b16 %v2171, %v2163
        %v2572 = vpack.c.b16 %v2172, %v2164
        %v2573 = vpack.c.b16 %v2173, %v2165
        %v2574 = vpack.c.b16 %v2174, %v2166
        %v2575 = vpack.c.b16 %v2175, %v2167
        %v2576 = vpack.c.b16 %v2176, %v2168
        %v2577 = vpack.c.b16 %v2177, %v2169
        %v2578 = vpack.c.b16 %v2178, %v2170
        %v2579 = vpack.c.b16 %v2187, %v2179
        %v2580 = vpack.c.b16 %v2188, %v2180
        %v2581 = vpack.c.b16 %v2189, %v2181
        %v2582 = vpack.c.b16 %v2190, %v2182
        %v2583 = vpack.c.b16 %v2191, %v2183
        %v2584 = vpack.c.b16 %v2192, %v2184
        %v2585 = vpack.c.b16 %v2193, %v2185
        %v2586 = vpack.c.b16 %v2194, %v2186
        %v2587 = vpack.c.b16 %v2203, %v2195
        %v2588 = vpack.c.b16 %v2204, %v2196
        %v2589 = vpack.c.b16 %v2205, %v2197
        %v2590 = vpack.c.b16 %v2206, %v2198
        %v2591 = vpack.c.b16 %v2207, %v2199
        %v2592 = vpack.c.b16 %v2208, %v2200
        %v2593 = vpack.c.b16 %v2209, %v2201
        %v2594 = vpack.c.b16 %v2210, %v2202
        %v2595 = vpack.c.b16 %v2219, %v2211
        %v2596 = vpack.c.b16 %v2220, %v2212
        %v2597 = vpack.c.b16 %v2221, %v2213
        %v2598 = vpack.c.b16 %v2222, %v2214
        %v2599 = vpack.c.b16 %v2223, %v2215
        %v2600 = vpack.c.b16 %v2224, %v2216
        %v2601 = vpack.c.b16 %v2225, %v2217
        %v2602 = vpack.c.b16 %v2226, %v2218
        %v2603 = vpack.c.b16 %v2235, %v2227
        %v2604 = vpack.c.b16 %v2236, %v2228
        %v2605 = vpack.c.b16 %v2237, %v2229
        %v2606 = vpack.c.b16 %v2238, %v2230
        %v2607 = vpack.c.b16 %v2239, %v2231
        %v2608 = vpack.c.b16 %v2240, %v2232
        %v2609 = vpack.c.b16 %v2241, %v2233
        %v2610 = vpack.c.b16 %v2242, %v2234
        %v2611 = vpack.c.b16 %v2251, %v2243
        %v2612 = vpack.c.b16 %v2252, %v2244
        %v2613 = vpack.c.b16 %v2253, %v2245
        %v2614 = vpack.c.b16 %v2254, %v2246
        %v2615 = vpack.c.b16 %v2255, %v2247
        %v2616 = vpack.c.b16 %v2256, %v2248
        %v2617 = vpack.c.b16 %v2257, %v2249
        %v2618 = vpack.c.b16 %v2258, %v2250
        %v2619 = vpack.c.b16 %v2267, %v2259
        %v2620 = vpack.c.b16 %v2268, %v2260
        %v2621 = vpack.c.b16 %v2269, %v2261
        %v2622 = vpack.c.b16 %v2270, %v2262
        %v2623 = vpack.c.b16 %v2271, %v2263
        %v2624 = vpack.c.b16 %v2272, %v2264
        %v2625 = vpack.c.b16 %v2273, %v2265
        %v2626 = vpack.c.b16 %v2274, %v2266
        %v2627 = vpack.c.b16 %v2283, %v2275
        %v2628 = vpack.c.b16 %v2284, %v2276
        %v2629 = vpack.c.b16 %v2285, %v2277
        %v2630 = vpack.c.b16 %v2286, %v2278
        %v2631 = vpack.c.b16 %v2287, %v2279
        %v2632 = vpack.c.b16 %v2288, %v2280
        %v2633 = vpack.c.b16 %v2289, %v2281
        %v2634 = vpack.c.b16 %v2290, %v2282
        %v2635 = vpack.c.b16 %v2299, %v2291
        %v2636 = vpack.c.b16 %v2300, %v2292
        %v2637 = vpack.c.b16 %v2301, %v2293
        %v2638 = vpack.c.b16 %v2302, %v2294
        %v2639 = vpack.c.b16 %v2303, %v2295
        %v2640 = vpack.c.b16 %v2304, %v2296
        %v2641 = vpack.c.b16 %v2305, %v2297
        %v2642 = vpack.c.b16 %v2306, %v2298
        %v2643 = vpack.c.b16 %v2315, %v2307
        %v2644 = vpack.c.b16 %v2316, %v2308
        %v2645 = vpack.c.b16 %v2317, %v2309
        %v2646 = vpack.c.b16 %v2318, %v2310
        %v2647 = vpack.c.b16 %v2319, %v2311
        %v2648 = vpack.c.b16 %v2320, %v2312
        %v2649 = vpack.c.b16 %v2321, %v2313
        %v2650 = vpack.c.b16 %v2322, %v2314
        %v2651 = vpack.c.b16 %v2331, %v2323
        %v2652 = vpack.c.b16 %v2332, %v2324
        %v2653 = vpack.c.b16 %v2333, %v2325
        %v2654 = vpack.c.b16 %v2334, %v2326
        %v2655 = vpack.c.b16 %v2335, %v2327
        %v2656 = vpack.c.b16 %v2336, %v2328
        %v2657 = vpack.c.b16 %v2337, %v2329
        %v2658 = vpack.c.b16 %v2338, %v2330
        %v2659 = vpack.c.b16 %v2347, %v2339
        %v2660 = vpack.c.b16 %v2348, %v2340
        %v2661 = vpack.c.b16 %v2349, %v2341
        %v2662 = vpack.c.b16 %v2350, %v2342
        %v2663 = vpack.c.b16 %v2351, %v2343
        %v2664 = vpack.c.b16 %v2352, %v2344
        %v2665 = vpack.c.b16 %v2353, %v2345
        %v2666 = vpack.c.b16 %v2354, %v2346
        %v2667 = vpack.c.b16 %v2363, %v2355
        %v2668 = vpack.c.b16 %v2364, %v2356
        %v2669 = vpack.c.b16 %v2365, %v2357
        %v2670 = vpack.c.b16 %v2366, %v2358
        %v2671 = vpack.c.b16 %v2367, %v2359
        %v2672 = vpack.c.b16 %v2368, %v2360
        %v2673 = vpack.c.b16 %v2369, %v2361
        %v2674 = vpack.c.b16 %v2370, %v2362
        %v2675 = vpack.c.b16 %v2379, %v2371
        %v2676 = vpack.c.b16 %v2380, %v2372
        %v2677 = vpack.c.b16 %v2381, %v2373
        %v2678 = vpack.c.b16 %v2382, %v2374
        %v2679 = vpack.c.b16 %v2383, %v2375
        %v2680 = vpack.c.b16 %v2384, %v2376
        %v2681 = vpack.c.b16 %v2385, %v2377
        %v2682 = vpack.c.b16 %v2386, %v2378
        %v2683 = vpack.c.b16 %v2395, %v2387
        %v2684 = vpack.c.b16 %v2396, %v2388
        %v2685 = vpack.c.b16 %v2397, %v2389
        %v2686 = vpack.c.b16 %v2398, %v2390
        %v2687 = vpack.c.b16 %v2399, %v2391
        %v2688 = vpack.c.b16 %v2400, %v2392
        %v2689 = vpack.c.b16 %v2401, %v2393
        %v2690 = vpack.c.b16 %v2402, %v2394
        %v2691 = vpack.c.b16 %v2411, %v2403
        %v2692 = vpack.c.b16 %v2412, %v2404
        %v2693 = vpack.c.b16 %v2413, %v2405
        %v2694 = vpack.c.b16 %v2414, %v2406
        %v2695 = vpack.c.b16 %v2415, %v2407
        %v2696 = vpack.c.b16 %v2416, %v2408
        %v2697 = vpack.c.b16 %v2417, %v2409
        %v2698 = vpack.c.b16 %v2418, %v2410
        %v2699 = vpack.c.b16 %v2427, %v2419
        %v2700 = vpack.c.b16 %v2428, %v2420
        %v2701 = vpack.c.b16 %v2429, %v2421
        %v2702 = vpack.c.b16 %v2430, %v2422
        %v2703 = vpack.c.b16 %v2431, %v2423
        %v2704 = vpack.c.b16 %v2432, %v2424
        %v2705 = vpack.c.b16 %v2433, %v2425
        %v2706 = vpack.c.b16 %v2434, %v2426
        %v2707 = vpack.c.b16 %v2443, %v2435
        %v2708 = vpack.c.b16 %v2444, %v2436
        %v2709 = vpack.c.b16 %v2445, %v2437
        %v2710 = vpack.c.b16 %v2446, %v2438
        %v2711 = vpack.c.b16 %v2447, %v2439
        %v2712 = vpack.c.b16 %v2448, %v2440
        %v2713 = vpack.c.b16 %v2449, %v2441
        %v2714 = vpack.c.b16 %v2450, %v2442
        %v2715 = vpack.c.b16 %v2459, %v2451
        %v2716 = vpack.c.b16 %v2460, %v2452
        %v2717 = vpack.c.b16 %v2461, %v2453
        %v2718 = vpack.c.b16 %v2462, %v2454
        %v2719 = vpack.c.b16 %v2463, %v2455
        %v2720 = vpack.c.b16 %v2464, %v2456
        %v2721 = vpack.c.b16 %v2465, %v2457
        %v2722 = vpack.c.b16 %v2466, %v2458
        %2979 = vmatprep.subr.bf16.mxu0 %v804
        %2980 = vmatpush1.bf16.msra.mxu0 %v803
        %2981 = vmatprep.subr.bf16.mxu0 %v808
        %2982 = vmatpush1.bf16.msra.mxu0 %v807
        %2983 = vmatprep.subr.bf16.mxu0 %v812
        %2984 = vmatpush1.bf16.msra.mxu0 %v811
        %2985 = vmatprep.subr.bf16.mxu0 %v816
        %2986 = vmatpush1.bf16.msra.mxu0 %v815
        %2987 = vmatprep.subr.bf16.mxu0 %v820
        %2988 = vmatpush1.bf16.msra.mxu0 %v819
        %2989 = vmatprep.subr.bf16.mxu0 %v824
        %2990 = vmatpush1.bf16.msra.mxu0 %v823
        %2991 = vmatprep.subr.bf16.mxu0 %v828
        %2992 = vmatpush1.bf16.msra.mxu0 %v827
        %2993 = vmatprep.subr.bf16.mxu0 %v832
        %2994 = vmatpush1.bf16.msra.mxu0 %v831
        %2995 = vmatprep.subr.bf16.mxu0 %v836
        %2996 = vmatpush1.bf16.msra.mxu0 %v835
        %2997 = vmatprep.subr.bf16.mxu0 %v840
        %2998 = vmatpush1.bf16.msra.mxu0 %v839
        %2999 = vmatprep.subr.bf16.mxu0 %v844
        %3000 = vmatpush1.bf16.msra.mxu0 %v843
        %3001 = vmatprep.subr.bf16.mxu0 %v848
        %3002 = vmatpush1.bf16.msra.mxu0 %v847
        %3003 = vmatprep.subr.bf16.mxu0 %v852
        %3004 = vmatpush1.bf16.msra.mxu0 %v851
        %3005 = vmatprep.subr.bf16.mxu0 %v856
        %3006 = vmatpush1.bf16.msra.mxu0 %v855
        %3007 = vmatprep.subr.bf16.mxu0 %v860
        %3008 = vmatpush1.bf16.msra.mxu0 %v859
        %3009 = vmatprep.subr.bf16.mxu0 %v864
        %3010 = vmatpush1.bf16.msra.mxu0 %v863
        %3011 = vmatprep.mubr.bf16.mxu0 %v2468
        %3012 = vmatmul.mubr.bf16.gmra.mrb[0].mxu0 %v2467
        %v3013 = vpop.f32.mrb[0].mxu0
        %v3014 = vadd.f32 %v1382, %v3013
        %v3015 = vpop.f32.mrb[0].mxu0
        %v3016 = vadd.f32 %v1382, %v3015
        %v3017 = vpop.f32.mrb[0].mxu0
        %v3018 = vadd.f32 %v1387, %v3017
        %v3019 = vpop.f32.mrb[0].mxu0
        %v3020 = vadd.f32 %v1387, %v3019
        %3021 = vmatprep.mubr.bf16.mxu0 %v2476
        %3022 = vmatmul.mubr.bf16.gmra.mrb[0].mxu0 %v2475
        %v3023 = vpop.f32.mrb[0].mxu0
        %v3024 = vadd.f32 %v1392, %v3023
        %v3025 = vpop.f32.mrb[0].mxu0
        %v3026 = vadd.f32 %v1392, %v3025
        %v3027 = vpop.f32.mrb[0].mxu0
        %v3028 = vadd.f32 %v1397, %v3027
        %v3029 = vpop.f32.mrb[0].mxu0
        %v3030 = vadd.f32 %v1397, %v3029
        %3031 = vmatprep.mubr.bf16.mxu0 %v2484
        %3032 = vmatmul.mubr.bf16.gmra.mrb[0].mxu0 %v2483
        %v3033 = vpop.f32.mrb[0].mxu0
        %v3034 = vadd.f32 %v1402, %v3033
        %v3035 = vpop.f32.mrb[0].mxu0
        %v3036 = vadd.f32 %v1402, %v3035
        %v3037 = vpop.f32.mrb[0].mxu0
        %v3038 = vadd.f32 %v1407, %v3037
        %v3039 = vpop.f32.mrb[0].mxu0
        %v3040 = vadd.f32 %v1407, %v3039
        %3041 = vmatprep.mubr.bf16.mxu0 %v2492
        %3042 = vmatmul.mubr.bf16.gmra.mrb[0].mxu0 %v2491
        %v3043 = vpop.f32.mrb[0].mxu0
        %v3044 = vadd.f32 %v1412, %v3043
        %v3045 = vpop.f32.mrb[0].mxu0
        %v3046 = vadd.f32 %v1412, %v3045
        %v3047 = vpop.f32.mrb[0].mxu0
        %v3048 = vadd.f32 %v1417, %v3047
        %v3049 = vpop.f32.mrb[0].mxu0
        %v3050 = vadd.f32 %v1417, %v3049
        %3051 = vmatprep.mubr.bf16.mxu0 %v2500
        %3052 = vmatmul.mubr.bf16.gmra.mrb[0].mxu0 %v2499
        %v3053 = vpop.f32.mrb[0].mxu0
        %v3054 = vadd.f32 %v1422, %v3053
        %v3055 = vpop.f32.mrb[0].mxu0
        %v3056 = vadd.f32 %v1422, %v3055
        %v3057 = vpop.f32.mrb[0].mxu0
        %v3058 = vadd.f32 %v1427, %v3057
        %v3059 = vpop.f32.mrb[0].mxu0
        %v3060 = vadd.f32 %v1427, %v3059
        %3061 = vmatprep.mubr.bf16.mxu0 %v2508
        %3062 = vmatmul.mubr.bf16.gmra.mrb[0].mxu0 %v2507
        %v3063 = vpop.f32.mrb[0].mxu0
        %v3064 = vadd.f32 %v1432, %v3063
        %v3065 = vpop.f32.mrb[0].mxu0
        %v3066 = vadd.f32 %v1432, %v3065
        %v3067 = vpop.f32.mrb[0].mxu0
        %v3068 = vadd.f32 %v1437, %v3067
        %v3069 = vpop.f32.mrb[0].mxu0
        %v3070 = vadd.f32 %v1437, %v3069
        %3071 = vmatprep.mubr.bf16.mxu0 %v2516
        %3072 = vmatmul.mubr.bf16.gmra.mrb[0].mxu0 %v2515
        %v3073 = vpop.f32.mrb[0].mxu0
        %v3074 = vadd.f32 %v1442, %v3073
        %v3075 = vpop.f32.mrb[0].mxu0
        %v3076 = vadd.f32 %v1442, %v3075
        %v3077 = vpop.f32.mrb[0].mxu0
        %v3078 = vadd.f32 %v1447, %v3077
        %v3079 = vpop.f32.mrb[0].mxu0
        %v3080 = vadd.f32 %v1447, %v3079
        %3081 = vmatprep.mubr.bf16.mxu0 %v2524
        %3082 = vmatmul.mubr.bf16.gmra.mrb[0].mxu0 %v2523
        %v3083 = vpop.f32.mrb[0].mxu0
        %v3084 = vadd.f32 %v1452, %v3083
        %v3085 = vpop.f32.mrb[0].mxu0
        %v3086 = vadd.f32 %v1452, %v3085
        %v3087 = vpop.f32.mrb[0].mxu0
        %v3088 = vadd.f32 %v1457, %v3087
        %v3089 = vpop.f32.mrb[0].mxu0
        %v3090 = vadd.f32 %v1457, %v3089
        %3091 = vmatprep.mubr.bf16.mxu0 %v2532
        %3092 = vmatmul.mubr.bf16.gmra.mrb[0].mxu0 %v2531
        %v3093 = vpop.f32.mrb[0].mxu0
        %v3094 = vadd.f32 %v1462, %v3093
        %v3095 = vpop.f32.mrb[0].mxu0
        %v3096 = vadd.f32 %v1462, %v3095
        %v3097 = vpop.f32.mrb[0].mxu0
        %v3098 = vadd.f32 %v1467, %v3097
        %v3099 = vpop.f32.mrb[0].mxu0
        %v3100 = vadd.f32 %v1467, %v3099
        %3101 = vmatprep.mubr.bf16.mxu0 %v2540
        %3102 = vmatmul.mubr.bf16.gmra.mrb[0].mxu0 %v2539
        %v3103 = vpop.f32.mrb[0].mxu0
        %v3104 = vadd.f32 %v1472, %v3103
        %v3105 = vpop.f32.mrb[0].mxu0
        %v3106 = vadd.f32 %v1472, %v3105
        %v3107 = vpop.f32.mrb[0].mxu0
        %v3108 = vadd.f32 %v1477, %v3107
        %v3109 = vpop.f32.mrb[0].mxu0
        %v3110 = vadd.f32 %v1477, %v3109
        %3111 = vmatprep.mubr.bf16.mxu0 %v2548
        %3112 = vmatmul.mubr.bf16.gmra.mrb[0].mxu0 %v2547
        %v3113 = vpop.f32.mrb[0].mxu0
        %v3114 = vadd.f32 %v1482, %v3113
        %v3115 = vpop.f32.mrb[0].mxu0
        %v3116 = vadd.f32 %v1482, %v3115
        %v3117 = vpop.f32.mrb[0].mxu0
        %v3118 = vadd.f32 %v1487, %v3117
        %v3119 = vpop.f32.mrb[0].mxu0
        %v3120 = vadd.f32 %v1487, %v3119
        %3121 = vmatprep.mubr.bf16.mxu0 %v2556
        %3122 = vmatmul.mubr.bf16.gmra.mrb[0].mxu0 %v2555
        %v3123 = vpop.f32.mrb[0].mxu0
        %v3124 = vadd.f32 %v1492, %v3123
        %v3125 = vpop.f32.mrb[0].mxu0
        %v3126 = vadd.f32 %v1492, %v3125
        %v3127 = vpop.f32.mrb[0].mxu0
        %v3128 = vadd.f32 %v1497, %v3127
        %v3129 = vpop.f32.mrb[0].mxu0
        %v3130 = vadd.f32 %v1497, %v3129
        %3131 = vmatprep.mubr.bf16.mxu0 %v2564
        %3132 = vmatmul.mubr.bf16.gmra.mrb[0].mxu0 %v2563
        %v3133 = vpop.f32.mrb[0].mxu0
        %v3134 = vadd.f32 %v1502, %v3133
        %v3135 = vpop.f32.mrb[0].mxu0
        %v3136 = vadd.f32 %v1502, %v3135
        %v3137 = vpop.f32.mrb[0].mxu0
        %v3138 = vadd.f32 %v1507, %v3137
        %v3139 = vpop.f32.mrb[0].mxu0
        %v3140 = vadd.f32 %v1507, %v3139
        %3141 = vmatprep.mubr.bf16.mxu0 %v2572
        %3142 = vmatmul.mubr.bf16.gmra.mrb[0].mxu0 %v2571
        %v3143 = vpop.f32.mrb[0].mxu0
        %v3144 = vadd.f32 %v1512, %v3143
        %v3145 = vpop.f32.mrb[0].mxu0
        %v3146 = vadd.f32 %v1512, %v3145
        %v3147 = vpop.f32.mrb[0].mxu0
        %v3148 = vadd.f32 %v1517, %v3147
        %v3149 = vpop.f32.mrb[0].mxu0
        %v3150 = vadd.f32 %v1517, %v3149
        %3151 = vmatprep.mubr.bf16.mxu0 %v2580
        %3152 = vmatmul.mubr.bf16.gmra.mrb[0].mxu0 %v2579
        %v3153 = vpop.f32.mrb[0].mxu0
        %v3154 = vadd.f32 %v1522, %v3153
        %v3155 = vpop.f32.mrb[0].mxu0
        %v3156 = vadd.f32 %v1522, %v3155
        %v3157 = vpop.f32.mrb[0].mxu0
        %v3158 = vadd.f32 %v1527, %v3157
        %v3159 = vpop.f32.mrb[0].mxu0
        %v3160 = vadd.f32 %v1527, %v3159
        %3161 = vmatprep.mubr.bf16.mxu0 %v2588
        %3162 = vmatmul.mubr.bf16.gmra.mrb[0].mxu0 %v2587
        %v3163 = vpop.f32.mrb[0].mxu0
        %v3164 = vadd.f32 %v1532, %v3163
        %v3165 = vpop.f32.mrb[0].mxu0
        %v3166 = vadd.f32 %v1532, %v3165
        %v3167 = vpop.f32.mrb[0].mxu0
        %v3168 = vadd.f32 %v1537, %v3167
        %v3169 = vpop.f32.mrb[0].mxu0
        %v3170 = vadd.f32 %v1537, %v3169
        %3171 = vmatprep.mubr.bf16.mxu0 %v2596
        %3172 = vmatmul.mubr.bf16.gmra.mrb[0].mxu0 %v2595
        %v3173 = vpop.f32.mrb[0].mxu0
        %v3174 = vadd.f32 %v1542, %v3173
        %v3175 = vpop.f32.mrb[0].mxu0
        %v3176 = vadd.f32 %v1542, %v3175
        %v3177 = vpop.f32.mrb[0].mxu0
        %v3178 = vadd.f32 %v1547, %v3177
        %v3179 = vpop.f32.mrb[0].mxu0
        %v3180 = vadd.f32 %v1547, %v3179
        %3181 = vmatprep.mubr.bf16.mxu0 %v2604
        %3182 = vmatmul.mubr.bf16.gmra.mrb[0].mxu0 %v2603
        %v3183 = vpop.f32.mrb[0].mxu0
        %v3184 = vadd.f32 %v1552, %v3183
        %v3185 = vpop.f32.mrb[0].mxu0
        %v3186 = vadd.f32 %v1552, %v3185
        %v3187 = vpop.f32.mrb[0].mxu0
        %v3188 = vadd.f32 %v1557, %v3187
        %v3189 = vpop.f32.mrb[0].mxu0
        %v3190 = vadd.f32 %v1557, %v3189
        %3191 = vmatprep.mubr.bf16.mxu0 %v2612
        %3192 = vmatmul.mubr.bf16.gmra.mrb[0].mxu0 %v2611
        %v3193 = vpop.f32.mrb[0].mxu0
        %v3194 = vadd.f32 %v1562, %v3193
        %v3195 = vpop.f32.mrb[0].mxu0
        %v3196 = vadd.f32 %v1562, %v3195
        %v3197 = vpop.f32.mrb[0].mxu0
        %v3198 = vadd.f32 %v1567, %v3197
        %v3199 = vpop.f32.mrb[0].mxu0
        %v3200 = vadd.f32 %v1567, %v3199
        %3201 = vmatprep.mubr.bf16.mxu0 %v2620
        %3202 = vmatmul.mubr.bf16.gmra.mrb[0].mxu0 %v2619
        %v3203 = vpop.f32.mrb[0].mxu0
        %v3204 = vadd.f32 %v1572, %v3203
        %v3205 = vpop.f32.mrb[0].mxu0
        %v3206 = vadd.f32 %v1572, %v3205
        %v3207 = vpop.f32.mrb[0].mxu0
        %v3208 = vadd.f32 %v1577, %v3207
        %v3209 = vpop.f32.mrb[0].mxu0
        %v3210 = vadd.f32 %v1577, %v3209
        %3211 = vmatprep.mubr.bf16.mxu0 %v2628
        %3212 = vmatmul.mubr.bf16.gmra.mrb[0].mxu0 %v2627
        %v3213 = vpop.f32.mrb[0].mxu0
        %v3214 = vadd.f32 %v1582, %v3213
        %v3215 = vpop.f32.mrb[0].mxu0
        %v3216 = vadd.f32 %v1582, %v3215
        %v3217 = vpop.f32.mrb[0].mxu0
        %v3218 = vadd.f32 %v1587, %v3217
        %v3219 = vpop.f32.mrb[0].mxu0
        %v3220 = vadd.f32 %v1587, %v3219
        %3221 = vmatprep.mubr.bf16.mxu0 %v2636
        %3222 = vmatmul.mubr.bf16.gmra.mrb[0].mxu0 %v2635
        %v3223 = vpop.f32.mrb[0].mxu0
        %v3224 = vadd.f32 %v1592, %v3223
        %v3225 = vpop.f32.mrb[0].mxu0
        %v3226 = vadd.f32 %v1592, %v3225
        %v3227 = vpop.f32.mrb[0].mxu0
        %v3228 = vadd.f32 %v1597, %v3227
        %v3229 = vpop.f32.mrb[0].mxu0
        %v3230 = vadd.f32 %v1597, %v3229
        %3231 = vmatprep.mubr.bf16.mxu0 %v2644
        %3232 = vmatmul.mubr.bf16.gmra.mrb[0].mxu0 %v2643
        %v3233 = vpop.f32.mrb[0].mxu0
        %v3234 = vadd.f32 %v1602, %v3233
        %v3235 = vpop.f32.mrb[0].mxu0
        %v3236 = vadd.f32 %v1602, %v3235
        %v3237 = vpop.f32.mrb[0].mxu0
        %v3238 = vadd.f32 %v1607, %v3237
        %v3239 = vpop.f32.mrb[0].mxu0
        %v3240 = vadd.f32 %v1607, %v3239
        %3241 = vmatprep.mubr.bf16.mxu0 %v2652
        %3242 = vmatmul.mubr.bf16.gmra.mrb[0].mxu0 %v2651
        %v3243 = vpop.f32.mrb[0].mxu0
        %v3244 = vadd.f32 %v1612, %v3243
        %v3245 = vpop.f32.mrb[0].mxu0
        %v3246 = vadd.f32 %v1612, %v3245
        %v3247 = vpop.f32.mrb[0].mxu0
        %v3248 = vadd.f32 %v1617, %v3247
        %v3249 = vpop.f32.mrb[0].mxu0
        %v3250 = vadd.f32 %v1617, %v3249
        %3251 = vmatprep.mubr.bf16.mxu0 %v2660
        %3252 = vmatmul.mubr.bf16.gmra.mrb[0].mxu0 %v2659
        %v3253 = vpop.f32.mrb[0].mxu0
        %v3254 = vadd.f32 %v1622, %v3253
        %v3255 = vpop.f32.mrb[0].mxu0
        %v3256 = vadd.f32 %v1622, %v3255
        %v3257 = vpop.f32.mrb[0].mxu0
        %v3258 = vadd.f32 %v1627, %v3257
        %v3259 = vpop.f32.mrb[0].mxu0
        %v3260 = vadd.f32 %v1627, %v3259
        %3261 = vmatprep.mubr.bf16.mxu0 %v2668
        %3262 = vmatmul.mubr.bf16.gmra.mrb[0].mxu0 %v2667
        %v3263 = vpop.f32.mrb[0].mxu0
        %v3264 = vadd.f32 %v1632, %v3263
        %v3265 = vpop.f32.mrb[0].mxu0
        %v3266 = vadd.f32 %v1632, %v3265
        %v3267 = vpop.f32.mrb[0].mxu0
        %v3268 = vadd.f32 %v1637, %v3267
        %v3269 = vpop.f32.mrb[0].mxu0
        %v3270 = vadd.f32 %v1637, %v3269
        %3271 = vmatprep.mubr.bf16.mxu0 %v2676
        %3272 = vmatmul.mubr.bf16.gmra.mrb[0].mxu0 %v2675
        %v3273 = vpop.f32.mrb[0].mxu0
        %v3274 = vadd.f32 %v1642, %v3273
        %v3275 = vpop.f32.mrb[0].mxu0
        %v3276 = vadd.f32 %v1642, %v3275
        %v3277 = vpop.f32.mrb[0].mxu0
        %v3278 = vadd.f32 %v1647, %v3277
        %v3279 = vpop.f32.mrb[0].mxu0
        %v3280 = vadd.f32 %v1647, %v3279
        %3281 = vmatprep.mubr.bf16.mxu0 %v2684
        %3282 = vmatmul.mubr.bf16.gmra.mrb[0].mxu0 %v2683
        %v3283 = vpop.f32.mrb[0].mxu0
        %v3284 = vadd.f32 %v1652, %v3283
        %v3285 = vpop.f32.mrb[0].mxu0
        %v3286 = vadd.f32 %v1652, %v3285
        %v3287 = vpop.f32.mrb[0].mxu0
        %v3288 = vadd.f32 %v1657, %v3287
        %v3289 = vpop.f32.mrb[0].mxu0
        %v3290 = vadd.f32 %v1657, %v3289
        %3291 = vmatprep.mubr.bf16.mxu0 %v2692
        %3292 = vmatmul.mubr.bf16.gmra.mrb[0].mxu0 %v2691
        %v3293 = vpop.f32.mrb[0].mxu0
        %v3294 = vadd.f32 %v1662, %v3293
        %v3295 = vpop.f32.mrb[0].mxu0
        %v3296 = vadd.f32 %v1662, %v3295
        %v3297 = vpop.f32.mrb[0].mxu0
        %v3298 = vadd.f32 %v1667, %v3297
        %v3299 = vpop.f32.mrb[0].mxu0
        %v3300 = vadd.f32 %v1667, %v3299
        %3301 = vmatprep.mubr.bf16.mxu0 %v2700
        %3302 = vmatmul.mubr.bf16.gmra.mrb[0].mxu0 %v2699
        %v3303 = vpop.f32.mrb[0].mxu0
        %v3304 = vadd.f32 %v1672, %v3303
        %v3305 = vpop.f32.mrb[0].mxu0
        %v3306 = vadd.f32 %v1672, %v3305
        %v3307 = vpop.f32.mrb[0].mxu0
        %v3308 = vadd.f32 %v1677, %v3307
        %v3309 = vpop.f32.mrb[0].mxu0
        %v3310 = vadd.f32 %v1677, %v3309
        %3311 = vmatprep.mubr.bf16.mxu0 %v2708
        %3312 = vmatmul.mubr.bf16.gmra.mrb[0].mxu0 %v2707
        %v3313 = vpop.f32.mrb[0].mxu0
        %v3314 = vadd.f32 %v1682, %v3313
        %v3315 = vpop.f32.mrb[0].mxu0
        %v3316 = vadd.f32 %v1682, %v3315
        %v3317 = vpop.f32.mrb[0].mxu0
        %v3318 = vadd.f32 %v1687, %v3317
        %v3319 = vpop.f32.mrb[0].mxu0
        %v3320 = vadd.f32 %v1687, %v3319
        %3321 = vmatprep.mubr.bf16.mxu0 %v2716
        %3322 = vmatmul.mubr.bf16.gmra.mrb[0].mxu0 %v2715
        %v3323 = vpop.f32.mrb[0].mxu0
        %v3324 = vadd.f32 %v1692, %v3323
        %v3325 = vpop.f32.mrb[0].mxu0
        %v3326 = vadd.f32 %v1692, %v3325
        %v3327 = vpop.f32.mrb[0].mxu0
        %v3328 = vadd.f32 %v1697, %v3327
        %v3329 = vpop.f32.mrb[0].mxu0
        %v3330 = vadd.f32 %v1697, %v3329
        %3331 = vdwg.mxu0
        %3332 = vmatprep.subr.bf16.mxu0 %v868
        %3333 = vmatpush1.bf16.msra.mxu0 %v867
        %3334 = vmatprep.subr.bf16.mxu0 %v872
        %3335 = vmatpush1.bf16.msra.mxu0 %v871
        %3336 = vmatprep.subr.bf16.mxu0 %v876
        %3337 = vmatpush1.bf16.msra.mxu0 %v875
        %3338 = vmatprep.subr.bf16.mxu0 %v880
        %3339 = vmatpush1.bf16.msra.mxu0 %v879
        %3340 = vmatprep.subr.bf16.mxu0 %v884
        %3341 = vmatpush1.bf16.msra.mxu0 %v883
        %3342 = vmatprep.subr.bf16.mxu0 %v888
        %3343 = vmatpush1.bf16.msra.mxu0 %v887
        %3344 = vmatprep.subr.bf16.mxu0 %v892
        %3345 = vmatpush1.bf16.msra.mxu0 %v891
        %3346 = vmatprep.subr.bf16.mxu0 %v896
        %3347 = vmatpush1.bf16.msra.mxu0 %v895
        %3348 = vmatprep.subr.bf16.mxu0 %v900
        %3349 = vmatpush1.bf16.msra.mxu0 %v899
        %3350 = vmatprep.subr.bf16.mxu0 %v904
        %3351 = vmatpush1.bf16.msra.mxu0 %v903
        %3352 = vmatprep.subr.bf16.mxu0 %v908
        %3353 = vmatpush1.bf16.msra.mxu0 %v907
        %3354 = vmatprep.subr.bf16.mxu0 %v912
        %3355 = vmatpush1.bf16.msra.mxu0 %v911
        %3356 = vmatprep.subr.bf16.mxu0 %v916
        %3357 = vmatpush1.bf16.msra.mxu0 %v915
        %3358 = vmatprep.subr.bf16.mxu0 %v920
        %3359 = vmatpush1.bf16.msra.mxu0 %v919
        %3360 = vmatprep.subr.bf16.mxu0 %v924
        %3361 = vmatpush1.bf16.msra.mxu0 %v923
        %3362 = vmatprep.subr.bf16.mxu0 %v928
        %3363 = vmatpush1.bf16.msra.mxu0 %v927
        %3364 = vmatprep.mubr.bf16.mxu0 %v2470
        %3365 = vmatmul.mubr.bf16.gmra.mrb[0].mxu0 %v2469
        %v3366 = vpop.f32.mrb[0].mxu0
        %v3367 = vadd.f32 %v3014, %v3366
        %v3368 = vpop.f32.mrb[0].mxu0
        %v3369 = vadd.f32 %v3016, %v3368
        %v3370 = vpop.f32.mrb[0].mxu0
        %v3371 = vadd.f32 %v3018, %v3370
        %v3372 = vpop.f32.mrb[0].mxu0
        %v3373 = vadd.f32 %v3020, %v3372
        %3374 = vmatprep.mubr.bf16.mxu0 %v2478
        %3375 = vmatmul.mubr.bf16.gmra.mrb[0].mxu0 %v2477
        %v3376 = vpop.f32.mrb[0].mxu0
        %v3377 = vadd.f32 %v3024, %v3376
        %v3378 = vpop.f32.mrb[0].mxu0
        %v3379 = vadd.f32 %v3026, %v3378
        %v3380 = vpop.f32.mrb[0].mxu0
        %v3381 = vadd.f32 %v3028, %v3380
        %v3382 = vpop.f32.mrb[0].mxu0
        %v3383 = vadd.f32 %v3030, %v3382
        %3384 = vmatprep.mubr.bf16.mxu0 %v2486
        %3385 = vmatmul.mubr.bf16.gmra.mrb[0].mxu0 %v2485
        %v3386 = vpop.f32.mrb[0].mxu0
        %v3387 = vadd.f32 %v3034, %v3386
        %v3388 = vpop.f32.mrb[0].mxu0
        %v3389 = vadd.f32 %v3036, %v3388
        %v3390 = vpop.f32.mrb[0].mxu0
        %v3391 = vadd.f32 %v3038, %v3390
        %v3392 = vpop.f32.mrb[0].mxu0
        %v3393 = vadd.f32 %v3040, %v3392
        %3394 = vmatprep.mubr.bf16.mxu0 %v2494
        %3395 = vmatmul.mubr.bf16.gmra.mrb[0].mxu0 %v2493
        %v3396 = vpop.f32.mrb[0].mxu0
        %v3397 = vadd.f32 %v3044, %v3396
        %v3398 = vpop.f32.mrb[0].mxu0
        %v3399 = vadd.f32 %v3046, %v3398
        %v3400 = vpop.f32.mrb[0].mxu0
        %v3401 = vadd.f32 %v3048, %v3400
        %v3402 = vpop.f32.mrb[0].mxu0
        %v3403 = vadd.f32 %v3050, %v3402
        %3404 = vmatprep.mubr.bf16.mxu0 %v2502
        %3405 = vmatmul.mubr.bf16.gmra.mrb[0].mxu0 %v2501
        %v3406 = vpop.f32.mrb[0].mxu0
        %v3407 = vadd.f32 %v3054, %v3406
        %v3408 = vpop.f32.mrb[0].mxu0
        %v3409 = vadd.f32 %v3056, %v3408
        %v3410 = vpop.f32.mrb[0].mxu0
        %v3411 = vadd.f32 %v3058, %v3410
        %v3412 = vpop.f32.mrb[0].mxu0
        %v3413 = vadd.f32 %v3060, %v3412
        %3414 = vmatprep.mubr.bf16.mxu0 %v2510
        %3415 = vmatmul.mubr.bf16.gmra.mrb[0].mxu0 %v2509
        %v3416 = vpop.f32.mrb[0].mxu0
        %v3417 = vadd.f32 %v3064, %v3416
        %v3418 = vpop.f32.mrb[0].mxu0
        %v3419 = vadd.f32 %v3066, %v3418
        %v3420 = vpop.f32.mrb[0].mxu0
        %v3421 = vadd.f32 %v3068, %v3420
        %v3422 = vpop.f32.mrb[0].mxu0
        %v3423 = vadd.f32 %v3070, %v3422
        %3424 = vmatprep.mubr.bf16.mxu0 %v2518
        %3425 = vmatmul.mubr.bf16.gmra.mrb[0].mxu0 %v2517
        %v3426 = vpop.f32.mrb[0].mxu0
        %v3427 = vadd.f32 %v3074, %v3426
        %v3428 = vpop.f32.mrb[0].mxu0
        %v3429 = vadd.f32 %v3076, %v3428
        %v3430 = vpop.f32.mrb[0].mxu0
        %v3431 = vadd.f32 %v3078, %v3430
        %v3432 = vpop.f32.mrb[0].mxu0
        %v3433 = vadd.f32 %v3080, %v3432
        %3434 = vmatprep.mubr.bf16.mxu0 %v2526
        %3435 = vmatmul.mubr.bf16.gmra.mrb[0].mxu0 %v2525
        %v3436 = vpop.f32.mrb[0].mxu0
        %v3437 = vadd.f32 %v3084, %v3436
        %v3438 = vpop.f32.mrb[0].mxu0
        %v3439 = vadd.f32 %v3086, %v3438
        %v3440 = vpop.f32.mrb[0].mxu0
        %v3441 = vadd.f32 %v3088, %v3440
        %v3442 = vpop.f32.mrb[0].mxu0
        %v3443 = vadd.f32 %v3090, %v3442
        %3444 = vmatprep.mubr.bf16.mxu0 %v2534
        %3445 = vmatmul.mubr.bf16.gmra.mrb[0].mxu0 %v2533
        %v3446 = vpop.f32.mrb[0].mxu0
        %v3447 = vadd.f32 %v3094, %v3446
        %v3448 = vpop.f32.mrb[0].mxu0
        %v3449 = vadd.f32 %v3096, %v3448
        %v3450 = vpop.f32.mrb[0].mxu0
        %v3451 = vadd.f32 %v3098, %v3450
        %v3452 = vpop.f32.mrb[0].mxu0
        %v3453 = vadd.f32 %v3100, %v3452
        %3454 = vmatprep.mubr.bf16.mxu0 %v2542
        %3455 = vmatmul.mubr.bf16.gmra.mrb[0].mxu0 %v2541
        %v3456 = vpop.f32.mrb[0].mxu0
        %v3457 = vadd.f32 %v3104, %v3456
        %v3458 = vpop.f32.mrb[0].mxu0
        %v3459 = vadd.f32 %v3106, %v3458
        %v3460 = vpop.f32.mrb[0].mxu0
        %v3461 = vadd.f32 %v3108, %v3460
        %v3462 = vpop.f32.mrb[0].mxu0
        %v3463 = vadd.f32 %v3110, %v3462
        %3464 = vmatprep.mubr.bf16.mxu0 %v2550
        %3465 = vmatmul.mubr.bf16.gmra.mrb[0].mxu0 %v2549
        %v3466 = vpop.f32.mrb[0].mxu0
        %v3467 = vadd.f32 %v3114, %v3466
        %v3468 = vpop.f32.mrb[0].mxu0
        %v3469 = vadd.f32 %v3116, %v3468
        %v3470 = vpop.f32.mrb[0].mxu0
        %v3471 = vadd.f32 %v3118, %v3470
        %v3472 = vpop.f32.mrb[0].mxu0
        %v3473 = vadd.f32 %v3120, %v3472
        %3474 = vmatprep.mubr.bf16.mxu0 %v2558
        %3475 = vmatmul.mubr.bf16.gmra.mrb[0].mxu0 %v2557
        %v3476 = vpop.f32.mrb[0].mxu0
        %v3477 = vadd.f32 %v3124, %v3476
        %v3478 = vpop.f32.mrb[0].mxu0
        %v3479 = vadd.f32 %v3126, %v3478
        %v3480 = vpop.f32.mrb[0].mxu0
        %v3481 = vadd.f32 %v3128, %v3480
        %v3482 = vpop.f32.mrb[0].mxu0
        %v3483 = vadd.f32 %v3130, %v3482
        %3484 = vmatprep.mubr.bf16.mxu0 %v2566
        %3485 = vmatmul.mubr.bf16.gmra.mrb[0].mxu0 %v2565
        %v3486 = vpop.f32.mrb[0].mxu0
        %v3487 = vadd.f32 %v3134, %v3486
        %v3488 = vpop.f32.mrb[0].mxu0
        %v3489 = vadd.f32 %v3136, %v3488
        %v3490 = vpop.f32.mrb[0].mxu0
        %v3491 = vadd.f32 %v3138, %v3490
        %v3492 = vpop.f32.mrb[0].mxu0
        %v3493 = vadd.f32 %v3140, %v3492
        %3494 = vmatprep.mubr.bf16.mxu0 %v2574
        %3495 = vmatmul.mubr.bf16.gmra.mrb[0].mxu0 %v2573
        %v3496 = vpop.f32.mrb[0].mxu0
        %v3497 = vadd.f32 %v3144, %v3496
        %v3498 = vpop.f32.mrb[0].mxu0
        %v3499 = vadd.f32 %v3146, %v3498
        %v3500 = vpop.f32.mrb[0].mxu0
        %v3501 = vadd.f32 %v3148, %v3500
        %v3502 = vpop.f32.mrb[0].mxu0
        %v3503 = vadd.f32 %v3150, %v3502
        %3504 = vmatprep.mubr.bf16.mxu0 %v2582
        %3505 = vmatmul.mubr.bf16.gmra.mrb[0].mxu0 %v2581
        %v3506 = vpop.f32.mrb[0].mxu0
        %v3507 = vadd.f32 %v3154, %v3506
        %v3508 = vpop.f32.mrb[0].mxu0
        %v3509 = vadd.f32 %v3156, %v3508
        %v3510 = vpop.f32.mrb[0].mxu0
        %v3511 = vadd.f32 %v3158, %v3510
        %v3512 = vpop.f32.mrb[0].mxu0
        %v3513 = vadd.f32 %v3160, %v3512
        %3514 = vmatprep.mubr.bf16.mxu0 %v2590
        %3515 = vmatmul.mubr.bf16.gmra.mrb[0].mxu0 %v2589
        %v3516 = vpop.f32.mrb[0].mxu0
        %v3517 = vadd.f32 %v3164, %v3516
        %v3518 = vpop.f32.mrb[0].mxu0
        %v3519 = vadd.f32 %v3166, %v3518
        %v3520 = vpop.f32.mrb[0].mxu0
        %v3521 = vadd.f32 %v3168, %v3520
        %v3522 = vpop.f32.mrb[0].mxu0
        %v3523 = vadd.f32 %v3170, %v3522
        %3524 = vmatprep.mubr.bf16.mxu0 %v2598
        %3525 = vmatmul.mubr.bf16.gmra.mrb[0].mxu0 %v2597
        %v3526 = vpop.f32.mrb[0].mxu0
        %v3527 = vadd.f32 %v3174, %v3526
        %v3528 = vpop.f32.mrb[0].mxu0
        %v3529 = vadd.f32 %v3176, %v3528
        %v3530 = vpop.f32.mrb[0].mxu0
        %v3531 = vadd.f32 %v3178, %v3530
        %v3532 = vpop.f32.mrb[0].mxu0
        %v3533 = vadd.f32 %v3180, %v3532
        %3534 = vmatprep.mubr.bf16.mxu0 %v2606
        %3535 = vmatmul.mubr.bf16.gmra.mrb[0].mxu0 %v2605
        %v3536 = vpop.f32.mrb[0].mxu0
        %v3537 = vadd.f32 %v3184, %v3536
        %v3538 = vpop.f32.mrb[0].mxu0
        %v3539 = vadd.f32 %v3186, %v3538
        %v3540 = vpop.f32.mrb[0].mxu0
        %v3541 = vadd.f32 %v3188, %v3540
        %v3542 = vpop.f32.mrb[0].mxu0
        %v3543 = vadd.f32 %v3190, %v3542
        %3544 = vmatprep.mubr.bf16.mxu0 %v2614
        %3545 = vmatmul.mubr.bf16.gmra.mrb[0].mxu0 %v2613
        %v3546 = vpop.f32.mrb[0].mxu0
        %v3547 = vadd.f32 %v3194, %v3546
        %v3548 = vpop.f32.mrb[0].mxu0
        %v3549 = vadd.f32 %v3196, %v3548
        %v3550 = vpop.f32.mrb[0].mxu0
        %v3551 = vadd.f32 %v3198, %v3550
        %v3552 = vpop.f32.mrb[0].mxu0
        %v3553 = vadd.f32 %v3200, %v3552
        %3554 = vmatprep.mubr.bf16.mxu0 %v2622
        %3555 = vmatmul.mubr.bf16.gmra.mrb[0].mxu0 %v2621
        %v3556 = vpop.f32.mrb[0].mxu0
        %v3557 = vadd.f32 %v3204, %v3556
        %v3558 = vpop.f32.mrb[0].mxu0
        %v3559 = vadd.f32 %v3206, %v3558
        %v3560 = vpop.f32.mrb[0].mxu0
        %v3561 = vadd.f32 %v3208, %v3560
        %v3562 = vpop.f32.mrb[0].mxu0
        %v3563 = vadd.f32 %v3210, %v3562
        %3564 = vmatprep.mubr.bf16.mxu0 %v2630
        %3565 = vmatmul.mubr.bf16.gmra.mrb[0].mxu0 %v2629
        %v3566 = vpop.f32.mrb[0].mxu0
        %v3567 = vadd.f32 %v3214, %v3566
        %v3568 = vpop.f32.mrb[0].mxu0
        %v3569 = vadd.f32 %v3216, %v3568
        %v3570 = vpop.f32.mrb[0].mxu0
        %v3571 = vadd.f32 %v3218, %v3570
        %v3572 = vpop.f32.mrb[0].mxu0
        %v3573 = vadd.f32 %v3220, %v3572
        %3574 = vmatprep.mubr.bf16.mxu0 %v2638
        %3575 = vmatmul.mubr.bf16.gmra.mrb[0].mxu0 %v2637
        %v3576 = vpop.f32.mrb[0].mxu0
        %v3577 = vadd.f32 %v3224, %v3576
        %v3578 = vpop.f32.mrb[0].mxu0
        %v3579 = vadd.f32 %v3226, %v3578
        %v3580 = vpop.f32.mrb[0].mxu0
        %v3581 = vadd.f32 %v3228, %v3580
        %v3582 = vpop.f32.mrb[0].mxu0
        %v3583 = vadd.f32 %v3230, %v3582
        %3584 = vmatprep.mubr.bf16.mxu0 %v2646
        %3585 = vmatmul.mubr.bf16.gmra.mrb[0].mxu0 %v2645
        %v3586 = vpop.f32.mrb[0].mxu0
        %v3587 = vadd.f32 %v3234, %v3586
        %v3588 = vpop.f32.mrb[0].mxu0
        %v3589 = vadd.f32 %v3236, %v3588
        %v3590 = vpop.f32.mrb[0].mxu0
        %v3591 = vadd.f32 %v3238, %v3590
        %v3592 = vpop.f32.mrb[0].mxu0
        %v3593 = vadd.f32 %v3240, %v3592
        %3594 = vmatprep.mubr.bf16.mxu0 %v2654
        %3595 = vmatmul.mubr.bf16.gmra.mrb[0].mxu0 %v2653
        %v3596 = vpop.f32.mrb[0].mxu0
        %v3597 = vadd.f32 %v3244, %v3596
        %v3598 = vpop.f32.mrb[0].mxu0
        %v3599 = vadd.f32 %v3246, %v3598
        %v3600 = vpop.f32.mrb[0].mxu0
        %v3601 = vadd.f32 %v3248, %v3600
        %v3602 = vpop.f32.mrb[0].mxu0
        %v3603 = vadd.f32 %v3250, %v3602
        %3604 = vmatprep.mubr.bf16.mxu0 %v2662
        %3605 = vmatmul.mubr.bf16.gmra.mrb[0].mxu0 %v2661
        %v3606 = vpop.f32.mrb[0].mxu0
        %v3607 = vadd.f32 %v3254, %v3606
        %v3608 = vpop.f32.mrb[0].mxu0
        %v3609 = vadd.f32 %v3256, %v3608
        %v3610 = vpop.f32.mrb[0].mxu0
        %v3611 = vadd.f32 %v3258, %v3610
        %v3612 = vpop.f32.mrb[0].mxu0
        %v3613 = vadd.f32 %v3260, %v3612
        %3614 = vmatprep.mubr.bf16.mxu0 %v2670
        %3615 = vmatmul.mubr.bf16.gmra.mrb[0].mxu0 %v2669
        %v3616 = vpop.f32.mrb[0].mxu0
        %v3617 = vadd.f32 %v3264, %v3616
        %v3618 = vpop.f32.mrb[0].mxu0
        %v3619 = vadd.f32 %v3266, %v3618
        %v3620 = vpop.f32.mrb[0].mxu0
        %v3621 = vadd.f32 %v3268, %v3620
        %v3622 = vpop.f32.mrb[0].mxu0
        %v3623 = vadd.f32 %v3270, %v3622
        %3624 = vmatprep.mubr.bf16.mxu0 %v2678
        %3625 = vmatmul.mubr.bf16.gmra.mrb[0].mxu0 %v2677
        %v3626 = vpop.f32.mrb[0].mxu0
        %v3627 = vadd.f32 %v3274, %v3626
        %v3628 = vpop.f32.mrb[0].mxu0
        %v3629 = vadd.f32 %v3276, %v3628
        %v3630 = vpop.f32.mrb[0].mxu0
        %v3631 = vadd.f32 %v3278, %v3630
        %v3632 = vpop.f32.mrb[0].mxu0
        %v3633 = vadd.f32 %v3280, %v3632
        %3634 = vmatprep.mubr.bf16.mxu0 %v2686
        %3635 = vmatmul.mubr.bf16.gmra.mrb[0].mxu0 %v2685
        %v3636 = vpop.f32.mrb[0].mxu0
        %v3637 = vadd.f32 %v3284, %v3636
        %v3638 = vpop.f32.mrb[0].mxu0
        %v3639 = vadd.f32 %v3286, %v3638
        %v3640 = vpop.f32.mrb[0].mxu0
        %v3641 = vadd.f32 %v3288, %v3640
        %v3642 = vpop.f32.mrb[0].mxu0
        %v3643 = vadd.f32 %v3290, %v3642
        %3644 = vmatprep.mubr.bf16.mxu0 %v2694
        %3645 = vmatmul.mubr.bf16.gmra.mrb[0].mxu0 %v2693
        %v3646 = vpop.f32.mrb[0].mxu0
        %v3647 = vadd.f32 %v3294, %v3646
        %v3648 = vpop.f32.mrb[0].mxu0
        %v3649 = vadd.f32 %v3296, %v3648
        %v3650 = vpop.f32.mrb[0].mxu0
        %v3651 = vadd.f32 %v3298, %v3650
        %v3652 = vpop.f32.mrb[0].mxu0
        %v3653 = vadd.f32 %v3300, %v3652
        %3654 = vmatprep.mubr.bf16.mxu0 %v2702
        %3655 = vmatmul.mubr.bf16.gmra.mrb[0].mxu0 %v2701
        %v3656 = vpop.f32.mrb[0].mxu0
        %v3657 = vadd.f32 %v3304, %v3656
        %v3658 = vpop.f32.mrb[0].mxu0
        %v3659 = vadd.f32 %v3306, %v3658
        %v3660 = vpop.f32.mrb[0].mxu0
        %v3661 = vadd.f32 %v3308, %v3660
        %v3662 = vpop.f32.mrb[0].mxu0
        %v3663 = vadd.f32 %v3310, %v3662
        %3664 = vmatprep.mubr.bf16.mxu0 %v2710
        %3665 = vmatmul.mubr.bf16.gmra.mrb[0].mxu0 %v2709
        %v3666 = vpop.f32.mrb[0].mxu0
        %v3667 = vadd.f32 %v3314, %v3666
        %v3668 = vpop.f32.mrb[0].mxu0
        %v3669 = vadd.f32 %v3316, %v3668
        %v3670 = vpop.f32.mrb[0].mxu0
        %v3671 = vadd.f32 %v3318, %v3670
        %v3672 = vpop.f32.mrb[0].mxu0
        %v3673 = vadd.f32 %v3320, %v3672
        %3674 = vmatprep.mubr.bf16.mxu0 %v2718
        %3675 = vmatmul.mubr.bf16.gmra.mrb[0].mxu0 %v2717
        %v3676 = vpop.f32.mrb[0].mxu0
        %v3677 = vadd.f32 %v3324, %v3676
        %v3678 = vpop.f32.mrb[0].mxu0
        %v3679 = vadd.f32 %v3326, %v3678
        %v3680 = vpop.f32.mrb[0].mxu0
        %v3681 = vadd.f32 %v3328, %v3680
        %v3682 = vpop.f32.mrb[0].mxu0
        %v3683 = vadd.f32 %v3330, %v3682
        %3684 = vdwg.mxu0
        %3685 = vmatprep.subr.bf16.mxu0 %v932
        %3686 = vmatpush1.bf16.msra.mxu0 %v931
        %3687 = vmatprep.subr.bf16.mxu0 %v936
        %3688 = vmatpush1.bf16.msra.mxu0 %v935
        %3689 = vmatprep.subr.bf16.mxu0 %v940
        %3690 = vmatpush1.bf16.msra.mxu0 %v939
        %3691 = vmatprep.subr.bf16.mxu0 %v944
        %3692 = vmatpush1.bf16.msra.mxu0 %v943
        %3693 = vmatprep.subr.bf16.mxu0 %v948
        %3694 = vmatpush1.bf16.msra.mxu0 %v947
        %3695 = vmatprep.subr.bf16.mxu0 %v952
        %3696 = vmatpush1.bf16.msra.mxu0 %v951
        %3697 = vmatprep.subr.bf16.mxu0 %v956
        %3698 = vmatpush1.bf16.msra.mxu0 %v955
        %3699 = vmatprep.subr.bf16.mxu0 %v960
        %3700 = vmatpush1.bf16.msra.mxu0 %v959
        %3701 = vmatprep.subr.bf16.mxu0 %v964
        %3702 = vmatpush1.bf16.msra.mxu0 %v963
        %3703 = vmatprep.subr.bf16.mxu0 %v968
        %3704 = vmatpush1.bf16.msra.mxu0 %v967
        %3705 = vmatprep.subr.bf16.mxu0 %v972
        %3706 = vmatpush1.bf16.msra.mxu0 %v971
        %3707 = vmatprep.subr.bf16.mxu0 %v976
        %3708 = vmatpush1.bf16.msra.mxu0 %v975
        %3709 = vmatprep.subr.bf16.mxu0 %v980
        %3710 = vmatpush1.bf16.msra.mxu0 %v979
        %3711 = vmatprep.subr.bf16.mxu0 %v984
        %3712 = vmatpush1.bf16.msra.mxu0 %v983
        %3713 = vmatprep.subr.bf16.mxu0 %v988
        %3714 = vmatpush1.bf16.msra.mxu0 %v987
        %3715 = vmatprep.subr.bf16.mxu0 %v992
        %3716 = vmatpush1.bf16.msra.mxu0 %v991
        %3717 = vmatprep.mubr.bf16.mxu0 %v2472
        %3718 = vmatmul.mubr.bf16.gmra.mrb[0].mxu0 %v2471
        %v3719 = vpop.f32.mrb[0].mxu0
        %v3720 = vadd.f32 %v3367, %v3719
        %v3721 = vpop.f32.mrb[0].mxu0
        %v3722 = vadd.f32 %v3369, %v3721
        %v3723 = vpop.f32.mrb[0].mxu0
        %v3724 = vadd.f32 %v3371, %v3723
        %v3725 = vpop.f32.mrb[0].mxu0
        %v3726 = vadd.f32 %v3373, %v3725
        %3727 = vmatprep.mubr.bf16.mxu0 %v2480
        %3728 = vmatmul.mubr.bf16.gmra.mrb[0].mxu0 %v2479
        %v3729 = vpop.f32.mrb[0].mxu0
        %v3730 = vadd.f32 %v3377, %v3729
        %v3731 = vpop.f32.mrb[0].mxu0
        %v3732 = vadd.f32 %v3379, %v3731
        %v3733 = vpop.f32.mrb[0].mxu0
        %v3734 = vadd.f32 %v3381, %v3733
        %v3735 = vpop.f32.mrb[0].mxu0
        %v3736 = vadd.f32 %v3383, %v3735
        %3737 = vmatprep.mubr.bf16.mxu0 %v2488
        %3738 = vmatmul.mubr.bf16.gmra.mrb[0].mxu0 %v2487
        %v3739 = vpop.f32.mrb[0].mxu0
        %v3740 = vadd.f32 %v3387, %v3739
        %v3741 = vpop.f32.mrb[0].mxu0
        %v3742 = vadd.f32 %v3389, %v3741
        %v3743 = vpop.f32.mrb[0].mxu0
        %v3744 = vadd.f32 %v3391, %v3743
        %v3745 = vpop.f32.mrb[0].mxu0
        %v3746 = vadd.f32 %v3393, %v3745
        %3747 = vmatprep.mubr.bf16.mxu0 %v2496
        %3748 = vmatmul.mubr.bf16.gmra.mrb[0].mxu0 %v2495
        %v3749 = vpop.f32.mrb[0].mxu0
        %v3750 = vadd.f32 %v3397, %v3749
        %v3751 = vpop.f32.mrb[0].mxu0
        %v3752 = vadd.f32 %v3399, %v3751
        %v3753 = vpop.f32.mrb[0].mxu0
        %v3754 = vadd.f32 %v3401, %v3753
        %v3755 = vpop.f32.mrb[0].mxu0
        %v3756 = vadd.f32 %v3403, %v3755
        %3757 = vmatprep.mubr.bf16.mxu0 %v2504
        %3758 = vmatmul.mubr.bf16.gmra.mrb[0].mxu0 %v2503
        %v3759 = vpop.f32.mrb[0].mxu0
        %v3760 = vadd.f32 %v3407, %v3759
        %v3761 = vpop.f32.mrb[0].mxu0
        %v3762 = vadd.f32 %v3409, %v3761
        %v3763 = vpop.f32.mrb[0].mxu0
        %v3764 = vadd.f32 %v3411, %v3763
        %v3765 = vpop.f32.mrb[0].mxu0
        %v3766 = vadd.f32 %v3413, %v3765
        %3767 = vmatprep.mubr.bf16.mxu0 %v2512
        %3768 = vmatmul.mubr.bf16.gmra.mrb[0].mxu0 %v2511
        %v3769 = vpop.f32.mrb[0].mxu0
        %v3770 = vadd.f32 %v3417, %v3769
        %v3771 = vpop.f32.mrb[0].mxu0
        %v3772 = vadd.f32 %v3419, %v3771
        %v3773 = vpop.f32.mrb[0].mxu0
        %v3774 = vadd.f32 %v3421, %v3773
        %v3775 = vpop.f32.mrb[0].mxu0
        %v3776 = vadd.f32 %v3423, %v3775
        %3777 = vmatprep.mubr.bf16.mxu0 %v2520
        %3778 = vmatmul.mubr.bf16.gmra.mrb[0].mxu0 %v2519
        %v3779 = vpop.f32.mrb[0].mxu0
        %v3780 = vadd.f32 %v3427, %v3779
        %v3781 = vpop.f32.mrb[0].mxu0
        %v3782 = vadd.f32 %v3429, %v3781
        %v3783 = vpop.f32.mrb[0].mxu0
        %v3784 = vadd.f32 %v3431, %v3783
        %v3785 = vpop.f32.mrb[0].mxu0
        %v3786 = vadd.f32 %v3433, %v3785
        %3787 = vmatprep.mubr.bf16.mxu0 %v2528
        %3788 = vmatmul.mubr.bf16.gmra.mrb[0].mxu0 %v2527
        %v3789 = vpop.f32.mrb[0].mxu0
        %v3790 = vadd.f32 %v3437, %v3789
        %v3791 = vpop.f32.mrb[0].mxu0
        %v3792 = vadd.f32 %v3439, %v3791
        %v3793 = vpop.f32.mrb[0].mxu0
        %v3794 = vadd.f32 %v3441, %v3793
        %v3795 = vpop.f32.mrb[0].mxu0
        %v3796 = vadd.f32 %v3443, %v3795
        %3797 = vmatprep.mubr.bf16.mxu0 %v2536
        %3798 = vmatmul.mubr.bf16.gmra.mrb[0].mxu0 %v2535
        %v3799 = vpop.f32.mrb[0].mxu0
        %v3800 = vadd.f32 %v3447, %v3799
        %v3801 = vpop.f32.mrb[0].mxu0
        %v3802 = vadd.f32 %v3449, %v3801
        %v3803 = vpop.f32.mrb[0].mxu0
        %v3804 = vadd.f32 %v3451, %v3803
        %v3805 = vpop.f32.mrb[0].mxu0
        %v3806 = vadd.f32 %v3453, %v3805
        %3807 = vmatprep.mubr.bf16.mxu0 %v2544
        %3808 = vmatmul.mubr.bf16.gmra.mrb[0].mxu0 %v2543
        %v3809 = vpop.f32.mrb[0].mxu0
        %v3810 = vadd.f32 %v3457, %v3809
        %v3811 = vpop.f32.mrb[0].mxu0
        %v3812 = vadd.f32 %v3459, %v3811
        %v3813 = vpop.f32.mrb[0].mxu0
        %v3814 = vadd.f32 %v3461, %v3813
        %v3815 = vpop.f32.mrb[0].mxu0
        %v3816 = vadd.f32 %v3463, %v3815
        %3817 = vmatprep.mubr.bf16.mxu0 %v2552
        %3818 = vmatmul.mubr.bf16.gmra.mrb[0].mxu0 %v2551
        %v3819 = vpop.f32.mrb[0].mxu0
        %v3820 = vadd.f32 %v3467, %v3819
        %v3821 = vpop.f32.mrb[0].mxu0
        %v3822 = vadd.f32 %v3469, %v3821
        %v3823 = vpop.f32.mrb[0].mxu0
        %v3824 = vadd.f32 %v3471, %v3823
        %v3825 = vpop.f32.mrb[0].mxu0
        %v3826 = vadd.f32 %v3473, %v3825
        %3827 = vmatprep.mubr.bf16.mxu0 %v2560
        %3828 = vmatmul.mubr.bf16.gmra.mrb[0].mxu0 %v2559
        %v3829 = vpop.f32.mrb[0].mxu0
        %v3830 = vadd.f32 %v3477, %v3829
        %v3831 = vpop.f32.mrb[0].mxu0
        %v3832 = vadd.f32 %v3479, %v3831
        %v3833 = vpop.f32.mrb[0].mxu0
        %v3834 = vadd.f32 %v3481, %v3833
        %v3835 = vpop.f32.mrb[0].mxu0
        %v3836 = vadd.f32 %v3483, %v3835
        %3837 = vmatprep.mubr.bf16.mxu0 %v2568
        %3838 = vmatmul.mubr.bf16.gmra.mrb[0].mxu0 %v2567
        %v3839 = vpop.f32.mrb[0].mxu0
        %v3840 = vadd.f32 %v3487, %v3839
        %v3841 = vpop.f32.mrb[0].mxu0
        %v3842 = vadd.f32 %v3489, %v3841
        %v3843 = vpop.f32.mrb[0].mxu0
        %v3844 = vadd.f32 %v3491, %v3843
        %v3845 = vpop.f32.mrb[0].mxu0
        %v3846 = vadd.f32 %v3493, %v3845
        %3847 = vmatprep.mubr.bf16.mxu0 %v2576
        %3848 = vmatmul.mubr.bf16.gmra.mrb[0].mxu0 %v2575
        %v3849 = vpop.f32.mrb[0].mxu0
        %v3850 = vadd.f32 %v3497, %v3849
        %v3851 = vpop.f32.mrb[0].mxu0
        %v3852 = vadd.f32 %v3499, %v3851
        %v3853 = vpop.f32.mrb[0].mxu0
        %v3854 = vadd.f32 %v3501, %v3853
        %v3855 = vpop.f32.mrb[0].mxu0
        %v3856 = vadd.f32 %v3503, %v3855
        %3857 = vmatprep.mubr.bf16.mxu0 %v2584
        %3858 = vmatmul.mubr.bf16.gmra.mrb[0].mxu0 %v2583
        %v3859 = vpop.f32.mrb[0].mxu0
        %v3860 = vadd.f32 %v3507, %v3859
        %v3861 = vpop.f32.mrb[0].mxu0
        %v3862 = vadd.f32 %v3509, %v3861
        %v3863 = vpop.f32.mrb[0].mxu0
        %v3864 = vadd.f32 %v3511, %v3863
        %v3865 = vpop.f32.mrb[0].mxu0
        %v3866 = vadd.f32 %v3513, %v3865
        %3867 = vmatprep.mubr.bf16.mxu0 %v2592
        %3868 = vmatmul.mubr.bf16.gmra.mrb[0].mxu0 %v2591
        %v3869 = vpop.f32.mrb[0].mxu0
        %v3870 = vadd.f32 %v3517, %v3869
        %v3871 = vpop.f32.mrb[0].mxu0
        %v3872 = vadd.f32 %v3519, %v3871
        %v3873 = vpop.f32.mrb[0].mxu0
        %v3874 = vadd.f32 %v3521, %v3873
        %v3875 = vpop.f32.mrb[0].mxu0
        %v3876 = vadd.f32 %v3523, %v3875
        %3877 = vmatprep.mubr.bf16.mxu0 %v2600
        %3878 = vmatmul.mubr.bf16.gmra.mrb[0].mxu0 %v2599
        %v3879 = vpop.f32.mrb[0].mxu0
        %v3880 = vadd.f32 %v3527, %v3879
        %v3881 = vpop.f32.mrb[0].mxu0
        %v3882 = vadd.f32 %v3529, %v3881
        %v3883 = vpop.f32.mrb[0].mxu0
        %v3884 = vadd.f32 %v3531, %v3883
        %v3885 = vpop.f32.mrb[0].mxu0
        %v3886 = vadd.f32 %v3533, %v3885
        %3887 = vmatprep.mubr.bf16.mxu0 %v2608
        %3888 = vmatmul.mubr.bf16.gmra.mrb[0].mxu0 %v2607
        %v3889 = vpop.f32.mrb[0].mxu0
        %v3890 = vadd.f32 %v3537, %v3889
        %v3891 = vpop.f32.mrb[0].mxu0
        %v3892 = vadd.f32 %v3539, %v3891
        %v3893 = vpop.f32.mrb[0].mxu0
        %v3894 = vadd.f32 %v3541, %v3893
        %v3895 = vpop.f32.mrb[0].mxu0
        %v3896 = vadd.f32 %v3543, %v3895
        %3897 = vmatprep.mubr.bf16.mxu0 %v2616
        %3898 = vmatmul.mubr.bf16.gmra.mrb[0].mxu0 %v2615
        %v3899 = vpop.f32.mrb[0].mxu0
        %v3900 = vadd.f32 %v3547, %v3899
        %v3901 = vpop.f32.mrb[0].mxu0
        %v3902 = vadd.f32 %v3549, %v3901
        %v3903 = vpop.f32.mrb[0].mxu0
        %v3904 = vadd.f32 %v3551, %v3903
        %v3905 = vpop.f32.mrb[0].mxu0
        %v3906 = vadd.f32 %v3553, %v3905
        %3907 = vmatprep.mubr.bf16.mxu0 %v2624
        %3908 = vmatmul.mubr.bf16.gmra.mrb[0].mxu0 %v2623
        %v3909 = vpop.f32.mrb[0].mxu0
        %v3910 = vadd.f32 %v3557, %v3909
        %v3911 = vpop.f32.mrb[0].mxu0
        %v3912 = vadd.f32 %v3559, %v3911
        %v3913 = vpop.f32.mrb[0].mxu0
        %v3914 = vadd.f32 %v3561, %v3913
        %v3915 = vpop.f32.mrb[0].mxu0
        %v3916 = vadd.f32 %v3563, %v3915
        %3917 = vmatprep.mubr.bf16.mxu0 %v2632
        %3918 = vmatmul.mubr.bf16.gmra.mrb[0].mxu0 %v2631
        %v3919 = vpop.f32.mrb[0].mxu0
        %v3920 = vadd.f32 %v3567, %v3919
        %v3921 = vpop.f32.mrb[0].mxu0
        %v3922 = vadd.f32 %v3569, %v3921
        %v3923 = vpop.f32.mrb[0].mxu0
        %v3924 = vadd.f32 %v3571, %v3923
        %v3925 = vpop.f32.mrb[0].mxu0
        %v3926 = vadd.f32 %v3573, %v3925
        %3927 = vmatprep.mubr.bf16.mxu0 %v2640
        %3928 = vmatmul.mubr.bf16.gmra.mrb[0].mxu0 %v2639
        %v3929 = vpop.f32.mrb[0].mxu0
        %v3930 = vadd.f32 %v3577, %v3929
        %v3931 = vpop.f32.mrb[0].mxu0
        %v3932 = vadd.f32 %v3579, %v3931
        %v3933 = vpop.f32.mrb[0].mxu0
        %v3934 = vadd.f32 %v3581, %v3933
        %v3935 = vpop.f32.mrb[0].mxu0
        %v3936 = vadd.f32 %v3583, %v3935
        %3937 = vmatprep.mubr.bf16.mxu0 %v2648
        %3938 = vmatmul.mubr.bf16.gmra.mrb[0].mxu0 %v2647
        %v3939 = vpop.f32.mrb[0].mxu0
        %v3940 = vadd.f32 %v3587, %v3939
        %v3941 = vpop.f32.mrb[0].mxu0
        %v3942 = vadd.f32 %v3589, %v3941
        %v3943 = vpop.f32.mrb[0].mxu0
        %v3944 = vadd.f32 %v3591, %v3943
        %v3945 = vpop.f32.mrb[0].mxu0
        %v3946 = vadd.f32 %v3593, %v3945
        %3947 = vmatprep.mubr.bf16.mxu0 %v2656
        %3948 = vmatmul.mubr.bf16.gmra.mrb[0].mxu0 %v2655
        %v3949 = vpop.f32.mrb[0].mxu0
        %v3950 = vadd.f32 %v3597, %v3949
        %v3951 = vpop.f32.mrb[0].mxu0
        %v3952 = vadd.f32 %v3599, %v3951
        %v3953 = vpop.f32.mrb[0].mxu0
        %v3954 = vadd.f32 %v3601, %v3953
        %v3955 = vpop.f32.mrb[0].mxu0
        %v3956 = vadd.f32 %v3603, %v3955
        %3957 = vmatprep.mubr.bf16.mxu0 %v2664
        %3958 = vmatmul.mubr.bf16.gmra.mrb[0].mxu0 %v2663
        %v3959 = vpop.f32.mrb[0].mxu0
        %v3960 = vadd.f32 %v3607, %v3959
        %v3961 = vpop.f32.mrb[0].mxu0
        %v3962 = vadd.f32 %v3609, %v3961
        %v3963 = vpop.f32.mrb[0].mxu0
        %v3964 = vadd.f32 %v3611, %v3963
        %v3965 = vpop.f32.mrb[0].mxu0
        %v3966 = vadd.f32 %v3613, %v3965
        %3967 = vmatprep.mubr.bf16.mxu0 %v2672
        %3968 = vmatmul.mubr.bf16.gmra.mrb[0].mxu0 %v2671
        %v3969 = vpop.f32.mrb[0].mxu0
        %v3970 = vadd.f32 %v3617, %v3969
        %v3971 = vpop.f32.mrb[0].mxu0
        %v3972 = vadd.f32 %v3619, %v3971
        %v3973 = vpop.f32.mrb[0].mxu0
        %v3974 = vadd.f32 %v3621, %v3973
        %v3975 = vpop.f32.mrb[0].mxu0
        %v3976 = vadd.f32 %v3623, %v3975
        %3977 = vmatprep.mubr.bf16.mxu0 %v2680
        %3978 = vmatmul.mubr.bf16.gmra.mrb[0].mxu0 %v2679
        %v3979 = vpop.f32.mrb[0].mxu0
        %v3980 = vadd.f32 %v3627, %v3979
        %v3981 = vpop.f32.mrb[0].mxu0
        %v3982 = vadd.f32 %v3629, %v3981
        %v3983 = vpop.f32.mrb[0].mxu0
        %v3984 = vadd.f32 %v3631, %v3983
        %v3985 = vpop.f32.mrb[0].mxu0
        %v3986 = vadd.f32 %v3633, %v3985
        %3987 = vmatprep.mubr.bf16.mxu0 %v2688
        %3988 = vmatmul.mubr.bf16.gmra.mrb[0].mxu0 %v2687
        %v3989 = vpop.f32.mrb[0].mxu0
        %v3990 = vadd.f32 %v3637, %v3989
        %v3991 = vpop.f32.mrb[0].mxu0
        %v3992 = vadd.f32 %v3639, %v3991
        %v3993 = vpop.f32.mrb[0].mxu0
        %v3994 = vadd.f32 %v3641, %v3993
        %v3995 = vpop.f32.mrb[0].mxu0
        %v3996 = vadd.f32 %v3643, %v3995
        %3997 = vmatprep.mubr.bf16.mxu0 %v2696
        %3998 = vmatmul.mubr.bf16.gmra.mrb[0].mxu0 %v2695
        %v3999 = vpop.f32.mrb[0].mxu0
        %v4000 = vadd.f32 %v3647, %v3999
        %v4001 = vpop.f32.mrb[0].mxu0
        %v4002 = vadd.f32 %v3649, %v4001
        %v4003 = vpop.f32.mrb[0].mxu0
        %v4004 = vadd.f32 %v3651, %v4003
        %v4005 = vpop.f32.mrb[0].mxu0
        %v4006 = vadd.f32 %v3653, %v4005
        %4007 = vmatprep.mubr.bf16.mxu0 %v2704
        %4008 = vmatmul.mubr.bf16.gmra.mrb[0].mxu0 %v2703
        %v4009 = vpop.f32.mrb[0].mxu0
        %v4010 = vadd.f32 %v3657, %v4009
        %v4011 = vpop.f32.mrb[0].mxu0
        %v4012 = vadd.f32 %v3659, %v4011
        %v4013 = vpop.f32.mrb[0].mxu0
        %v4014 = vadd.f32 %v3661, %v4013
        %v4015 = vpop.f32.mrb[0].mxu0
        %v4016 = vadd.f32 %v3663, %v4015
        %4017 = vmatprep.mubr.bf16.mxu0 %v2712
        %4018 = vmatmul.mubr.bf16.gmra.mrb[0].mxu0 %v2711
        %v4019 = vpop.f32.mrb[0].mxu0
        %v4020 = vadd.f32 %v3667, %v4019
        %v4021 = vpop.f32.mrb[0].mxu0
        %v4022 = vadd.f32 %v3669, %v4021
        %v4023 = vpop.f32.mrb[0].mxu0
        %v4024 = vadd.f32 %v3671, %v4023
        %v4025 = vpop.f32.mrb[0].mxu0
        %v4026 = vadd.f32 %v3673, %v4025
        %4027 = vmatprep.mubr.bf16.mxu0 %v2720
        %4028 = vmatmul.mubr.bf16.gmra.mrb[0].mxu0 %v2719
        %v4029 = vpop.f32.mrb[0].mxu0
        %v4030 = vadd.f32 %v3677, %v4029
        %v4031 = vpop.f32.mrb[0].mxu0
        %v4032 = vadd.f32 %v3679, %v4031
        %v4033 = vpop.f32.mrb[0].mxu0
        %v4034 = vadd.f32 %v3681, %v4033
        %v4035 = vpop.f32.mrb[0].mxu0
        %v4036 = vadd.f32 %v3683, %v4035
        %4037 = vdwg.mxu0
        %4038 = vmatprep.subr.bf16.mxu0 %v996
        %4039 = vmatpush1.bf16.msra.mxu0 %v995
        %4040 = vmatprep.subr.bf16.mxu0 %v1000
        %4041 = vmatpush1.bf16.msra.mxu0 %v999
        %4042 = vmatprep.subr.bf16.mxu0 %v1004
        %4043 = vmatpush1.bf16.msra.mxu0 %v1003
        %4044 = vmatprep.subr.bf16.mxu0 %v1008
        %4045 = vmatpush1.bf16.msra.mxu0 %v1007
        %4046 = vmatprep.subr.bf16.mxu0 %v1012
        %4047 = vmatpush1.bf16.msra.mxu0 %v1011
        %4048 = vmatprep.subr.bf16.mxu0 %v1016
        %4049 = vmatpush1.bf16.msra.mxu0 %v1015
        %4050 = vmatprep.subr.bf16.mxu0 %v1020
        %4051 = vmatpush1.bf16.msra.mxu0 %v1019
        %4052 = vmatprep.subr.bf16.mxu0 %v1024
        %4053 = vmatpush1.bf16.msra.mxu0 %v1023
        %4054 = vmatprep.subr.bf16.mxu0 %v1028
        %4055 = vmatpush1.bf16.msra.mxu0 %v1027
        %4056 = vmatprep.subr.bf16.mxu0 %v1032
        %4057 = vmatpush1.bf16.msra.mxu0 %v1031
        %4058 = vmatprep.subr.bf16.mxu0 %v1036
        %4059 = vmatpush1.bf16.msra.mxu0 %v1035
        %4060 = vmatprep.subr.bf16.mxu0 %v1040
        %4061 = vmatpush1.bf16.msra.mxu0 %v1039
        %4062 = vmatprep.subr.bf16.mxu0 %v1044
        %4063 = vmatpush1.bf16.msra.mxu0 %v1043
        %4064 = vmatprep.subr.bf16.mxu0 %v1048
        %4065 = vmatpush1.bf16.msra.mxu0 %v1047
        %4066 = vmatprep.subr.bf16.mxu0 %v1052
        %4067 = vmatpush1.bf16.msra.mxu0 %v1051
        %4068 = vmatprep.subr.bf16.mxu0 %v1056
        %4069 = vmatpush1.bf16.msra.mxu0 %v1055
        %4070 = vmatprep.mubr.bf16.mxu0 %v2474
        %4071 = vmatmul.mubr.bf16.gmra.mrb[0].mxu0 %v2473
        %v4072 = vpop.f32.mrb[0].mxu0
        %v4073 = vadd.f32 %v3720, %v4072
        %v4074 = vpop.f32.mrb[0].mxu0
        %v4075 = vadd.f32 %v3722, %v4074
        %v4076 = vpop.f32.mrb[0].mxu0
        %v4077 = vadd.f32 %v3724, %v4076
        %v4078 = vpop.f32.mrb[0].mxu0
        %v4079 = vadd.f32 %v3726, %v4078
        %4080 = vmatprep.mubr.bf16.mxu0 %v2482
        %4081 = vmatmul.mubr.bf16.gmra.mrb[0].mxu0 %v2481
        %v4082 = vpop.f32.mrb[0].mxu0
        %v4083 = vadd.f32 %v3730, %v4082
        %v4084 = vpop.f32.mrb[0].mxu0
        %v4085 = vadd.f32 %v3732, %v4084
        %v4086 = vpop.f32.mrb[0].mxu0
        %v4087 = vadd.f32 %v3734, %v4086
        %v4088 = vpop.f32.mrb[0].mxu0
        %v4089 = vadd.f32 %v3736, %v4088
        %4090 = vmatprep.mubr.bf16.mxu0 %v2490
        %4091 = vmatmul.mubr.bf16.gmra.mrb[0].mxu0 %v2489
        %v4092 = vpop.f32.mrb[0].mxu0
        %v4093 = vadd.f32 %v3740, %v4092
        %v4094 = vpop.f32.mrb[0].mxu0
        %v4095 = vadd.f32 %v3742, %v4094
        %v4096 = vpop.f32.mrb[0].mxu0
        %v4097 = vadd.f32 %v3744, %v4096
        %v4098 = vpop.f32.mrb[0].mxu0
        %v4099 = vadd.f32 %v3746, %v4098
        %4100 = vmatprep.mubr.bf16.mxu0 %v2498
        %4101 = vmatmul.mubr.bf16.gmra.mrb[0].mxu0 %v2497
        %v4102 = vpop.f32.mrb[0].mxu0
        %v4103 = vadd.f32 %v3750, %v4102
        %v4104 = vpop.f32.mrb[0].mxu0
        %v4105 = vadd.f32 %v3752, %v4104
        %v4106 = vpop.f32.mrb[0].mxu0
        %v4107 = vadd.f32 %v3754, %v4106
        %v4108 = vpop.f32.mrb[0].mxu0
        %v4109 = vadd.f32 %v3756, %v4108
        %4110 = vmatprep.mubr.bf16.mxu0 %v2506
        %4111 = vmatmul.mubr.bf16.gmra.mrb[0].mxu0 %v2505
        %v4112 = vpop.f32.mrb[0].mxu0
        %v4113 = vadd.f32 %v3760, %v4112
        %v4114 = vpop.f32.mrb[0].mxu0
        %v4115 = vadd.f32 %v3762, %v4114
        %v4116 = vpop.f32.mrb[0].mxu0
        %v4117 = vadd.f32 %v3764, %v4116
        %v4118 = vpop.f32.mrb[0].mxu0
        %v4119 = vadd.f32 %v3766, %v4118
        %4120 = vmatprep.mubr.bf16.mxu0 %v2514
        %4121 = vmatmul.mubr.bf16.gmra.mrb[0].mxu0 %v2513
        %v4122 = vpop.f32.mrb[0].mxu0
        %v4123 = vadd.f32 %v3770, %v4122
        %v4124 = vpop.f32.mrb[0].mxu0
        %v4125 = vadd.f32 %v3772, %v4124
        %v4126 = vpop.f32.mrb[0].mxu0
        %v4127 = vadd.f32 %v3774, %v4126
        %v4128 = vpop.f32.mrb[0].mxu0
        %v4129 = vadd.f32 %v3776, %v4128
        %4130 = vmatprep.mubr.bf16.mxu0 %v2522
        %4131 = vmatmul.mubr.bf16.gmra.mrb[0].mxu0 %v2521
        %v4132 = vpop.f32.mrb[0].mxu0
        %v4133 = vadd.f32 %v3780, %v4132
        %v4134 = vpop.f32.mrb[0].mxu0
        %v4135 = vadd.f32 %v3782, %v4134
        %v4136 = vpop.f32.mrb[0].mxu0
        %v4137 = vadd.f32 %v3784, %v4136
        %v4138 = vpop.f32.mrb[0].mxu0
        %v4139 = vadd.f32 %v3786, %v4138
        %4140 = vmatprep.mubr.bf16.mxu0 %v2530
        %4141 = vmatmul.mubr.bf16.gmra.mrb[0].mxu0 %v2529
        %v4142 = vpop.f32.mrb[0].mxu0
        %v4143 = vadd.f32 %v3790, %v4142
        %v4144 = vpop.f32.mrb[0].mxu0
        %v4145 = vadd.f32 %v3792, %v4144
        %v4146 = vpop.f32.mrb[0].mxu0
        %v4147 = vadd.f32 %v3794, %v4146
        %v4148 = vpop.f32.mrb[0].mxu0
        %v4149 = vadd.f32 %v3796, %v4148
        %4150 = vmatprep.mubr.bf16.mxu0 %v2538
        %4151 = vmatmul.mubr.bf16.gmra.mrb[0].mxu0 %v2537
        %v4152 = vpop.f32.mrb[0].mxu0
        %v4153 = vadd.f32 %v3800, %v4152
        %v4154 = vpop.f32.mrb[0].mxu0
        %v4155 = vadd.f32 %v3802, %v4154
        %v4156 = vpop.f32.mrb[0].mxu0
        %v4157 = vadd.f32 %v3804, %v4156
        %v4158 = vpop.f32.mrb[0].mxu0
        %v4159 = vadd.f32 %v3806, %v4158
        %4160 = vmatprep.mubr.bf16.mxu0 %v2546
        %4161 = vmatmul.mubr.bf16.gmra.mrb[0].mxu0 %v2545
        %v4162 = vpop.f32.mrb[0].mxu0
        %v4163 = vadd.f32 %v3810, %v4162
        %v4164 = vpop.f32.mrb[0].mxu0
        %v4165 = vadd.f32 %v3812, %v4164
        %v4166 = vpop.f32.mrb[0].mxu0
        %v4167 = vadd.f32 %v3814, %v4166
        %v4168 = vpop.f32.mrb[0].mxu0
        %v4169 = vadd.f32 %v3816, %v4168
        %4170 = vmatprep.mubr.bf16.mxu0 %v2554
        %4171 = vmatmul.mubr.bf16.gmra.mrb[0].mxu0 %v2553
        %v4172 = vpop.f32.mrb[0].mxu0
        %v4173 = vadd.f32 %v3820, %v4172
        %v4174 = vpop.f32.mrb[0].mxu0
        %v4175 = vadd.f32 %v3822, %v4174
        %v4176 = vpop.f32.mrb[0].mxu0
        %v4177 = vadd.f32 %v3824, %v4176
        %v4178 = vpop.f32.mrb[0].mxu0
        %v4179 = vadd.f32 %v3826, %v4178
        %4180 = vmatprep.mubr.bf16.mxu0 %v2562
        %4181 = vmatmul.mubr.bf16.gmra.mrb[0].mxu0 %v2561
        %v4182 = vpop.f32.mrb[0].mxu0
        %v4183 = vadd.f32 %v3830, %v4182
        %v4184 = vpop.f32.mrb[0].mxu0
        %v4185 = vadd.f32 %v3832, %v4184
        %v4186 = vpop.f32.mrb[0].mxu0
        %v4187 = vadd.f32 %v3834, %v4186
        %v4188 = vpop.f32.mrb[0].mxu0
        %v4189 = vadd.f32 %v3836, %v4188
        %4190 = vmatprep.mubr.bf16.mxu0 %v2570
        %4191 = vmatmul.mubr.bf16.gmra.mrb[0].mxu0 %v2569
        %v4192 = vpop.f32.mrb[0].mxu0
        %v4193 = vadd.f32 %v3840, %v4192
        %v4194 = vpop.f32.mrb[0].mxu0
        %v4195 = vadd.f32 %v3842, %v4194
        %v4196 = vpop.f32.mrb[0].mxu0
        %v4197 = vadd.f32 %v3844, %v4196
        %v4198 = vpop.f32.mrb[0].mxu0
        %v4199 = vadd.f32 %v3846, %v4198
        %4200 = vmatprep.mubr.bf16.mxu0 %v2578
        %4201 = vmatmul.mubr.bf16.gmra.mrb[0].mxu0 %v2577
        %v4202 = vpop.f32.mrb[0].mxu0
        %v4203 = vadd.f32 %v3850, %v4202
        %v4204 = vpop.f32.mrb[0].mxu0
        %v4205 = vadd.f32 %v3852, %v4204
        %v4206 = vpop.f32.mrb[0].mxu0
        %v4207 = vadd.f32 %v3854, %v4206
        %v4208 = vpop.f32.mrb[0].mxu0
        %v4209 = vadd.f32 %v3856, %v4208
        %4210 = vmatprep.mubr.bf16.mxu0 %v2586
        %4211 = vmatmul.mubr.bf16.gmra.mrb[0].mxu0 %v2585
        %v4212 = vpop.f32.mrb[0].mxu0
        %v4213 = vadd.f32 %v3860, %v4212
        %v4214 = vpop.f32.mrb[0].mxu0
        %v4215 = vadd.f32 %v3862, %v4214
        %v4216 = vpop.f32.mrb[0].mxu0
        %v4217 = vadd.f32 %v3864, %v4216
        %v4218 = vpop.f32.mrb[0].mxu0
        %v4219 = vadd.f32 %v3866, %v4218
        %4220 = vmatprep.mubr.bf16.mxu0 %v2594
        %4221 = vmatmul.mubr.bf16.gmra.mrb[0].mxu0 %v2593
        %v4222 = vpop.f32.mrb[0].mxu0
        %v4223 = vadd.f32 %v3870, %v4222
        %v4224 = vpop.f32.mrb[0].mxu0
        %v4225 = vadd.f32 %v3872, %v4224
        %v4226 = vpop.f32.mrb[0].mxu0
        %v4227 = vadd.f32 %v3874, %v4226
        %v4228 = vpop.f32.mrb[0].mxu0
        %v4229 = vadd.f32 %v3876, %v4228
        %4230 = vmatprep.mubr.bf16.mxu0 %v2602
        %4231 = vmatmul.mubr.bf16.gmra.mrb[0].mxu0 %v2601
        %v4232 = vpop.f32.mrb[0].mxu0
        %v4233 = vadd.f32 %v3880, %v4232
        %v4234 = vpop.f32.mrb[0].mxu0
        %v4235 = vadd.f32 %v3882, %v4234
        %v4236 = vpop.f32.mrb[0].mxu0
        %v4237 = vadd.f32 %v3884, %v4236
        %v4238 = vpop.f32.mrb[0].mxu0
        %v4239 = vadd.f32 %v3886, %v4238
        %4240 = vmatprep.mubr.bf16.mxu0 %v2610
        %4241 = vmatmul.mubr.bf16.gmra.mrb[0].mxu0 %v2609
        %v4242 = vpop.f32.mrb[0].mxu0
        %v4243 = vadd.f32 %v3890, %v4242
        %v4244 = vpop.f32.mrb[0].mxu0
        %v4245 = vadd.f32 %v3892, %v4244
        %v4246 = vpop.f32.mrb[0].mxu0
        %v4247 = vadd.f32 %v3894, %v4246
        %v4248 = vpop.f32.mrb[0].mxu0
        %v4249 = vadd.f32 %v3896, %v4248
        %4250 = vmatprep.mubr.bf16.mxu0 %v2618
        %4251 = vmatmul.mubr.bf16.gmra.mrb[0].mxu0 %v2617
        %v4252 = vpop.f32.mrb[0].mxu0
        %v4253 = vadd.f32 %v3900, %v4252
        %v4254 = vpop.f32.mrb[0].mxu0
        %v4255 = vadd.f32 %v3902, %v4254
        %v4256 = vpop.f32.mrb[0].mxu0
        %v4257 = vadd.f32 %v3904, %v4256
        %v4258 = vpop.f32.mrb[0].mxu0
        %v4259 = vadd.f32 %v3906, %v4258
        %4260 = vmatprep.mubr.bf16.mxu0 %v2626
        %4261 = vmatmul.mubr.bf16.gmra.mrb[0].mxu0 %v2625
        %v4262 = vpop.f32.mrb[0].mxu0
        %v4263 = vadd.f32 %v3910, %v4262
        %v4264 = vpop.f32.mrb[0].mxu0
        %v4265 = vadd.f32 %v3912, %v4264
        %v4266 = vpop.f32.mrb[0].mxu0
        %v4267 = vadd.f32 %v3914, %v4266
        %v4268 = vpop.f32.mrb[0].mxu0
        %v4269 = vadd.f32 %v3916, %v4268
        %4270 = vmatprep.mubr.bf16.mxu0 %v2634
        %4271 = vmatmul.mubr.bf16.gmra.mrb[0].mxu0 %v2633
        %v4272 = vpop.f32.mrb[0].mxu0
        %v4273 = vadd.f32 %v3920, %v4272
        %v4274 = vpop.f32.mrb[0].mxu0
        %v4275 = vadd.f32 %v3922, %v4274
        %v4276 = vpop.f32.mrb[0].mxu0
        %v4277 = vadd.f32 %v3924, %v4276
        %v4278 = vpop.f32.mrb[0].mxu0
        %v4279 = vadd.f32 %v3926, %v4278
        %4280 = vmatprep.mubr.bf16.mxu0 %v2642
        %4281 = vmatmul.mubr.bf16.gmra.mrb[0].mxu0 %v2641
        %v4282 = vpop.f32.mrb[0].mxu0
        %v4283 = vadd.f32 %v3930, %v4282
        %v4284 = vpop.f32.mrb[0].mxu0
        %v4285 = vadd.f32 %v3932, %v4284
        %v4286 = vpop.f32.mrb[0].mxu0
        %v4287 = vadd.f32 %v3934, %v4286
        %v4288 = vpop.f32.mrb[0].mxu0
        %v4289 = vadd.f32 %v3936, %v4288
        %4290 = vmatprep.mubr.bf16.mxu0 %v2650
        %4291 = vmatmul.mubr.bf16.gmra.mrb[0].mxu0 %v2649
        %v4292 = vpop.f32.mrb[0].mxu0
        %v4293 = vadd.f32 %v3940, %v4292
        %v4294 = vpop.f32.mrb[0].mxu0
        %v4295 = vadd.f32 %v3942, %v4294
        %v4296 = vpop.f32.mrb[0].mxu0
        %v4297 = vadd.f32 %v3944, %v4296
        %v4298 = vpop.f32.mrb[0].mxu0
        %v4299 = vadd.f32 %v3946, %v4298
        %4300 = vmatprep.mubr.bf16.mxu0 %v2658
        %4301 = vmatmul.mubr.bf16.gmra.mrb[0].mxu0 %v2657
        %v4302 = vpop.f32.mrb[0].mxu0
        %v4303 = vadd.f32 %v3950, %v4302
        %v4304 = vpop.f32.mrb[0].mxu0
        %v4305 = vadd.f32 %v3952, %v4304
        %v4306 = vpop.f32.mrb[0].mxu0
        %v4307 = vadd.f32 %v3954, %v4306
        %v4308 = vpop.f32.mrb[0].mxu0
        %v4309 = vadd.f32 %v3956, %v4308
        %4310 = vmatprep.mubr.bf16.mxu0 %v2666
        %4311 = vmatmul.mubr.bf16.gmra.mrb[0].mxu0 %v2665
        %v4312 = vpop.f32.mrb[0].mxu0
        %v4313 = vadd.f32 %v3960, %v4312
        %v4314 = vpop.f32.mrb[0].mxu0
        %v4315 = vadd.f32 %v3962, %v4314
        %v4316 = vpop.f32.mrb[0].mxu0
        %v4317 = vadd.f32 %v3964, %v4316
        %v4318 = vpop.f32.mrb[0].mxu0
        %v4319 = vadd.f32 %v3966, %v4318
        %4320 = vmatprep.mubr.bf16.mxu0 %v2674
        %4321 = vmatmul.mubr.bf16.gmra.mrb[0].mxu0 %v2673
        %v4322 = vpop.f32.mrb[0].mxu0
        %v4323 = vadd.f32 %v3970, %v4322
        %v4324 = vpop.f32.mrb[0].mxu0
        %v4325 = vadd.f32 %v3972, %v4324
        %v4326 = vpop.f32.mrb[0].mxu0
        %v4327 = vadd.f32 %v3974, %v4326
        %v4328 = vpop.f32.mrb[0].mxu0
        %v4329 = vadd.f32 %v3976, %v4328
        %4330 = vmatprep.mubr.bf16.mxu0 %v2682
        %4331 = vmatmul.mubr.bf16.gmra.mrb[0].mxu0 %v2681
        %v4332 = vpop.f32.mrb[0].mxu0
        %v4333 = vadd.f32 %v3980, %v4332
        %v4334 = vpop.f32.mrb[0].mxu0
        %v4335 = vadd.f32 %v3982, %v4334
        %v4336 = vpop.f32.mrb[0].mxu0
        %v4337 = vadd.f32 %v3984, %v4336
        %v4338 = vpop.f32.mrb[0].mxu0
        %v4339 = vadd.f32 %v3986, %v4338
        %4340 = vmatprep.mubr.bf16.mxu0 %v2690
        %4341 = vmatmul.mubr.bf16.gmra.mrb[0].mxu0 %v2689
        %v4342 = vpop.f32.mrb[0].mxu0
        %v4343 = vadd.f32 %v3990, %v4342
        %v4344 = vpop.f32.mrb[0].mxu0
        %v4345 = vadd.f32 %v3992, %v4344
        %v4346 = vpop.f32.mrb[0].mxu0
        %v4347 = vadd.f32 %v3994, %v4346
        %v4348 = vpop.f32.mrb[0].mxu0
        %v4349 = vadd.f32 %v3996, %v4348
        %4350 = vmatprep.mubr.bf16.mxu0 %v2698
        %4351 = vmatmul.mubr.bf16.gmra.mrb[0].mxu0 %v2697
        %v4352 = vpop.f32.mrb[0].mxu0
        %v4353 = vadd.f32 %v4000, %v4352
        %v4354 = vpop.f32.mrb[0].mxu0
        %v4355 = vadd.f32 %v4002, %v4354
        %v4356 = vpop.f32.mrb[0].mxu0
        %v4357 = vadd.f32 %v4004, %v4356
        %v4358 = vpop.f32.mrb[0].mxu0
        %v4359 = vadd.f32 %v4006, %v4358
        %4360 = vmatprep.mubr.bf16.mxu0 %v2706
        %4361 = vmatmul.mubr.bf16.gmra.mrb[0].mxu0 %v2705
        %v4362 = vpop.f32.mrb[0].mxu0
        %v4363 = vadd.f32 %v4010, %v4362
        %v4364 = vpop.f32.mrb[0].mxu0
        %v4365 = vadd.f32 %v4012, %v4364
        %v4366 = vpop.f32.mrb[0].mxu0
        %v4367 = vadd.f32 %v4014, %v4366
        %v4368 = vpop.f32.mrb[0].mxu0
        %v4369 = vadd.f32 %v4016, %v4368
        %4370 = vmatprep.mubr.bf16.mxu0 %v2714
        %4371 = vmatmul.mubr.bf16.gmra.mrb[0].mxu0 %v2713
        %v4372 = vpop.f32.mrb[0].mxu0
        %v4373 = vadd.f32 %v4020, %v4372
        %v4374 = vpop.f32.mrb[0].mxu0
        %v4375 = vadd.f32 %v4022, %v4374
        %v4376 = vpop.f32.mrb[0].mxu0
        %v4377 = vadd.f32 %v4024, %v4376
        %v4378 = vpop.f32.mrb[0].mxu0
        %v4379 = vadd.f32 %v4026, %v4378
        %4380 = vmatprep.mubr.bf16.mxu0 %v2722
        %4381 = vmatmul.mubr.bf16.gmra.mrb[0].mxu0 %v2721
        %v4382 = vpop.f32.mrb[0].mxu0
        %v4383 = vadd.f32 %v4030, %v4382
        %v4384 = vpop.f32.mrb[0].mxu0
        %v4385 = vadd.f32 %v4032, %v4384
        %v4386 = vpop.f32.mrb[0].mxu0
        %v4387 = vadd.f32 %v4034, %v4386
        %v4388 = vpop.f32.mrb[0].mxu0
        %v4389 = vadd.f32 %v4036, %v4388
        %4390 = vdwg.mxu0
        %4391 = vmatprep.subr.bf16.mxu0 %v806
        %4392 = vmatpush1.bf16.msra.mxu0 %v805
        %4393 = vmatprep.subr.bf16.mxu0 %v810
        %4394 = vmatpush1.bf16.msra.mxu0 %v809
        %4395 = vmatprep.subr.bf16.mxu0 %v814
        %4396 = vmatpush1.bf16.msra.mxu0 %v813
        %4397 = vmatprep.subr.bf16.mxu0 %v818
        %4398 = vmatpush1.bf16.msra.mxu0 %v817
        %4399 = vmatprep.subr.bf16.mxu0 %v822
        %4400 = vmatpush1.bf16.msra.mxu0 %v821
        %4401 = vmatprep.subr.bf16.mxu0 %v826
        %4402 = vmatpush1.bf16.msra.mxu0 %v825
        %4403 = vmatprep.subr.bf16.mxu0 %v830
        %4404 = vmatpush1.bf16.msra.mxu0 %v829
        %4405 = vmatprep.subr.bf16.mxu0 %v834
        %4406 = vmatpush1.bf16.msra.mxu0 %v833
        %4407 = vmatprep.subr.bf16.mxu0 %v838
        %4408 = vmatpush1.bf16.msra.mxu0 %v837
        %4409 = vmatprep.subr.bf16.mxu0 %v842
        %4410 = vmatpush1.bf16.msra.mxu0 %v841
        %4411 = vmatprep.subr.bf16.mxu0 %v846
        %4412 = vmatpush1.bf16.msra.mxu0 %v845
        %4413 = vmatprep.subr.bf16.mxu0 %v850
        %4414 = vmatpush1.bf16.msra.mxu0 %v849
        %4415 = vmatprep.subr.bf16.mxu0 %v854
        %4416 = vmatpush1.bf16.msra.mxu0 %v853
        %4417 = vmatprep.subr.bf16.mxu0 %v858
        %4418 = vmatpush1.bf16.msra.mxu0 %v857
        %4419 = vmatprep.subr.bf16.mxu0 %v862
        %4420 = vmatpush1.bf16.msra.mxu0 %v861
        %4421 = vmatprep.subr.bf16.mxu0 %v866
        %4422 = vmatpush1.bf16.msra.mxu0 %v865
        %4423 = vmatprep.mubr.bf16.mxu0 %v2468
        %4424 = vmatmul.mubr.bf16.gmra.mrb[0].mxu0 %v2467
        %v4425 = vpop.f32.mrb[0].mxu0
        %v4426 = vadd.f32 %v1382, %v4425
        %v4427 = vpop.f32.mrb[0].mxu0
        %v4428 = vadd.f32 %v1382, %v4427
        %v4429 = vpop.f32.mrb[0].mxu0
        %v4430 = vadd.f32 %v1387, %v4429
        %v4431 = vpop.f32.mrb[0].mxu0
        %v4432 = vadd.f32 %v1387, %v4431
        %4433 = vmatprep.mubr.bf16.mxu0 %v2476
        %4434 = vmatmul.mubr.bf16.gmra.mrb[0].mxu0 %v2475
        %v4435 = vpop.f32.mrb[0].mxu0
        %v4436 = vadd.f32 %v1392, %v4435
        %v4437 = vpop.f32.mrb[0].mxu0
        %v4438 = vadd.f32 %v1392, %v4437
        %v4439 = vpop.f32.mrb[0].mxu0
        %v4440 = vadd.f32 %v1397, %v4439
        %v4441 = vpop.f32.mrb[0].mxu0
        %v4442 = vadd.f32 %v1397, %v4441
        %4443 = vmatprep.mubr.bf16.mxu0 %v2484
        %4444 = vmatmul.mubr.bf16.gmra.mrb[0].mxu0 %v2483
        %v4445 = vpop.f32.mrb[0].mxu0
        %v4446 = vadd.f32 %v1402, %v4445
        %v4447 = vpop.f32.mrb[0].mxu0
        %v4448 = vadd.f32 %v1402, %v4447
        %v4449 = vpop.f32.mrb[0].mxu0
        %v4450 = vadd.f32 %v1407, %v4449
        %v4451 = vpop.f32.mrb[0].mxu0
        %v4452 = vadd.f32 %v1407, %v4451
        %4453 = vmatprep.mubr.bf16.mxu0 %v2492
        %4454 = vmatmul.mubr.bf16.gmra.mrb[0].mxu0 %v2491
        %v4455 = vpop.f32.mrb[0].mxu0
        %v4456 = vadd.f32 %v1412, %v4455
        %v4457 = vpop.f32.mrb[0].mxu0
        %v4458 = vadd.f32 %v1412, %v4457
        %v4459 = vpop.f32.mrb[0].mxu0
        %v4460 = vadd.f32 %v1417, %v4459
        %v4461 = vpop.f32.mrb[0].mxu0
        %v4462 = vadd.f32 %v1417, %v4461
        %4463 = vmatprep.mubr.bf16.mxu0 %v2500
        %4464 = vmatmul.mubr.bf16.gmra.mrb[0].mxu0 %v2499
        %v4465 = vpop.f32.mrb[0].mxu0
        %v4466 = vadd.f32 %v1422, %v4465
        %v4467 = vpop.f32.mrb[0].mxu0
        %v4468 = vadd.f32 %v1422, %v4467
        %v4469 = vpop.f32.mrb[0].mxu0
        %v4470 = vadd.f32 %v1427, %v4469
        %v4471 = vpop.f32.mrb[0].mxu0
        %v4472 = vadd.f32 %v1427, %v4471
        %4473 = vmatprep.mubr.bf16.mxu0 %v2508
        %4474 = vmatmul.mubr.bf16.gmra.mrb[0].mxu0 %v2507
        %v4475 = vpop.f32.mrb[0].mxu0
        %v4476 = vadd.f32 %v1432, %v4475
        %v4477 = vpop.f32.mrb[0].mxu0
        %v4478 = vadd.f32 %v1432, %v4477
        %v4479 = vpop.f32.mrb[0].mxu0
        %v4480 = vadd.f32 %v1437, %v4479
        %v4481 = vpop.f32.mrb[0].mxu0
        %v4482 = vadd.f32 %v1437, %v4481
        %4483 = vmatprep.mubr.bf16.mxu0 %v2516
        %4484 = vmatmul.mubr.bf16.gmra.mrb[0].mxu0 %v2515
        %v4485 = vpop.f32.mrb[0].mxu0
        %v4486 = vadd.f32 %v1442, %v4485
        %v4487 = vpop.f32.mrb[0].mxu0
        %v4488 = vadd.f32 %v1442, %v4487
        %v4489 = vpop.f32.mrb[0].mxu0
        %v4490 = vadd.f32 %v1447, %v4489
        %v4491 = vpop.f32.mrb[0].mxu0
        %v4492 = vadd.f32 %v1447, %v4491
        %4493 = vmatprep.mubr.bf16.mxu0 %v2524
        %4494 = vmatmul.mubr.bf16.gmra.mrb[0].mxu0 %v2523
        %v4495 = vpop.f32.mrb[0].mxu0
        %v4496 = vadd.f32 %v1452, %v4495
        %v4497 = vpop.f32.mrb[0].mxu0
        %v4498 = vadd.f32 %v1452, %v4497
        %v4499 = vpop.f32.mrb[0].mxu0
        %v4500 = vadd.f32 %v1457, %v4499
        %v4501 = vpop.f32.mrb[0].mxu0
        %v4502 = vadd.f32 %v1457, %v4501
        %4503 = vmatprep.mubr.bf16.mxu0 %v2532
        %4504 = vmatmul.mubr.bf16.gmra.mrb[0].mxu0 %v2531
        %v4505 = vpop.f32.mrb[0].mxu0
        %v4506 = vadd.f32 %v1462, %v4505
        %v4507 = vpop.f32.mrb[0].mxu0
        %v4508 = vadd.f32 %v1462, %v4507
        %v4509 = vpop.f32.mrb[0].mxu0
        %v4510 = vadd.f32 %v1467, %v4509
        %v4511 = vpop.f32.mrb[0].mxu0
        %v4512 = vadd.f32 %v1467, %v4511
        %4513 = vmatprep.mubr.bf16.mxu0 %v2540
        %4514 = vmatmul.mubr.bf16.gmra.mrb[0].mxu0 %v2539
        %v4515 = vpop.f32.mrb[0].mxu0
        %v4516 = vadd.f32 %v1472, %v4515
        %v4517 = vpop.f32.mrb[0].mxu0
        %v4518 = vadd.f32 %v1472, %v4517
        %v4519 = vpop.f32.mrb[0].mxu0
        %v4520 = vadd.f32 %v1477, %v4519
        %v4521 = vpop.f32.mrb[0].mxu0
        %v4522 = vadd.f32 %v1477, %v4521
        %4523 = vmatprep.mubr.bf16.mxu0 %v2548
        %4524 = vmatmul.mubr.bf16.gmra.mrb[0].mxu0 %v2547
        %v4525 = vpop.f32.mrb[0].mxu0
        %v4526 = vadd.f32 %v1482, %v4525
        %v4527 = vpop.f32.mrb[0].mxu0
        %v4528 = vadd.f32 %v1482, %v4527
        %v4529 = vpop.f32.mrb[0].mxu0
        %v4530 = vadd.f32 %v1487, %v4529
        %v4531 = vpop.f32.mrb[0].mxu0
        %v4532 = vadd.f32 %v1487, %v4531
        %4533 = vmatprep.mubr.bf16.mxu0 %v2556
        %4534 = vmatmul.mubr.bf16.gmra.mrb[0].mxu0 %v2555
        %v4535 = vpop.f32.mrb[0].mxu0
        %v4536 = vadd.f32 %v1492, %v4535
        %v4537 = vpop.f32.mrb[0].mxu0
        %v4538 = vadd.f32 %v1492, %v4537
        %v4539 = vpop.f32.mrb[0].mxu0
        %v4540 = vadd.f32 %v1497, %v4539
        %v4541 = vpop.f32.mrb[0].mxu0
        %v4542 = vadd.f32 %v1497, %v4541
        %4543 = vmatprep.mubr.bf16.mxu0 %v2564
        %4544 = vmatmul.mubr.bf16.gmra.mrb[0].mxu0 %v2563
        %v4545 = vpop.f32.mrb[0].mxu0
        %v4546 = vadd.f32 %v1502, %v4545
        %v4547 = vpop.f32.mrb[0].mxu0
        %v4548 = vadd.f32 %v1502, %v4547
        %v4549 = vpop.f32.mrb[0].mxu0
        %v4550 = vadd.f32 %v1507, %v4549
        %v4551 = vpop.f32.mrb[0].mxu0
        %v4552 = vadd.f32 %v1507, %v4551
        %4553 = vmatprep.mubr.bf16.mxu0 %v2572
        %4554 = vmatmul.mubr.bf16.gmra.mrb[0].mxu0 %v2571
        %v4555 = vpop.f32.mrb[0].mxu0
        %v4556 = vadd.f32 %v1512, %v4555
        %v4557 = vpop.f32.mrb[0].mxu0
        %v4558 = vadd.f32 %v1512, %v4557
        %v4559 = vpop.f32.mrb[0].mxu0
        %v4560 = vadd.f32 %v1517, %v4559
        %v4561 = vpop.f32.mrb[0].mxu0
        %v4562 = vadd.f32 %v1517, %v4561
        %4563 = vmatprep.mubr.bf16.mxu0 %v2580
        %4564 = vmatmul.mubr.bf16.gmra.mrb[0].mxu0 %v2579
        %v4565 = vpop.f32.mrb[0].mxu0
        %v4566 = vadd.f32 %v1522, %v4565
        %v4567 = vpop.f32.mrb[0].mxu0
        %v4568 = vadd.f32 %v1522, %v4567
        %v4569 = vpop.f32.mrb[0].mxu0
        %v4570 = vadd.f32 %v1527, %v4569
        %v4571 = vpop.f32.mrb[0].mxu0
        %v4572 = vadd.f32 %v1527, %v4571
        %4573 = vmatprep.mubr.bf16.mxu0 %v2588
        %4574 = vmatmul.mubr.bf16.gmra.mrb[0].mxu0 %v2587
        %v4575 = vpop.f32.mrb[0].mxu0
        %v4576 = vadd.f32 %v1532, %v4575
        %v4577 = vpop.f32.mrb[0].mxu0
        %v4578 = vadd.f32 %v1532, %v4577
        %v4579 = vpop.f32.mrb[0].mxu0
        %v4580 = vadd.f32 %v1537, %v4579
        %v4581 = vpop.f32.mrb[0].mxu0
        %v4582 = vadd.f32 %v1537, %v4581
        %4583 = vmatprep.mubr.bf16.mxu0 %v2596
        %4584 = vmatmul.mubr.bf16.gmra.mrb[0].mxu0 %v2595
        %v4585 = vpop.f32.mrb[0].mxu0
        %v4586 = vadd.f32 %v1542, %v4585
        %v4587 = vpop.f32.mrb[0].mxu0
        %v4588 = vadd.f32 %v1542, %v4587
        %v4589 = vpop.f32.mrb[0].mxu0
        %v4590 = vadd.f32 %v1547, %v4589
        %v4591 = vpop.f32.mrb[0].mxu0
        %v4592 = vadd.f32 %v1547, %v4591
        %4593 = vmatprep.mubr.bf16.mxu0 %v2604
        %4594 = vmatmul.mubr.bf16.gmra.mrb[0].mxu0 %v2603
        %v4595 = vpop.f32.mrb[0].mxu0
        %v4596 = vadd.f32 %v1552, %v4595
        %v4597 = vpop.f32.mrb[0].mxu0
        %v4598 = vadd.f32 %v1552, %v4597
        %v4599 = vpop.f32.mrb[0].mxu0
        %v4600 = vadd.f32 %v1557, %v4599
        %v4601 = vpop.f32.mrb[0].mxu0
        %v4602 = vadd.f32 %v1557, %v4601
        %4603 = vmatprep.mubr.bf16.mxu0 %v2612
        %4604 = vmatmul.mubr.bf16.gmra.mrb[0].mxu0 %v2611
        %v4605 = vpop.f32.mrb[0].mxu0
        %v4606 = vadd.f32 %v1562, %v4605
        %v4607 = vpop.f32.mrb[0].mxu0
        %v4608 = vadd.f32 %v1562, %v4607
        %v4609 = vpop.f32.mrb[0].mxu0
        %v4610 = vadd.f32 %v1567, %v4609
        %v4611 = vpop.f32.mrb[0].mxu0
        %v4612 = vadd.f32 %v1567, %v4611
        %4613 = vmatprep.mubr.bf16.mxu0 %v2620
        %4614 = vmatmul.mubr.bf16.gmra.mrb[0].mxu0 %v2619
        %v4615 = vpop.f32.mrb[0].mxu0
        %v4616 = vadd.f32 %v1572, %v4615
        %v4617 = vpop.f32.mrb[0].mxu0
        %v4618 = vadd.f32 %v1572, %v4617
        %v4619 = vpop.f32.mrb[0].mxu0
        %v4620 = vadd.f32 %v1577, %v4619
        %v4621 = vpop.f32.mrb[0].mxu0
        %v4622 = vadd.f32 %v1577, %v4621
        %4623 = vmatprep.mubr.bf16.mxu0 %v2628
        %4624 = vmatmul.mubr.bf16.gmra.mrb[0].mxu0 %v2627
        %v4625 = vpop.f32.mrb[0].mxu0
        %v4626 = vadd.f32 %v1582, %v4625
        %v4627 = vpop.f32.mrb[0].mxu0
        %v4628 = vadd.f32 %v1582, %v4627
        %v4629 = vpop.f32.mrb[0].mxu0
        %v4630 = vadd.f32 %v1587, %v4629
        %v4631 = vpop.f32.mrb[0].mxu0
        %v4632 = vadd.f32 %v1587, %v4631
        %4633 = vmatprep.mubr.bf16.mxu0 %v2636
        %4634 = vmatmul.mubr.bf16.gmra.mrb[0].mxu0 %v2635
        %v4635 = vpop.f32.mrb[0].mxu0
        %v4636 = vadd.f32 %v1592, %v4635
        %v4637 = vpop.f32.mrb[0].mxu0
        %v4638 = vadd.f32 %v1592, %v4637
        %v4639 = vpop.f32.mrb[0].mxu0
        %v4640 = vadd.f32 %v1597, %v4639
        %v4641 = vpop.f32.mrb[0].mxu0
        %v4642 = vadd.f32 %v1597, %v4641
        %4643 = vmatprep.mubr.bf16.mxu0 %v2644
        %4644 = vmatmul.mubr.bf16.gmra.mrb[0].mxu0 %v2643
        %v4645 = vpop.f32.mrb[0].mxu0
        %v4646 = vadd.f32 %v1602, %v4645
        %v4647 = vpop.f32.mrb[0].mxu0
        %v4648 = vadd.f32 %v1602, %v4647
        %v4649 = vpop.f32.mrb[0].mxu0
        %v4650 = vadd.f32 %v1607, %v4649
        %v4651 = vpop.f32.mrb[0].mxu0
        %v4652 = vadd.f32 %v1607, %v4651
        %4653 = vmatprep.mubr.bf16.mxu0 %v2652
        %4654 = vmatmul.mubr.bf16.gmra.mrb[0].mxu0 %v2651
        %v4655 = vpop.f32.mrb[0].mxu0
        %v4656 = vadd.f32 %v1612, %v4655
        %v4657 = vpop.f32.mrb[0].mxu0
        %v4658 = vadd.f32 %v1612, %v4657
        %v4659 = vpop.f32.mrb[0].mxu0
        %v4660 = vadd.f32 %v1617, %v4659
        %v4661 = vpop.f32.mrb[0].mxu0
        %v4662 = vadd.f32 %v1617, %v4661
        %4663 = vmatprep.mubr.bf16.mxu0 %v2660
        %4664 = vmatmul.mubr.bf16.gmra.mrb[0].mxu0 %v2659
        %v4665 = vpop.f32.mrb[0].mxu0
        %v4666 = vadd.f32 %v1622, %v4665
        %v4667 = vpop.f32.mrb[0].mxu0
        %v4668 = vadd.f32 %v1622, %v4667
        %v4669 = vpop.f32.mrb[0].mxu0
        %v4670 = vadd.f32 %v1627, %v4669
        %v4671 = vpop.f32.mrb[0].mxu0
        %v4672 = vadd.f32 %v1627, %v4671
        %4673 = vmatprep.mubr.bf16.mxu0 %v2668
        %4674 = vmatmul.mubr.bf16.gmra.mrb[0].mxu0 %v2667
        %v4675 = vpop.f32.mrb[0].mxu0
        %v4676 = vadd.f32 %v1632, %v4675
        %v4677 = vpop.f32.mrb[0].mxu0
        %v4678 = vadd.f32 %v1632, %v4677
        %v4679 = vpop.f32.mrb[0].mxu0
        %v4680 = vadd.f32 %v1637, %v4679
        %v4681 = vpop.f32.mrb[0].mxu0
        %v4682 = vadd.f32 %v1637, %v4681
        %4683 = vmatprep.mubr.bf16.mxu0 %v2676
        %4684 = vmatmul.mubr.bf16.gmra.mrb[0].mxu0 %v2675
        %v4685 = vpop.f32.mrb[0].mxu0
        %v4686 = vadd.f32 %v1642, %v4685
        %v4687 = vpop.f32.mrb[0].mxu0
        %v4688 = vadd.f32 %v1642, %v4687
        %v4689 = vpop.f32.mrb[0].mxu0
        %v4690 = vadd.f32 %v1647, %v4689
        %v4691 = vpop.f32.mrb[0].mxu0
        %v4692 = vadd.f32 %v1647, %v4691
        %4693 = vmatprep.mubr.bf16.mxu0 %v2684
        %4694 = vmatmul.mubr.bf16.gmra.mrb[0].mxu0 %v2683
        %v4695 = vpop.f32.mrb[0].mxu0
        %v4696 = vadd.f32 %v1652, %v4695
        %v4697 = vpop.f32.mrb[0].mxu0
        %v4698 = vadd.f32 %v1652, %v4697
        %v4699 = vpop.f32.mrb[0].mxu0
        %v4700 = vadd.f32 %v1657, %v4699
        %v4701 = vpop.f32.mrb[0].mxu0
        %v4702 = vadd.f32 %v1657, %v4701
        %4703 = vmatprep.mubr.bf16.mxu0 %v2692
        %4704 = vmatmul.mubr.bf16.gmra.mrb[0].mxu0 %v2691
        %v4705 = vpop.f32.mrb[0].mxu0
        %v4706 = vadd.f32 %v1662, %v4705
        %v4707 = vpop.f32.mrb[0].mxu0
        %v4708 = vadd.f32 %v1662, %v4707
        %v4709 = vpop.f32.mrb[0].mxu0
        %v4710 = vadd.f32 %v1667, %v4709
        %v4711 = vpop.f32.mrb[0].mxu0
        %v4712 = vadd.f32 %v1667, %v4711
        %4713 = vmatprep.mubr.bf16.mxu0 %v2700
        %4714 = vmatmul.mubr.bf16.gmra.mrb[0].mxu0 %v2699
        %v4715 = vpop.f32.mrb[0].mxu0
        %v4716 = vadd.f32 %v1672, %v4715
        %v4717 = vpop.f32.mrb[0].mxu0
        %v4718 = vadd.f32 %v1672, %v4717
        %v4719 = vpop.f32.mrb[0].mxu0
        %v4720 = vadd.f32 %v1677, %v4719
        %v4721 = vpop.f32.mrb[0].mxu0
        %v4722 = vadd.f32 %v1677, %v4721
        %4723 = vmatprep.mubr.bf16.mxu0 %v2708
        %4724 = vmatmul.mubr.bf16.gmra.mrb[0].mxu0 %v2707
        %v4725 = vpop.f32.mrb[0].mxu0
        %v4726 = vadd.f32 %v1682, %v4725
        %v4727 = vpop.f32.mrb[0].mxu0
        %v4728 = vadd.f32 %v1682, %v4727
        %v4729 = vpop.f32.mrb[0].mxu0
        %v4730 = vadd.f32 %v1687, %v4729
        %v4731 = vpop.f32.mrb[0].mxu0
        %v4732 = vadd.f32 %v1687, %v4731
        %4733 = vmatprep.mubr.bf16.mxu0 %v2716
        %4734 = vmatmul.mubr.bf16.gmra.mrb[0].mxu0 %v2715
        %v4735 = vpop.f32.mrb[0].mxu0
        %v4736 = vadd.f32 %v1692, %v4735
        %v4737 = vpop.f32.mrb[0].mxu0
        %v4738 = vadd.f32 %v1692, %v4737
        %v4739 = vpop.f32.mrb[0].mxu0
        %v4740 = vadd.f32 %v1697, %v4739
        %v4741 = vpop.f32.mrb[0].mxu0
        %v4742 = vadd.f32 %v1697, %v4741
        %4743 = vdwg.mxu0
        %4744 = vmatprep.subr.bf16.mxu0 %v870
        %4745 = vmatpush1.bf16.msra.mxu0 %v869
        %4746 = vmatprep.subr.bf16.mxu0 %v874
        %4747 = vmatpush1.bf16.msra.mxu0 %v873
        %4748 = vmatprep.subr.bf16.mxu0 %v878
        %4749 = vmatpush1.bf16.msra.mxu0 %v877
        %4750 = vmatprep.subr.bf16.mxu0 %v882
        %4751 = vmatpush1.bf16.msra.mxu0 %v881
        %4752 = vmatprep.subr.bf16.mxu0 %v886
        %4753 = vmatpush1.bf16.msra.mxu0 %v885
        %4754 = vmatprep.subr.bf16.mxu0 %v890
        %4755 = vmatpush1.bf16.msra.mxu0 %v889
        %4756 = vmatprep.subr.bf16.mxu0 %v894
        %4757 = vmatpush1.bf16.msra.mxu0 %v893
        %4758 = vmatprep.subr.bf16.mxu0 %v898
        %4759 = vmatpush1.bf16.msra.mxu0 %v897
        %4760 = vmatprep.subr.bf16.mxu0 %v902
        %4761 = vmatpush1.bf16.msra.mxu0 %v901
        %4762 = vmatprep.subr.bf16.mxu0 %v906
        %4763 = vmatpush1.bf16.msra.mxu0 %v905
        %4764 = vmatprep.subr.bf16.mxu0 %v910
        %4765 = vmatpush1.bf16.msra.mxu0 %v909
        %4766 = vmatprep.subr.bf16.mxu0 %v914
        %4767 = vmatpush1.bf16.msra.mxu0 %v913
        %4768 = vmatprep.subr.bf16.mxu0 %v918
        %4769 = vmatpush1.bf16.msra.mxu0 %v917
        %4770 = vmatprep.subr.bf16.mxu0 %v922
        %4771 = vmatpush1.bf16.msra.mxu0 %v921
        %4772 = vmatprep.subr.bf16.mxu0 %v926
        %4773 = vmatpush1.bf16.msra.mxu0 %v925
        %4774 = vmatprep.subr.bf16.mxu0 %v930
        %4775 = vmatpush1.bf16.msra.mxu0 %v929
        %4776 = vmatprep.mubr.bf16.mxu0 %v2470
        %4777 = vmatmul.mubr.bf16.gmra.mrb[0].mxu0 %v2469
        %v4778 = vpop.f32.mrb[0].mxu0
        %v4779 = vadd.f32 %v4426, %v4778
        %v4780 = vpop.f32.mrb[0].mxu0
        %v4781 = vadd.f32 %v4428, %v4780
        %v4782 = vpop.f32.mrb[0].mxu0
        %v4783 = vadd.f32 %v4430, %v4782
        %v4784 = vpop.f32.mrb[0].mxu0
        %v4785 = vadd.f32 %v4432, %v4784
        %4786 = vmatprep.mubr.bf16.mxu0 %v2478
        %4787 = vmatmul.mubr.bf16.gmra.mrb[0].mxu0 %v2477
        %v4788 = vpop.f32.mrb[0].mxu0
        %v4789 = vadd.f32 %v4436, %v4788
        %v4790 = vpop.f32.mrb[0].mxu0
        %v4791 = vadd.f32 %v4438, %v4790
        %v4792 = vpop.f32.mrb[0].mxu0
        %v4793 = vadd.f32 %v4440, %v4792
        %v4794 = vpop.f32.mrb[0].mxu0
        %v4795 = vadd.f32 %v4442, %v4794
        %4796 = vmatprep.mubr.bf16.mxu0 %v2486
        %4797 = vmatmul.mubr.bf16.gmra.mrb[0].mxu0 %v2485
        %v4798 = vpop.f32.mrb[0].mxu0
        %v4799 = vadd.f32 %v4446, %v4798
        %v4800 = vpop.f32.mrb[0].mxu0
        %v4801 = vadd.f32 %v4448, %v4800
        %v4802 = vpop.f32.mrb[0].mxu0
        %v4803 = vadd.f32 %v4450, %v4802
        %v4804 = vpop.f32.mrb[0].mxu0
        %v4805 = vadd.f32 %v4452, %v4804
        %4806 = vmatprep.mubr.bf16.mxu0 %v2494
        %4807 = vmatmul.mubr.bf16.gmra.mrb[0].mxu0 %v2493
        %v4808 = vpop.f32.mrb[0].mxu0
        %v4809 = vadd.f32 %v4456, %v4808
        %v4810 = vpop.f32.mrb[0].mxu0
        %v4811 = vadd.f32 %v4458, %v4810
        %v4812 = vpop.f32.mrb[0].mxu0
        %v4813 = vadd.f32 %v4460, %v4812
        %v4814 = vpop.f32.mrb[0].mxu0
        %v4815 = vadd.f32 %v4462, %v4814
        %4816 = vmatprep.mubr.bf16.mxu0 %v2502
        %4817 = vmatmul.mubr.bf16.gmra.mrb[0].mxu0 %v2501
        %v4818 = vpop.f32.mrb[0].mxu0
        %v4819 = vadd.f32 %v4466, %v4818
        %v4820 = vpop.f32.mrb[0].mxu0
        %v4821 = vadd.f32 %v4468, %v4820
        %v4822 = vpop.f32.mrb[0].mxu0
        %v4823 = vadd.f32 %v4470, %v4822
        %v4824 = vpop.f32.mrb[0].mxu0
        %v4825 = vadd.f32 %v4472, %v4824
        %4826 = vmatprep.mubr.bf16.mxu0 %v2510
        %4827 = vmatmul.mubr.bf16.gmra.mrb[0].mxu0 %v2509
        %v4828 = vpop.f32.mrb[0].mxu0
        %v4829 = vadd.f32 %v4476, %v4828
        %v4830 = vpop.f32.mrb[0].mxu0
        %v4831 = vadd.f32 %v4478, %v4830
        %v4832 = vpop.f32.mrb[0].mxu0
        %v4833 = vadd.f32 %v4480, %v4832
        %v4834 = vpop.f32.mrb[0].mxu0
        %v4835 = vadd.f32 %v4482, %v4834
        %4836 = vmatprep.mubr.bf16.mxu0 %v2518
        %4837 = vmatmul.mubr.bf16.gmra.mrb[0].mxu0 %v2517
        %v4838 = vpop.f32.mrb[0].mxu0
        %v4839 = vadd.f32 %v4486, %v4838
        %v4840 = vpop.f32.mrb[0].mxu0
        %v4841 = vadd.f32 %v4488, %v4840
        %v4842 = vpop.f32.mrb[0].mxu0
        %v4843 = vadd.f32 %v4490, %v4842
        %v4844 = vpop.f32.mrb[0].mxu0
        %v4845 = vadd.f32 %v4492, %v4844
        %4846 = vmatprep.mubr.bf16.mxu0 %v2526
        %4847 = vmatmul.mubr.bf16.gmra.mrb[0].mxu0 %v2525
        %v4848 = vpop.f32.mrb[0].mxu0
        %v4849 = vadd.f32 %v4496, %v4848
        %v4850 = vpop.f32.mrb[0].mxu0
        %v4851 = vadd.f32 %v4498, %v4850
        %v4852 = vpop.f32.mrb[0].mxu0
        %v4853 = vadd.f32 %v4500, %v4852
        %v4854 = vpop.f32.mrb[0].mxu0
        %v4855 = vadd.f32 %v4502, %v4854
        %4856 = vmatprep.mubr.bf16.mxu0 %v2534
        %4857 = vmatmul.mubr.bf16.gmra.mrb[0].mxu0 %v2533
        %v4858 = vpop.f32.mrb[0].mxu0
        %v4859 = vadd.f32 %v4506, %v4858
        %v4860 = vpop.f32.mrb[0].mxu0
        %v4861 = vadd.f32 %v4508, %v4860
        %v4862 = vpop.f32.mrb[0].mxu0
        %v4863 = vadd.f32 %v4510, %v4862
        %v4864 = vpop.f32.mrb[0].mxu0
        %v4865 = vadd.f32 %v4512, %v4864
        %4866 = vmatprep.mubr.bf16.mxu0 %v2542
        %4867 = vmatmul.mubr.bf16.gmra.mrb[0].mxu0 %v2541
        %v4868 = vpop.f32.mrb[0].mxu0
        %v4869 = vadd.f32 %v4516, %v4868
        %v4870 = vpop.f32.mrb[0].mxu0
        %v4871 = vadd.f32 %v4518, %v4870
        %v4872 = vpop.f32.mrb[0].mxu0
        %v4873 = vadd.f32 %v4520, %v4872
        %v4874 = vpop.f32.mrb[0].mxu0
        %v4875 = vadd.f32 %v4522, %v4874
        %4876 = vmatprep.mubr.bf16.mxu0 %v2550
        %4877 = vmatmul.mubr.bf16.gmra.mrb[0].mxu0 %v2549
        %v4878 = vpop.f32.mrb[0].mxu0
        %v4879 = vadd.f32 %v4526, %v4878
        %v4880 = vpop.f32.mrb[0].mxu0
        %v4881 = vadd.f32 %v4528, %v4880
        %v4882 = vpop.f32.mrb[0].mxu0
        %v4883 = vadd.f32 %v4530, %v4882
        %v4884 = vpop.f32.mrb[0].mxu0
        %v4885 = vadd.f32 %v4532, %v4884
        %4886 = vmatprep.mubr.bf16.mxu0 %v2558
        %4887 = vmatmul.mubr.bf16.gmra.mrb[0].mxu0 %v2557
        %v4888 = vpop.f32.mrb[0].mxu0
        %v4889 = vadd.f32 %v4536, %v4888
        %v4890 = vpop.f32.mrb[0].mxu0
        %v4891 = vadd.f32 %v4538, %v4890
        %v4892 = vpop.f32.mrb[0].mxu0
        %v4893 = vadd.f32 %v4540, %v4892
        %v4894 = vpop.f32.mrb[0].mxu0
        %v4895 = vadd.f32 %v4542, %v4894
        %4896 = vmatprep.mubr.bf16.mxu0 %v2566
        %4897 = vmatmul.mubr.bf16.gmra.mrb[0].mxu0 %v2565
        %v4898 = vpop.f32.mrb[0].mxu0
        %v4899 = vadd.f32 %v4546, %v4898
        %v4900 = vpop.f32.mrb[0].mxu0
        %v4901 = vadd.f32 %v4548, %v4900
        %v4902 = vpop.f32.mrb[0].mxu0
        %v4903 = vadd.f32 %v4550, %v4902
        %v4904 = vpop.f32.mrb[0].mxu0
        %v4905 = vadd.f32 %v4552, %v4904
        %4906 = vmatprep.mubr.bf16.mxu0 %v2574
        %4907 = vmatmul.mubr.bf16.gmra.mrb[0].mxu0 %v2573
        %v4908 = vpop.f32.mrb[0].mxu0
        %v4909 = vadd.f32 %v4556, %v4908
        %v4910 = vpop.f32.mrb[0].mxu0
        %v4911 = vadd.f32 %v4558, %v4910
        %v4912 = vpop.f32.mrb[0].mxu0
        %v4913 = vadd.f32 %v4560, %v4912
        %v4914 = vpop.f32.mrb[0].mxu0
        %v4915 = vadd.f32 %v4562, %v4914
        %4916 = vmatprep.mubr.bf16.mxu0 %v2582
        %4917 = vmatmul.mubr.bf16.gmra.mrb[0].mxu0 %v2581
        %v4918 = vpop.f32.mrb[0].mxu0
        %v4919 = vadd.f32 %v4566, %v4918
        %v4920 = vpop.f32.mrb[0].mxu0
        %v4921 = vadd.f32 %v4568, %v4920
        %v4922 = vpop.f32.mrb[0].mxu0
        %v4923 = vadd.f32 %v4570, %v4922
        %v4924 = vpop.f32.mrb[0].mxu0
        %v4925 = vadd.f32 %v4572, %v4924
        %4926 = vmatprep.mubr.bf16.mxu0 %v2590
        %4927 = vmatmul.mubr.bf16.gmra.mrb[0].mxu0 %v2589
        %v4928 = vpop.f32.mrb[0].mxu0
        %v4929 = vadd.f32 %v4576, %v4928
        %v4930 = vpop.f32.mrb[0].mxu0
        %v4931 = vadd.f32 %v4578, %v4930
        %v4932 = vpop.f32.mrb[0].mxu0
        %v4933 = vadd.f32 %v4580, %v4932
        %v4934 = vpop.f32.mrb[0].mxu0
        %v4935 = vadd.f32 %v4582, %v4934
        %4936 = vmatprep.mubr.bf16.mxu0 %v2598
        %4937 = vmatmul.mubr.bf16.gmra.mrb[0].mxu0 %v2597
        %v4938 = vpop.f32.mrb[0].mxu0
        %v4939 = vadd.f32 %v4586, %v4938
        %v4940 = vpop.f32.mrb[0].mxu0
        %v4941 = vadd.f32 %v4588, %v4940
        %v4942 = vpop.f32.mrb[0].mxu0
        %v4943 = vadd.f32 %v4590, %v4942
        %v4944 = vpop.f32.mrb[0].mxu0
        %v4945 = vadd.f32 %v4592, %v4944
        %4946 = vmatprep.mubr.bf16.mxu0 %v2606
        %4947 = vmatmul.mubr.bf16.gmra.mrb[0].mxu0 %v2605
        %v4948 = vpop.f32.mrb[0].mxu0
        %v4949 = vadd.f32 %v4596, %v4948
        %v4950 = vpop.f32.mrb[0].mxu0
        %v4951 = vadd.f32 %v4598, %v4950
        %v4952 = vpop.f32.mrb[0].mxu0
        %v4953 = vadd.f32 %v4600, %v4952
        %v4954 = vpop.f32.mrb[0].mxu0
        %v4955 = vadd.f32 %v4602, %v4954
        %4956 = vmatprep.mubr.bf16.mxu0 %v2614
        %4957 = vmatmul.mubr.bf16.gmra.mrb[0].mxu0 %v2613
        %v4958 = vpop.f32.mrb[0].mxu0
        %v4959 = vadd.f32 %v4606, %v4958
        %v4960 = vpop.f32.mrb[0].mxu0
        %v4961 = vadd.f32 %v4608, %v4960
        %v4962 = vpop.f32.mrb[0].mxu0
        %v4963 = vadd.f32 %v4610, %v4962
        %v4964 = vpop.f32.mrb[0].mxu0
        %v4965 = vadd.f32 %v4612, %v4964
        %4966 = vmatprep.mubr.bf16.mxu0 %v2622
        %4967 = vmatmul.mubr.bf16.gmra.mrb[0].mxu0 %v2621
        %v4968 = vpop.f32.mrb[0].mxu0
        %v4969 = vadd.f32 %v4616, %v4968
        %v4970 = vpop.f32.mrb[0].mxu0
        %v4971 = vadd.f32 %v4618, %v4970
        %v4972 = vpop.f32.mrb[0].mxu0
        %v4973 = vadd.f32 %v4620, %v4972
        %v4974 = vpop.f32.mrb[0].mxu0
        %v4975 = vadd.f32 %v4622, %v4974
        %4976 = vmatprep.mubr.bf16.mxu0 %v2630
        %4977 = vmatmul.mubr.bf16.gmra.mrb[0].mxu0 %v2629
        %v4978 = vpop.f32.mrb[0].mxu0
        %v4979 = vadd.f32 %v4626, %v4978
        %v4980 = vpop.f32.mrb[0].mxu0
        %v4981 = vadd.f32 %v4628, %v4980
        %v4982 = vpop.f32.mrb[0].mxu0
        %v4983 = vadd.f32 %v4630, %v4982
        %v4984 = vpop.f32.mrb[0].mxu0
        %v4985 = vadd.f32 %v4632, %v4984
        %4986 = vmatprep.mubr.bf16.mxu0 %v2638
        %4987 = vmatmul.mubr.bf16.gmra.mrb[0].mxu0 %v2637
        %v4988 = vpop.f32.mrb[0].mxu0
        %v4989 = vadd.f32 %v4636, %v4988
        %v4990 = vpop.f32.mrb[0].mxu0
        %v4991 = vadd.f32 %v4638, %v4990
        %v4992 = vpop.f32.mrb[0].mxu0
        %v4993 = vadd.f32 %v4640, %v4992
        %v4994 = vpop.f32.mrb[0].mxu0
        %v4995 = vadd.f32 %v4642, %v4994
        %4996 = vmatprep.mubr.bf16.mxu0 %v2646
        %4997 = vmatmul.mubr.bf16.gmra.mrb[0].mxu0 %v2645
        %v4998 = vpop.f32.mrb[0].mxu0
        %v4999 = vadd.f32 %v4646, %v4998
        %v5000 = vpop.f32.mrb[0].mxu0
        %v5001 = vadd.f32 %v4648, %v5000
        %v5002 = vpop.f32.mrb[0].mxu0
        %v5003 = vadd.f32 %v4650, %v5002
        %v5004 = vpop.f32.mrb[0].mxu0
        %v5005 = vadd.f32 %v4652, %v5004
        %5006 = vmatprep.mubr.bf16.mxu0 %v2654
        %5007 = vmatmul.mubr.bf16.gmra.mrb[0].mxu0 %v2653
        %v5008 = vpop.f32.mrb[0].mxu0
        %v5009 = vadd.f32 %v4656, %v5008
        %v5010 = vpop.f32.mrb[0].mxu0
        %v5011 = vadd.f32 %v4658, %v5010
        %v5012 = vpop.f32.mrb[0].mxu0
        %v5013 = vadd.f32 %v4660, %v5012
        %v5014 = vpop.f32.mrb[0].mxu0
        %v5015 = vadd.f32 %v4662, %v5014
        %5016 = vmatprep.mubr.bf16.mxu0 %v2662
        %5017 = vmatmul.mubr.bf16.gmra.mrb[0].mxu0 %v2661
        %v5018 = vpop.f32.mrb[0].mxu0
        %v5019 = vadd.f32 %v4666, %v5018
        %v5020 = vpop.f32.mrb[0].mxu0
        %v5021 = vadd.f32 %v4668, %v5020
        %v5022 = vpop.f32.mrb[0].mxu0
        %v5023 = vadd.f32 %v4670, %v5022
        %v5024 = vpop.f32.mrb[0].mxu0
        %v5025 = vadd.f32 %v4672, %v5024
        %5026 = vmatprep.mubr.bf16.mxu0 %v2670
        %5027 = vmatmul.mubr.bf16.gmra.mrb[0].mxu0 %v2669
        %v5028 = vpop.f32.mrb[0].mxu0
        %v5029 = vadd.f32 %v4676, %v5028
        %v5030 = vpop.f32.mrb[0].mxu0
        %v5031 = vadd.f32 %v4678, %v5030
        %v5032 = vpop.f32.mrb[0].mxu0
        %v5033 = vadd.f32 %v4680, %v5032
        %v5034 = vpop.f32.mrb[0].mxu0
        %v5035 = vadd.f32 %v4682, %v5034
        %5036 = vmatprep.mubr.bf16.mxu0 %v2678
        %5037 = vmatmul.mubr.bf16.gmra.mrb[0].mxu0 %v2677
        %v5038 = vpop.f32.mrb[0].mxu0
        %v5039 = vadd.f32 %v4686, %v5038
        %v5040 = vpop.f32.mrb[0].mxu0
        %v5041 = vadd.f32 %v4688, %v5040
        %v5042 = vpop.f32.mrb[0].mxu0
        %v5043 = vadd.f32 %v4690, %v5042
        %v5044 = vpop.f32.mrb[0].mxu0
        %v5045 = vadd.f32 %v4692, %v5044
        %5046 = vmatprep.mubr.bf16.mxu0 %v2686
        %5047 = vmatmul.mubr.bf16.gmra.mrb[0].mxu0 %v2685
        %v5048 = vpop.f32.mrb[0].mxu0
        %v5049 = vadd.f32 %v4696, %v5048
        %v5050 = vpop.f32.mrb[0].mxu0
        %v5051 = vadd.f32 %v4698, %v5050
        %v5052 = vpop.f32.mrb[0].mxu0
        %v5053 = vadd.f32 %v4700, %v5052
        %v5054 = vpop.f32.mrb[0].mxu0
        %v5055 = vadd.f32 %v4702, %v5054
        %5056 = vmatprep.mubr.bf16.mxu0 %v2694
        %5057 = vmatmul.mubr.bf16.gmra.mrb[0].mxu0 %v2693
        %v5058 = vpop.f32.mrb[0].mxu0
        %v5059 = vadd.f32 %v4706, %v5058
        %v5060 = vpop.f32.mrb[0].mxu0
        %v5061 = vadd.f32 %v4708, %v5060
        %v5062 = vpop.f32.mrb[0].mxu0
        %v5063 = vadd.f32 %v4710, %v5062
        %v5064 = vpop.f32.mrb[0].mxu0
        %v5065 = vadd.f32 %v4712, %v5064
        %5066 = vmatprep.mubr.bf16.mxu0 %v2702
        %5067 = vmatmul.mubr.bf16.gmra.mrb[0].mxu0 %v2701
        %v5068 = vpop.f32.mrb[0].mxu0
        %v5069 = vadd.f32 %v4716, %v5068
        %v5070 = vpop.f32.mrb[0].mxu0
        %v5071 = vadd.f32 %v4718, %v5070
        %v5072 = vpop.f32.mrb[0].mxu0
        %v5073 = vadd.f32 %v4720, %v5072
        %v5074 = vpop.f32.mrb[0].mxu0
        %v5075 = vadd.f32 %v4722, %v5074
        %5076 = vmatprep.mubr.bf16.mxu0 %v2710
        %5077 = vmatmul.mubr.bf16.gmra.mrb[0].mxu0 %v2709
        %v5078 = vpop.f32.mrb[0].mxu0
        %v5079 = vadd.f32 %v4726, %v5078
        %v5080 = vpop.f32.mrb[0].mxu0
        %v5081 = vadd.f32 %v4728, %v5080
        %v5082 = vpop.f32.mrb[0].mxu0
        %v5083 = vadd.f32 %v4730, %v5082
        %v5084 = vpop.f32.mrb[0].mxu0
        %v5085 = vadd.f32 %v4732, %v5084
        %5086 = vmatprep.mubr.bf16.mxu0 %v2718
        %5087 = vmatmul.mubr.bf16.gmra.mrb[0].mxu0 %v2717
        %v5088 = vpop.f32.mrb[0].mxu0
        %v5089 = vadd.f32 %v4736, %v5088
        %v5090 = vpop.f32.mrb[0].mxu0
        %v5091 = vadd.f32 %v4738, %v5090
        %v5092 = vpop.f32.mrb[0].mxu0
        %v5093 = vadd.f32 %v4740, %v5092
        %v5094 = vpop.f32.mrb[0].mxu0
        %v5095 = vadd.f32 %v4742, %v5094
        %5096 = vdwg.mxu0
        %5097 = vmatprep.subr.bf16.mxu0 %v934
        %5098 = vmatpush1.bf16.msra.mxu0 %v933
        %5099 = vmatprep.subr.bf16.mxu0 %v938
        %5100 = vmatpush1.bf16.msra.mxu0 %v937
        %5101 = vmatprep.subr.bf16.mxu0 %v942
        %5102 = vmatpush1.bf16.msra.mxu0 %v941
        %5103 = vmatprep.subr.bf16.mxu0 %v946
        %5104 = vmatpush1.bf16.msra.mxu0 %v945
        %5105 = vmatprep.subr.bf16.mxu0 %v950
        %5106 = vmatpush1.bf16.msra.mxu0 %v949
        %5107 = vmatprep.subr.bf16.mxu0 %v954
        %5108 = vmatpush1.bf16.msra.mxu0 %v953
        %5109 = vmatprep.subr.bf16.mxu0 %v958
        %5110 = vmatpush1.bf16.msra.mxu0 %v957
        %5111 = vmatprep.subr.bf16.mxu0 %v962
        %5112 = vmatpush1.bf16.msra.mxu0 %v961
        %5113 = vmatprep.subr.bf16.mxu0 %v966
        %5114 = vmatpush1.bf16.msra.mxu0 %v965
        %5115 = vmatprep.subr.bf16.mxu0 %v970
        %5116 = vmatpush1.bf16.msra.mxu0 %v969
        %5117 = vmatprep.subr.bf16.mxu0 %v974
        %5118 = vmatpush1.bf16.msra.mxu0 %v973
        %5119 = vmatprep.subr.bf16.mxu0 %v978
        %5120 = vmatpush1.bf16.msra.mxu0 %v977
        %5121 = vmatprep.subr.bf16.mxu0 %v982
        %5122 = vmatpush1.bf16.msra.mxu0 %v981
        %5123 = vmatprep.subr.bf16.mxu0 %v986
        %5124 = vmatpush1.bf16.msra.mxu0 %v985
        %5125 = vmatprep.subr.bf16.mxu0 %v990
        %5126 = vmatpush1.bf16.msra.mxu0 %v989
        %5127 = vmatprep.subr.bf16.mxu0 %v994
        %5128 = vmatpush1.bf16.msra.mxu0 %v993
        %5129 = vmatprep.mubr.bf16.mxu0 %v2472
        %5130 = vmatmul.mubr.bf16.gmra.mrb[0].mxu0 %v2471
        %v5131 = vpop.f32.mrb[0].mxu0
        %v5132 = vadd.f32 %v4779, %v5131
        %v5133 = vpop.f32.mrb[0].mxu0
        %v5134 = vadd.f32 %v4781, %v5133
        %v5135 = vpop.f32.mrb[0].mxu0
        %v5136 = vadd.f32 %v4783, %v5135
        %v5137 = vpop.f32.mrb[0].mxu0
        %v5138 = vadd.f32 %v4785, %v5137
        %5139 = vmatprep.mubr.bf16.mxu0 %v2480
        %5140 = vmatmul.mubr.bf16.gmra.mrb[0].mxu0 %v2479
        %v5141 = vpop.f32.mrb[0].mxu0
        %v5142 = vadd.f32 %v4789, %v5141
        %v5143 = vpop.f32.mrb[0].mxu0
        %v5144 = vadd.f32 %v4791, %v5143
        %v5145 = vpop.f32.mrb[0].mxu0
        %v5146 = vadd.f32 %v4793, %v5145
        %v5147 = vpop.f32.mrb[0].mxu0
        %v5148 = vadd.f32 %v4795, %v5147
        %5149 = vmatprep.mubr.bf16.mxu0 %v2488
        %5150 = vmatmul.mubr.bf16.gmra.mrb[0].mxu0 %v2487
        %v5151 = vpop.f32.mrb[0].mxu0
        %v5152 = vadd.f32 %v4799, %v5151
        %v5153 = vpop.f32.mrb[0].mxu0
        %v5154 = vadd.f32 %v4801, %v5153
        %v5155 = vpop.f32.mrb[0].mxu0
        %v5156 = vadd.f32 %v4803, %v5155
        %v5157 = vpop.f32.mrb[0].mxu0
        %v5158 = vadd.f32 %v4805, %v5157
        %5159 = vmatprep.mubr.bf16.mxu0 %v2496
        %5160 = vmatmul.mubr.bf16.gmra.mrb[0].mxu0 %v2495
        %v5161 = vpop.f32.mrb[0].mxu0
        %v5162 = vadd.f32 %v4809, %v5161
        %v5163 = vpop.f32.mrb[0].mxu0
        %v5164 = vadd.f32 %v4811, %v5163
        %v5165 = vpop.f32.mrb[0].mxu0
        %v5166 = vadd.f32 %v4813, %v5165
        %v5167 = vpop.f32.mrb[0].mxu0
        %v5168 = vadd.f32 %v4815, %v5167
        %5169 = vmatprep.mubr.bf16.mxu0 %v2504
        %5170 = vmatmul.mubr.bf16.gmra.mrb[0].mxu0 %v2503
        %v5171 = vpop.f32.mrb[0].mxu0
        %v5172 = vadd.f32 %v4819, %v5171
        %v5173 = vpop.f32.mrb[0].mxu0
        %v5174 = vadd.f32 %v4821, %v5173
        %v5175 = vpop.f32.mrb[0].mxu0
        %v5176 = vadd.f32 %v4823, %v5175
        %v5177 = vpop.f32.mrb[0].mxu0
        %v5178 = vadd.f32 %v4825, %v5177
        %5179 = vmatprep.mubr.bf16.mxu0 %v2512
        %5180 = vmatmul.mubr.bf16.gmra.mrb[0].mxu0 %v2511
        %v5181 = vpop.f32.mrb[0].mxu0
        %v5182 = vadd.f32 %v4829, %v5181
        %v5183 = vpop.f32.mrb[0].mxu0
        %v5184 = vadd.f32 %v4831, %v5183
        %v5185 = vpop.f32.mrb[0].mxu0
        %v5186 = vadd.f32 %v4833, %v5185
        %v5187 = vpop.f32.mrb[0].mxu0
        %v5188 = vadd.f32 %v4835, %v5187
        %5189 = vmatprep.mubr.bf16.mxu0 %v2520
        %5190 = vmatmul.mubr.bf16.gmra.mrb[0].mxu0 %v2519
        %v5191 = vpop.f32.mrb[0].mxu0
        %v5192 = vadd.f32 %v4839, %v5191
        %v5193 = vpop.f32.mrb[0].mxu0
        %v5194 = vadd.f32 %v4841, %v5193
        %v5195 = vpop.f32.mrb[0].mxu0
        %v5196 = vadd.f32 %v4843, %v5195
        %v5197 = vpop.f32.mrb[0].mxu0
        %v5198 = vadd.f32 %v4845, %v5197
        %5199 = vmatprep.mubr.bf16.mxu0 %v2528
        %5200 = vmatmul.mubr.bf16.gmra.mrb[0].mxu0 %v2527
        %v5201 = vpop.f32.mrb[0].mxu0
        %v5202 = vadd.f32 %v4849, %v5201
        %v5203 = vpop.f32.mrb[0].mxu0
        %v5204 = vadd.f32 %v4851, %v5203
        %v5205 = vpop.f32.mrb[0].mxu0
        %v5206 = vadd.f32 %v4853, %v5205
        %v5207 = vpop.f32.mrb[0].mxu0
        %v5208 = vadd.f32 %v4855, %v5207
        %5209 = vmatprep.mubr.bf16.mxu0 %v2536
        %5210 = vmatmul.mubr.bf16.gmra.mrb[0].mxu0 %v2535
        %v5211 = vpop.f32.mrb[0].mxu0
        %v5212 = vadd.f32 %v4859, %v5211
        %v5213 = vpop.f32.mrb[0].mxu0
        %v5214 = vadd.f32 %v4861, %v5213
        %v5215 = vpop.f32.mrb[0].mxu0
        %v5216 = vadd.f32 %v4863, %v5215
        %v5217 = vpop.f32.mrb[0].mxu0
        %v5218 = vadd.f32 %v4865, %v5217
        %5219 = vmatprep.mubr.bf16.mxu0 %v2544
        %5220 = vmatmul.mubr.bf16.gmra.mrb[0].mxu0 %v2543
        %v5221 = vpop.f32.mrb[0].mxu0
        %v5222 = vadd.f32 %v4869, %v5221
        %v5223 = vpop.f32.mrb[0].mxu0
        %v5224 = vadd.f32 %v4871, %v5223
        %v5225 = vpop.f32.mrb[0].mxu0
        %v5226 = vadd.f32 %v4873, %v5225
        %v5227 = vpop.f32.mrb[0].mxu0
        %v5228 = vadd.f32 %v4875, %v5227
        %5229 = vmatprep.mubr.bf16.mxu0 %v2552
        %5230 = vmatmul.mubr.bf16.gmra.mrb[0].mxu0 %v2551
        %v5231 = vpop.f32.mrb[0].mxu0
        %v5232 = vadd.f32 %v4879, %v5231
        %v5233 = vpop.f32.mrb[0].mxu0
        %v5234 = vadd.f32 %v4881, %v5233
        %v5235 = vpop.f32.mrb[0].mxu0
        %v5236 = vadd.f32 %v4883, %v5235
        %v5237 = vpop.f32.mrb[0].mxu0
        %v5238 = vadd.f32 %v4885, %v5237
        %5239 = vmatprep.mubr.bf16.mxu0 %v2560
        %5240 = vmatmul.mubr.bf16.gmra.mrb[0].mxu0 %v2559
        %v5241 = vpop.f32.mrb[0].mxu0
        %v5242 = vadd.f32 %v4889, %v5241
        %v5243 = vpop.f32.mrb[0].mxu0
        %v5244 = vadd.f32 %v4891, %v5243
        %v5245 = vpop.f32.mrb[0].mxu0
        %v5246 = vadd.f32 %v4893, %v5245
        %v5247 = vpop.f32.mrb[0].mxu0
        %v5248 = vadd.f32 %v4895, %v5247
        %5249 = vmatprep.mubr.bf16.mxu0 %v2568
        %5250 = vmatmul.mubr.bf16.gmra.mrb[0].mxu0 %v2567
        %v5251 = vpop.f32.mrb[0].mxu0
        %v5252 = vadd.f32 %v4899, %v5251
        %v5253 = vpop.f32.mrb[0].mxu0
        %v5254 = vadd.f32 %v4901, %v5253
        %v5255 = vpop.f32.mrb[0].mxu0
        %v5256 = vadd.f32 %v4903, %v5255
        %v5257 = vpop.f32.mrb[0].mxu0
        %v5258 = vadd.f32 %v4905, %v5257
        %5259 = vmatprep.mubr.bf16.mxu0 %v2576
        %5260 = vmatmul.mubr.bf16.gmra.mrb[0].mxu0 %v2575
        %v5261 = vpop.f32.mrb[0].mxu0
        %v5262 = vadd.f32 %v4909, %v5261
        %v5263 = vpop.f32.mrb[0].mxu0
        %v5264 = vadd.f32 %v4911, %v5263
        %v5265 = vpop.f32.mrb[0].mxu0
        %v5266 = vadd.f32 %v4913, %v5265
        %v5267 = vpop.f32.mrb[0].mxu0
        %v5268 = vadd.f32 %v4915, %v5267
        %5269 = vmatprep.mubr.bf16.mxu0 %v2584
        %5270 = vmatmul.mubr.bf16.gmra.mrb[0].mxu0 %v2583
        %v5271 = vpop.f32.mrb[0].mxu0
        %v5272 = vadd.f32 %v4919, %v5271
        %v5273 = vpop.f32.mrb[0].mxu0
        %v5274 = vadd.f32 %v4921, %v5273
        %v5275 = vpop.f32.mrb[0].mxu0
        %v5276 = vadd.f32 %v4923, %v5275
        %v5277 = vpop.f32.mrb[0].mxu0
        %v5278 = vadd.f32 %v4925, %v5277
        %5279 = vmatprep.mubr.bf16.mxu0 %v2592
        %5280 = vmatmul.mubr.bf16.gmra.mrb[0].mxu0 %v2591
        %v5281 = vpop.f32.mrb[0].mxu0
        %v5282 = vadd.f32 %v4929, %v5281
        %v5283 = vpop.f32.mrb[0].mxu0
        %v5284 = vadd.f32 %v4931, %v5283
        %v5285 = vpop.f32.mrb[0].mxu0
        %v5286 = vadd.f32 %v4933, %v5285
        %v5287 = vpop.f32.mrb[0].mxu0
        %v5288 = vadd.f32 %v4935, %v5287
        %5289 = vmatprep.mubr.bf16.mxu0 %v2600
        %5290 = vmatmul.mubr.bf16.gmra.mrb[0].mxu0 %v2599
        %v5291 = vpop.f32.mrb[0].mxu0
        %v5292 = vadd.f32 %v4939, %v5291
        %v5293 = vpop.f32.mrb[0].mxu0
        %v5294 = vadd.f32 %v4941, %v5293
        %v5295 = vpop.f32.mrb[0].mxu0
        %v5296 = vadd.f32 %v4943, %v5295
        %v5297 = vpop.f32.mrb[0].mxu0
        %v5298 = vadd.f32 %v4945, %v5297
        %5299 = vmatprep.mubr.bf16.mxu0 %v2608
        %5300 = vmatmul.mubr.bf16.gmra.mrb[0].mxu0 %v2607
        %v5301 = vpop.f32.mrb[0].mxu0
        %v5302 = vadd.f32 %v4949, %v5301
        %v5303 = vpop.f32.mrb[0].mxu0
        %v5304 = vadd.f32 %v4951, %v5303
        %v5305 = vpop.f32.mrb[0].mxu0
        %v5306 = vadd.f32 %v4953, %v5305
        %v5307 = vpop.f32.mrb[0].mxu0
        %v5308 = vadd.f32 %v4955, %v5307
        %5309 = vmatprep.mubr.bf16.mxu0 %v2616
        %5310 = vmatmul.mubr.bf16.gmra.mrb[0].mxu0 %v2615
        %v5311 = vpop.f32.mrb[0].mxu0
        %v5312 = vadd.f32 %v4959, %v5311
        %v5313 = vpop.f32.mrb[0].mxu0
        %v5314 = vadd.f32 %v4961, %v5313
        %v5315 = vpop.f32.mrb[0].mxu0
        %v5316 = vadd.f32 %v4963, %v5315
        %v5317 = vpop.f32.mrb[0].mxu0
        %v5318 = vadd.f32 %v4965, %v5317
        %5319 = vmatprep.mubr.bf16.mxu0 %v2624
        %5320 = vmatmul.mubr.bf16.gmra.mrb[0].mxu0 %v2623
        %v5321 = vpop.f32.mrb[0].mxu0
        %v5322 = vadd.f32 %v4969, %v5321
        %v5323 = vpop.f32.mrb[0].mxu0
        %v5324 = vadd.f32 %v4971, %v5323
        %v5325 = vpop.f32.mrb[0].mxu0
        %v5326 = vadd.f32 %v4973, %v5325
        %v5327 = vpop.f32.mrb[0].mxu0
        %v5328 = vadd.f32 %v4975, %v5327
        %5329 = vmatprep.mubr.bf16.mxu0 %v2632
        %5330 = vmatmul.mubr.bf16.gmra.mrb[0].mxu0 %v2631
        %v5331 = vpop.f32.mrb[0].mxu0
        %v5332 = vadd.f32 %v4979, %v5331
        %v5333 = vpop.f32.mrb[0].mxu0
        %v5334 = vadd.f32 %v4981, %v5333
        %v5335 = vpop.f32.mrb[0].mxu0
        %v5336 = vadd.f32 %v4983, %v5335
        %v5337 = vpop.f32.mrb[0].mxu0
        %v5338 = vadd.f32 %v4985, %v5337
        %5339 = vmatprep.mubr.bf16.mxu0 %v2640
        %5340 = vmatmul.mubr.bf16.gmra.mrb[0].mxu0 %v2639
        %v5341 = vpop.f32.mrb[0].mxu0
        %v5342 = vadd.f32 %v4989, %v5341
        %v5343 = vpop.f32.mrb[0].mxu0
        %v5344 = vadd.f32 %v4991, %v5343
        %v5345 = vpop.f32.mrb[0].mxu0
        %v5346 = vadd.f32 %v4993, %v5345
        %v5347 = vpop.f32.mrb[0].mxu0
        %v5348 = vadd.f32 %v4995, %v5347
        %5349 = vmatprep.mubr.bf16.mxu0 %v2648
        %5350 = vmatmul.mubr.bf16.gmra.mrb[0].mxu0 %v2647
        %v5351 = vpop.f32.mrb[0].mxu0
        %v5352 = vadd.f32 %v4999, %v5351
        %v5353 = vpop.f32.mrb[0].mxu0
        %v5354 = vadd.f32 %v5001, %v5353
        %v5355 = vpop.f32.mrb[0].mxu0
        %v5356 = vadd.f32 %v5003, %v5355
        %v5357 = vpop.f32.mrb[0].mxu0
        %v5358 = vadd.f32 %v5005, %v5357
        %5359 = vmatprep.mubr.bf16.mxu0 %v2656
        %5360 = vmatmul.mubr.bf16.gmra.mrb[0].mxu0 %v2655
        %v5361 = vpop.f32.mrb[0].mxu0
        %v5362 = vadd.f32 %v5009, %v5361
        %v5363 = vpop.f32.mrb[0].mxu0
        %v5364 = vadd.f32 %v5011, %v5363
        %v5365 = vpop.f32.mrb[0].mxu0
        %v5366 = vadd.f32 %v5013, %v5365
        %v5367 = vpop.f32.mrb[0].mxu0
        %v5368 = vadd.f32 %v5015, %v5367
        %5369 = vmatprep.mubr.bf16.mxu0 %v2664
        %5370 = vmatmul.mubr.bf16.gmra.mrb[0].mxu0 %v2663
        %v5371 = vpop.f32.mrb[0].mxu0
        %v5372 = vadd.f32 %v5019, %v5371
        %v5373 = vpop.f32.mrb[0].mxu0
        %v5374 = vadd.f32 %v5021, %v5373
        %v5375 = vpop.f32.mrb[0].mxu0
        %v5376 = vadd.f32 %v5023, %v5375
        %v5377 = vpop.f32.mrb[0].mxu0
        %v5378 = vadd.f32 %v5025, %v5377
        %5379 = vmatprep.mubr.bf16.mxu0 %v2672
        %5380 = vmatmul.mubr.bf16.gmra.mrb[0].mxu0 %v2671
        %v5381 = vpop.f32.mrb[0].mxu0
        %v5382 = vadd.f32 %v5029, %v5381
        %v5383 = vpop.f32.mrb[0].mxu0
        %v5384 = vadd.f32 %v5031, %v5383
        %v5385 = vpop.f32.mrb[0].mxu0
        %v5386 = vadd.f32 %v5033, %v5385
        %v5387 = vpop.f32.mrb[0].mxu0
        %v5388 = vadd.f32 %v5035, %v5387
        %5389 = vmatprep.mubr.bf16.mxu0 %v2680
        %5390 = vmatmul.mubr.bf16.gmra.mrb[0].mxu0 %v2679
        %v5391 = vpop.f32.mrb[0].mxu0
        %v5392 = vadd.f32 %v5039, %v5391
        %v5393 = vpop.f32.mrb[0].mxu0
        %v5394 = vadd.f32 %v5041, %v5393
        %v5395 = vpop.f32.mrb[0].mxu0
        %v5396 = vadd.f32 %v5043, %v5395
        %v5397 = vpop.f32.mrb[0].mxu0
        %v5398 = vadd.f32 %v5045, %v5397
        %5399 = vmatprep.mubr.bf16.mxu0 %v2688
        %5400 = vmatmul.mubr.bf16.gmra.mrb[0].mxu0 %v2687
        %v5401 = vpop.f32.mrb[0].mxu0
        %v5402 = vadd.f32 %v5049, %v5401
        %v5403 = vpop.f32.mrb[0].mxu0
        %v5404 = vadd.f32 %v5051, %v5403
        %v5405 = vpop.f32.mrb[0].mxu0
        %v5406 = vadd.f32 %v5053, %v5405
        %v5407 = vpop.f32.mrb[0].mxu0
        %v5408 = vadd.f32 %v5055, %v5407
        %5409 = vmatprep.mubr.bf16.mxu0 %v2696
        %5410 = vmatmul.mubr.bf16.gmra.mrb[0].mxu0 %v2695
        %v5411 = vpop.f32.mrb[0].mxu0
        %v5412 = vadd.f32 %v5059, %v5411
        %v5413 = vpop.f32.mrb[0].mxu0
        %v5414 = vadd.f32 %v5061, %v5413
        %v5415 = vpop.f32.mrb[0].mxu0
        %v5416 = vadd.f32 %v5063, %v5415
        %v5417 = vpop.f32.mrb[0].mxu0
        %v5418 = vadd.f32 %v5065, %v5417
        %5419 = vmatprep.mubr.bf16.mxu0 %v2704
        %5420 = vmatmul.mubr.bf16.gmra.mrb[0].mxu0 %v2703
        %v5421 = vpop.f32.mrb[0].mxu0
        %v5422 = vadd.f32 %v5069, %v5421
        %v5423 = vpop.f32.mrb[0].mxu0
        %v5424 = vadd.f32 %v5071, %v5423
        %v5425 = vpop.f32.mrb[0].mxu0
        %v5426 = vadd.f32 %v5073, %v5425
        %v5427 = vpop.f32.mrb[0].mxu0
        %v5428 = vadd.f32 %v5075, %v5427
        %5429 = vmatprep.mubr.bf16.mxu0 %v2712
        %5430 = vmatmul.mubr.bf16.gmra.mrb[0].mxu0 %v2711
        %v5431 = vpop.f32.mrb[0].mxu0
        %v5432 = vadd.f32 %v5079, %v5431
        %v5433 = vpop.f32.mrb[0].mxu0
        %v5434 = vadd.f32 %v5081, %v5433
        %v5435 = vpop.f32.mrb[0].mxu0
        %v5436 = vadd.f32 %v5083, %v5435
        %v5437 = vpop.f32.mrb[0].mxu0
        %v5438 = vadd.f32 %v5085, %v5437
        %5439 = vmatprep.mubr.bf16.mxu0 %v2720
        %5440 = vmatmul.mubr.bf16.gmra.mrb[0].mxu0 %v2719
        %v5441 = vpop.f32.mrb[0].mxu0
        %v5442 = vadd.f32 %v5089, %v5441
        %v5443 = vpop.f32.mrb[0].mxu0
        %v5444 = vadd.f32 %v5091, %v5443
        %v5445 = vpop.f32.mrb[0].mxu0
        %v5446 = vadd.f32 %v5093, %v5445
        %v5447 = vpop.f32.mrb[0].mxu0
        %v5448 = vadd.f32 %v5095, %v5447
        %5449 = vdwg.mxu0
        %5450 = vmatprep.subr.bf16.mxu0 %v998
        %5451 = vmatpush1.bf16.msra.mxu0 %v997
        %5452 = vmatprep.subr.bf16.mxu0 %v1002
        %5453 = vmatpush1.bf16.msra.mxu0 %v1001
        %5454 = vmatprep.subr.bf16.mxu0 %v1006
        %5455 = vmatpush1.bf16.msra.mxu0 %v1005
        %5456 = vmatprep.subr.bf16.mxu0 %v1010
        %5457 = vmatpush1.bf16.msra.mxu0 %v1009
        %5458 = vmatprep.subr.bf16.mxu0 %v1014
        %5459 = vmatpush1.bf16.msra.mxu0 %v1013
        %5460 = vmatprep.subr.bf16.mxu0 %v1018
        %5461 = vmatpush1.bf16.msra.mxu0 %v1017
        %5462 = vmatprep.subr.bf16.mxu0 %v1022
        %5463 = vmatpush1.bf16.msra.mxu0 %v1021
        %5464 = vmatprep.subr.bf16.mxu0 %v1026
        %5465 = vmatpush1.bf16.msra.mxu0 %v1025
        %5466 = vmatprep.subr.bf16.mxu0 %v1030
        %5467 = vmatpush1.bf16.msra.mxu0 %v1029
        %5468 = vmatprep.subr.bf16.mxu0 %v1034
        %5469 = vmatpush1.bf16.msra.mxu0 %v1033
        %5470 = vmatprep.subr.bf16.mxu0 %v1038
        %5471 = vmatpush1.bf16.msra.mxu0 %v1037
        %5472 = vmatprep.subr.bf16.mxu0 %v1042
        %5473 = vmatpush1.bf16.msra.mxu0 %v1041
        %5474 = vmatprep.subr.bf16.mxu0 %v1046
        %5475 = vmatpush1.bf16.msra.mxu0 %v1045
        %5476 = vmatprep.subr.bf16.mxu0 %v1050
        %5477 = vmatpush1.bf16.msra.mxu0 %v1049
        %5478 = vmatprep.subr.bf16.mxu0 %v1054
        %5479 = vmatpush1.bf16.msra.mxu0 %v1053
        %5480 = vmatprep.subr.bf16.mxu0 %v1058
        %5481 = vmatpush1.bf16.msra.mxu0 %v1057
        %5482 = vmatprep.mubr.bf16.mxu0 %v2474
        %5483 = vmatmul.mubr.bf16.gmra.mrb[0].mxu0 %v2473
        %v5484 = vpop.f32.mrb[0].mxu0
        %v5485 = vadd.f32 %v5132, %v5484
        %v5486 = vpop.f32.mrb[0].mxu0
        %v5487 = vadd.f32 %v5134, %v5486
        %v5488 = vpop.f32.mrb[0].mxu0
        %v5489 = vadd.f32 %v5136, %v5488
        %v5490 = vpop.f32.mrb[0].mxu0
        %v5491 = vadd.f32 %v5138, %v5490
        %5492 = vmatprep.mubr.bf16.mxu0 %v2482
        %5493 = vmatmul.mubr.bf16.gmra.mrb[0].mxu0 %v2481
        %v5494 = vpop.f32.mrb[0].mxu0
        %v5495 = vadd.f32 %v5142, %v5494
        %v5496 = vpop.f32.mrb[0].mxu0
        %v5497 = vadd.f32 %v5144, %v5496
        %v5498 = vpop.f32.mrb[0].mxu0
        %v5499 = vadd.f32 %v5146, %v5498
        %v5500 = vpop.f32.mrb[0].mxu0
        %v5501 = vadd.f32 %v5148, %v5500
        %5502 = vmatprep.mubr.bf16.mxu0 %v2490
        %5503 = vmatmul.mubr.bf16.gmra.mrb[0].mxu0 %v2489
        %v5504 = vpop.f32.mrb[0].mxu0
        %v5505 = vadd.f32 %v5152, %v5504
        %v5506 = vpop.f32.mrb[0].mxu0
        %v5507 = vadd.f32 %v5154, %v5506
        %v5508 = vpop.f32.mrb[0].mxu0
        %v5509 = vadd.f32 %v5156, %v5508
        %v5510 = vpop.f32.mrb[0].mxu0
        %v5511 = vadd.f32 %v5158, %v5510
        %5512 = vmatprep.mubr.bf16.mxu0 %v2498
        %5513 = vmatmul.mubr.bf16.gmra.mrb[0].mxu0 %v2497
        %v5514 = vpop.f32.mrb[0].mxu0
        %v5515 = vadd.f32 %v5162, %v5514
        %v5516 = vpop.f32.mrb[0].mxu0
        %v5517 = vadd.f32 %v5164, %v5516
        %v5518 = vpop.f32.mrb[0].mxu0
        %v5519 = vadd.f32 %v5166, %v5518
        %v5520 = vpop.f32.mrb[0].mxu0
        %v5521 = vadd.f32 %v5168, %v5520
        %5522 = vmatprep.mubr.bf16.mxu0 %v2506
        %5523 = vmatmul.mubr.bf16.gmra.mrb[0].mxu0 %v2505
        %v5524 = vpop.f32.mrb[0].mxu0
        %v5525 = vadd.f32 %v5172, %v5524
        %v5526 = vpop.f32.mrb[0].mxu0
        %v5527 = vadd.f32 %v5174, %v5526
        %v5528 = vpop.f32.mrb[0].mxu0
        %v5529 = vadd.f32 %v5176, %v5528
        %v5530 = vpop.f32.mrb[0].mxu0
        %v5531 = vadd.f32 %v5178, %v5530
        %5532 = vmatprep.mubr.bf16.mxu0 %v2514
        %5533 = vmatmul.mubr.bf16.gmra.mrb[0].mxu0 %v2513
        %v5534 = vpop.f32.mrb[0].mxu0
        %v5535 = vadd.f32 %v5182, %v5534
        %v5536 = vpop.f32.mrb[0].mxu0
        %v5537 = vadd.f32 %v5184, %v5536
        %v5538 = vpop.f32.mrb[0].mxu0
        %v5539 = vadd.f32 %v5186, %v5538
        %v5540 = vpop.f32.mrb[0].mxu0
        %v5541 = vadd.f32 %v5188, %v5540
        %5542 = vmatprep.mubr.bf16.mxu0 %v2522
        %5543 = vmatmul.mubr.bf16.gmra.mrb[0].mxu0 %v2521
        %v5544 = vpop.f32.mrb[0].mxu0
        %v5545 = vadd.f32 %v5192, %v5544
        %v5546 = vpop.f32.mrb[0].mxu0
        %v5547 = vadd.f32 %v5194, %v5546
        %v5548 = vpop.f32.mrb[0].mxu0
        %v5549 = vadd.f32 %v5196, %v5548
        %v5550 = vpop.f32.mrb[0].mxu0
        %v5551 = vadd.f32 %v5198, %v5550
        %5552 = vmatprep.mubr.bf16.mxu0 %v2530
        %5553 = vmatmul.mubr.bf16.gmra.mrb[0].mxu0 %v2529
        %v5554 = vpop.f32.mrb[0].mxu0
        %v5555 = vadd.f32 %v5202, %v5554
        %v5556 = vpop.f32.mrb[0].mxu0
        %v5557 = vadd.f32 %v5204, %v5556
        %v5558 = vpop.f32.mrb[0].mxu0
        %v5559 = vadd.f32 %v5206, %v5558
        %v5560 = vpop.f32.mrb[0].mxu0
        %v5561 = vadd.f32 %v5208, %v5560
        %5562 = vmatprep.mubr.bf16.mxu0 %v2538
        %5563 = vmatmul.mubr.bf16.gmra.mrb[0].mxu0 %v2537
        %v5564 = vpop.f32.mrb[0].mxu0
        %v5565 = vadd.f32 %v5212, %v5564
        %v5566 = vpop.f32.mrb[0].mxu0
        %v5567 = vadd.f32 %v5214, %v5566
        %v5568 = vpop.f32.mrb[0].mxu0
        %v5569 = vadd.f32 %v5216, %v5568
        %v5570 = vpop.f32.mrb[0].mxu0
        %v5571 = vadd.f32 %v5218, %v5570
        %5572 = vmatprep.mubr.bf16.mxu0 %v2546
        %5573 = vmatmul.mubr.bf16.gmra.mrb[0].mxu0 %v2545
        %v5574 = vpop.f32.mrb[0].mxu0
        %v5575 = vadd.f32 %v5222, %v5574
        %v5576 = vpop.f32.mrb[0].mxu0
        %v5577 = vadd.f32 %v5224, %v5576
        %v5578 = vpop.f32.mrb[0].mxu0
        %v5579 = vadd.f32 %v5226, %v5578
        %v5580 = vpop.f32.mrb[0].mxu0
        %v5581 = vadd.f32 %v5228, %v5580
        %5582 = vmatprep.mubr.bf16.mxu0 %v2554
        %5583 = vmatmul.mubr.bf16.gmra.mrb[0].mxu0 %v2553
        %v5584 = vpop.f32.mrb[0].mxu0
        %v5585 = vadd.f32 %v5232, %v5584
        %v5586 = vpop.f32.mrb[0].mxu0
        %v5587 = vadd.f32 %v5234, %v5586
        %v5588 = vpop.f32.mrb[0].mxu0
        %v5589 = vadd.f32 %v5236, %v5588
        %v5590 = vpop.f32.mrb[0].mxu0
        %v5591 = vadd.f32 %v5238, %v5590
        %5592 = vmatprep.mubr.bf16.mxu0 %v2562
        %5593 = vmatmul.mubr.bf16.gmra.mrb[0].mxu0 %v2561
        %v5594 = vpop.f32.mrb[0].mxu0
        %v5595 = vadd.f32 %v5242, %v5594
        %v5596 = vpop.f32.mrb[0].mxu0
        %v5597 = vadd.f32 %v5244, %v5596
        %v5598 = vpop.f32.mrb[0].mxu0
        %v5599 = vadd.f32 %v5246, %v5598
        %v5600 = vpop.f32.mrb[0].mxu0
        %v5601 = vadd.f32 %v5248, %v5600
        %5602 = vmatprep.mubr.bf16.mxu0 %v2570
        %5603 = vmatmul.mubr.bf16.gmra.mrb[0].mxu0 %v2569
        %v5604 = vpop.f32.mrb[0].mxu0
        %v5605 = vadd.f32 %v5252, %v5604
        %v5606 = vpop.f32.mrb[0].mxu0
        %v5607 = vadd.f32 %v5254, %v5606
        %v5608 = vpop.f32.mrb[0].mxu0
        %v5609 = vadd.f32 %v5256, %v5608
        %v5610 = vpop.f32.mrb[0].mxu0
        %v5611 = vadd.f32 %v5258, %v5610
        %5612 = vmatprep.mubr.bf16.mxu0 %v2578
        %5613 = vmatmul.mubr.bf16.gmra.mrb[0].mxu0 %v2577
        %v5614 = vpop.f32.mrb[0].mxu0
        %v5615 = vadd.f32 %v5262, %v5614
        %v5616 = vpop.f32.mrb[0].mxu0
        %v5617 = vadd.f32 %v5264, %v5616
        %v5618 = vpop.f32.mrb[0].mxu0
        %v5619 = vadd.f32 %v5266, %v5618
        %v5620 = vpop.f32.mrb[0].mxu0
        %v5621 = vadd.f32 %v5268, %v5620
        %5622 = vmatprep.mubr.bf16.mxu0 %v2586
        %5623 = vmatmul.mubr.bf16.gmra.mrb[0].mxu0 %v2585
        %v5624 = vpop.f32.mrb[0].mxu0
        %v5625 = vadd.f32 %v5272, %v5624
        %v5626 = vpop.f32.mrb[0].mxu0
        %v5627 = vadd.f32 %v5274, %v5626
        %v5628 = vpop.f32.mrb[0].mxu0
        %v5629 = vadd.f32 %v5276, %v5628
        %v5630 = vpop.f32.mrb[0].mxu0
        %v5631 = vadd.f32 %v5278, %v5630
        %5632 = vmatprep.mubr.bf16.mxu0 %v2594
        %5633 = vmatmul.mubr.bf16.gmra.mrb[0].mxu0 %v2593
        %v5634 = vpop.f32.mrb[0].mxu0
        %v5635 = vadd.f32 %v5282, %v5634
        %v5636 = vpop.f32.mrb[0].mxu0
        %v5637 = vadd.f32 %v5284, %v5636
        %v5638 = vpop.f32.mrb[0].mxu0
        %v5639 = vadd.f32 %v5286, %v5638
        %v5640 = vpop.f32.mrb[0].mxu0
        %v5641 = vadd.f32 %v5288, %v5640
        %5642 = vmatprep.mubr.bf16.mxu0 %v2602
        %5643 = vmatmul.mubr.bf16.gmra.mrb[0].mxu0 %v2601
        %v5644 = vpop.f32.mrb[0].mxu0
        %v5645 = vadd.f32 %v5292, %v5644
        %v5646 = vpop.f32.mrb[0].mxu0
        %v5647 = vadd.f32 %v5294, %v5646
        %v5648 = vpop.f32.mrb[0].mxu0
        %v5649 = vadd.f32 %v5296, %v5648
        %v5650 = vpop.f32.mrb[0].mxu0
        %v5651 = vadd.f32 %v5298, %v5650
        %5652 = vmatprep.mubr.bf16.mxu0 %v2610
        %5653 = vmatmul.mubr.bf16.gmra.mrb[0].mxu0 %v2609
        %v5654 = vpop.f32.mrb[0].mxu0
        %v5655 = vadd.f32 %v5302, %v5654
        %v5656 = vpop.f32.mrb[0].mxu0
        %v5657 = vadd.f32 %v5304, %v5656
        %v5658 = vpop.f32.mrb[0].mxu0
        %v5659 = vadd.f32 %v5306, %v5658
        %v5660 = vpop.f32.mrb[0].mxu0
        %v5661 = vadd.f32 %v5308, %v5660
        %5662 = vmatprep.mubr.bf16.mxu0 %v2618
        %5663 = vmatmul.mubr.bf16.gmra.mrb[0].mxu0 %v2617
        %v5664 = vpop.f32.mrb[0].mxu0
        %v5665 = vadd.f32 %v5312, %v5664
        %v5666 = vpop.f32.mrb[0].mxu0
        %v5667 = vadd.f32 %v5314, %v5666
        %v5668 = vpop.f32.mrb[0].mxu0
        %v5669 = vadd.f32 %v5316, %v5668
        %v5670 = vpop.f32.mrb[0].mxu0
        %v5671 = vadd.f32 %v5318, %v5670
        %5672 = vmatprep.mubr.bf16.mxu0 %v2626
        %5673 = vmatmul.mubr.bf16.gmra.mrb[0].mxu0 %v2625
        %v5674 = vpop.f32.mrb[0].mxu0
        %v5675 = vadd.f32 %v5322, %v5674
        %v5676 = vpop.f32.mrb[0].mxu0
        %v5677 = vadd.f32 %v5324, %v5676
        %v5678 = vpop.f32.mrb[0].mxu0
        %v5679 = vadd.f32 %v5326, %v5678
        %v5680 = vpop.f32.mrb[0].mxu0
        %v5681 = vadd.f32 %v5328, %v5680
        %5682 = vmatprep.mubr.bf16.mxu0 %v2634
        %5683 = vmatmul.mubr.bf16.gmra.mrb[0].mxu0 %v2633
        %v5684 = vpop.f32.mrb[0].mxu0
        %v5685 = vadd.f32 %v5332, %v5684
        %v5686 = vpop.f32.mrb[0].mxu0
        %v5687 = vadd.f32 %v5334, %v5686
        %v5688 = vpop.f32.mrb[0].mxu0
        %v5689 = vadd.f32 %v5336, %v5688
        %v5690 = vpop.f32.mrb[0].mxu0
        %v5691 = vadd.f32 %v5338, %v5690
        %5692 = vmatprep.mubr.bf16.mxu0 %v2642
        %5693 = vmatmul.mubr.bf16.gmra.mrb[0].mxu0 %v2641
        %v5694 = vpop.f32.mrb[0].mxu0
        %v5695 = vadd.f32 %v5342, %v5694
        %v5696 = vpop.f32.mrb[0].mxu0
        %v5697 = vadd.f32 %v5344, %v5696
        %v5698 = vpop.f32.mrb[0].mxu0
        %v5699 = vadd.f32 %v5346, %v5698
        %v5700 = vpop.f32.mrb[0].mxu0
        %v5701 = vadd.f32 %v5348, %v5700
        %5702 = vmatprep.mubr.bf16.mxu0 %v2650
        %5703 = vmatmul.mubr.bf16.gmra.mrb[0].mxu0 %v2649
        %v5704 = vpop.f32.mrb[0].mxu0
        %v5705 = vadd.f32 %v5352, %v5704
        %v5706 = vpop.f32.mrb[0].mxu0
        %v5707 = vadd.f32 %v5354, %v5706
        %v5708 = vpop.f32.mrb[0].mxu0
        %v5709 = vadd.f32 %v5356, %v5708
        %v5710 = vpop.f32.mrb[0].mxu0
        %v5711 = vadd.f32 %v5358, %v5710
        %5712 = vmatprep.mubr.bf16.mxu0 %v2658
        %5713 = vmatmul.mubr.bf16.gmra.mrb[0].mxu0 %v2657
        %v5714 = vpop.f32.mrb[0].mxu0
        %v5715 = vadd.f32 %v5362, %v5714
        %v5716 = vpop.f32.mrb[0].mxu0
        %v5717 = vadd.f32 %v5364, %v5716
        %v5718 = vpop.f32.mrb[0].mxu0
        %v5719 = vadd.f32 %v5366, %v5718
        %v5720 = vpop.f32.mrb[0].mxu0
        %v5721 = vadd.f32 %v5368, %v5720
        %5722 = vmatprep.mubr.bf16.mxu0 %v2666
        %5723 = vmatmul.mubr.bf16.gmra.mrb[0].mxu0 %v2665
        %v5724 = vpop.f32.mrb[0].mxu0
        %v5725 = vadd.f32 %v5372, %v5724
        %v5726 = vpop.f32.mrb[0].mxu0
        %v5727 = vadd.f32 %v5374, %v5726
        %v5728 = vpop.f32.mrb[0].mxu0
        %v5729 = vadd.f32 %v5376, %v5728
        %v5730 = vpop.f32.mrb[0].mxu0
        %v5731 = vadd.f32 %v5378, %v5730
        %5732 = vmatprep.mubr.bf16.mxu0 %v2674
        %5733 = vmatmul.mubr.bf16.gmra.mrb[0].mxu0 %v2673
        %v5734 = vpop.f32.mrb[0].mxu0
        %v5735 = vadd.f32 %v5382, %v5734
        %v5736 = vpop.f32.mrb[0].mxu0
        %v5737 = vadd.f32 %v5384, %v5736
        %v5738 = vpop.f32.mrb[0].mxu0
        %v5739 = vadd.f32 %v5386, %v5738
        %v5740 = vpop.f32.mrb[0].mxu0
        %v5741 = vadd.f32 %v5388, %v5740
        %5742 = vmatprep.mubr.bf16.mxu0 %v2682
        %5743 = vmatmul.mubr.bf16.gmra.mrb[0].mxu0 %v2681
        %v5744 = vpop.f32.mrb[0].mxu0
        %v5745 = vadd.f32 %v5392, %v5744
        %v5746 = vpop.f32.mrb[0].mxu0
        %v5747 = vadd.f32 %v5394, %v5746
        %v5748 = vpop.f32.mrb[0].mxu0
        %v5749 = vadd.f32 %v5396, %v5748
        %v5750 = vpop.f32.mrb[0].mxu0
        %v5751 = vadd.f32 %v5398, %v5750
        %5752 = vmatprep.mubr.bf16.mxu0 %v2690
        %5753 = vmatmul.mubr.bf16.gmra.mrb[0].mxu0 %v2689
        %v5754 = vpop.f32.mrb[0].mxu0
        %v5755 = vadd.f32 %v5402, %v5754
        %v5756 = vpop.f32.mrb[0].mxu0
        %v5757 = vadd.f32 %v5404, %v5756
        %v5758 = vpop.f32.mrb[0].mxu0
        %v5759 = vadd.f32 %v5406, %v5758
        %v5760 = vpop.f32.mrb[0].mxu0
        %v5761 = vadd.f32 %v5408, %v5760
        %5762 = vmatprep.mubr.bf16.mxu0 %v2698
        %5763 = vmatmul.mubr.bf16.gmra.mrb[0].mxu0 %v2697
        %v5764 = vpop.f32.mrb[0].mxu0
        %v5765 = vadd.f32 %v5412, %v5764
        %v5766 = vpop.f32.mrb[0].mxu0
        %v5767 = vadd.f32 %v5414, %v5766
        %v5768 = vpop.f32.mrb[0].mxu0
        %v5769 = vadd.f32 %v5416, %v5768
        %v5770 = vpop.f32.mrb[0].mxu0
        %v5771 = vadd.f32 %v5418, %v5770
        %5772 = vmatprep.mubr.bf16.mxu0 %v2706
        %5773 = vmatmul.mubr.bf16.gmra.mrb[0].mxu0 %v2705
        %v5774 = vpop.f32.mrb[0].mxu0
        %v5775 = vadd.f32 %v5422, %v5774
        %v5776 = vpop.f32.mrb[0].mxu0
        %v5777 = vadd.f32 %v5424, %v5776
        %v5778 = vpop.f32.mrb[0].mxu0
        %v5779 = vadd.f32 %v5426, %v5778
        %v5780 = vpop.f32.mrb[0].mxu0
        %v5781 = vadd.f32 %v5428, %v5780
        %5782 = vmatprep.mubr.bf16.mxu0 %v2714
        %5783 = vmatmul.mubr.bf16.gmra.mrb[0].mxu0 %v2713
        %v5784 = vpop.f32.mrb[0].mxu0
        %v5785 = vadd.f32 %v5432, %v5784
        %v5786 = vpop.f32.mrb[0].mxu0
        %v5787 = vadd.f32 %v5434, %v5786
        %v5788 = vpop.f32.mrb[0].mxu0
        %v5789 = vadd.f32 %v5436, %v5788
        %v5790 = vpop.f32.mrb[0].mxu0
        %v5791 = vadd.f32 %v5438, %v5790
        %5792 = vmatprep.mubr.bf16.mxu0 %v2722
        %5793 = vmatmul.mubr.bf16.gmra.mrb[0].mxu0 %v2721
        %v5794 = vpop.f32.mrb[0].mxu0
        %v5795 = vadd.f32 %v5442, %v5794
        %v5796 = vpop.f32.mrb[0].mxu0
        %v5797 = vadd.f32 %v5444, %v5796
        %v5798 = vpop.f32.mrb[0].mxu0
        %v5799 = vadd.f32 %v5446, %v5798
        %v5800 = vpop.f32.mrb[0].mxu0
        %v5801 = vadd.f32 %v5448, %v5800
        %5802 = vdwg.mxu0
        %v5803 = vmul.f32 %v4073, 0.01
        %v5804 = vmul.f32 %v4075, 0.01
        %v5805 = vmul.f32 %v5485, 0.01
        %v5806 = vmul.f32 %v5487, 0.01
        %v5807 = vmul.f32 %v4077, 0.01
        %v5808 = vmul.f32 %v4079, 0.01
        %v5809 = vmul.f32 %v5489, 0.01
        %v5810 = vmul.f32 %v5491, 0.01
        %v5811 = vmul.f32 %v4083, 0.01
        %v5812 = vmul.f32 %v4085, 0.01
        %v5813 = vmul.f32 %v5495, 0.01
        %v5814 = vmul.f32 %v5497, 0.01
        %v5815 = vmul.f32 %v4087, 0.01
        %v5816 = vmul.f32 %v4089, 0.01
        %v5817 = vmul.f32 %v5499, 0.01
        %v5818 = vmul.f32 %v5501, 0.01
        %v5819 = vmul.f32 %v4093, 0.01
        %v5820 = vmul.f32 %v4095, 0.01
        %v5821 = vmul.f32 %v5505, 0.01
        %v5822 = vmul.f32 %v5507, 0.01
        %v5823 = vmul.f32 %v4097, 0.01
        %v5824 = vmul.f32 %v4099, 0.01
        %v5825 = vmul.f32 %v5509, 0.01
        %v5826 = vmul.f32 %v5511, 0.01
        %v5827 = vmul.f32 %v4103, 0.01
        %v5828 = vmul.f32 %v4105, 0.01
        %v5829 = vmul.f32 %v5515, 0.01
        %v5830 = vmul.f32 %v5517, 0.01
        %v5831 = vmul.f32 %v4107, 0.01
        %v5832 = vmul.f32 %v4109, 0.01
        %v5833 = vmul.f32 %v5519, 0.01
        %v5834 = vmul.f32 %v5521, 0.01
        %v5835 = vmul.f32 %v4113, 0.01
        %v5836 = vmul.f32 %v4115, 0.01
        %v5837 = vmul.f32 %v5525, 0.01
        %v5838 = vmul.f32 %v5527, 0.01
        %v5839 = vmul.f32 %v4117, 0.01
        %v5840 = vmul.f32 %v4119, 0.01
        %v5841 = vmul.f32 %v5529, 0.01
        %v5842 = vmul.f32 %v5531, 0.01
        %v5843 = vmul.f32 %v4123, 0.01
        %v5844 = vmul.f32 %v4125, 0.01
        %v5845 = vmul.f32 %v5535, 0.01
        %v5846 = vmul.f32 %v5537, 0.01
        %v5847 = vmul.f32 %v4127, 0.01
        %v5848 = vmul.f32 %v4129, 0.01
        %v5849 = vmul.f32 %v5539, 0.01
        %v5850 = vmul.f32 %v5541, 0.01
        %v5851 = vmul.f32 %v4133, 0.01
        %v5852 = vmul.f32 %v4135, 0.01
        %v5853 = vmul.f32 %v5545, 0.01
        %v5854 = vmul.f32 %v5547, 0.01
        %v5855 = vmul.f32 %v4137, 0.01
        %v5856 = vmul.f32 %v4139, 0.01
        %v5857 = vmul.f32 %v5549, 0.01
        %v5858 = vmul.f32 %v5551, 0.01
        %v5859 = vmul.f32 %v4143, 0.01
        %v5860 = vmul.f32 %v4145, 0.01
        %v5861 = vmul.f32 %v5555, 0.01
        %v5862 = vmul.f32 %v5557, 0.01
        %v5863 = vmul.f32 %v4147, 0.01
        %v5864 = vmul.f32 %v4149, 0.01
        %v5865 = vmul.f32 %v5559, 0.01
        %v5866 = vmul.f32 %v5561, 0.01
        %v5867 = vmul.f32 %v4153, 0.01
        %v5868 = vmul.f32 %v4155, 0.01
        %v5869 = vmul.f32 %v5565, 0.01
        %v5870 = vmul.f32 %v5567, 0.01
        %v5871 = vmul.f32 %v4157, 0.01
        %v5872 = vmul.f32 %v4159, 0.01
        %v5873 = vmul.f32 %v5569, 0.01
        %v5874 = vmul.f32 %v5571, 0.01
        %v5875 = vmul.f32 %v4163, 0.01
        %v5876 = vmul.f32 %v4165, 0.01
        %v5877 = vmul.f32 %v5575, 0.01
        %v5878 = vmul.f32 %v5577, 0.01
        %v5879 = vmul.f32 %v4167, 0.01
        %v5880 = vmul.f32 %v4169, 0.01
        %v5881 = vmul.f32 %v5579, 0.01
        %v5882 = vmul.f32 %v5581, 0.01
        %v5883 = vmul.f32 %v4173, 0.01
        %v5884 = vmul.f32 %v4175, 0.01
        %v5885 = vmul.f32 %v5585, 0.01
        %v5886 = vmul.f32 %v5587, 0.01
        %v5887 = vmul.f32 %v4177, 0.01
        %v5888 = vmul.f32 %v4179, 0.01
        %v5889 = vmul.f32 %v5589, 0.01
        %v5890 = vmul.f32 %v5591, 0.01
        %v5891 = vmul.f32 %v4183, 0.01
        %v5892 = vmul.f32 %v4185, 0.01
        %v5893 = vmul.f32 %v5595, 0.01
        %v5894 = vmul.f32 %v5597, 0.01
        %v5895 = vmul.f32 %v4187, 0.01
        %v5896 = vmul.f32 %v4189, 0.01
        %v5897 = vmul.f32 %v5599, 0.01
        %v5898 = vmul.f32 %v5601, 0.01
        %v5899 = vmul.f32 %v4193, 0.01
        %v5900 = vmul.f32 %v4195, 0.01
        %v5901 = vmul.f32 %v5605, 0.01
        %v5902 = vmul.f32 %v5607, 0.01
        %v5903 = vmul.f32 %v4197, 0.01
        %v5904 = vmul.f32 %v4199, 0.01
        %v5905 = vmul.f32 %v5609, 0.01
        %v5906 = vmul.f32 %v5611, 0.01
        %v5907 = vmul.f32 %v4203, 0.01
        %v5908 = vmul.f32 %v4205, 0.01
        %v5909 = vmul.f32 %v5615, 0.01
        %v5910 = vmul.f32 %v5617, 0.01
        %v5911 = vmul.f32 %v4207, 0.01
        %v5912 = vmul.f32 %v4209, 0.01
        %v5913 = vmul.f32 %v5619, 0.01
        %v5914 = vmul.f32 %v5621, 0.01
        %v5915 = vmul.f32 %v4213, 0.01
        %v5916 = vmul.f32 %v4215, 0.01
        %v5917 = vmul.f32 %v5625, 0.01
        %v5918 = vmul.f32 %v5627, 0.01
        %v5919 = vmul.f32 %v4217, 0.01
        %v5920 = vmul.f32 %v4219, 0.01
        %v5921 = vmul.f32 %v5629, 0.01
        %v5922 = vmul.f32 %v5631, 0.01
        %v5923 = vmul.f32 %v4223, 0.01
        %v5924 = vmul.f32 %v4225, 0.01
        %v5925 = vmul.f32 %v5635, 0.01
        %v5926 = vmul.f32 %v5637, 0.01
        %v5927 = vmul.f32 %v4227, 0.01
        %v5928 = vmul.f32 %v4229, 0.01
        %v5929 = vmul.f32 %v5639, 0.01
        %v5930 = vmul.f32 %v5641, 0.01
        %v5931 = vmul.f32 %v4233, 0.01
        %v5932 = vmul.f32 %v4235, 0.01
        %v5933 = vmul.f32 %v5645, 0.01
        %v5934 = vmul.f32 %v5647, 0.01
        %v5935 = vmul.f32 %v4237, 0.01
        %v5936 = vmul.f32 %v4239, 0.01
        %v5937 = vmul.f32 %v5649, 0.01
        %v5938 = vmul.f32 %v5651, 0.01
        %v5939 = vmul.f32 %v4243, 0.01
        %v5940 = vmul.f32 %v4245, 0.01
        %v5941 = vmul.f32 %v5655, 0.01
        %v5942 = vmul.f32 %v5657, 0.01
        %v5943 = vmul.f32 %v4247, 0.01
        %v5944 = vmul.f32 %v4249, 0.01
        %v5945 = vmul.f32 %v5659, 0.01
        %v5946 = vmul.f32 %v5661, 0.01
        %v5947 = vmul.f32 %v4253, 0.01
        %v5948 = vmul.f32 %v4255, 0.01
        %v5949 = vmul.f32 %v5665, 0.01
        %v5950 = vmul.f32 %v5667, 0.01
        %v5951 = vmul.f32 %v4257, 0.01
        %v5952 = vmul.f32 %v4259, 0.01
        %v5953 = vmul.f32 %v5669, 0.01
        %v5954 = vmul.f32 %v5671, 0.01
        %v5955 = vmul.f32 %v4263, 0.01
        %v5956 = vmul.f32 %v4265, 0.01
        %v5957 = vmul.f32 %v5675, 0.01
        %v5958 = vmul.f32 %v5677, 0.01
        %v5959 = vmul.f32 %v4267, 0.01
        %v5960 = vmul.f32 %v4269, 0.01
        %v5961 = vmul.f32 %v5679, 0.01
        %v5962 = vmul.f32 %v5681, 0.01
        %v5963 = vmul.f32 %v4273, 0.01
        %v5964 = vmul.f32 %v4275, 0.01
        %v5965 = vmul.f32 %v5685, 0.01
        %v5966 = vmul.f32 %v5687, 0.01
        %v5967 = vmul.f32 %v4277, 0.01
        %v5968 = vmul.f32 %v4279, 0.01
        %v5969 = vmul.f32 %v5689, 0.01
        %v5970 = vmul.f32 %v5691, 0.01
        %v5971 = vmul.f32 %v4283, 0.01
        %v5972 = vmul.f32 %v4285, 0.01
        %v5973 = vmul.f32 %v5695, 0.01
        %v5974 = vmul.f32 %v5697, 0.01
        %v5975 = vmul.f32 %v4287, 0.01
        %v5976 = vmul.f32 %v4289, 0.01
        %v5977 = vmul.f32 %v5699, 0.01
        %v5978 = vmul.f32 %v5701, 0.01
        %v5979 = vmul.f32 %v4293, 0.01
        %v5980 = vmul.f32 %v4295, 0.01
        %v5981 = vmul.f32 %v5705, 0.01
        %v5982 = vmul.f32 %v5707, 0.01
        %v5983 = vmul.f32 %v4297, 0.01
        %v5984 = vmul.f32 %v4299, 0.01
        %v5985 = vmul.f32 %v5709, 0.01
        %v5986 = vmul.f32 %v5711, 0.01
        %v5987 = vmul.f32 %v4303, 0.01
        %v5988 = vmul.f32 %v4305, 0.01
        %v5989 = vmul.f32 %v5715, 0.01
        %v5990 = vmul.f32 %v5717, 0.01
        %v5991 = vmul.f32 %v4307, 0.01
        %v5992 = vmul.f32 %v4309, 0.01
        %v5993 = vmul.f32 %v5719, 0.01
        %v5994 = vmul.f32 %v5721, 0.01
        %v5995 = vmul.f32 %v4313, 0.01
        %v5996 = vmul.f32 %v4315, 0.01
        %v5997 = vmul.f32 %v5725, 0.01
        %v5998 = vmul.f32 %v5727, 0.01
        %v5999 = vmul.f32 %v4317, 0.01
        %v6000 = vmul.f32 %v4319, 0.01
        %v6001 = vmul.f32 %v5729, 0.01
        %v6002 = vmul.f32 %v5731, 0.01
        %v6003 = vmul.f32 %v4323, 0.01
        %v6004 = vmul.f32 %v4325, 0.01
        %v6005 = vmul.f32 %v5735, 0.01
        %v6006 = vmul.f32 %v5737, 0.01
        %v6007 = vmul.f32 %v4327, 0.01
        %v6008 = vmul.f32 %v4329, 0.01
        %v6009 = vmul.f32 %v5739, 0.01
        %v6010 = vmul.f32 %v5741, 0.01
        %v6011 = vmul.f32 %v4333, 0.01
        %v6012 = vmul.f32 %v4335, 0.01
        %v6013 = vmul.f32 %v5745, 0.01
        %v6014 = vmul.f32 %v5747, 0.01
        %v6015 = vmul.f32 %v4337, 0.01
        %v6016 = vmul.f32 %v4339, 0.01
        %v6017 = vmul.f32 %v5749, 0.01
        %v6018 = vmul.f32 %v5751, 0.01
        %v6019 = vmul.f32 %v4343, 0.01
        %v6020 = vmul.f32 %v4345, 0.01
        %v6021 = vmul.f32 %v5755, 0.01
        %v6022 = vmul.f32 %v5757, 0.01
        %v6023 = vmul.f32 %v4347, 0.01
        %v6024 = vmul.f32 %v4349, 0.01
        %v6025 = vmul.f32 %v5759, 0.01
        %v6026 = vmul.f32 %v5761, 0.01
        %v6027 = vmul.f32 %v4353, 0.01
        %v6028 = vmul.f32 %v4355, 0.01
        %v6029 = vmul.f32 %v5765, 0.01
        %v6030 = vmul.f32 %v5767, 0.01
        %v6031 = vmul.f32 %v4357, 0.01
        %v6032 = vmul.f32 %v4359, 0.01
        %v6033 = vmul.f32 %v5769, 0.01
        %v6034 = vmul.f32 %v5771, 0.01
        %v6035 = vmul.f32 %v4363, 0.01
        %v6036 = vmul.f32 %v4365, 0.01
        %v6037 = vmul.f32 %v5775, 0.01
        %v6038 = vmul.f32 %v5777, 0.01
        %v6039 = vmul.f32 %v4367, 0.01
        %v6040 = vmul.f32 %v4369, 0.01
        %v6041 = vmul.f32 %v5779, 0.01
        %v6042 = vmul.f32 %v5781, 0.01
        %v6043 = vmul.f32 %v4373, 0.01
        %v6044 = vmul.f32 %v4375, 0.01
        %v6045 = vmul.f32 %v5785, 0.01
        %v6046 = vmul.f32 %v5787, 0.01
        %v6047 = vmul.f32 %v4377, 0.01
        %v6048 = vmul.f32 %v4379, 0.01
        %v6049 = vmul.f32 %v5789, 0.01
        %v6050 = vmul.f32 %v5791, 0.01
        %v6051 = vmul.f32 %v4383, 0.01
        %v6052 = vmul.f32 %v4385, 0.01
        %v6053 = vmul.f32 %v5795, 0.01
        %v6054 = vmul.f32 %v5797, 0.01
        %v6055 = vmul.f32 %v4387, 0.01
        %v6056 = vmul.f32 %v4389, 0.01
        %v6057 = vmul.f32 %v5799, 0.01
        %v6058 = vmul.f32 %v5801, 0.01
        %v6059 = vmax.f32 %v4073, %v5803
        %v6060 = vmax.f32 %v4075, %v5804
        %v6061 = vmax.f32 %v5485, %v5805
        %v6062 = vmax.f32 %v5487, %v5806
        %v6063 = vmax.f32 %v4077, %v5807
        %v6064 = vmax.f32 %v4079, %v5808
        %v6065 = vmax.f32 %v5489, %v5809
        %v6066 = vmax.f32 %v5491, %v5810
        %v6067 = vmax.f32 %v4083, %v5811
        %v6068 = vmax.f32 %v4085, %v5812
        %v6069 = vmax.f32 %v5495, %v5813
        %v6070 = vmax.f32 %v5497, %v5814
        %v6071 = vmax.f32 %v4087, %v5815
        %v6072 = vmax.f32 %v4089, %v5816
        %v6073 = vmax.f32 %v5499, %v5817
        %v6074 = vmax.f32 %v5501, %v5818
        %v6075 = vmax.f32 %v4093, %v5819
        %v6076 = vmax.f32 %v4095, %v5820
        %v6077 = vmax.f32 %v5505, %v5821
        %v6078 = vmax.f32 %v5507, %v5822
        %v6079 = vmax.f32 %v4097, %v5823
        %v6080 = vmax.f32 %v4099, %v5824
        %v6081 = vmax.f32 %v5509, %v5825
        %v6082 = vmax.f32 %v5511, %v5826
        %v6083 = vmax.f32 %v4103, %v5827
        %v6084 = vmax.f32 %v4105, %v5828
        %v6085 = vmax.f32 %v5515, %v5829
        %v6086 = vmax.f32 %v5517, %v5830
        %v6087 = vmax.f32 %v4107, %v5831
        %v6088 = vmax.f32 %v4109, %v5832
        %v6089 = vmax.f32 %v5519, %v5833
        %v6090 = vmax.f32 %v5521, %v5834
        %v6091 = vmax.f32 %v4113, %v5835
        %v6092 = vmax.f32 %v4115, %v5836
        %v6093 = vmax.f32 %v5525, %v5837
        %v6094 = vmax.f32 %v5527, %v5838
        %v6095 = vmax.f32 %v4117, %v5839
        %v6096 = vmax.f32 %v4119, %v5840
        %v6097 = vmax.f32 %v5529, %v5841
        %v6098 = vmax.f32 %v5531, %v5842
        %v6099 = vmax.f32 %v4123, %v5843
        %v6100 = vmax.f32 %v4125, %v5844
        %v6101 = vmax.f32 %v5535, %v5845
        %v6102 = vmax.f32 %v5537, %v5846
        %v6103 = vmax.f32 %v4127, %v5847
        %v6104 = vmax.f32 %v4129, %v5848
        %v6105 = vmax.f32 %v5539, %v5849
        %v6106 = vmax.f32 %v5541, %v5850
        %v6107 = vmax.f32 %v4133, %v5851
        %v6108 = vmax.f32 %v4135, %v5852
        %v6109 = vmax.f32 %v5545, %v5853
        %v6110 = vmax.f32 %v5547, %v5854
        %v6111 = vmax.f32 %v4137, %v5855
        %v6112 = vmax.f32 %v4139, %v5856
        %v6113 = vmax.f32 %v5549, %v5857
        %v6114 = vmax.f32 %v5551, %v5858
        %v6115 = vmax.f32 %v4143, %v5859
        %v6116 = vmax.f32 %v4145, %v5860
        %v6117 = vmax.f32 %v5555, %v5861
        %v6118 = vmax.f32 %v5557, %v5862
        %v6119 = vmax.f32 %v4147, %v5863
        %v6120 = vmax.f32 %v4149, %v5864
        %v6121 = vmax.f32 %v5559, %v5865
        %v6122 = vmax.f32 %v5561, %v5866
        %v6123 = vmax.f32 %v4153, %v5867
        %v6124 = vmax.f32 %v4155, %v5868
        %v6125 = vmax.f32 %v5565, %v5869
        %v6126 = vmax.f32 %v5567, %v5870
        %v6127 = vmax.f32 %v4157, %v5871
        %v6128 = vmax.f32 %v4159, %v5872
        %v6129 = vmax.f32 %v5569, %v5873
        %v6130 = vmax.f32 %v5571, %v5874
        %v6131 = vmax.f32 %v4163, %v5875
        %v6132 = vmax.f32 %v4165, %v5876
        %v6133 = vmax.f32 %v5575, %v5877
        %v6134 = vmax.f32 %v5577, %v5878
        %v6135 = vmax.f32 %v4167, %v5879
        %v6136 = vmax.f32 %v4169, %v5880
        %v6137 = vmax.f32 %v5579, %v5881
        %v6138 = vmax.f32 %v5581, %v5882
        %v6139 = vmax.f32 %v4173, %v5883
        %v6140 = vmax.f32 %v4175, %v5884
        %v6141 = vmax.f32 %v5585, %v5885
        %v6142 = vmax.f32 %v5587, %v5886
        %v6143 = vmax.f32 %v4177, %v5887
        %v6144 = vmax.f32 %v4179, %v5888
        %v6145 = vmax.f32 %v5589, %v5889
        %v6146 = vmax.f32 %v5591, %v5890
        %v6147 = vmax.f32 %v4183, %v5891
        %v6148 = vmax.f32 %v4185, %v5892
        %v6149 = vmax.f32 %v5595, %v5893
        %v6150 = vmax.f32 %v5597, %v5894
        %v6151 = vmax.f32 %v4187, %v5895
        %v6152 = vmax.f32 %v4189, %v5896
        %v6153 = vmax.f32 %v5599, %v5897
        %v6154 = vmax.f32 %v5601, %v5898
        %v6155 = vmax.f32 %v4193, %v5899
        %v6156 = vmax.f32 %v4195, %v5900
        %v6157 = vmax.f32 %v5605, %v5901
        %v6158 = vmax.f32 %v5607, %v5902
        %v6159 = vmax.f32 %v4197, %v5903
        %v6160 = vmax.f32 %v4199, %v5904
        %v6161 = vmax.f32 %v5609, %v5905
        %v6162 = vmax.f32 %v5611, %v5906
        %v6163 = vmax.f32 %v4203, %v5907
        %v6164 = vmax.f32 %v4205, %v5908
        %v6165 = vmax.f32 %v5615, %v5909
        %v6166 = vmax.f32 %v5617, %v5910
        %v6167 = vmax.f32 %v4207, %v5911
        %v6168 = vmax.f32 %v4209, %v5912
        %v6169 = vmax.f32 %v5619, %v5913
        %v6170 = vmax.f32 %v5621, %v5914
        %v6171 = vmax.f32 %v4213, %v5915
        %v6172 = vmax.f32 %v4215, %v5916
        %v6173 = vmax.f32 %v5625, %v5917
        %v6174 = vmax.f32 %v5627, %v5918
        %v6175 = vmax.f32 %v4217, %v5919
        %v6176 = vmax.f32 %v4219, %v5920
        %v6177 = vmax.f32 %v5629, %v5921
        %v6178 = vmax.f32 %v5631, %v5922
        %v6179 = vmax.f32 %v4223, %v5923
        %v6180 = vmax.f32 %v4225, %v5924
        %v6181 = vmax.f32 %v5635, %v5925
        %v6182 = vmax.f32 %v5637, %v5926
        %v6183 = vmax.f32 %v4227, %v5927
        %v6184 = vmax.f32 %v4229, %v5928
        %v6185 = vmax.f32 %v5639, %v5929
        %v6186 = vmax.f32 %v5641, %v5930
        %v6187 = vmax.f32 %v4233, %v5931
        %v6188 = vmax.f32 %v4235, %v5932
        %v6189 = vmax.f32 %v5645, %v5933
        %v6190 = vmax.f32 %v5647, %v5934
        %v6191 = vmax.f32 %v4237, %v5935
        %v6192 = vmax.f32 %v4239, %v5936
        %v6193 = vmax.f32 %v5649, %v5937
        %v6194 = vmax.f32 %v5651, %v5938
        %v6195 = vmax.f32 %v4243, %v5939
        %v6196 = vmax.f32 %v4245, %v5940
        %v6197 = vmax.f32 %v5655, %v5941
        %v6198 = vmax.f32 %v5657, %v5942
        %v6199 = vmax.f32 %v4247, %v5943
        %v6200 = vmax.f32 %v4249, %v5944
        %v6201 = vmax.f32 %v5659, %v5945
        %v6202 = vmax.f32 %v5661, %v5946
        %v6203 = vmax.f32 %v4253, %v5947
        %v6204 = vmax.f32 %v4255, %v5948
        %v6205 = vmax.f32 %v5665, %v5949
        %v6206 = vmax.f32 %v5667, %v5950
        %v6207 = vmax.f32 %v4257, %v5951
        %v6208 = vmax.f32 %v4259, %v5952
        %v6209 = vmax.f32 %v5669, %v5953
        %v6210 = vmax.f32 %v5671, %v5954
        %v6211 = vmax.f32 %v4263, %v5955
        %v6212 = vmax.f32 %v4265, %v5956
        %v6213 = vmax.f32 %v5675, %v5957
        %v6214 = vmax.f32 %v5677, %v5958
        %v6215 = vmax.f32 %v4267, %v5959
        %v6216 = vmax.f32 %v4269, %v5960
        %v6217 = vmax.f32 %v5679, %v5961
        %v6218 = vmax.f32 %v5681, %v5962
        %v6219 = vmax.f32 %v4273, %v5963
        %v6220 = vmax.f32 %v4275, %v5964
        %v6221 = vmax.f32 %v5685, %v5965
        %v6222 = vmax.f32 %v5687, %v5966
        %v6223 = vmax.f32 %v4277, %v5967
        %v6224 = vmax.f32 %v4279, %v5968
        %v6225 = vmax.f32 %v5689, %v5969
        %v6226 = vmax.f32 %v5691, %v5970
        %v6227 = vmax.f32 %v4283, %v5971
        %v6228 = vmax.f32 %v4285, %v5972
        %v6229 = vmax.f32 %v5695, %v5973
        %v6230 = vmax.f32 %v5697, %v5974
        %v6231 = vmax.f32 %v4287, %v5975
        %v6232 = vmax.f32 %v4289, %v5976
        %v6233 = vmax.f32 %v5699, %v5977
        %v6234 = vmax.f32 %v5701, %v5978
        %v6235 = vmax.f32 %v4293, %v5979
        %v6236 = vmax.f32 %v4295, %v5980
        %v6237 = vmax.f32 %v5705, %v5981
        %v6238 = vmax.f32 %v5707, %v5982
        %v6239 = vmax.f32 %v4297, %v5983
        %v6240 = vmax.f32 %v4299, %v5984
        %v6241 = vmax.f32 %v5709, %v5985
        %v6242 = vmax.f32 %v5711, %v5986
        %v6243 = vmax.f32 %v4303, %v5987
        %v6244 = vmax.f32 %v4305, %v5988
        %v6245 = vmax.f32 %v5715, %v5989
        %v6246 = vmax.f32 %v5717, %v5990
        %v6247 = vmax.f32 %v4307, %v5991
        %v6248 = vmax.f32 %v4309, %v5992
        %v6249 = vmax.f32 %v5719, %v5993
        %v6250 = vmax.f32 %v5721, %v5994
        %v6251 = vmax.f32 %v4313, %v5995
        %v6252 = vmax.f32 %v4315, %v5996
        %v6253 = vmax.f32 %v5725, %v5997
        %v6254 = vmax.f32 %v5727, %v5998
        %v6255 = vmax.f32 %v4317, %v5999
        %v6256 = vmax.f32 %v4319, %v6000
        %v6257 = vmax.f32 %v5729, %v6001
        %v6258 = vmax.f32 %v5731, %v6002
        %v6259 = vmax.f32 %v4323, %v6003
        %v6260 = vmax.f32 %v4325, %v6004
        %v6261 = vmax.f32 %v5735, %v6005
        %v6262 = vmax.f32 %v5737, %v6006
        %v6263 = vmax.f32 %v4327, %v6007
        %v6264 = vmax.f32 %v4329, %v6008
        %v6265 = vmax.f32 %v5739, %v6009
        %v6266 = vmax.f32 %v5741, %v6010
        %v6267 = vmax.f32 %v4333, %v6011
        %v6268 = vmax.f32 %v4335, %v6012
        %v6269 = vmax.f32 %v5745, %v6013
        %v6270 = vmax.f32 %v5747, %v6014
        %v6271 = vmax.f32 %v4337, %v6015
        %v6272 = vmax.f32 %v4339, %v6016
        %v6273 = vmax.f32 %v5749, %v6017
        %v6274 = vmax.f32 %v5751, %v6018
        %v6275 = vmax.f32 %v4343, %v6019
        %v6276 = vmax.f32 %v4345, %v6020
        %v6277 = vmax.f32 %v5755, %v6021
        %v6278 = vmax.f32 %v5757, %v6022
        %v6279 = vmax.f32 %v4347, %v6023
        %v6280 = vmax.f32 %v4349, %v6024
        %v6281 = vmax.f32 %v5759, %v6025
        %v6282 = vmax.f32 %v5761, %v6026
        %v6283 = vmax.f32 %v4353, %v6027
        %v6284 = vmax.f32 %v4355, %v6028
        %v6285 = vmax.f32 %v5765, %v6029
        %v6286 = vmax.f32 %v5767, %v6030
        %v6287 = vmax.f32 %v4357, %v6031
        %v6288 = vmax.f32 %v4359, %v6032
        %v6289 = vmax.f32 %v5769, %v6033
        %v6290 = vmax.f32 %v5771, %v6034
        %v6291 = vmax.f32 %v4363, %v6035
        %v6292 = vmax.f32 %v4365, %v6036
        %v6293 = vmax.f32 %v5775, %v6037
        %v6294 = vmax.f32 %v5777, %v6038
        %v6295 = vmax.f32 %v4367, %v6039
        %v6296 = vmax.f32 %v4369, %v6040
        %v6297 = vmax.f32 %v5779, %v6041
        %v6298 = vmax.f32 %v5781, %v6042
        %v6299 = vmax.f32 %v4373, %v6043
        %v6300 = vmax.f32 %v4375, %v6044
        %v6301 = vmax.f32 %v5785, %v6045
        %v6302 = vmax.f32 %v5787, %v6046
        %v6303 = vmax.f32 %v4377, %v6047
        %v6304 = vmax.f32 %v4379, %v6048
        %v6305 = vmax.f32 %v5789, %v6049
        %v6306 = vmax.f32 %v5791, %v6050
        %v6307 = vmax.f32 %v4383, %v6051
        %v6308 = vmax.f32 %v4385, %v6052
        %v6309 = vmax.f32 %v5795, %v6053
        %v6310 = vmax.f32 %v5797, %v6054
        %v6311 = vmax.f32 %v4387, %v6055
        %v6312 = vmax.f32 %v4389, %v6056
        %v6313 = vmax.f32 %v5799, %v6057
        %v6314 = vmax.f32 %v5801, %v6058
        %v6315 = vpack.c.bf16 %v6063, %v6059
        %v6316 = vpack.c.bf16 %v6064, %v6060
        %v6317 = vpack.c.bf16 %v6065, %v6061
        %v6318 = vpack.c.bf16 %v6066, %v6062
        %v6319 = vpack.c.bf16 %v6071, %v6067
        %v6320 = vpack.c.bf16 %v6072, %v6068
        %v6321 = vpack.c.bf16 %v6073, %v6069
        %v6322 = vpack.c.bf16 %v6074, %v6070
        %v6323 = vpack.c.bf16 %v6079, %v6075
        %v6324 = vpack.c.bf16 %v6080, %v6076
        %v6325 = vpack.c.bf16 %v6081, %v6077
        %v6326 = vpack.c.bf16 %v6082, %v6078
        %v6327 = vpack.c.bf16 %v6087, %v6083
        %v6328 = vpack.c.bf16 %v6088, %v6084
        %v6329 = vpack.c.bf16 %v6089, %v6085
        %v6330 = vpack.c.bf16 %v6090, %v6086
        %v6331 = vpack.c.bf16 %v6095, %v6091
        %v6332 = vpack.c.bf16 %v6096, %v6092
        %v6333 = vpack.c.bf16 %v6097, %v6093
        %v6334 = vpack.c.bf16 %v6098, %v6094
        %v6335 = vpack.c.bf16 %v6103, %v6099
        %v6336 = vpack.c.bf16 %v6104, %v6100
        %v6337 = vpack.c.bf16 %v6105, %v6101
        %v6338 = vpack.c.bf16 %v6106, %v6102
        %v6339 = vpack.c.bf16 %v6111, %v6107
        %v6340 = vpack.c.bf16 %v6112, %v6108
        %v6341 = vpack.c.bf16 %v6113, %v6109
        %v6342 = vpack.c.bf16 %v6114, %v6110
        %v6343 = vpack.c.bf16 %v6119, %v6115
        %v6344 = vpack.c.bf16 %v6120, %v6116
        %v6345 = vpack.c.bf16 %v6121, %v6117
        %v6346 = vpack.c.bf16 %v6122, %v6118
        %v6347 = vpack.c.bf16 %v6127, %v6123
        %v6348 = vpack.c.bf16 %v6128, %v6124
        %v6349 = vpack.c.bf16 %v6129, %v6125
        %v6350 = vpack.c.bf16 %v6130, %v6126
        %v6351 = vpack.c.bf16 %v6135, %v6131
        %v6352 = vpack.c.bf16 %v6136, %v6132
        %v6353 = vpack.c.bf16 %v6137, %v6133
        %v6354 = vpack.c.bf16 %v6138, %v6134
        %v6355 = vpack.c.bf16 %v6143, %v6139
        %v6356 = vpack.c.bf16 %v6144, %v6140
        %v6357 = vpack.c.bf16 %v6145, %v6141
        %v6358 = vpack.c.bf16 %v6146, %v6142
        %v6359 = vpack.c.bf16 %v6151, %v6147
        %v6360 = vpack.c.bf16 %v6152, %v6148
        %v6361 = vpack.c.bf16 %v6153, %v6149
        %v6362 = vpack.c.bf16 %v6154, %v6150
        %v6363 = vpack.c.bf16 %v6159, %v6155
        %v6364 = vpack.c.bf16 %v6160, %v6156
        %v6365 = vpack.c.bf16 %v6161, %v6157
        %v6366 = vpack.c.bf16 %v6162, %v6158
        %v6367 = vpack.c.bf16 %v6167, %v6163
        %v6368 = vpack.c.bf16 %v6168, %v6164
        %v6369 = vpack.c.bf16 %v6169, %v6165
        %v6370 = vpack.c.bf16 %v6170, %v6166
        %v6371 = vpack.c.bf16 %v6175, %v6171
        %v6372 = vpack.c.bf16 %v6176, %v6172
        %v6373 = vpack.c.bf16 %v6177, %v6173
        %v6374 = vpack.c.bf16 %v6178, %v6174
        %v6375 = vpack.c.bf16 %v6183, %v6179
        %v6376 = vpack.c.bf16 %v6184, %v6180
        %v6377 = vpack.c.bf16 %v6185, %v6181
        %v6378 = vpack.c.bf16 %v6186, %v6182
        %v6379 = vpack.c.bf16 %v6191, %v6187
        %v6380 = vpack.c.bf16 %v6192, %v6188
        %v6381 = vpack.c.bf16 %v6193, %v6189
        %v6382 = vpack.c.bf16 %v6194, %v6190
        %v6383 = vpack.c.bf16 %v6199, %v6195
        %v6384 = vpack.c.bf16 %v6200, %v6196
        %v6385 = vpack.c.bf16 %v6201, %v6197
        %v6386 = vpack.c.bf16 %v6202, %v6198
        %v6387 = vpack.c.bf16 %v6207, %v6203
        %v6388 = vpack.c.bf16 %v6208, %v6204
        %v6389 = vpack.c.bf16 %v6209, %v6205
        %v6390 = vpack.c.bf16 %v6210, %v6206
        %v6391 = vpack.c.bf16 %v6215, %v6211
        %v6392 = vpack.c.bf16 %v6216, %v6212
        %v6393 = vpack.c.bf16 %v6217, %v6213
        %v6394 = vpack.c.bf16 %v6218, %v6214
        %v6395 = vpack.c.bf16 %v6223, %v6219
        %v6396 = vpack.c.bf16 %v6224, %v6220
        %v6397 = vpack.c.bf16 %v6225, %v6221
        %v6398 = vpack.c.bf16 %v6226, %v6222
        %v6399 = vpack.c.bf16 %v6231, %v6227
        %v6400 = vpack.c.bf16 %v6232, %v6228
        %v6401 = vpack.c.bf16 %v6233, %v6229
        %v6402 = vpack.c.bf16 %v6234, %v6230
        %v6403 = vpack.c.bf16 %v6239, %v6235
        %v6404 = vpack.c.bf16 %v6240, %v6236
        %v6405 = vpack.c.bf16 %v6241, %v6237
        %v6406 = vpack.c.bf16 %v6242, %v6238
        %v6407 = vpack.c.bf16 %v6247, %v6243
        %v6408 = vpack.c.bf16 %v6248, %v6244
        %v6409 = vpack.c.bf16 %v6249, %v6245
        %v6410 = vpack.c.bf16 %v6250, %v6246
        %v6411 = vpack.c.bf16 %v6255, %v6251
        %v6412 = vpack.c.bf16 %v6256, %v6252
        %v6413 = vpack.c.bf16 %v6257, %v6253
        %v6414 = vpack.c.bf16 %v6258, %v6254
        %v6415 = vpack.c.bf16 %v6263, %v6259
        %v6416 = vpack.c.bf16 %v6264, %v6260
        %v6417 = vpack.c.bf16 %v6265, %v6261
        %v6418 = vpack.c.bf16 %v6266, %v6262
        %v6419 = vpack.c.bf16 %v6271, %v6267
        %v6420 = vpack.c.bf16 %v6272, %v6268
        %v6421 = vpack.c.bf16 %v6273, %v6269
        %v6422 = vpack.c.bf16 %v6274, %v6270
        %v6423 = vpack.c.bf16 %v6279, %v6275
        %v6424 = vpack.c.bf16 %v6280, %v6276
        %v6425 = vpack.c.bf16 %v6281, %v6277
        %v6426 = vpack.c.bf16 %v6282, %v6278
        %v6427 = vpack.c.bf16 %v6287, %v6283
        %v6428 = vpack.c.bf16 %v6288, %v6284
        %v6429 = vpack.c.bf16 %v6289, %v6285
        %v6430 = vpack.c.bf16 %v6290, %v6286
        %v6431 = vpack.c.bf16 %v6295, %v6291
        %v6432 = vpack.c.bf16 %v6296, %v6292
        %v6433 = vpack.c.bf16 %v6297, %v6293
        %v6434 = vpack.c.bf16 %v6298, %v6294
        %v6435 = vpack.c.bf16 %v6303, %v6299
        %v6436 = vpack.c.bf16 %v6304, %v6300
        %v6437 = vpack.c.bf16 %v6305, %v6301
        %v6438 = vpack.c.bf16 %v6306, %v6302
        %v6439 = vpack.c.bf16 %v6311, %v6307
        %v6440 = vpack.c.bf16 %v6312, %v6308
        %v6441 = vpack.c.bf16 %v6313, %v6309
        %v6442 = vpack.c.bf16 %v6314, %v6310
        %v6443 = vld [vmem:[#allocation8] sm:$0xf]
        %s6444 = sld [smem:[#allocation2]]
        %v6445 = vstv %s6444
        %v6448 = vunpack.c.l.s4 1966171168
        %v6449 = vunpack.c.0.s8 %v6448
        %v6450 = vlaneseq
        %v6451 = vshrl.u32 %v6450, 7
        %v6452 = vsub.s32 %v6449, %v6451
        %v6453 = vrot.slane %v6443, %v6452
        %v6454 = vcombine.high %v6453, %v6453
        %v6456 = vunpack.c.l.s4 1966171168
        %v6457 = vunpack.c.0.s8 %v6456
        %v6458 = vlaneseq
        %v6459 = vshrl.u32 %v6458, 7
        %v6460 = vsub.s32 %v6457, %v6459
        %v6461 = vrot.slane %v6453, %v6460
        %v6463 = vunpack.c.l.s4 1966171168
        %v6464 = vunpack.c.0.s8 %v6463
        %v6465 = vlaneseq
        %v6466 = vshrl.u32 %v6465, 7
        %v6467 = vsub.s32 %v6464, %v6466
        %v6468 = vrot.slane %v6454, %v6467
        %v6469 = vcombine.high %v6461, %v6461
        %v6470 = vcombine.high %v6468, %v6468
        %6475 = vmatprep.subr.bf16.mxu0 %v6316
        %6476 = vmatpush1.bf16.msra.mxu0 %v6315
        %6477 = vmatprep.subr.bf16.mxu0 %v6320
        %6478 = vmatpush1.bf16.msra.mxu0 %v6319
        %6479 = vmatprep.subr.bf16.mxu0 %v6324
        %6480 = vmatpush1.bf16.msra.mxu0 %v6323
        %6481 = vmatprep.subr.bf16.mxu0 %v6328
        %6482 = vmatpush1.bf16.msra.mxu0 %v6327
        %6483 = vmatprep.subr.bf16.mxu0 %v6332
        %6484 = vmatpush1.bf16.msra.mxu0 %v6331
        %6485 = vmatprep.subr.bf16.mxu0 %v6336
        %6486 = vmatpush1.bf16.msra.mxu0 %v6335
        %6487 = vmatprep.subr.bf16.mxu0 %v6340
        %6488 = vmatpush1.bf16.msra.mxu0 %v6339
        %6489 = vmatprep.subr.bf16.mxu0 %v6344
        %6490 = vmatpush1.bf16.msra.mxu0 %v6343
        %6491 = vmatprep.subr.bf16.mxu0 %v6348
        %6492 = vmatpush1.bf16.msra.mxu0 %v6347
        %6493 = vmatprep.subr.bf16.mxu0 %v6352
        %6494 = vmatpush1.bf16.msra.mxu0 %v6351
        %6495 = vmatprep.subr.bf16.mxu0 %v6356
        %6496 = vmatpush1.bf16.msra.mxu0 %v6355
        %6497 = vmatprep.subr.bf16.mxu0 %v6360
        %6498 = vmatpush1.bf16.msra.mxu0 %v6359
        %6499 = vmatprep.subr.bf16.mxu0 %v6364
        %6500 = vmatpush1.bf16.msra.mxu0 %v6363
        %6501 = vmatprep.subr.bf16.mxu0 %v6368
        %6502 = vmatpush1.bf16.msra.mxu0 %v6367
        %6503 = vmatprep.subr.bf16.mxu0 %v6372
        %6504 = vmatpush1.bf16.msra.mxu0 %v6371
        %6505 = vmatprep.subr.bf16.mxu0 %v6376
        %6506 = vmatpush1.bf16.msra.mxu0 %v6375
        %6507 = vmatprep.mubr.bf16.mxu0 %v6468
        %6508 = vmatmul.mubr.bf16.gmra.mrb[0].mxu0 %v6461
        %v6509 = vpop.f32.mrb[0].mxu0
        %v6510 = vadd.f32 %v6445, %v6509
        %v6511 = vpop.f32.mrb[0].mxu0
        %v6512 = vadd.f32 %v6445, %v6511
        %v6513 = vpop.f32.mrb[0].mxu0
        %v6514 = vpop.f32.mrb[0].mxu0
        %6515 = vdwg.mxu0
        %6516 = vmatprep.subr.bf16.mxu0 %v6380
        %6517 = vmatpush1.bf16.msra.mxu0 %v6379
        %6518 = vmatprep.subr.bf16.mxu0 %v6384
        %6519 = vmatpush1.bf16.msra.mxu0 %v6383
        %6520 = vmatprep.subr.bf16.mxu0 %v6388
        %6521 = vmatpush1.bf16.msra.mxu0 %v6387
        %6522 = vmatprep.subr.bf16.mxu0 %v6392
        %6523 = vmatpush1.bf16.msra.mxu0 %v6391
        %6524 = vmatprep.subr.bf16.mxu0 %v6396
        %6525 = vmatpush1.bf16.msra.mxu0 %v6395
        %6526 = vmatprep.subr.bf16.mxu0 %v6400
        %6527 = vmatpush1.bf16.msra.mxu0 %v6399
        %6528 = vmatprep.subr.bf16.mxu0 %v6404
        %6529 = vmatpush1.bf16.msra.mxu0 %v6403
        %6530 = vmatprep.subr.bf16.mxu0 %v6408
        %6531 = vmatpush1.bf16.msra.mxu0 %v6407
        %6532 = vmatprep.subr.bf16.mxu0 %v6412
        %6533 = vmatpush1.bf16.msra.mxu0 %v6411
        %6534 = vmatprep.subr.bf16.mxu0 %v6416
        %6535 = vmatpush1.bf16.msra.mxu0 %v6415
        %6536 = vmatprep.subr.bf16.mxu0 %v6420
        %6537 = vmatpush1.bf16.msra.mxu0 %v6419
        %6538 = vmatprep.subr.bf16.mxu0 %v6424
        %6539 = vmatpush1.bf16.msra.mxu0 %v6423
        %6540 = vmatprep.subr.bf16.mxu0 %v6428
        %6541 = vmatpush1.bf16.msra.mxu0 %v6427
        %6542 = vmatprep.subr.bf16.mxu0 %v6432
        %6543 = vmatpush1.bf16.msra.mxu0 %v6431
        %6544 = vmatprep.subr.bf16.mxu0 %v6436
        %6545 = vmatpush1.bf16.msra.mxu0 %v6435
        %6546 = vmatprep.subr.bf16.mxu0 %v6440
        %6547 = vmatpush1.bf16.msra.mxu0 %v6439
        %6548 = vmatprep.mubr.bf16.mxu0 %v6470
        %6549 = vmatmul.mubr.bf16.gmra.mrb[0].mxu0 %v6469
        %v6550 = vpop.f32.mrb[0].mxu0
        %v6551 = vadd.f32 %v6510, %v6550
        %v6552 = vpop.f32.mrb[0].mxu0
        %v6553 = vadd.f32 %v6512, %v6552
        %v6554 = vpop.f32.mrb[0].mxu0
        %v6555 = vpop.f32.mrb[0].mxu0
        %6556 = vdwg.mxu0
        %6557 = vmatprep.subr.bf16.mxu0 %v6318
        %6558 = vmatpush1.bf16.msra.mxu0 %v6317
        %6559 = vmatprep.subr.bf16.mxu0 %v6322
        %6560 = vmatpush1.bf16.msra.mxu0 %v6321
        %6561 = vmatprep.subr.bf16.mxu0 %v6326
        %6562 = vmatpush1.bf16.msra.mxu0 %v6325
        %6563 = vmatprep.subr.bf16.mxu0 %v6330
        %6564 = vmatpush1.bf16.msra.mxu0 %v6329
        %6565 = vmatprep.subr.bf16.mxu0 %v6334
        %6566 = vmatpush1.bf16.msra.mxu0 %v6333
        %6567 = vmatprep.subr.bf16.mxu0 %v6338
        %6568 = vmatpush1.bf16.msra.mxu0 %v6337
        %6569 = vmatprep.subr.bf16.mxu0 %v6342
        %6570 = vmatpush1.bf16.msra.mxu0 %v6341
        %6571 = vmatprep.subr.bf16.mxu0 %v6346
        %6572 = vmatpush1.bf16.msra.mxu0 %v6345
        %6573 = vmatprep.subr.bf16.mxu0 %v6350
        %6574 = vmatpush1.bf16.msra.mxu0 %v6349
        %6575 = vmatprep.subr.bf16.mxu0 %v6354
        %6576 = vmatpush1.bf16.msra.mxu0 %v6353
        %6577 = vmatprep.subr.bf16.mxu0 %v6358
        %6578 = vmatpush1.bf16.msra.mxu0 %v6357
        %6579 = vmatprep.subr.bf16.mxu0 %v6362
        %6580 = vmatpush1.bf16.msra.mxu0 %v6361
        %6581 = vmatprep.subr.bf16.mxu0 %v6366
        %6582 = vmatpush1.bf16.msra.mxu0 %v6365
        %6583 = vmatprep.subr.bf16.mxu0 %v6370
        %6584 = vmatpush1.bf16.msra.mxu0 %v6369
        %6585 = vmatprep.subr.bf16.mxu0 %v6374
        %6586 = vmatpush1.bf16.msra.mxu0 %v6373
        %6587 = vmatprep.subr.bf16.mxu0 %v6378
        %6588 = vmatpush1.bf16.msra.mxu0 %v6377
        %6589 = vmatprep.mubr.bf16.mxu0 %v6468
        %6590 = vmatmul.mubr.bf16.gmra.mrb[0].mxu0 %v6461
        %v6591 = vpop.f32.mrb[0].mxu0
        %v6592 = vadd.f32 %v6445, %v6591
        %v6593 = vpop.f32.mrb[0].mxu0
        %v6594 = vadd.f32 %v6445, %v6593
        %v6595 = vpop.f32.mrb[0].mxu0
        %v6596 = vpop.f32.mrb[0].mxu0
        %6597 = vdwg.mxu0
        %6598 = vmatprep.subr.bf16.mxu0 %v6382
        %6599 = vmatpush1.bf16.msra.mxu0 %v6381
        %6600 = vmatprep.subr.bf16.mxu0 %v6386
        %6601 = vmatpush1.bf16.msra.mxu0 %v6385
        %6602 = vmatprep.subr.bf16.mxu0 %v6390
        %6603 = vmatpush1.bf16.msra.mxu0 %v6389
        %6604 = vmatprep.subr.bf16.mxu0 %v6394
        %6605 = vmatpush1.bf16.msra.mxu0 %v6393
        %6606 = vmatprep.subr.bf16.mxu0 %v6398
        %6607 = vmatpush1.bf16.msra.mxu0 %v6397
        %6608 = vmatprep.subr.bf16.mxu0 %v6402
        %6609 = vmatpush1.bf16.msra.mxu0 %v6401
        %6610 = vmatprep.subr.bf16.mxu0 %v6406
        %6611 = vmatpush1.bf16.msra.mxu0 %v6405
        %6612 = vmatprep.subr.bf16.mxu0 %v6410
        %6613 = vmatpush1.bf16.msra.mxu0 %v6409
        %6614 = vmatprep.subr.bf16.mxu0 %v6414
        %6615 = vmatpush1.bf16.msra.mxu0 %v6413
        %6616 = vmatprep.subr.bf16.mxu0 %v6418
        %6617 = vmatpush1.bf16.msra.mxu0 %v6417
        %6618 = vmatprep.subr.bf16.mxu0 %v6422
        %6619 = vmatpush1.bf16.msra.mxu0 %v6421
        %6620 = vmatprep.subr.bf16.mxu0 %v6426
        %6621 = vmatpush1.bf16.msra.mxu0 %v6425
        %6622 = vmatprep.subr.bf16.mxu0 %v6430
        %6623 = vmatpush1.bf16.msra.mxu0 %v6429
        %6624 = vmatprep.subr.bf16.mxu0 %v6434
        %6625 = vmatpush1.bf16.msra.mxu0 %v6433
        %6626 = vmatprep.subr.bf16.mxu0 %v6438
        %6627 = vmatpush1.bf16.msra.mxu0 %v6437
        %6628 = vmatprep.subr.bf16.mxu0 %v6442
        %6629 = vmatpush1.bf16.msra.mxu0 %v6441
        %6630 = vmatprep.mubr.bf16.mxu0 %v6470
        %6631 = vmatmul.mubr.bf16.gmra.mrb[0].mxu0 %v6469
        %v6632 = vpop.f32.mrb[0].mxu0
        %v6633 = vadd.f32 %v6592, %v6632
        %v6634 = vpop.f32.mrb[0].mxu0
        %v6635 = vadd.f32 %v6594, %v6634
        %v6636 = vpop.f32.mrb[0].mxu0
        %v6637 = vpop.f32.mrb[0].mxu0
        %6638 = vdwg.mxu0
        %v6639 = vxor.u32 %v6551, 2147483648
        %v6640 = vxor.u32 %v6553, 2147483648
        %v6641 = vxor.u32 %v6633, 2147483648
        %v6642 = vxor.u32 %v6635, 2147483648
        %v6643 = vmul.f32 %v6639, 1.442695
        %v6644 = vpow.pop %v6643
        %v6645 = vmul.f32 %v6640, 1.442695
        %v6646 = vpow.pop %v6645
        %v6647 = vmul.f32 %v6641, 1.442695
        %v6648 = vpow.pop %v6647
        %v6649 = vmul.f32 %v6642, 1.442695
        %v6650 = vpow.pop %v6649
        %v6651 = vadd.f32 %v6644, 1.0
        %v6652 = vadd.f32 %v6646, 1.0
        %v6653 = vadd.f32 %v6648, 1.0
        %v6654 = vadd.f32 %v6650, 1.0
        %v6655 = vrcp.pop %v6651
        %v6656 = vmul.f32 1.0, %v6655
        %v6657 = vrcp.pop %v6652
        %v6658 = vmul.f32 1.0, %v6657
        %v6659 = vrcp.pop %v6653
        %v6660 = vmul.f32 1.0, %v6659
        %v6661 = vrcp.pop %v6654
        %v6662 = vmul.f32 1.0, %v6661
        %v6667 = vcombine.low %v6656, %v6658
        %v6668 = vcombine.low %v6660, %v6662
        %v6670 = vunpack.c.l.s4 1966171168
        %v6671 = vunpack.c.0.s8 %v6670
        %v6672 = vlaneseq
        %v6673 = vshrl.u32 %v6672, 7
        %v6674 = vsub.s32 %v6671, %v6673
        %v6675 = vrot.slane %v6667, %v6674
        %v6677 = vunpack.c.l.s4 1966171168
        %v6678 = vunpack.c.0.s8 %v6677
        %v6679 = vlaneseq
        %v6680 = vshrl.u32 %v6679, 7
        %v6681 = vsub.s32 %v6678, %v6680
        %v6682 = vrot.slane %v6668, %v6681
        %v6683 = vcombine.low %v6675, %v6682
        %v6685 = vunpack.c.l.s4 1966171168
        %v6686 = vunpack.c.0.s8 %v6685
        %v6687 = vlaneseq
        %v6688 = vshrl.u32 %v6687, 7
        %v6689 = vsub.s32 %v6686, %v6688
        %v6690 = vrot.slane %v6683, %v6689
        %v6692 = vlaneseq
        %vm6693 = vcmp.ge.s32.totalorder %v6692, 0
        %vm6694 = vcmp.lt.s32.totalorder %v6692, 512
        %vm6695 = vmand %vm6693, %vm6694
        %6696 = vst.msk [vmem:[%s288] sm:$0xf] %vm6695, %v6690
        %s6697 = sand.u32 %s158, 1
        %s6698 = scalar_lea.sflag [#allocation5], %s6697
        %s6699 = sand.u32 %s158, 1
        %s6700 = smul.addr %s6699, 4
        %s6701 = scalar_lea.vmem [#allocation9], %s6700
        // Predicated region
        $region53: #{tpu_custom_call.1} parent=39 // pred_check
          %p6702 = pneg %p168
        $region54: #{tpu_custom_call.1} parent=39 // pred_check_branch
          %6704 = sbr.rel (%p6702) target = $region56
        $region55: #{tpu_custom_call.1} parent=39 // pred_region
          %s6705 = smul.u32 4, %s29
          %s6707 = ssub.s32 64, 64
          %6708 = vsyncadd %s6698, %s6707
          %s6709 = smul.addr %s28, 4
          %s6710 = sadd.s32 %s6705, %s6709
          %s6711 = smul.addr %s6710, 16
          %s6712 = scalar_lea.hbm %s5, %s6711
          %s6714 = sshll.u32 %s6701, 4
          %s6715 = int_to_ptr.vmem [resolvable:$true] %s6714
          %6717 = dma.vmem_to_hbm [thread:$0]  %s6715, 64, %s6712, %s6698
        $region56: #{tpu_custom_call.1} parent=39 // pred_fallthru
          _
      $region40: #{tpu_custom_call.1} parent=5 // pred_fallthru
        _
      %p6718 = scmp.le.s32.totalorder 2, %s19
      // Predicated region
      $region57: #{tpu_custom_call.1} parent=5 // pred_check
        %p6719 = pneg %p6718
      $region58: #{tpu_custom_call.1} parent=5 // pred_check_branch
        %6721 = sbr.rel (%p6719) target = $region60
      $region59: #{tpu_custom_call.1} parent=5 // pred_region
        %s6722 = ssub.s32 %s19, 2
        // Predicated region
        $region61: #{tpu_custom_call.1} parent=59 // pred_check
          %p6723 = pneg %p174
        $region62: #{tpu_custom_call.1} parent=59 // pred_check_branch
          %6725 = sbr.rel (%p6723) target = $region64
        $region63: #{tpu_custom_call.1} parent=59 // pred_region
          %s6726 = sand.u32 %s159, 1
          %s6727 = scalar_lea.sflag [#allocation5], %s6726
          %s6728 = sand.u32 %s159, 1
          %s6729 = smul.addr %s6728, 4
          %s6730 = scalar_lea.vmem [#allocation9], %s6729
          %6731 = dma.done %s6727, 64
        $region64: #{tpu_custom_call.1} parent=59 // pred_fallthru
          _
      $region60: #{tpu_custom_call.1} parent=5 // pred_fallthru
        _
    $region6: #{tpu_custom_call.1} parent=1 // loop_footer
      %s23 = sadd.s32 1, %s19
    $region7: #{tpu_custom_call.1} parent=1 // loop_footer_branch
      %18 = sbr.rel target = $region3
    $region8: #{tpu_custom_call.1} parent=1 // loop_exit
      _
    %6732 = vsyncpa [#allocation4], 1
    %s6733 = scalar_lea.sflag [#allocation4], 1
    %6734 = vsyncpa %s6733, 1
    %6735 = vsyncpa [#allocation7], 1
    %6736 = vsyncpa [#allocation5], 1
    %s6737 = scalar_lea.sflag [#allocation5], 1
    %6738 = vsyncpa %s6737, 1

</llo_original>
